<compile_context>
chip_gen: v7x
topology: tpu7x:2x2x1
jax: 0.10.0
libtpu: 0.0.40
codegen_flags: <defaults>
</compile_context>

<pallas_src>
import functools

import jax
import jax.numpy as jnp
from jax.experimental import pallas as pl
from jax.experimental.pallas import tpu as pltpu

C_IN, C1, C2, K, L = 6, 64, 32, 5, 100
LP = L // 2                 # 50 after MaxPool1d(2)
KC_IN = K * C_IN            # 30  (conv1 im2col contraction depth)
FLAT = C2 * LP              # 1600
HID = 800
PAD = K // 2                # 2


# ---------------------------------------------------------------------------
# Fused kernel: conv1 -> relu -> maxpool(2) -> conv2 -> relu -> flatten
#               -> linear1 -> relu -> (dropout=id) -> relu -> linear2 [-> sigmoid]
# One batch element per grid step; weights resident via constant index maps.
# ---------------------------------------------------------------------------
def _fused_kernel(x_ref, w1_ref, b1_ref, w2_ref, b2_ref,
                  w3_ref, b3_ref, w4_ref, b4_ref,
                  o_ref, feat_ref, *, apply_sigmoid):
    # x_ref : (1, 2, KC_IN, LP) bf16  im2col'd input; axis1 = even/odd phase
    # w1_ref: (C1, KC_IN)       bf16  conv1 weight, flattened taps
    # b1_ref: (C1, 1)           f32
    # w2_ref: (K, C2, C1)       bf16  conv2 weight split per tap
    # b2_ref: (C2, 1)           f32
    # w3_ref: (FLAT, HID)       bf16  linear1 weight (transposed)
    # b3_ref: (1, HID)          f32
    # w4_ref: (HID, outd)       bf16  linear2 weight (transposed)
    # b4_ref: (1, outd)         f32
    # o_ref : (1, 1, outd)      f32
    # feat_ref: (1, FLAT)       f32   VMEM scratch (flattened conv features)

    # --- conv1: one im2col matmul per even/odd output phase -----------------
    xe = x_ref[0, 0]                                       # (KC_IN, LP)
    xo = x_ref[0, 1]
    w1 = w1_ref[...]
    b1 = b1_ref[...]
    ye = jnp.dot(w1, xe, preferred_element_type=jnp.float32) + b1
    yo = jnp.dot(w1, xo, preferred_element_type=jnp.float32) + b1
    # relu then maxpool(2) == max of the two phases clamped at 0
    pooled = jnp.maximum(jnp.maximum(ye, yo), 0.0)         # (C1, LP) f32
    pooled = pooled.astype(jnp.bfloat16)

    # --- conv2 (padding=2): K accumulating tap matmuls ----------------------
    zpad = jnp.zeros((C1, PAD), jnp.bfloat16)
    ppad = jnp.concatenate([zpad, pooled, zpad], axis=1)   # (C1, LP + 2*PAD)
    acc = jnp.zeros((C2, LP), jnp.float32)
    for k in range(K):
        acc = acc + jnp.dot(w2_ref[k], ppad[:, k:k + LP],
                            preferred_element_type=jnp.float32)
    h2 = jnp.maximum(acc + b2_ref[...], 0.0)               # (C2, LP) f32

    # --- Flatten (torch order c*LP + l): scatter rows into a lane-dense row -
    for c in range(C2):
        feat_ref[0:1, c * LP:(c + 1) * LP] = h2[c:c + 1, :]

    # --- linear1 -> relu -> (dropout=identity) -> relu -> linear2 -----------
    feat = feat_ref[...].astype(jnp.bfloat16)              # (1, FLAT)
    h = jnp.dot(feat, w3_ref[...], preferred_element_type=jnp.float32) + b3_ref[...]
    h = jnp.maximum(h, 0.0)
    # nn.Dropout is identity at inference; the second ReLU is a no-op on ReLU output.
    out = jnp.dot(h.astype(jnp.bfloat16), w4_ref[...],
                  preferred_element_type=jnp.float32) + b4_ref[...]
    if apply_sigmoid:
        out = 1.0 / (1.0 + jnp.exp(-out))                  # exact sigmoid
    o_ref[0] = out


def fused_forward(xeo, w1f, b1c, w2t, b2c, w3t, b3r, w4t, b4r, apply_sigmoid):
    B = xeo.shape[0]
    outd = w4t.shape[1]
    kern = functools.partial(_fused_kernel, apply_sigmoid=apply_sigmoid)
    out = pl.pallas_call(
        kern,
        out_shape=jax.ShapeDtypeStruct((B, 1, outd), jnp.float32),
        grid=(B,),
        in_specs=[
            pl.BlockSpec((1, 2, KC_IN, LP), lambda b: (b, 0, 0, 0)),
            pl.BlockSpec((C1, KC_IN), lambda b: (0, 0)),
            pl.BlockSpec((C1, 1), lambda b: (0, 0)),
            pl.BlockSpec((K, C2, C1), lambda b: (0, 0, 0)),
            pl.BlockSpec((C2, 1), lambda b: (0, 0)),
            pl.BlockSpec((FLAT, HID), lambda b: (0, 0)),
            pl.BlockSpec((1, HID), lambda b: (0, 0)),
            pl.BlockSpec((HID, outd), lambda b: (0, 0)),
            pl.BlockSpec((1, outd), lambda b: (0, 0)),
        ],
        out_specs=pl.BlockSpec((1, 1, outd), lambda b: (b, 0, 0)),
        scratch_shapes=[pltpu.VMEM((1, FLAT), jnp.float32)],
        compiler_params=pltpu.CompilerParams(
            dimension_semantics=("parallel",)),
    )(xeo, w1f, b1c, w2t, b2c, w3t, b3r, w4t, b4r)
    return out.reshape(B, outd)


# ---------------------------------------------------------------------------
# Parameters (deterministic, synthetic) and full forward pass
# ---------------------------------------------------------------------------
def init_params(key, activity):
    outd = 4 if activity else 1
    ks = jax.random.split(key, 6)
    # Conv layers (PyTorch shapes: (Cout, Cin, K)); small uniform init
    w1 = jax.random.uniform(ks[0], (C1, C_IN, K), jnp.float32, -0.1, 0.1)
    b1 = jax.random.uniform(ks[1], (C1,), jnp.float32, -0.1, 0.1)
    w2 = jax.random.uniform(ks[2], (C2, C1, K), jnp.float32, -0.05, 0.05)
    b2 = jax.random.uniform(ks[3], (C2,), jnp.float32, -0.05, 0.05)
    # _init_weights: Linear weights uniform, bias zero (scaled so outputs stay finite)
    w3 = jax.random.uniform(ks[4], (HID, FLAT), jnp.float32) * 1e-3
    b3 = jnp.zeros((HID,), jnp.float32)
    w4 = jax.random.uniform(ks[5], (outd, HID), jnp.float32) * 1e-3
    b4 = jnp.zeros((outd,), jnp.float32)
    return dict(w1=w1, b1=b1, w2=w2, b2=b2, w3=w3, b3=b3, w4=w4, b4=b4)


def cnn_forward(x, params, activity):
    # x: (B, C_in, L) NCW, same as PyTorch.  Linear1 expects 1600 = 32*(L/2) -> L = 100.
    B = x.shape[0]
    x = x.astype(jnp.float32)

    # conv1 im2col + even/odd phases (cheap one-time XLA layout on a tiny input)
    xpad = jnp.pad(x, ((0, 0), (0, 0), (PAD, PAD)))                  # (B, 6, 104)
    taps = [xpad[:, :, k:k + L] for k in range(K)]                   # K x (B, 6, 100)
    xcol = jnp.stack(taps, axis=1).reshape(B, KC_IN, L)              # row = k*C_IN + c
    xeo = jnp.stack([xcol[:, :, 0::2], xcol[:, :, 1::2]],
                    axis=1).astype(jnp.bfloat16)                     # (B, 2, 30, 50)

    # flattened-tap conv1 weight: W[o, k*Cin + c] = w1[o, c, k]
    w1f = params["w1"].transpose(0, 2, 1).reshape(C1, KC_IN).astype(jnp.bfloat16)
    # per-tap conv2 weight: W2t[k, o, c] = w2[o, c, k]
    w2t = params["w2"].transpose(2, 0, 1).astype(jnp.bfloat16)       # (5, 32, 64)
    w3t = params["w3"].T.astype(jnp.bfloat16)                        # (1600, 800)
    w4t = params["w4"].T.astype(jnp.bfloat16)                        # (800, outd)

    out = fused_forward(xeo, w1f, params["b1"][:, None],
                        w2t, params["b2"][:, None],
                        w3t, params["b3"][None, :],
                        w4t, params["b4"][None, :],
                        apply_sigmoid=not activity)                  # (B, outd)
    if not activity:
        out = jnp.squeeze(out)          # matches x.squeeze(): (B, 1) -> (B,)
    else:
        out = out.astype(jnp.float32)   # matches x.type(torch.float)
    return out
    # TODO(synk): nn.Dropout(p=0.5) is implemented as identity (inference mode);
    # training-mode random masking is not reproduced.


if __name__ == "__main__":
    activity = False   # Linear2 -> 1 output, then sigmoid + squeeze
    key = jax.random.PRNGKey(0)
    kx, kp = jax.random.split(key)
    x = jax.random.normal(kx, (2, C_IN, L), jnp.float32)   # (B=2, C=6, L=100)
    params = init_params(kp, activity)
    fwd = jax.jit(functools.partial(cnn_forward, activity=activity))
    out = fwd(x, params)
    jax.block_until_ready(out)
    assert out.shape == (2,)
    print("KERNEL_OK")
</pallas_src>

<mosaic_0001>
module attributes {stable_mosaic.version = 11 : i64} {
  func.func @_fused_kernel(%arg0: i32, %arg1: memref<1x2x30x50xbf16, #tpu.memory_space<vmem>>, %arg2: memref<64x30xbf16, #tpu.memory_space<vmem>>, %arg3: memref<64x1xf32, #tpu.memory_space<vmem>>, %arg4: memref<5x32x64xbf16, #tpu.memory_space<vmem>>, %arg5: memref<32x1xf32, #tpu.memory_space<vmem>>, %arg6: memref<1600x800xbf16, #tpu.memory_space<vmem>>, %arg7: memref<1x800xf32, #tpu.memory_space<vmem>>, %arg8: memref<800x1xbf16, #tpu.memory_space<vmem>>, %arg9: memref<1x1xf32, #tpu.memory_space<vmem>>, %arg10: memref<1x1x1xf32, #tpu.memory_space<vmem>>, %arg11: memref<1x1600xf32, #tpu.memory_space<vmem>>) attributes {dimension_semantics = [#tpu.dimension_semantics<parallel>], iteration_bounds = array<i64: 2>, scalar_prefetch = 0 : i64, scratch_operands = 1 : i64, tpu.core_type = #tpu.core_type<tc>, window_params = [{transform_indices = @transform_0, window_bounds = array<i64: 1, 2, 30, 50>}, {pipeline_mode = #tpu.pipeline_mode<synchronous>, transform_indices = @transform_1, window_bounds = array<i64: 64, 30>}, {pipeline_mode = #tpu.pipeline_mode<synchronous>, transform_indices = @transform_2, window_bounds = array<i64: 64, 1>}, {pipeline_mode = #tpu.pipeline_mode<synchronous>, transform_indices = @transform_3, window_bounds = array<i64: 5, 32, 64>}, {pipeline_mode = #tpu.pipeline_mode<synchronous>, transform_indices = @transform_4, window_bounds = array<i64: 32, 1>}, {pipeline_mode = #tpu.pipeline_mode<synchronous>, transform_indices = @transform_5, window_bounds = array<i64: 1600, 800>}, {pipeline_mode = #tpu.pipeline_mode<synchronous>, transform_indices = @transform_6, window_bounds = array<i64: 1, 800>}, {pipeline_mode = #tpu.pipeline_mode<synchronous>, transform_indices = @transform_7, window_bounds = array<i64: 800, 1>}, {pipeline_mode = #tpu.pipeline_mode<synchronous>, transform_indices = @transform_8, window_bounds = array<i64: 1, 1>}, {transform_indices = @transform_9, window_bounds = array<i64: 1, 1, 1>}]} {
    %c0 = arith.constant 0 : index
    %c0_0 = arith.constant 0 : index
    %c0_1 = arith.constant 0 : index
    %c0_2 = arith.constant 0 : index
    %0 = vector.load %arg1[%c0, %c0_0, %c0_1, %c0_2] : memref<1x2x30x50xbf16, #tpu.memory_space<vmem>>, vector<1x1x30x50xbf16>
    %1 = vector.shape_cast %0 : vector<1x1x30x50xbf16> to vector<30x50xbf16>
    %c0_3 = arith.constant 0 : index
    %c1 = arith.constant 1 : index
    %c0_4 = arith.constant 0 : index
    %c0_5 = arith.constant 0 : index
    %2 = vector.load %arg1[%c0_3, %c1, %c0_4, %c0_5] : memref<1x2x30x50xbf16, #tpu.memory_space<vmem>>, vector<1x1x30x50xbf16>
    %3 = vector.shape_cast %2 : vector<1x1x30x50xbf16> to vector<30x50xbf16>
    %c0_6 = arith.constant 0 : index
    %c0_7 = arith.constant 0 : index
    %4 = vector.load %arg2[%c0_6, %c0_7] : memref<64x30xbf16, #tpu.memory_space<vmem>>, vector<64x30xbf16>
    %c0_8 = arith.constant 0 : index
    %c0_9 = arith.constant 0 : index
    %5 = vector.load %arg3[%c0_8, %c0_9] : memref<64x1xf32, #tpu.memory_space<vmem>>, vector<64x1xf32>
    %cst = arith.constant dense<0.000000e+00> : vector<64x50xf32>
    %6 = tpu.matmul %4, %1, %cst {dimension_numbers = #tpu.dot_dimension_numbers<[1], [0], [0], [1], [0, 0, 1, 1], [], []>} : vector<64x30xbf16>, vector<30x50xbf16>, vector<64x50xf32> -> vector<64x50xf32>
    %7 = vector.broadcast %5 : vector<64x1xf32> to vector<64x50xf32>
    %8 = arith.addf %6, %7 : vector<64x50xf32>
    %cst_10 = arith.constant dense<0.000000e+00> : vector<64x50xf32>
    %9 = tpu.matmul %4, %3, %cst_10 {dimension_numbers = #tpu.dot_dimension_numbers<[1], [0], [0], [1], [0, 0, 1, 1], [], []>} : vector<64x30xbf16>, vector<30x50xbf16>, vector<64x50xf32> -> vector<64x50xf32>
    %10 = vector.broadcast %5 : vector<64x1xf32> to vector<64x50xf32>
    %11 = arith.addf %9, %10 : vector<64x50xf32>
    %12 = arith.maximumf %8, %11 : vector<64x50xf32>
    %cst_11 = arith.constant 0.000000e+00 : f32
    %13 = vector.broadcast %cst_11 : f32 to vector<64x50xf32>
    %14 = arith.maximumf %12, %13 : vector<64x50xf32>
    %15 = arith.truncf %14 : vector<64x50xf32> to vector<64x50xbf16>
    %cst_12 = arith.constant 0.000000e+00 : bf16
    %16 = vector.broadcast %cst_12 : bf16 to vector<64x2xbf16>
    %17 = tpu.concatenate %16, %15, %16 in 1 : vector<64x2xbf16>, vector<64x50xbf16>, vector<64x2xbf16> -> vector<64x54xbf16>
    %cst_13 = arith.constant 0.000000e+00 : f32
    %18 = vector.broadcast %cst_13 : f32 to vector<32x50xf32>
    %c0_14 = arith.constant 0 : index
    %c0_15 = arith.constant 0 : index
    %c0_16 = arith.constant 0 : index
    %19 = vector.load %arg4[%c0_14, %c0_15, %c0_16] : memref<5x32x64xbf16, #tpu.memory_space<vmem>>, vector<1x32x64xbf16>
    %20 = vector.shape_cast %19 : vector<1x32x64xbf16> to vector<32x64xbf16>
    %21 = vector.extract_strided_slice %17 {offsets = [0, 0], sizes = [64, 50], strides = [1, 1]} : vector<64x54xbf16> to vector<64x50xbf16>
    %cst_17 = arith.constant dense<0.000000e+00> : vector<32x50xf32>
    %22 = tpu.matmul %20, %21, %cst_17 {dimension_numbers = #tpu.dot_dimension_numbers<[1], [0], [0], [1], [0, 0, 1, 1], [], []>} : vector<32x64xbf16>, vector<64x50xbf16>, vector<32x50xf32> -> vector<32x50xf32>
    %23 = arith.addf %18, %22 : vector<32x50xf32>
    %c1_18 = arith.constant 1 : index
    %c0_19 = arith.constant 0 : index
    %c0_20 = arith.constant 0 : index
    %24 = vector.load %arg4[%c1_18, %c0_19, %c0_20] : memref<5x32x64xbf16, #tpu.memory_space<vmem>>, vector<1x32x64xbf16>
    %25 = vector.shape_cast %24 : vector<1x32x64xbf16> to vector<32x64xbf16>
    %26 = vector.extract_strided_slice %17 {offsets = [0, 1], sizes = [64, 50], strides = [1, 1]} : vector<64x54xbf16> to vector<64x50xbf16>
    %cst_21 = arith.constant dense<0.000000e+00> : vector<32x50xf32>
    %27 = tpu.matmul %25, %26, %cst_21 {dimension_numbers = #tpu.dot_dimension_numbers<[1], [0], [0], [1], [0, 0, 1, 1], [], []>} : vector<32x64xbf16>, vector<64x50xbf16>, vector<32x50xf32> -> vector<32x50xf32>
    %28 = arith.addf %23, %27 : vector<32x50xf32>
    %c2 = arith.constant 2 : index
    %c0_22 = arith.constant 0 : index
    %c0_23 = arith.constant 0 : index
    %29 = vector.load %arg4[%c2, %c0_22, %c0_23] : memref<5x32x64xbf16, #tpu.memory_space<vmem>>, vector<1x32x64xbf16>
    %30 = vector.shape_cast %29 : vector<1x32x64xbf16> to vector<32x64xbf16>
    %31 = vector.extract_strided_slice %17 {offsets = [0, 2], sizes = [64, 50], strides = [1, 1]} : vector<64x54xbf16> to vector<64x50xbf16>
    %cst_24 = arith.constant dense<0.000000e+00> : vector<32x50xf32>
    %32 = tpu.matmul %30, %31, %cst_24 {dimension_numbers = #tpu.dot_dimension_numbers<[1], [0], [0], [1], [0, 0, 1, 1], [], []>} : vector<32x64xbf16>, vector<64x50xbf16>, vector<32x50xf32> -> vector<32x50xf32>
    %33 = arith.addf %28, %32 : vector<32x50xf32>
    %c3 = arith.constant 3 : index
    %c0_25 = arith.constant 0 : index
    %c0_26 = arith.constant 0 : index
    %34 = vector.load %arg4[%c3, %c0_25, %c0_26] : memref<5x32x64xbf16, #tpu.memory_space<vmem>>, vector<1x32x64xbf16>
    %35 = vector.shape_cast %34 : vector<1x32x64xbf16> to vector<32x64xbf16>
    %36 = vector.extract_strided_slice %17 {offsets = [0, 3], sizes = [64, 50], strides = [1, 1]} : vector<64x54xbf16> to vector<64x50xbf16>
    %cst_27 = arith.constant dense<0.000000e+00> : vector<32x50xf32>
    %37 = tpu.matmul %35, %36, %cst_27 {dimension_numbers = #tpu.dot_dimension_numbers<[1], [0], [0], [1], [0, 0, 1, 1], [], []>} : vector<32x64xbf16>, vector<64x50xbf16>, vector<32x50xf32> -> vector<32x50xf32>
    %38 = arith.addf %33, %37 : vector<32x50xf32>
    %c4 = arith.constant 4 : index
    %c0_28 = arith.constant 0 : index
    %c0_29 = arith.constant 0 : index
    %39 = vector.load %arg4[%c4, %c0_28, %c0_29] : memref<5x32x64xbf16, #tpu.memory_space<vmem>>, vector<1x32x64xbf16>
    %40 = vector.shape_cast %39 : vector<1x32x64xbf16> to vector<32x64xbf16>
    %41 = vector.extract_strided_slice %17 {offsets = [0, 4], sizes = [64, 50], strides = [1, 1]} : vector<64x54xbf16> to vector<64x50xbf16>
    %cst_30 = arith.constant dense<0.000000e+00> : vector<32x50xf32>
    %42 = tpu.matmul %40, %41, %cst_30 {dimension_numbers = #tpu.dot_dimension_numbers<[1], [0], [0], [1], [0, 0, 1, 1], [], []>} : vector<32x64xbf16>, vector<64x50xbf16>, vector<32x50xf32> -> vector<32x50xf32>
    %43 = arith.addf %38, %42 : vector<32x50xf32>
    %c0_31 = arith.constant 0 : index
    %c0_32 = arith.constant 0 : index
    %44 = vector.load %arg5[%c0_31, %c0_32] : memref<32x1xf32, #tpu.memory_space<vmem>>, vector<32x1xf32>
    %45 = vector.broadcast %44 : vector<32x1xf32> to vector<32x50xf32>
    %46 = arith.addf %43, %45 : vector<32x50xf32>
    %cst_33 = arith.constant 0.000000e+00 : f32
    %47 = vector.broadcast %cst_33 : f32 to vector<32x50xf32>
    %48 = arith.maximumf %46, %47 : vector<32x50xf32>
    %49 = vector.extract_strided_slice %48 {offsets = [0, 0], sizes = [1, 50], strides = [1, 1]} : vector<32x50xf32> to vector<1x50xf32>
    %c0_34 = arith.constant 0 : index
    %c0_35 = arith.constant 0 : index
    %50 = vector.load %arg11[%c0_34, %c0_35] : memref<1x1600xf32, #tpu.memory_space<vmem>>, vector<1x50xf32>
    tpu.vector_store %arg11[%c0_34, %c0_35], %49 {strides = array<i32>} : memref<1x1600xf32, #tpu.memory_space<vmem>>, vector<1x50xf32>,
    %51 = vector.extract_strided_slice %48 {offsets = [1, 0], sizes = [1, 50], strides = [1, 1]} : vector<32x50xf32> to vector<1x50xf32>
    %c0_36 = arith.constant 0 : index
    %c50 = arith.constant 50 : index
    %52 = vector.load %arg11[%c0_36, %c50] : memref<1x1600xf32, #tpu.memory_space<vmem>>, vector<1x50xf32>
    tpu.vector_store %arg11[%c0_36, %c50], %51 {strides = array<i32>} : memref<1x1600xf32, #tpu.memory_space<vmem>>, vector<1x50xf32>,
    %53 = vector.extract_strided_slice %48 {offsets = [2, 0], sizes = [1, 50], strides = [1, 1]} : vector<32x50xf32> to vector<1x50xf32>
    %c0_37 = arith.constant 0 : index
    %c100 = arith.constant 100 : index
    %54 = vector.load %arg11[%c0_37, %c100] : memref<1x1600xf32, #tpu.memory_space<vmem>>, vector<1x50xf32>
    tpu.vector_store %arg11[%c0_37, %c100], %53 {strides = array<i32>} : memref<1x1600xf32, #tpu.memory_space<vmem>>, vector<1x50xf32>,
    %55 = vector.extract_strided_slice %48 {offsets = [3, 0], sizes = [1, 50], strides = [1, 1]} : vector<32x50xf32> to vector<1x50xf32>
    %c0_38 = arith.constant 0 : index
    %c150 = arith.constant 150 : index
    %56 = vector.load %arg11[%c0_38, %c150] : memref<1x1600xf32, #tpu.memory_space<vmem>>, vector<1x50xf32>
    tpu.vector_store %arg11[%c0_38, %c150], %55 {strides = array<i32>} : memref<1x1600xf32, #tpu.memory_space<vmem>>, vector<1x50xf32>,
    %57 = vector.extract_strided_slice %48 {offsets = [4, 0], sizes = [1, 50], strides = [1, 1]} : vector<32x50xf32> to vector<1x50xf32>
    %c0_39 = arith.constant 0 : index
    %c200 = arith.constant 200 : index
    %58 = vector.load %arg11[%c0_39, %c200] : memref<1x1600xf32, #tpu.memory_space<vmem>>, vector<1x50xf32>
    tpu.vector_store %arg11[%c0_39, %c200], %57 {strides = array<i32>} : memref<1x1600xf32, #tpu.memory_space<vmem>>, vector<1x50xf32>,
    %59 = vector.extract_strided_slice %48 {offsets = [5, 0], sizes = [1, 50], strides = [1, 1]} : vector<32x50xf32> to vector<1x50xf32>
    %c0_40 = arith.constant 0 : index
    %c250 = arith.constant 250 : index
    %60 = vector.load %arg11[%c0_40, %c250] : memref<1x1600xf32, #tpu.memory_space<vmem>>, vector<1x50xf32>
    tpu.vector_store %arg11[%c0_40, %c250], %59 {strides = array<i32>} : memref<1x1600xf32, #tpu.memory_space<vmem>>, vector<1x50xf32>,
    %61 = vector.extract_strided_slice %48 {offsets = [6, 0], sizes = [1, 50], strides = [1, 1]} : vector<32x50xf32> to vector<1x50xf32>
    %c0_41 = arith.constant 0 : index
    %c300 = arith.constant 300 : index
    %62 = vector.load %arg11[%c0_41, %c300] : memref<1x1600xf32, #tpu.memory_space<vmem>>, vector<1x50xf32>
    tpu.vector_store %arg11[%c0_41, %c300], %61 {strides = array<i32>} : memref<1x1600xf32, #tpu.memory_space<vmem>>, vector<1x50xf32>,
    %63 = vector.extract_strided_slice %48 {offsets = [7, 0], sizes = [1, 50], strides = [1, 1]} : vector<32x50xf32> to vector<1x50xf32>
    %c0_42 = arith.constant 0 : index
    %c350 = arith.constant 350 : index
    %64 = vector.load %arg11[%c0_42, %c350] : memref<1x1600xf32, #tpu.memory_space<vmem>>, vector<1x50xf32>
    tpu.vector_store %arg11[%c0_42, %c350], %63 {strides = array<i32>} : memref<1x1600xf32, #tpu.memory_space<vmem>>, vector<1x50xf32>,
    %65 = vector.extract_strided_slice %48 {offsets = [8, 0], sizes = [1, 50], strides = [1, 1]} : vector<32x50xf32> to vector<1x50xf32>
    %c0_43 = arith.constant 0 : index
    %c400 = arith.constant 400 : index
    %66 = vector.load %arg11[%c0_43, %c400] : memref<1x1600xf32, #tpu.memory_space<vmem>>, vector<1x50xf32>
    tpu.vector_store %arg11[%c0_43, %c400], %65 {strides = array<i32>} : memref<1x1600xf32, #tpu.memory_space<vmem>>, vector<1x50xf32>,
    %67 = vector.extract_strided_slice %48 {offsets = [9, 0], sizes = [1, 50], strides = [1, 1]} : vector<32x50xf32> to vector<1x50xf32>
    %c0_44 = arith.constant 0 : index
    %c450 = arith.constant 450 : index
    %68 = vector.load %arg11[%c0_44, %c450] : memref<1x1600xf32, #tpu.memory_space<vmem>>, vector<1x50xf32>
    tpu.vector_store %arg11[%c0_44, %c450], %67 {strides = array<i32>} : memref<1x1600xf32, #tpu.memory_space<vmem>>, vector<1x50xf32>,
    %69 = vector.extract_strided_slice %48 {offsets = [10, 0], sizes = [1, 50], strides = [1, 1]} : vector<32x50xf32> to vector<1x50xf32>
    %c0_45 = arith.constant 0 : index
    %c500 = arith.constant 500 : index
    %70 = vector.load %arg11[%c0_45, %c500] : memref<1x1600xf32, #tpu.memory_space<vmem>>, vector<1x50xf32>
    tpu.vector_store %arg11[%c0_45, %c500], %69 {strides = array<i32>} : memref<1x1600xf32, #tpu.memory_space<vmem>>, vector<1x50xf32>,
    %71 = vector.extract_strided_slice %48 {offsets = [11, 0], sizes = [1, 50], strides = [1, 1]} : vector<32x50xf32> to vector<1x50xf32>
    %c0_46 = arith.constant 0 : index
    %c550 = arith.constant 550 : index
    %72 = vector.load %arg11[%c0_46, %c550] : memref<1x1600xf32, #tpu.memory_space<vmem>>, vector<1x50xf32>
    tpu.vector_store %arg11[%c0_46, %c550], %71 {strides = array<i32>} : memref<1x1600xf32, #tpu.memory_space<vmem>>, vector<1x50xf32>,
    %73 = vector.extract_strided_slice %48 {offsets = [12, 0], sizes = [1, 50], strides = [1, 1]} : vector<32x50xf32> to vector<1x50xf32>
    %c0_47 = arith.constant 0 : index
    %c600 = arith.constant 600 : index
    %74 = vector.load %arg11[%c0_47, %c600] : memref<1x1600xf32, #tpu.memory_space<vmem>>, vector<1x50xf32>
    tpu.vector_store %arg11[%c0_47, %c600], %73 {strides = array<i32>} : memref<1x1600xf32, #tpu.memory_space<vmem>>, vector<1x50xf32>,
    %75 = vector.extract_strided_slice %48 {offsets = [13, 0], sizes = [1, 50], strides = [1, 1]} : vector<32x50xf32> to vector<1x50xf32>
    %c0_48 = arith.constant 0 : index
    %c650 = arith.constant 650 : index
    %76 = vector.load %arg11[%c0_48, %c650] : memref<1x1600xf32, #tpu.memory_space<vmem>>, vector<1x50xf32>
    tpu.vector_store %arg11[%c0_48, %c650], %75 {strides = array<i32>} : memref<1x1600xf32, #tpu.memory_space<vmem>>, vector<1x50xf32>,
    %77 = vector.extract_strided_slice %48 {offsets = [14, 0], sizes = [1, 50], strides = [1, 1]} : vector<32x50xf32> to vector<1x50xf32>
    %c0_49 = arith.constant 0 : index
    %c700 = arith.constant 700 : index
    %78 = vector.load %arg11[%c0_49, %c700] : memref<1x1600xf32, #tpu.memory_space<vmem>>, vector<1x50xf32>
    tpu.vector_store %arg11[%c0_49, %c700], %77 {strides = array<i32>} : memref<1x1600xf32, #tpu.memory_space<vmem>>, vector<1x50xf32>,
    %79 = vector.extract_strided_slice %48 {offsets = [15, 0], sizes = [1, 50], strides = [1, 1]} : vector<32x50xf32> to vector<1x50xf32>
    %c0_50 = arith.constant 0 : index
    %c750 = arith.constant 750 : index
    %80 = vector.load %arg11[%c0_50, %c750] : memref<1x1600xf32, #tpu.memory_space<vmem>>, vector<1x50xf32>
    tpu.vector_store %arg11[%c0_50, %c750], %79 {strides = array<i32>} : memref<1x1600xf32, #tpu.memory_space<vmem>>, vector<1x50xf32>,
    %81 = vector.extract_strided_slice %48 {offsets = [16, 0], sizes = [1, 50], strides = [1, 1]} : vector<32x50xf32> to vector<1x50xf32>
    %c0_51 = arith.constant 0 : index
    %c800 = arith.constant 800 : index
    %82 = vector.load %arg11[%c0_51, %c800] : memref<1x1600xf32, #tpu.memory_space<vmem>>, vector<1x50xf32>
    tpu.vector_store %arg11[%c0_51, %c800], %81 {strides = array<i32>} : memref<1x1600xf32, #tpu.memory_space<vmem>>, vector<1x50xf32>,
    %83 = vector.extract_strided_slice %48 {offsets = [17, 0], sizes = [1, 50], strides = [1, 1]} : vector<32x50xf32> to vector<1x50xf32>
    %c0_52 = arith.constant 0 : index
    %c850 = arith.constant 850 : index
    %84 = vector.load %arg11[%c0_52, %c850] : memref<1x1600xf32, #tpu.memory_space<vmem>>, vector<1x50xf32>
    tpu.vector_store %arg11[%c0_52, %c850], %83 {strides = array<i32>} : memref<1x1600xf32, #tpu.memory_space<vmem>>, vector<1x50xf32>,
    %85 = vector.extract_strided_slice %48 {offsets = [18, 0], sizes = [1, 50], strides = [1, 1]} : vector<32x50xf32> to vector<1x50xf32>
    %c0_53 = arith.constant 0 : index
    %c900 = arith.constant 900 : index
    %86 = vector.load %arg11[%c0_53, %c900] : memref<1x1600xf32, #tpu.memory_space<vmem>>, vector<1x50xf32>
    tpu.vector_store %arg11[%c0_53, %c900], %85 {strides = array<i32>} : memref<1x1600xf32, #tpu.memory_space<vmem>>, vector<1x50xf32>,
    %87 = vector.extract_strided_slice %48 {offsets = [19, 0], sizes = [1, 50], strides = [1, 1]} : vector<32x50xf32> to vector<1x50xf32>
    %c0_54 = arith.constant 0 : index
    %c950 = arith.constant 950 : index
    %88 = vector.load %arg11[%c0_54, %c950] : memref<1x1600xf32, #tpu.memory_space<vmem>>, vector<1x50xf32>
    tpu.vector_store %arg11[%c0_54, %c950], %87 {strides = array<i32>} : memref<1x1600xf32, #tpu.memory_space<vmem>>, vector<1x50xf32>,
    %89 = vector.extract_strided_slice %48 {offsets = [20, 0], sizes = [1, 50], strides = [1, 1]} : vector<32x50xf32> to vector<1x50xf32>
    %c0_55 = arith.constant 0 : index
    %c1000 = arith.constant 1000 : index
    %90 = vector.load %arg11[%c0_55, %c1000] : memref<1x1600xf32, #tpu.memory_space<vmem>>, vector<1x50xf32>
    tpu.vector_store %arg11[%c0_55, %c1000], %89 {strides = array<i32>} : memref<1x1600xf32, #tpu.memory_space<vmem>>, vector<1x50xf32>,
    %91 = vector.extract_strided_slice %48 {offsets = [21, 0], sizes = [1, 50], strides = [1, 1]} : vector<32x50xf32> to vector<1x50xf32>
    %c0_56 = arith.constant 0 : index
    %c1050 = arith.constant 1050 : index
    %92 = vector.load %arg11[%c0_56, %c1050] : memref<1x1600xf32, #tpu.memory_space<vmem>>, vector<1x50xf32>
    tpu.vector_store %arg11[%c0_56, %c1050], %91 {strides = array<i32>} : memref<1x1600xf32, #tpu.memory_space<vmem>>, vector<1x50xf32>,
    %93 = vector.extract_strided_slice %48 {offsets = [22, 0], sizes = [1, 50], strides = [1, 1]} : vector<32x50xf32> to vector<1x50xf32>
    %c0_57 = arith.constant 0 : index
    %c1100 = arith.constant 1100 : index
    %94 = vector.load %arg11[%c0_57, %c1100] : memref<1x1600xf32, #tpu.memory_space<vmem>>, vector<1x50xf32>
    tpu.vector_store %arg11[%c0_57, %c1100], %93 {strides = array<i32>} : memref<1x1600xf32, #tpu.memory_space<vmem>>, vector<1x50xf32>,
    %95 = vector.extract_strided_slice %48 {offsets = [23, 0], sizes = [1, 50], strides = [1, 1]} : vector<32x50xf32> to vector<1x50xf32>
    %c0_58 = arith.constant 0 : index
    %c1150 = arith.constant 1150 : index
    %96 = vector.load %arg11[%c0_58, %c1150] : memref<1x1600xf32, #tpu.memory_space<vmem>>, vector<1x50xf32>
    tpu.vector_store %arg11[%c0_58, %c1150], %95 {strides = array<i32>} : memref<1x1600xf32, #tpu.memory_space<vmem>>, vector<1x50xf32>,
    %97 = vector.extract_strided_slice %48 {offsets = [24, 0], sizes = [1, 50], strides = [1, 1]} : vector<32x50xf32> to vector<1x50xf32>
    %c0_59 = arith.constant 0 : index
    %c1200 = arith.constant 1200 : index
    %98 = vector.load %arg11[%c0_59, %c1200] : memref<1x1600xf32, #tpu.memory_space<vmem>>, vector<1x50xf32>
    tpu.vector_store %arg11[%c0_59, %c1200], %97 {strides = array<i32>} : memref<1x1600xf32, #tpu.memory_space<vmem>>, vector<1x50xf32>,
    %99 = vector.extract_strided_slice %48 {offsets = [25, 0], sizes = [1, 50], strides = [1, 1]} : vector<32x50xf32> to vector<1x50xf32>
    %c0_60 = arith.constant 0 : index
    %c1250 = arith.constant 1250 : index
    %100 = vector.load %arg11[%c0_60, %c1250] : memref<1x1600xf32, #tpu.memory_space<vmem>>, vector<1x50xf32>
    tpu.vector_store %arg11[%c0_60, %c1250], %99 {strides = array<i32>} : memref<1x1600xf32, #tpu.memory_space<vmem>>, vector<1x50xf32>,
    %101 = vector.extract_strided_slice %48 {offsets = [26, 0], sizes = [1, 50], strides = [1, 1]} : vector<32x50xf32> to vector<1x50xf32>
    %c0_61 = arith.constant 0 : index
    %c1300 = arith.constant 1300 : index
    %102 = vector.load %arg11[%c0_61, %c1300] : memref<1x1600xf32, #tpu.memory_space<vmem>>, vector<1x50xf32>
    tpu.vector_store %arg11[%c0_61, %c1300], %101 {strides = array<i32>} : memref<1x1600xf32, #tpu.memory_space<vmem>>, vector<1x50xf32>,
    %103 = vector.extract_strided_slice %48 {offsets = [27, 0], sizes = [1, 50], strides = [1, 1]} : vector<32x50xf32> to vector<1x50xf32>
    %c0_62 = arith.constant 0 : index
    %c1350 = arith.constant 1350 : index
    %104 = vector.load %arg11[%c0_62, %c1350] : memref<1x1600xf32, #tpu.memory_space<vmem>>, vector<1x50xf32>
    tpu.vector_store %arg11[%c0_62, %c1350], %103 {strides = array<i32>} : memref<1x1600xf32, #tpu.memory_space<vmem>>, vector<1x50xf32>,
    %105 = vector.extract_strided_slice %48 {offsets = [28, 0], sizes = [1, 50], strides = [1, 1]} : vector<32x50xf32> to vector<1x50xf32>
    %c0_63 = arith.constant 0 : index
    %c1400 = arith.constant 1400 : index
    %106 = vector.load %arg11[%c0_63, %c1400] : memref<1x1600xf32, #tpu.memory_space<vmem>>, vector<1x50xf32>
    tpu.vector_store %arg11[%c0_63, %c1400], %105 {strides = array<i32>} : memref<1x1600xf32, #tpu.memory_space<vmem>>, vector<1x50xf32>,
    %107 = vector.extract_strided_slice %48 {offsets = [29, 0], sizes = [1, 50], strides = [1, 1]} : vector<32x50xf32> to vector<1x50xf32>
    %c0_64 = arith.constant 0 : index
    %c1450 = arith.constant 1450 : index
    %108 = vector.load %arg11[%c0_64, %c1450] : memref<1x1600xf32, #tpu.memory_space<vmem>>, vector<1x50xf32>
    tpu.vector_store %arg11[%c0_64, %c1450], %107 {strides = array<i32>} : memref<1x1600xf32, #tpu.memory_space<vmem>>, vector<1x50xf32>,
    %109 = vector.extract_strided_slice %48 {offsets = [30, 0], sizes = [1, 50], strides = [1, 1]} : vector<32x50xf32> to vector<1x50xf32>
    %c0_65 = arith.constant 0 : index
    %c1500 = arith.constant 1500 : index
    %110 = vector.load %arg11[%c0_65, %c1500] : memref<1x1600xf32, #tpu.memory_space<vmem>>, vector<1x50xf32>
    tpu.vector_store %arg11[%c0_65, %c1500], %109 {strides = array<i32>} : memref<1x1600xf32, #tpu.memory_space<vmem>>, vector<1x50xf32>,
    %111 = vector.extract_strided_slice %48 {offsets = [31, 0], sizes = [1, 50], strides = [1, 1]} : vector<32x50xf32> to vector<1x50xf32>
    %c0_66 = arith.constant 0 : index
    %c1550 = arith.constant 1550 : index
    %112 = vector.load %arg11[%c0_66, %c1550] : memref<1x1600xf32, #tpu.memory_space<vmem>>, vector<1x50xf32>
    tpu.vector_store %arg11[%c0_66, %c1550], %111 {strides = array<i32>} : memref<1x1600xf32, #tpu.memory_space<vmem>>, vector<1x50xf32>,
    %c0_67 = arith.constant 0 : index
    %c0_68 = arith.constant 0 : index
    %113 = vector.load %arg11[%c0_67, %c0_68] : memref<1x1600xf32, #tpu.memory_space<vmem>>, vector<1x1600xf32>
    %114 = arith.truncf %113 : vector<1x1600xf32> to vector<1x1600xbf16>
    %c0_69 = arith.constant 0 : index
    %c0_70 = arith.constant 0 : index
    %115 = vector.load %arg6[%c0_69, %c0_70] : memref<1600x800xbf16, #tpu.memory_space<vmem>>, vector<1600x800xbf16>
    %cst_71 = arith.constant dense<0.000000e+00> : vector<1x800xf32>
    %116 = tpu.matmul %114, %115, %cst_71 {dimension_numbers = #tpu.dot_dimension_numbers<[1], [0], [0], [1], [0, 0, 1, 1], [], []>} : vector<1x1600xbf16>, vector<1600x800xbf16>, vector<1x800xf32> -> vector<1x800xf32>
    %c0_72 = arith.constant 0 : index
    %c0_73 = arith.constant 0 : index
    %117 = vector.load %arg7[%c0_72, %c0_73] : memref<1x800xf32, #tpu.memory_space<vmem>>, vector<1x800xf32>
    %118 = arith.addf %116, %117 : vector<1x800xf32>
    %cst_74 = arith.constant 0.000000e+00 : f32
    %119 = vector.broadcast %cst_74 : f32 to vector<1x800xf32>
    %120 = arith.maximumf %118, %119 : vector<1x800xf32>
    %121 = arith.truncf %120 : vector<1x800xf32> to vector<1x800xbf16>
    %c0_75 = arith.constant 0 : index
    %c0_76 = arith.constant 0 : index
    %122 = vector.load %arg8[%c0_75, %c0_76] : memref<800x1xbf16, #tpu.memory_space<vmem>>, vector<800x1xbf16>
    %cst_77 = arith.constant dense<0.000000e+00> : vector<1x1xf32>
    %123 = tpu.matmul %121, %122, %cst_77 {dimension_numbers = #tpu.dot_dimension_numbers<[1], [0], [0], [1], [0, 0, 1, 1], [], []>} : vector<1x800xbf16>, vector<800x1xbf16>, vector<1x1xf32> -> vector<1x1xf32>
    %c0_78 = arith.constant 0 : index
    %c0_79 = arith.constant 0 : index
    %124 = vector.load %arg9[%c0_78, %c0_79] : memref<1x1xf32, #tpu.memory_space<vmem>>, vector<1x1xf32>
    %125 = arith.addf %123, %124 : vector<1x1xf32>
    %cst_80 = arith.constant 0.000000e+00 : f32
    %126 = vector.broadcast %cst_80 : f32 to vector<1x1xf32>
    %127 = arith.subf %126, %125 : vector<1x1xf32>
    %128 = math.exp %127 : vector<1x1xf32>
    %cst_81 = arith.constant 1.000000e+00 : f32
    %129 = vector.broadcast %cst_81 : f32 to vector<1x1xf32>
    %130 = arith.addf %129, %128 : vector<1x1xf32>
    %cst_82 = arith.constant 1.000000e+00 : f32
    %131 = vector.broadcast %cst_82 : f32 to vector<1x1xf32>
    %132 = arith.divf %131, %130 : vector<1x1xf32>
    %c0_83 = arith.constant 0 : index
    %c0_84 = arith.constant 0 : index
    %c0_85 = arith.constant 0 : index
    %133 = vector.load %arg10[%c0_83, %c0_84, %c0_85] : memref<1x1x1xf32, #tpu.memory_space<vmem>>, vector<1x1x1xf32>
    %134 = vector.shape_cast %133 : vector<1x1x1xf32> to vector<1x1xf32>
    %135 = vector.shape_cast %132 : vector<1x1xf32> to vector<1x1x1xf32>
    tpu.vector_store %arg10[%c0_83, %c0_84, %c0_85], %135 {strides = array<i32>} : memref<1x1x1xf32, #tpu.memory_space<vmem>>, vector<1x1x1xf32>,
    return
  }
  func.func @transform_0(%arg0: i32) -> (i32, i32, i32, i32) {
    %c0_i32 = arith.constant 0 : i32
    %c0_i32_0 = arith.constant 0 : i32
    %c0_i32_1 = arith.constant 0 : i32
    %c0_i32_2 = arith.constant 0 : i32
    return %arg0, %c0_i32, %c0_i32_0, %c0_i32_1 : i32, i32, i32, i32
  }
  func.func @transform_1(%arg0: i32) -> (i32, i32) {
    %c0_i32 = arith.constant 0 : i32
    %c0_i32_0 = arith.constant 0 : i32
    %c0_i32_1 = arith.constant 0 : i32
    return %c0_i32, %c0_i32_0 : i32, i32
  }
  func.func @transform_2(%arg0: i32) -> (i32, i32) {
    %c0_i32 = arith.constant 0 : i32
    %c0_i32_0 = arith.constant 0 : i32
    %c0_i32_1 = arith.constant 0 : i32
    return %c0_i32, %c0_i32_0 : i32, i32
  }
  func.func @transform_3(%arg0: i32) -> (i32, i32, i32) {
    %c0_i32 = arith.constant 0 : i32
    %c0_i32_0 = arith.constant 0 : i32
    %c0_i32_1 = arith.constant 0 : i32
    %c0_i32_2 = arith.constant 0 : i32
    return %c0_i32, %c0_i32_0, %c0_i32_1 : i32, i32, i32
  }
  func.func @transform_4(%arg0: i32) -> (i32, i32) {
    %c0_i32 = arith.constant 0 : i32
    %c0_i32_0 = arith.constant 0 : i32
    %c0_i32_1 = arith.constant 0 : i32
    return %c0_i32, %c0_i32_0 : i32, i32
  }
  func.func @transform_5(%arg0: i32) -> (i32, i32) {
    %c0_i32 = arith.constant 0 : i32
    %c0_i32_0 = arith.constant 0 : i32
    %c0_i32_1 = arith.constant 0 : i32
    return %c0_i32, %c0_i32_0 : i32, i32
  }
  func.func @transform_6(%arg0: i32) -> (i32, i32) {
    %c0_i32 = arith.constant 0 : i32
    %c0_i32_0 = arith.constant 0 : i32
    %c0_i32_1 = arith.constant 0 : i32
    return %c0_i32, %c0_i32_0 : i32, i32
  }
  func.func @transform_7(%arg0: i32) -> (i32, i32) {
    %c0_i32 = arith.constant 0 : i32
    %c0_i32_0 = arith.constant 0 : i32
    %c0_i32_1 = arith.constant 0 : i32
    return %c0_i32, %c0_i32_0 : i32, i32
  }
  func.func @transform_8(%arg0: i32) -> (i32, i32) {
    %c0_i32 = arith.constant 0 : i32
    %c0_i32_0 = arith.constant 0 : i32
    %c0_i32_1 = arith.constant 0 : i32
    return %c0_i32, %c0_i32_0 : i32, i32
  }
  func.func @transform_9(%arg0: i32) -> (i32, i32, i32) {
    %c0_i32 = arith.constant 0 : i32
    %c0_i32_0 = arith.constant 0 : i32
    %c0_i32_1 = arith.constant 0 : i32
    return %arg0, %c0_i32, %c0_i32_0 : i32, i32, i32
  }
}

</mosaic_0001>

<llo_original>
// kernel: cnn_forward.1
$region0: #{cnn_forward.1}
  #allocation0 [shape = 'u32[]', space=smem, size = 0x4, offset = 0x4, fixed_abs, tag = 'smem constant byte address 0x4 - core index']
  #allocation1 [shape = 'u32[144,128]{1,0:T(1,128)}', space=vmem, size = 0x12000, scoped, tag = 'internal scratch']
  #allocation2 [shape = 'f32[1,1600]{1,0:T(1,128)}', space=vmem, size = 0x1a00, scoped, tag = 'scratch operand']
  #allocation3 [shape = 'f32[1,1]{1,0:T(1,128)S(1)}', space=vmem, size = 0x200, scoped, tag = 'scoped memory for cnn_forward.1']
  %s0 = inlined_call_operand.vmem [shape: bf16[2,2,30,50], index: 0, kind: input, shape index: {}]
  %s1 = inlined_call_operand.vmem [shape: bf16[64,30], index: 1, kind: input, shape index: {}]
  %s2 = inlined_call_operand.vmem [shape: f32[64,1], index: 2, kind: input, shape index: {}]
  %s3 = inlined_call_operand.vmem [shape: bf16[5,32,64], index: 3, kind: input, shape index: {}]
  %s4 = inlined_call_operand.vmem [shape: f32[32,1], index: 4, kind: input, shape index: {}]
  %s5 = inlined_call_operand.vmem [shape: bf16[1600,800], index: 5, kind: input, shape index: {}]
  %s6 = inlined_call_operand.vmem [shape: f32[1,800], index: 6, kind: input, shape index: {}]
  %s7 = inlined_call_operand.vmem [shape: bf16[800,1], index: 7, kind: input, shape index: {}]
  %s8 = inlined_call_operand.<no memory space> [shape: f32[1,1], index: 8, kind: input, shape index: {}]
  %s9 = inlined_call_operand.vmem [shape: f32[2,1,1], index: 9, kind: output, shape index: {}]
  %s10 = sld [smem:[#allocation0]]
  $region69: #{cnn_forward.1} parent=0
    _
  %s12 = ssub.s32 1, %s10
  %s13 = scalar_select 0, %s12, %s10
  %v14 = vstv %s8
  %15 = vst [vmem:[#allocation3] sm:$0x1] %v14
  loop: start=0, step=1, limit=4
  $region2: #{cnn_forward.1} parent=0 // loop_pre_header
    _
  $region3: #{cnn_forward.1} parent=0 // loop_header
    %s17 = sphi 0, %s21
    %p18 = scmp.ge.s32.totalorder %s17, 4
    %s27 = sphi 0, %s29
    %s30 = sphi 0, %s27
    %s31 = sphi 0, %s30
    %s47 = sphi 0, %s31
    %s51 = sphi 0, %s51
    %s53 = sphi 0, %s51
    %s54 = sphi 0, %s53
    %s68 = sphi 0, %s54
    %s72 = sphi 0, %s72
    %s74 = sphi 0, %s72
    %s75 = sphi 0, %s74
    %s89 = sphi 0, %s75
    %s93 = sphi 0, %s93
    %s95 = sphi 0, %s93
    %s96 = sphi 0, %s95
    %s110 = sphi 0, %s96
    %s114 = sphi 0, %s114
    %s116 = sphi 0, %s114
    %s117 = sphi 0, %s116
    %s131 = sphi 0, %s117
    %s135 = sphi 0, %s135
    %s137 = sphi 0, %s135
    %s138 = sphi 0, %s137
    %s152 = sphi 0, %s138
    %s156 = sphi 0, %s156
    %s158 = sphi 0, %s156
    %s159 = sphi 0, %s158
    %s173 = sphi 0, %s159
    %s177 = sphi 0, %s177
    %s179 = sphi 0, %s177
    %s180 = sphi 0, %s179
    %s194 = sphi 0, %s180
    %s198 = sphi 0, %s198
    %s200 = sphi 0, %s198
    %s201 = sphi 0, %s200
    %s215 = sphi 0, %s201
    %s221 = sphi 0, %s223
    %s224 = sphi 0, %s221
    %s225 = sphi 0, %s224
    %s241 = sphi 0, %s225
  $region4: #{cnn_forward.1} parent=0 // loop_header_branch
    %20 = sbr.rel (%p18) target = $region8
  $region5: #{cnn_forward.1} parent=0 // loop_body
    %s22 = ssub.s32 %s17, 1
    %s23 = ssub.s32 %s17, 2
    %s24 = sadd.s32 %s17, 1
    %s25 = ssub.s32 %s17, %s24
    %p26 = scmp.eq.s32.totalorder %s25, 0
    %s28 = sadd.s32 %s27, 1
    %s29 = scalar_select %p26, %s27, %s28
    %p32 = pneg %p26
    %p33 = scmp.eq.s32.totalorder %s17, 1
    %p34 = por %p32, %p33
    %p35 = scmp.ne.s32.totalorder %s27, %s30
    %p36 = scmp.eq.s32.totalorder %s17, 0
    %p37 = por %p35, %p36
    %p38 = scmp.ne.s32.totalorder %s27, %s30
    %p39 = scmp.eq.s32.totalorder %s22, 1
    %p40 = por %p38, %p39
    %p41 = scmp.ne.s32.totalorder %s30, %s31
    %p42 = scmp.eq.s32.totalorder %s22, 0
    %p43 = por %p41, %p42
    %p44 = scmp.ne.s32.totalorder %s30, %s31
    %p45 = scmp.eq.s32.totalorder %s23, 1
    %p46 = por %p44, %p45
    %p48 = scmp.ne.s32.totalorder %s31, %s47
    %p49 = scmp.eq.s32.totalorder %s23, 0
    %p50 = por %p48, %p49
    %s52 = sadd.s32 %s51, 1
    %p55 = scmp.eq.s32.totalorder %s17, 1
    %p56 = scmp.ne.s32.totalorder %s51, %s53
    %p57 = scmp.eq.s32.totalorder %s17, 0
    %p58 = por %p56, %p57
    %p59 = scmp.ne.s32.totalorder %s51, %s53
    %p60 = scmp.eq.s32.totalorder %s22, 1
    %p61 = por %p59, %p60
    %p62 = scmp.ne.s32.totalorder %s53, %s54
    %p63 = scmp.eq.s32.totalorder %s22, 0
    %p64 = por %p62, %p63
    %p65 = scmp.ne.s32.totalorder %s53, %s54
    %p66 = scmp.eq.s32.totalorder %s23, 1
    %p67 = por %p65, %p66
    %p69 = scmp.ne.s32.totalorder %s54, %s68
    %p70 = scmp.eq.s32.totalorder %s23, 0
    %p71 = por %p69, %p70
    %s73 = sadd.s32 %s72, 1
    %p76 = scmp.eq.s32.totalorder %s17, 1
    %p77 = scmp.ne.s32.totalorder %s72, %s74
    %p78 = scmp.eq.s32.totalorder %s17, 0
    %p79 = por %p77, %p78
    %p80 = scmp.ne.s32.totalorder %s72, %s74
    %p81 = scmp.eq.s32.totalorder %s22, 1
    %p82 = por %p80, %p81
    %p83 = scmp.ne.s32.totalorder %s74, %s75
    %p84 = scmp.eq.s32.totalorder %s22, 0
    %p85 = por %p83, %p84
    %p86 = scmp.ne.s32.totalorder %s74, %s75
    %p87 = scmp.eq.s32.totalorder %s23, 1
    %p88 = por %p86, %p87
    %p90 = scmp.ne.s32.totalorder %s75, %s89
    %p91 = scmp.eq.s32.totalorder %s23, 0
    %p92 = por %p90, %p91
    %s94 = sadd.s32 %s93, 1
    %p97 = scmp.eq.s32.totalorder %s17, 1
    %p98 = scmp.ne.s32.totalorder %s93, %s95
    %p99 = scmp.eq.s32.totalorder %s17, 0
    %p100 = por %p98, %p99
    %p101 = scmp.ne.s32.totalorder %s93, %s95
    %p102 = scmp.eq.s32.totalorder %s22, 1
    %p103 = por %p101, %p102
    %p104 = scmp.ne.s32.totalorder %s95, %s96
    %p105 = scmp.eq.s32.totalorder %s22, 0
    %p106 = por %p104, %p105
    %p107 = scmp.ne.s32.totalorder %s95, %s96
    %p108 = scmp.eq.s32.totalorder %s23, 1
    %p109 = por %p107, %p108
    %p111 = scmp.ne.s32.totalorder %s96, %s110
    %p112 = scmp.eq.s32.totalorder %s23, 0
    %p113 = por %p111, %p112
    %s115 = sadd.s32 %s114, 1
    %p118 = scmp.eq.s32.totalorder %s17, 1
    %p119 = scmp.ne.s32.totalorder %s114, %s116
    %p120 = scmp.eq.s32.totalorder %s17, 0
    %p121 = por %p119, %p120
    %p122 = scmp.ne.s32.totalorder %s114, %s116
    %p123 = scmp.eq.s32.totalorder %s22, 1
    %p124 = por %p122, %p123
    %p125 = scmp.ne.s32.totalorder %s116, %s117
    %p126 = scmp.eq.s32.totalorder %s22, 0
    %p127 = por %p125, %p126
    %p128 = scmp.ne.s32.totalorder %s116, %s117
    %p129 = scmp.eq.s32.totalorder %s23, 1
    %p130 = por %p128, %p129
    %p132 = scmp.ne.s32.totalorder %s117, %s131
    %p133 = scmp.eq.s32.totalorder %s23, 0
    %p134 = por %p132, %p133
    %s136 = sadd.s32 %s135, 1
    %p139 = scmp.eq.s32.totalorder %s17, 1
    %p140 = scmp.ne.s32.totalorder %s135, %s137
    %p141 = scmp.eq.s32.totalorder %s17, 0
    %p142 = por %p140, %p141
    %p143 = scmp.ne.s32.totalorder %s135, %s137
    %p144 = scmp.eq.s32.totalorder %s22, 1
    %p145 = por %p143, %p144
    %p146 = scmp.ne.s32.totalorder %s137, %s138
    %p147 = scmp.eq.s32.totalorder %s22, 0
    %p148 = por %p146, %p147
    %p149 = scmp.ne.s32.totalorder %s137, %s138
    %p150 = scmp.eq.s32.totalorder %s23, 1
    %p151 = por %p149, %p150
    %p153 = scmp.ne.s32.totalorder %s138, %s152
    %p154 = scmp.eq.s32.totalorder %s23, 0
    %p155 = por %p153, %p154
    %s157 = sadd.s32 %s156, 1
    %p160 = scmp.eq.s32.totalorder %s17, 1
    %p161 = scmp.ne.s32.totalorder %s156, %s158
    %p162 = scmp.eq.s32.totalorder %s17, 0
    %p163 = por %p161, %p162
    %p164 = scmp.ne.s32.totalorder %s156, %s158
    %p165 = scmp.eq.s32.totalorder %s22, 1
    %p166 = por %p164, %p165
    %p167 = scmp.ne.s32.totalorder %s158, %s159
    %p168 = scmp.eq.s32.totalorder %s22, 0
    %p169 = por %p167, %p168
    %p170 = scmp.ne.s32.totalorder %s158, %s159
    %p171 = scmp.eq.s32.totalorder %s23, 1
    %p172 = por %p170, %p171
    %p174 = scmp.ne.s32.totalorder %s159, %s173
    %p175 = scmp.eq.s32.totalorder %s23, 0
    %p176 = por %p174, %p175
    %s178 = sadd.s32 %s177, 1
    %p181 = scmp.eq.s32.totalorder %s17, 1
    %p182 = scmp.ne.s32.totalorder %s177, %s179
    %p183 = scmp.eq.s32.totalorder %s17, 0
    %p184 = por %p182, %p183
    %p185 = scmp.ne.s32.totalorder %s177, %s179
    %p186 = scmp.eq.s32.totalorder %s22, 1
    %p187 = por %p185, %p186
    %p188 = scmp.ne.s32.totalorder %s179, %s180
    %p189 = scmp.eq.s32.totalorder %s22, 0
    %p190 = por %p188, %p189
    %p191 = scmp.ne.s32.totalorder %s179, %s180
    %p192 = scmp.eq.s32.totalorder %s23, 1
    %p193 = por %p191, %p192
    %p195 = scmp.ne.s32.totalorder %s180, %s194
    %p196 = scmp.eq.s32.totalorder %s23, 0
    %p197 = por %p195, %p196
    %s199 = sadd.s32 %s198, 1
    %p202 = scmp.eq.s32.totalorder %s17, 1
    %p203 = scmp.ne.s32.totalorder %s198, %s200
    %p204 = scmp.eq.s32.totalorder %s17, 0
    %p205 = por %p203, %p204
    %p206 = scmp.ne.s32.totalorder %s198, %s200
    %p207 = scmp.eq.s32.totalorder %s22, 1
    %p208 = por %p206, %p207
    %p209 = scmp.ne.s32.totalorder %s200, %s201
    %p210 = scmp.eq.s32.totalorder %s22, 0
    %p211 = por %p209, %p210
    %p212 = scmp.ne.s32.totalorder %s200, %s201
    %p213 = scmp.eq.s32.totalorder %s23, 1
    %p214 = por %p212, %p213
    %p216 = scmp.ne.s32.totalorder %s201, %s215
    %p217 = scmp.eq.s32.totalorder %s23, 0
    %p218 = por %p216, %p217
    %s219 = ssub.s32 %s17, %s24
    %p220 = scmp.eq.s32.totalorder %s219, 0
    %s222 = sadd.s32 %s221, 1
    %s223 = scalar_select %p220, %s221, %s222
    %p226 = pneg %p220
    %p227 = scmp.eq.s32.totalorder %s17, 1
    %p228 = por %p226, %p227
    %p229 = scmp.ne.s32.totalorder %s221, %s224
    %p230 = scmp.eq.s32.totalorder %s17, 0
    %p231 = por %p229, %p230
    %p232 = scmp.ne.s32.totalorder %s221, %s224
    %p233 = scmp.eq.s32.totalorder %s22, 1
    %p234 = por %p232, %p233
    %p235 = scmp.ne.s32.totalorder %s224, %s225
    %p236 = scmp.eq.s32.totalorder %s22, 0
    %p237 = por %p235, %p236
    %p238 = scmp.ne.s32.totalorder %s224, %s225
    %p239 = scmp.eq.s32.totalorder %s23, 1
    %p240 = por %p238, %p239
    %p242 = scmp.ne.s32.totalorder %s225, %s241
    %p243 = scmp.eq.s32.totalorder %s23, 0
    %p244 = por %p242, %p243
    %p245 = scmp.le.s32.totalorder 1, %s17
    %p246 = scmp.lt.s32.totalorder %s17, 3
    %p247 = pnand %p245, %p246
    %p248 = pneg %p247
    // Predicated region
    $region9: #{cnn_forward.1} parent=5 // pred_check
      _
    $region10: #{cnn_forward.1} parent=5 // pred_check_branch
      %250 = sbr.rel (%p247) target = $region12
    $region11: #{cnn_forward.1} parent=5 // pred_region
      %s251 = ssub.s32 %s17, 1
      // Predicated region
      $region13: #{cnn_forward.1} parent=11 // pred_check
        %p252 = pneg %p64
      $region14: #{cnn_forward.1} parent=11 // pred_check_branch
        %254 = sbr.rel (%p252) target = $region16
      $region15: #{cnn_forward.1} parent=11 // pred_region
        _
      $region16: #{cnn_forward.1} parent=11 // pred_fallthru
        _
      // Predicated region
      $region17: #{cnn_forward.1} parent=11 // pred_check
        %p255 = pneg %p85
      $region18: #{cnn_forward.1} parent=11 // pred_check_branch
        %257 = sbr.rel (%p255) target = $region20
      $region19: #{cnn_forward.1} parent=11 // pred_region
        _
      $region20: #{cnn_forward.1} parent=11 // pred_fallthru
        _
      // Predicated region
      $region21: #{cnn_forward.1} parent=11 // pred_check
        %p258 = pneg %p106
      $region22: #{cnn_forward.1} parent=11 // pred_check_branch
        %260 = sbr.rel (%p258) target = $region24
      $region23: #{cnn_forward.1} parent=11 // pred_region
        _
      $region24: #{cnn_forward.1} parent=11 // pred_fallthru
        _
      // Predicated region
      $region25: #{cnn_forward.1} parent=11 // pred_check
        %p261 = pneg %p127
      $region26: #{cnn_forward.1} parent=11 // pred_check_branch
        %263 = sbr.rel (%p261) target = $region28
      $region27: #{cnn_forward.1} parent=11 // pred_region
        _
      $region28: #{cnn_forward.1} parent=11 // pred_fallthru
        _
      // Predicated region
      $region29: #{cnn_forward.1} parent=11 // pred_check
        %p264 = pneg %p148
      $region30: #{cnn_forward.1} parent=11 // pred_check_branch
        %266 = sbr.rel (%p264) target = $region32
      $region31: #{cnn_forward.1} parent=11 // pred_region
        _
      $region32: #{cnn_forward.1} parent=11 // pred_fallthru
        _
      // Predicated region
      $region33: #{cnn_forward.1} parent=11 // pred_check
        %p267 = pneg %p169
      $region34: #{cnn_forward.1} parent=11 // pred_check_branch
        %269 = sbr.rel (%p267) target = $region36
      $region35: #{cnn_forward.1} parent=11 // pred_region
        _
      $region36: #{cnn_forward.1} parent=11 // pred_fallthru
        _
      // Predicated region
      $region37: #{cnn_forward.1} parent=11 // pred_check
        %p270 = pneg %p190
      $region38: #{cnn_forward.1} parent=11 // pred_check_branch
        %272 = sbr.rel (%p270) target = $region40
      $region39: #{cnn_forward.1} parent=11 // pred_region
        _
      $region40: #{cnn_forward.1} parent=11 // pred_fallthru
        _
      // Predicated region
      $region41: #{cnn_forward.1} parent=11 // pred_check
        %p273 = pneg %p211
      $region42: #{cnn_forward.1} parent=11 // pred_check_branch
        %275 = sbr.rel (%p273) target = $region44
      $region43: #{cnn_forward.1} parent=11 // pred_region
        _
      $region44: #{cnn_forward.1} parent=11 // pred_fallthru
        _
    $region12: #{cnn_forward.1} parent=5 // pred_fallthru
      _
    %p276 = scmp.lt.s32.totalorder %s17, 2
    // Predicated region
    $region45: #{cnn_forward.1} parent=5 // pred_check
      %p277 = pneg %p276
    $region46: #{cnn_forward.1} parent=5 // pred_check_branch
      %279 = sbr.rel (%p277) target = $region48
    $region47: #{cnn_forward.1} parent=5 // pred_region
      // Predicated region
      $region49: #{cnn_forward.1} parent=47 // pred_check
        %p280 = pneg %p37
      $region50: #{cnn_forward.1} parent=47 // pred_check_branch
        %282 = sbr.rel (%p280) target = $region52
      $region51: #{cnn_forward.1} parent=47 // pred_region
        %p283 = scmp.lt.s32.totalorder %s17, 1
        %s284 = scalar_select %p283, %s17, 1
        %s285 = smul.addr %s284, 8
        %s286 = smul.addr %s285, 4
        %s287 = scalar_lea.vmem %s0, %s286
      $region52: #{cnn_forward.1} parent=47 // pred_fallthru
        _
    $region48: #{cnn_forward.1} parent=5 // pred_fallthru
      _
    %p288 = scmp.le.s32.totalorder 1, %s17
    %p289 = scmp.lt.s32.totalorder %s17, 3
    %p290 = pnand %p288, %p289
    %p291 = pneg %p290
    // Predicated region
    $region53: #{cnn_forward.1} parent=5 // pred_check
      _
    $region54: #{cnn_forward.1} parent=5 // pred_check_branch
      %293 = sbr.rel (%p290) target = $region56
    $region55: #{cnn_forward.1} parent=5 // pred_region
      %s294 = ssub.s32 %s17, 1
      %p295 = scmp.lt.s32.totalorder %s22, 1
      %s296 = scalar_select %p295, %s22, 1
      %s297 = smul.addr %s296, 8
      %s298 = smul.addr %s297, 4
      %s299 = scalar_lea.vmem %s0, %s298
      %p300 = pneg %p43
      %p301 = pneg %p40
      %p302 = pneg %p64
      %p303 = pneg %p61
      %p304 = pneg %p85
      %p305 = pneg %p82
      %p306 = pneg %p106
      %p307 = pneg %p103
      %p308 = pneg %p127
      %p309 = pneg %p124
      %p310 = pneg %p148
      %p311 = pneg %p145
      %p312 = pneg %p169
      %p313 = pneg %p166
      %p314 = pneg %p190
      %p315 = pneg %p187
      %p316 = pneg %p211
      %p317 = pneg %p208
      %p318 = pneg %p237
      %p319 = pneg %p234
      %p320 = scmp.lt.s32.totalorder %s22, 1
      %s321 = scalar_select %p320, %s22, 1
      %s322 = scalar_lea.vmem %s9, %s321
      %p323 = scmp.lt.s32.totalorder %s22, 1
      %s324 = scalar_select %p323, %s22, 1
      %s325 = smul.addr %s324, 8
      %s326 = smul.addr %s325, 4
      %s327 = scalar_lea.vmem %s0, %s326
      %p328 = scmp.lt.s32.totalorder %s22, 1
      %s329 = scalar_select %p328, %s22, 1
      %s330 = scalar_lea.vmem %s9, %s329
      %v332 = vld [vmem:[%s327] sm:$0xf]
      %v333 = vld [vmem:[%s327 + $0x4] sm:$0xf]
      %v334 = vld [vmem:[%s327 + $0x8] sm:$0xf]
      %v335 = vld [vmem:[%s327 + $0xc] sm:$0x7]
      %s336 = scalar_lea.vmem %s327, 16
      %v337 = vld [vmem:[%s336] sm:$0xf]
      %v338 = vld [vmem:[%s336 + $0x4] sm:$0xf]
      %v339 = vld [vmem:[%s336 + $0x8] sm:$0xf]
      %v340 = vld [vmem:[%s336 + $0xc] sm:$0x7]
      %v341 = vld [vmem:[%s1] sm:$0xf]
      %v342 = vld [vmem:[%s1 + $0x4] sm:$0xf]
      %v343 = vld [vmem:[%s1 + $0x8] sm:$0xf]
      %v344 = vld [vmem:[%s1 + $0xc] sm:$0xf]
      %v345 = vld [vmem:[%s1 + $0x10] sm:$0xf]
      %v346 = vld [vmem:[%s1 + $0x14] sm:$0xf]
      %v347 = vld [vmem:[%s1 + $0x18] sm:$0xf]
      %v348 = vld [vmem:[%s1 + $0x1c] sm:$0xf]
      %v349 = vld [vmem:[%s2] sm:$0xff]
      %v350 = vld [vmem:[%s2 + $0x8] sm:$0xff]
      %v351 = vld [vmem:[%s2 + $0x10] sm:$0xff]
      %v352 = vld [vmem:[%s2 + $0x18] sm:$0xff]
      %v353 = vld [vmem:[%s2 + $0x20] sm:$0xff]
      %v354 = vld [vmem:[%s2 + $0x28] sm:$0xff]
      %v355 = vld [vmem:[%s2 + $0x30] sm:$0xff]
      %v356 = vld [vmem:[%s2 + $0x38] sm:$0xff]
      %358 = vset.pattern.permute.xlu0 0
      %359 = vperm.xlu0 %358, %v349
      %v360 = vpop.permute.xlu0 %359
      %363 = vset.pattern.permute.xlu0 0
      %364 = vperm.xlu0 %363, %v350
      %v365 = vpop.permute.xlu0 %364
      %368 = vset.pattern.permute.xlu0 0
      %369 = vperm.xlu0 %368, %v351
      %v370 = vpop.permute.xlu0 %369
      %373 = vset.pattern.permute.xlu0 0
      %374 = vperm.xlu0 %373, %v352
      %v375 = vpop.permute.xlu0 %374
      %378 = vset.pattern.permute.xlu0 0
      %379 = vperm.xlu0 %378, %v353
      %v380 = vpop.permute.xlu0 %379
      %383 = vset.pattern.permute.xlu0 0
      %384 = vperm.xlu0 %383, %v354
      %v385 = vpop.permute.xlu0 %384
      %388 = vset.pattern.permute.xlu0 0
      %389 = vperm.xlu0 %388, %v355
      %v390 = vpop.permute.xlu0 %389
      %393 = vset.pattern.permute.xlu0 0
      %394 = vperm.xlu0 %393, %v356
      %v395 = vpop.permute.xlu0 %394
      %v405 = vunpack.c.l.b16 %v341
      %v406 = vunpack.c.l.b16 %v342
      %v407 = vunpack.c.l.b16 %v343
      %v408 = vunpack.c.l.b16 %v344
      %v409 = vunpack.c.l.b16 %v345
      %v410 = vunpack.c.l.b16 %v346
      %v411 = vunpack.c.l.b16 %v347
      %v412 = vunpack.c.l.b16 %v348
      %v413 = vpack.c.b16 %v406, %v405
      %v414 = vpack.c.b16 %v408, %v407
      %v415 = vpack.c.b16 %v410, %v409
      %v416 = vpack.c.b16 %v412, %v411
      %v421 = vunpack.c.l.b16 %v332
      %v422 = vunpack.c.l.b16 %v333
      %v423 = vunpack.c.l.b16 %v334
      %v424 = vunpack.c.l.b16 %v335
      %v425 = vpack.c.b16 %v422, %v421
      %v426 = vpack.c.b16 %v424, %v423
      %vm428 = vcmask 244736
      %v430 = vsel %vm428, %v413, 0
      %v433 = vsel %vm428, %v414, 0
      %v436 = vsel %vm428, %v415, 0
      %v439 = vsel %vm428, %v416, 0
      %vm441 = vcmask 1046528
      %v443 = vsel %vm441, %v426, 0
      %445 = vmatprep.subr.bf16.mxu0 0
      %446 = vmatpush1.bf16.msra.mxu0 %v425
      %447 = vmatprep.subr.bf16.mxu0 0
      %448 = vmatpush1.bf16.msra.mxu0 %v443
      %449 = vmatprep.subr.bf16.mxu0 0
      %450 = vmatpush1.bf16.msra.mxu0 0
      %451 = vmatprep.subr.bf16.mxu0 0
      %452 = vmatpush1.bf16.msra.mxu0 0
      %453 = vmatprep.subr.bf16.mxu0 0
      %454 = vmatpush1.bf16.msra.mxu0 0
      %455 = vmatprep.subr.bf16.mxu0 0
      %456 = vmatpush1.bf16.msra.mxu0 0
      %457 = vmatprep.subr.bf16.mxu0 0
      %458 = vmatpush1.bf16.msra.mxu0 0
      %459 = vmatprep.subr.bf16.mxu0 0
      %460 = vmatpush1.bf16.msra.mxu0 0
      %461 = vmatprep.subr.bf16.mxu0 0
      %462 = vmatpush1.bf16.msra.mxu0 0
      %463 = vmatprep.subr.bf16.mxu0 0
      %464 = vmatpush1.bf16.msra.mxu0 0
      %465 = vmatprep.subr.bf16.mxu0 0
      %466 = vmatpush1.bf16.msra.mxu0 0
      %467 = vmatprep.subr.bf16.mxu0 0
      %468 = vmatpush1.bf16.msra.mxu0 0
      %469 = vmatprep.subr.bf16.mxu0 0
      %470 = vmatpush1.bf16.msra.mxu0 0
      %471 = vmatprep.subr.bf16.mxu0 0
      %472 = vmatpush1.bf16.msra.mxu0 0
      %473 = vmatprep.subr.bf16.mxu0 0
      %474 = vmatpush1.bf16.msra.mxu0 0
      %475 = vmatprep.subr.bf16.mxu0 0
      %476 = vmatpush1.bf16.msra.mxu0 0
      %477 = vmatprep.mubr.bf16.mxu0 0
      %478 = vmatmul.mubr.bf16.gmra.mrb[0].mxu0 %v430
      %v479 = vpop.f32.mrb[0].mxu0
      %v480 = vadd.f32 %v360, %v479
      %v481 = vpop.f32.mrb[0].mxu0
      %v482 = vpop.f32.mrb[0].mxu0
      %v483 = vadd.f32 %v365, %v482
      %v484 = vpop.f32.mrb[0].mxu0
      %485 = vmatprep.mubr.bf16.mxu0 0
      %486 = vmatmul.mubr.bf16.gmra.mrb[0].mxu0 %v433
      %v487 = vpop.f32.mrb[0].mxu0
      %v488 = vadd.f32 %v370, %v487
      %v489 = vpop.f32.mrb[0].mxu0
      %v490 = vpop.f32.mrb[0].mxu0
      %v491 = vadd.f32 %v375, %v490
      %v492 = vpop.f32.mrb[0].mxu0
      %493 = vmatprep.mubr.bf16.mxu0 0
      %494 = vmatmul.mubr.bf16.gmra.mrb[0].mxu0 %v436
      %v495 = vpop.f32.mrb[0].mxu0
      %v496 = vadd.f32 %v380, %v495
      %v497 = vpop.f32.mrb[0].mxu0
      %v498 = vpop.f32.mrb[0].mxu0
      %v499 = vadd.f32 %v385, %v498
      %v500 = vpop.f32.mrb[0].mxu0
      %501 = vmatprep.mubr.bf16.mxu0 0
      %502 = vmatmul.mubr.bf16.gmra.mrb[0].mxu0 %v439
      %v503 = vpop.f32.mrb[0].mxu0
      %v504 = vadd.f32 %v390, %v503
      %v505 = vpop.f32.mrb[0].mxu0
      %v506 = vpop.f32.mrb[0].mxu0
      %v507 = vadd.f32 %v395, %v506
      %v508 = vpop.f32.mrb[0].mxu0
      %509 = vdwg.mxu0
      %v514 = vunpack.c.l.b16 %v337
      %v515 = vunpack.c.l.b16 %v338
      %v516 = vunpack.c.l.b16 %v339
      %v517 = vunpack.c.l.b16 %v340
      %v518 = vpack.c.b16 %v515, %v514
      %v519 = vpack.c.b16 %v517, %v516
      %v522 = vsel %vm441, %v519, 0
      %524 = vmatprep.subr.bf16.mxu0 0
      %525 = vmatpush1.bf16.msra.mxu0 %v518
      %526 = vmatprep.subr.bf16.mxu0 0
      %527 = vmatpush1.bf16.msra.mxu0 %v522
      %528 = vmatprep.subr.bf16.mxu0 0
      %529 = vmatpush1.bf16.msra.mxu0 0
      %530 = vmatprep.subr.bf16.mxu0 0
      %531 = vmatpush1.bf16.msra.mxu0 0
      %532 = vmatprep.subr.bf16.mxu0 0
      %533 = vmatpush1.bf16.msra.mxu0 0
      %534 = vmatprep.subr.bf16.mxu0 0
      %535 = vmatpush1.bf16.msra.mxu0 0
      %536 = vmatprep.subr.bf16.mxu0 0
      %537 = vmatpush1.bf16.msra.mxu0 0
      %538 = vmatprep.subr.bf16.mxu0 0
      %539 = vmatpush1.bf16.msra.mxu0 0
      %540 = vmatprep.subr.bf16.mxu0 0
      %541 = vmatpush1.bf16.msra.mxu0 0
      %542 = vmatprep.subr.bf16.mxu0 0
      %543 = vmatpush1.bf16.msra.mxu0 0
      %544 = vmatprep.subr.bf16.mxu0 0
      %545 = vmatpush1.bf16.msra.mxu0 0
      %546 = vmatprep.subr.bf16.mxu0 0
      %547 = vmatpush1.bf16.msra.mxu0 0
      %548 = vmatprep.subr.bf16.mxu0 0
      %549 = vmatpush1.bf16.msra.mxu0 0
      %550 = vmatprep.subr.bf16.mxu0 0
      %551 = vmatpush1.bf16.msra.mxu0 0
      %552 = vmatprep.subr.bf16.mxu0 0
      %553 = vmatpush1.bf16.msra.mxu0 0
      %554 = vmatprep.subr.bf16.mxu0 0
      %555 = vmatpush1.bf16.msra.mxu0 0
      %556 = vmatprep.mubr.bf16.mxu0 0
      %557 = vmatmul.mubr.bf16.gmra.mrb[0].mxu0 %v430
      %v558 = vpop.f32.mrb[0].mxu0
      %v559 = vadd.f32 %v360, %v558
      %v560 = vpop.f32.mrb[0].mxu0
      %v561 = vpop.f32.mrb[0].mxu0
      %v562 = vadd.f32 %v365, %v561
      %v563 = vpop.f32.mrb[0].mxu0
      %564 = vmatprep.mubr.bf16.mxu0 0
      %565 = vmatmul.mubr.bf16.gmra.mrb[0].mxu0 %v433
      %v566 = vpop.f32.mrb[0].mxu0
      %v567 = vadd.f32 %v370, %v566
      %v568 = vpop.f32.mrb[0].mxu0
      %v569 = vpop.f32.mrb[0].mxu0
      %v570 = vadd.f32 %v375, %v569
      %v571 = vpop.f32.mrb[0].mxu0
      %572 = vmatprep.mubr.bf16.mxu0 0
      %573 = vmatmul.mubr.bf16.gmra.mrb[0].mxu0 %v436
      %v574 = vpop.f32.mrb[0].mxu0
      %v575 = vadd.f32 %v380, %v574
      %v576 = vpop.f32.mrb[0].mxu0
      %v577 = vpop.f32.mrb[0].mxu0
      %v578 = vadd.f32 %v385, %v577
      %v579 = vpop.f32.mrb[0].mxu0
      %580 = vmatprep.mubr.bf16.mxu0 0
      %581 = vmatmul.mubr.bf16.gmra.mrb[0].mxu0 %v439
      %v582 = vpop.f32.mrb[0].mxu0
      %v583 = vadd.f32 %v390, %v582
      %v584 = vpop.f32.mrb[0].mxu0
      %v585 = vpop.f32.mrb[0].mxu0
      %v586 = vadd.f32 %v395, %v585
      %v587 = vpop.f32.mrb[0].mxu0
      %588 = vdwg.mxu0
      %v589 = vmax.f32 %v480, %v559
      %v590 = vmax.f32 %v483, %v562
      %v591 = vmax.f32 %v488, %v567
      %v592 = vmax.f32 %v491, %v570
      %v593 = vmax.f32 %v496, %v575
      %v594 = vmax.f32 %v499, %v578
      %v595 = vmax.f32 %v504, %v583
      %v596 = vmax.f32 %v507, %v586
      %v597 = vmax.f32 %v589, 0.0
      %v598 = vmax.f32 %v590, 0.0
      %v599 = vmax.f32 %v591, 0.0
      %v600 = vmax.f32 %v592, 0.0
      %v601 = vmax.f32 %v593, 0.0
      %v602 = vmax.f32 %v594, 0.0
      %v603 = vmax.f32 %v595, 0.0
      %v604 = vmax.f32 %v596, 0.0
      %v605 = vpack.c.bf16 %v598, %v597
      %v606 = vpack.c.bf16 %v600, %v599
      %v607 = vpack.c.bf16 %v602, %v601
      %v608 = vpack.c.bf16 %v604, %v603
      %613 = vrot.lane.b32.xlu0 %v605, 2
      %v614 = vpop.permute.xlu0 %613
      %615 = vrot.lane.b32.xlu0 %v606, 2
      %v616 = vpop.permute.xlu0 %615
      %617 = vrot.lane.b32.xlu0 %v607, 2
      %v618 = vpop.permute.xlu0 %617
      %619 = vrot.lane.b32.xlu0 %v608, 2
      %v620 = vpop.permute.xlu0 %619
      %vm621 = vcmask 15360
      %v624 = vsel %vm621, 0, %v614
      %v626 = vsel %vm621, 0, %v616
      %v628 = vsel %vm621, 0, %v618
      %v630 = vsel %vm621, 0, %v620
      %vm631 = vcmask 424960
      %v632 = vsel %vm631, %v624, 0
      %v634 = vsel %vm631, %v626, 0
      %v636 = vsel %vm631, %v628, 0
      %v638 = vsel %vm631, %v630, 0
      %v640 = vld [vmem:[%s3] sm:$0xf]
      %v641 = vld [vmem:[%s3 + $0x4] sm:$0xf]
      %v642 = vld [vmem:[%s3 + $0x8] sm:$0xf]
      %v643 = vld [vmem:[%s3 + $0xc] sm:$0xf]
      %s644 = scalar_lea.vmem %s3, 16
      %v645 = vld [vmem:[%s644] sm:$0xf]
      %v646 = vld [vmem:[%s644 + $0x4] sm:$0xf]
      %v647 = vld [vmem:[%s644 + $0x8] sm:$0xf]
      %v648 = vld [vmem:[%s644 + $0xc] sm:$0xf]
      %v653 = vunpack.c.l.b16 %v645
      %v654 = vunpack.c.l.b16 %v646
      %v655 = vunpack.c.l.b16 %v647
      %v656 = vunpack.c.l.b16 %v648
      %v657 = vpack.c.b16 %v654, %v653
      %v658 = vpack.c.b16 %v656, %v655
      %663 = vrot.lane.b32.xlu0 %v632, 127
      %v664 = vpop.permute.xlu0 %663
      %665 = vrot.lane.b32.xlu0 %v634, 127
      %v666 = vpop.permute.xlu0 %665
      %667 = vrot.lane.b32.xlu0 %v636, 127
      %v668 = vpop.permute.xlu0 %667
      %669 = vrot.lane.b32.xlu0 %v638, 127
      %v670 = vpop.permute.xlu0 %669
      %vm675 = vcmask 523264
      %v677 = vsel %vm675, %v657, 0
      %v680 = vsel %vm675, %v658, 0
      %682 = vmatprep.subr.bf16.mxu0 0
      %683 = vmatpush1.bf16.msra.mxu0 %v664
      %684 = vmatprep.subr.bf16.mxu0 0
      %685 = vmatpush1.bf16.msra.mxu0 %v666
      %686 = vmatprep.subr.bf16.mxu0 0
      %687 = vmatpush1.bf16.msra.mxu0 %v668
      %688 = vmatprep.subr.bf16.mxu0 0
      %689 = vmatpush1.bf16.msra.mxu0 %v670
      %690 = vmatprep.subr.bf16.mxu0 0
      %691 = vmatpush1.bf16.msra.mxu0 0
      %692 = vmatprep.subr.bf16.mxu0 0
      %693 = vmatpush1.bf16.msra.mxu0 0
      %694 = vmatprep.subr.bf16.mxu0 0
      %695 = vmatpush1.bf16.msra.mxu0 0
      %696 = vmatprep.subr.bf16.mxu0 0
      %697 = vmatpush1.bf16.msra.mxu0 0
      %698 = vmatprep.subr.bf16.mxu0 0
      %699 = vmatpush1.bf16.msra.mxu0 0
      %700 = vmatprep.subr.bf16.mxu0 0
      %701 = vmatpush1.bf16.msra.mxu0 0
      %702 = vmatprep.subr.bf16.mxu0 0
      %703 = vmatpush1.bf16.msra.mxu0 0
      %704 = vmatprep.subr.bf16.mxu0 0
      %705 = vmatpush1.bf16.msra.mxu0 0
      %706 = vmatprep.subr.bf16.mxu0 0
      %707 = vmatpush1.bf16.msra.mxu0 0
      %708 = vmatprep.subr.bf16.mxu0 0
      %709 = vmatpush1.bf16.msra.mxu0 0
      %710 = vmatprep.subr.bf16.mxu0 0
      %711 = vmatpush1.bf16.msra.mxu0 0
      %712 = vmatprep.subr.bf16.mxu0 0
      %713 = vmatpush1.bf16.msra.mxu0 0
      %714 = vmatprep.mubr.bf16.mxu0 0
      %715 = vmatmul.mubr.bf16.gmra.mrb[0].mxu0 %v677
      %v716 = vpop.f32.mrb[0].mxu0
      %v717 = vadd.f32 0.0, %v716
      %v718 = vpop.f32.mrb[0].mxu0
      %v719 = vpop.f32.mrb[0].mxu0
      %v720 = vadd.f32 0.0, %v719
      %v721 = vpop.f32.mrb[0].mxu0
      %722 = vmatprep.mubr.bf16.mxu0 0
      %723 = vmatmul.mubr.bf16.gmra.mrb[0].mxu0 %v680
      %v724 = vpop.f32.mrb[0].mxu0
      %v725 = vadd.f32 0.0, %v724
      %v726 = vpop.f32.mrb[0].mxu0
      %v727 = vpop.f32.mrb[0].mxu0
      %v728 = vadd.f32 0.0, %v727
      %v729 = vpop.f32.mrb[0].mxu0
      %730 = vdwg.mxu0
      %v735 = vunpack.c.l.b16 %v640
      %v736 = vunpack.c.l.b16 %v641
      %v737 = vunpack.c.l.b16 %v642
      %v738 = vunpack.c.l.b16 %v643
      %v739 = vpack.c.b16 %v736, %v735
      %v740 = vpack.c.b16 %v738, %v737
      %v742 = vsel %vm675, %v739, 0
      %v745 = vsel %vm675, %v740, 0
      %747 = vmatprep.subr.bf16.mxu0 0
      %748 = vmatpush1.bf16.msra.mxu0 %v632
      %749 = vmatprep.subr.bf16.mxu0 0
      %750 = vmatpush1.bf16.msra.mxu0 %v634
      %751 = vmatprep.subr.bf16.mxu0 0
      %752 = vmatpush1.bf16.msra.mxu0 %v636
      %753 = vmatprep.subr.bf16.mxu0 0
      %754 = vmatpush1.bf16.msra.mxu0 %v638
      %755 = vmatprep.subr.bf16.mxu0 0
      %756 = vmatpush1.bf16.msra.mxu0 0
      %757 = vmatprep.subr.bf16.mxu0 0
      %758 = vmatpush1.bf16.msra.mxu0 0
      %759 = vmatprep.subr.bf16.mxu0 0
      %760 = vmatpush1.bf16.msra.mxu0 0
      %761 = vmatprep.subr.bf16.mxu0 0
      %762 = vmatpush1.bf16.msra.mxu0 0
      %763 = vmatprep.subr.bf16.mxu0 0
      %764 = vmatpush1.bf16.msra.mxu0 0
      %765 = vmatprep.subr.bf16.mxu0 0
      %766 = vmatpush1.bf16.msra.mxu0 0
      %767 = vmatprep.subr.bf16.mxu0 0
      %768 = vmatpush1.bf16.msra.mxu0 0
      %769 = vmatprep.subr.bf16.mxu0 0
      %770 = vmatpush1.bf16.msra.mxu0 0
      %771 = vmatprep.subr.bf16.mxu0 0
      %772 = vmatpush1.bf16.msra.mxu0 0
      %773 = vmatprep.subr.bf16.mxu0 0
      %774 = vmatpush1.bf16.msra.mxu0 0
      %775 = vmatprep.subr.bf16.mxu0 0
      %776 = vmatpush1.bf16.msra.mxu0 0
      %777 = vmatprep.subr.bf16.mxu0 0
      %778 = vmatpush1.bf16.msra.mxu0 0
      %779 = vmatprep.mubr.bf16.mxu0 0
      %780 = vmatmul.mubr.bf16.gmra.mrb[0].mxu0 %v742
      %v781 = vpop.f32.mrb[0].mxu0
      %v782 = vadd.f32 %v717, %v781
      %v783 = vpop.f32.mrb[0].mxu0
      %v784 = vpop.f32.mrb[0].mxu0
      %v785 = vadd.f32 %v720, %v784
      %v786 = vpop.f32.mrb[0].mxu0
      %787 = vmatprep.mubr.bf16.mxu0 0
      %788 = vmatmul.mubr.bf16.gmra.mrb[0].mxu0 %v745
      %v789 = vpop.f32.mrb[0].mxu0
      %v790 = vadd.f32 %v725, %v789
      %v791 = vpop.f32.mrb[0].mxu0
      %v792 = vpop.f32.mrb[0].mxu0
      %v793 = vadd.f32 %v728, %v792
      %v794 = vpop.f32.mrb[0].mxu0
      %795 = vdwg.mxu0
      %s796 = scalar_lea.vmem %s3, 32
      %v797 = vld [vmem:[%s796] sm:$0xf]
      %v798 = vld [vmem:[%s796 + $0x4] sm:$0xf]
      %v799 = vld [vmem:[%s796 + $0x8] sm:$0xf]
      %v800 = vld [vmem:[%s796 + $0xc] sm:$0xf]
      %v805 = vunpack.c.l.b16 %v797
      %v806 = vunpack.c.l.b16 %v798
      %v807 = vunpack.c.l.b16 %v799
      %v808 = vunpack.c.l.b16 %v800
      %v809 = vpack.c.b16 %v806, %v805
      %v810 = vpack.c.b16 %v808, %v807
      %811 = vrot.lane.b32.xlu0 %v632, 126
      %v812 = vpop.permute.xlu0 %811
      %813 = vrot.lane.b32.xlu0 %v634, 126
      %v814 = vpop.permute.xlu0 %813
      %815 = vrot.lane.b32.xlu0 %v636, 126
      %v816 = vpop.permute.xlu0 %815
      %817 = vrot.lane.b32.xlu0 %v638, 126
      %v818 = vpop.permute.xlu0 %817
      %v824 = vsel %vm675, %v809, 0
      %v827 = vsel %vm675, %v810, 0
      %829 = vmatprep.subr.bf16.mxu0 0
      %830 = vmatpush1.bf16.msra.mxu0 %v812
      %831 = vmatprep.subr.bf16.mxu0 0
      %832 = vmatpush1.bf16.msra.mxu0 %v814
      %833 = vmatprep.subr.bf16.mxu0 0
      %834 = vmatpush1.bf16.msra.mxu0 %v816
      %835 = vmatprep.subr.bf16.mxu0 0
      %836 = vmatpush1.bf16.msra.mxu0 %v818
      %837 = vmatprep.subr.bf16.mxu0 0
      %838 = vmatpush1.bf16.msra.mxu0 0
      %839 = vmatprep.subr.bf16.mxu0 0
      %840 = vmatpush1.bf16.msra.mxu0 0
      %841 = vmatprep.subr.bf16.mxu0 0
      %842 = vmatpush1.bf16.msra.mxu0 0
      %843 = vmatprep.subr.bf16.mxu0 0
      %844 = vmatpush1.bf16.msra.mxu0 0
      %845 = vmatprep.subr.bf16.mxu0 0
      %846 = vmatpush1.bf16.msra.mxu0 0
      %847 = vmatprep.subr.bf16.mxu0 0
      %848 = vmatpush1.bf16.msra.mxu0 0
      %849 = vmatprep.subr.bf16.mxu0 0
      %850 = vmatpush1.bf16.msra.mxu0 0
      %851 = vmatprep.subr.bf16.mxu0 0
      %852 = vmatpush1.bf16.msra.mxu0 0
      %853 = vmatprep.subr.bf16.mxu0 0
      %854 = vmatpush1.bf16.msra.mxu0 0
      %855 = vmatprep.subr.bf16.mxu0 0
      %856 = vmatpush1.bf16.msra.mxu0 0
      %857 = vmatprep.subr.bf16.mxu0 0
      %858 = vmatpush1.bf16.msra.mxu0 0
      %859 = vmatprep.subr.bf16.mxu0 0
      %860 = vmatpush1.bf16.msra.mxu0 0
      %861 = vmatprep.mubr.bf16.mxu0 0
      %862 = vmatmul.mubr.bf16.gmra.mrb[0].mxu0 %v824
      %v863 = vpop.f32.mrb[0].mxu0
      %v864 = vadd.f32 0.0, %v863
      %v865 = vpop.f32.mrb[0].mxu0
      %v866 = vpop.f32.mrb[0].mxu0
      %v867 = vadd.f32 0.0, %v866
      %v868 = vpop.f32.mrb[0].mxu0
      %869 = vmatprep.mubr.bf16.mxu0 0
      %870 = vmatmul.mubr.bf16.gmra.mrb[0].mxu0 %v827
      %v871 = vpop.f32.mrb[0].mxu0
      %v872 = vadd.f32 0.0, %v871
      %v873 = vpop.f32.mrb[0].mxu0
      %v874 = vpop.f32.mrb[0].mxu0
      %v875 = vadd.f32 0.0, %v874
      %v876 = vpop.f32.mrb[0].mxu0
      %877 = vdwg.mxu0
      %v878 = vadd.f32 %v782, %v864
      %v879 = vadd.f32 %v785, %v867
      %v880 = vadd.f32 %v790, %v872
      %v881 = vadd.f32 %v793, %v875
      %s882 = scalar_lea.vmem %s3, 48
      %v883 = vld [vmem:[%s882] sm:$0xf]
      %v884 = vld [vmem:[%s882 + $0x4] sm:$0xf]
      %v885 = vld [vmem:[%s882 + $0x8] sm:$0xf]
      %v886 = vld [vmem:[%s882 + $0xc] sm:$0xf]
      %v891 = vunpack.c.l.b16 %v883
      %v892 = vunpack.c.l.b16 %v884
      %v893 = vunpack.c.l.b16 %v885
      %v894 = vunpack.c.l.b16 %v886
      %v895 = vpack.c.b16 %v892, %v891
      %v896 = vpack.c.b16 %v894, %v893
      %897 = vrot.lane.b32.xlu0 %v632, 125
      %v898 = vpop.permute.xlu0 %897
      %899 = vrot.lane.b32.xlu0 %v634, 125
      %v900 = vpop.permute.xlu0 %899
      %901 = vrot.lane.b32.xlu0 %v636, 125
      %v902 = vpop.permute.xlu0 %901
      %903 = vrot.lane.b32.xlu0 %v638, 125
      %v904 = vpop.permute.xlu0 %903
      %v910 = vsel %vm675, %v895, 0
      %v913 = vsel %vm675, %v896, 0
      %915 = vmatprep.subr.bf16.mxu0 0
      %916 = vmatpush1.bf16.msra.mxu0 %v898
      %917 = vmatprep.subr.bf16.mxu0 0
      %918 = vmatpush1.bf16.msra.mxu0 %v900
      %919 = vmatprep.subr.bf16.mxu0 0
      %920 = vmatpush1.bf16.msra.mxu0 %v902
      %921 = vmatprep.subr.bf16.mxu0 0
      %922 = vmatpush1.bf16.msra.mxu0 %v904
      %923 = vmatprep.subr.bf16.mxu0 0
      %924 = vmatpush1.bf16.msra.mxu0 0
      %925 = vmatprep.subr.bf16.mxu0 0
      %926 = vmatpush1.bf16.msra.mxu0 0
      %927 = vmatprep.subr.bf16.mxu0 0
      %928 = vmatpush1.bf16.msra.mxu0 0
      %929 = vmatprep.subr.bf16.mxu0 0
      %930 = vmatpush1.bf16.msra.mxu0 0
      %931 = vmatprep.subr.bf16.mxu0 0
      %932 = vmatpush1.bf16.msra.mxu0 0
      %933 = vmatprep.subr.bf16.mxu0 0
      %934 = vmatpush1.bf16.msra.mxu0 0
      %935 = vmatprep.subr.bf16.mxu0 0
      %936 = vmatpush1.bf16.msra.mxu0 0
      %937 = vmatprep.subr.bf16.mxu0 0
      %938 = vmatpush1.bf16.msra.mxu0 0
      %939 = vmatprep.subr.bf16.mxu0 0
      %940 = vmatpush1.bf16.msra.mxu0 0
      %941 = vmatprep.subr.bf16.mxu0 0
      %942 = vmatpush1.bf16.msra.mxu0 0
      %943 = vmatprep.subr.bf16.mxu0 0
      %944 = vmatpush1.bf16.msra.mxu0 0
      %945 = vmatprep.subr.bf16.mxu0 0
      %946 = vmatpush1.bf16.msra.mxu0 0
      %947 = vmatprep.mubr.bf16.mxu0 0
      %948 = vmatmul.mubr.bf16.gmra.mrb[0].mxu0 %v910
      %v949 = vpop.f32.mrb[0].mxu0
      %v950 = vadd.f32 0.0, %v949
      %v951 = vpop.f32.mrb[0].mxu0
      %v952 = vpop.f32.mrb[0].mxu0
      %v953 = vadd.f32 0.0, %v952
      %v954 = vpop.f32.mrb[0].mxu0
      %955 = vmatprep.mubr.bf16.mxu0 0
      %956 = vmatmul.mubr.bf16.gmra.mrb[0].mxu0 %v913
      %v957 = vpop.f32.mrb[0].mxu0
      %v958 = vadd.f32 0.0, %v957
      %v959 = vpop.f32.mrb[0].mxu0
      %v960 = vpop.f32.mrb[0].mxu0
      %v961 = vadd.f32 0.0, %v960
      %v962 = vpop.f32.mrb[0].mxu0
      %963 = vdwg.mxu0
      %v964 = vadd.f32 %v878, %v950
      %v965 = vadd.f32 %v879, %v953
      %v966 = vadd.f32 %v880, %v958
      %v967 = vadd.f32 %v881, %v961
      %s968 = scalar_lea.vmem %s3, 64
      %v969 = vld [vmem:[%s968] sm:$0xf]
      %v970 = vld [vmem:[%s968 + $0x4] sm:$0xf]
      %v971 = vld [vmem:[%s968 + $0x8] sm:$0xf]
      %v972 = vld [vmem:[%s968 + $0xc] sm:$0xf]
      %v977 = vunpack.c.l.b16 %v969
      %v978 = vunpack.c.l.b16 %v970
      %v979 = vunpack.c.l.b16 %v971
      %v980 = vunpack.c.l.b16 %v972
      %v981 = vpack.c.b16 %v978, %v977
      %v982 = vpack.c.b16 %v980, %v979
      %983 = vrot.lane.b32.xlu0 %v632, 124
      %v984 = vpop.permute.xlu0 %983
      %985 = vrot.lane.b32.xlu0 %v634, 124
      %v986 = vpop.permute.xlu0 %985
      %987 = vrot.lane.b32.xlu0 %v636, 124
      %v988 = vpop.permute.xlu0 %987
      %989 = vrot.lane.b32.xlu0 %v638, 124
      %v990 = vpop.permute.xlu0 %989
      %v996 = vsel %vm675, %v981, 0
      %v999 = vsel %vm675, %v982, 0
      %1001 = vmatprep.subr.bf16.mxu0 0
      %1002 = vmatpush1.bf16.msra.mxu0 %v984
      %1003 = vmatprep.subr.bf16.mxu0 0
      %1004 = vmatpush1.bf16.msra.mxu0 %v986
      %1005 = vmatprep.subr.bf16.mxu0 0
      %1006 = vmatpush1.bf16.msra.mxu0 %v988
      %1007 = vmatprep.subr.bf16.mxu0 0
      %1008 = vmatpush1.bf16.msra.mxu0 %v990
      %1009 = vmatprep.subr.bf16.mxu0 0
      %1010 = vmatpush1.bf16.msra.mxu0 0
      %1011 = vmatprep.subr.bf16.mxu0 0
      %1012 = vmatpush1.bf16.msra.mxu0 0
      %1013 = vmatprep.subr.bf16.mxu0 0
      %1014 = vmatpush1.bf16.msra.mxu0 0
      %1015 = vmatprep.subr.bf16.mxu0 0
      %1016 = vmatpush1.bf16.msra.mxu0 0
      %1017 = vmatprep.subr.bf16.mxu0 0
      %1018 = vmatpush1.bf16.msra.mxu0 0
      %1019 = vmatprep.subr.bf16.mxu0 0
      %1020 = vmatpush1.bf16.msra.mxu0 0
      %1021 = vmatprep.subr.bf16.mxu0 0
      %1022 = vmatpush1.bf16.msra.mxu0 0
      %1023 = vmatprep.subr.bf16.mxu0 0
      %1024 = vmatpush1.bf16.msra.mxu0 0
      %1025 = vmatprep.subr.bf16.mxu0 0
      %1026 = vmatpush1.bf16.msra.mxu0 0
      %1027 = vmatprep.subr.bf16.mxu0 0
      %1028 = vmatpush1.bf16.msra.mxu0 0
      %1029 = vmatprep.subr.bf16.mxu0 0
      %1030 = vmatpush1.bf16.msra.mxu0 0
      %1031 = vmatprep.subr.bf16.mxu0 0
      %1032 = vmatpush1.bf16.msra.mxu0 0
      %1033 = vmatprep.mubr.bf16.mxu0 0
      %1034 = vmatmul.mubr.bf16.gmra.mrb[0].mxu0 %v996
      %v1035 = vpop.f32.mrb[0].mxu0
      %v1036 = vadd.f32 0.0, %v1035
      %v1037 = vpop.f32.mrb[0].mxu0
      %v1038 = vpop.f32.mrb[0].mxu0
      %v1039 = vadd.f32 0.0, %v1038
      %v1040 = vpop.f32.mrb[0].mxu0
      %1041 = vmatprep.mubr.bf16.mxu0 0
      %1042 = vmatmul.mubr.bf16.gmra.mrb[0].mxu0 %v999
      %v1043 = vpop.f32.mrb[0].mxu0
      %v1044 = vadd.f32 0.0, %v1043
      %v1045 = vpop.f32.mrb[0].mxu0
      %v1046 = vpop.f32.mrb[0].mxu0
      %v1047 = vadd.f32 0.0, %v1046
      %v1048 = vpop.f32.mrb[0].mxu0
      %1049 = vdwg.mxu0
      %v1050 = vadd.f32 %v964, %v1036
      %v1051 = vadd.f32 %v965, %v1039
      %v1052 = vadd.f32 %v966, %v1044
      %v1053 = vadd.f32 %v967, %v1047
      %v1054 = vld [vmem:[%s4] sm:$0xff]
      %v1055 = vld [vmem:[%s4 + $0x8] sm:$0xff]
      %v1056 = vld [vmem:[%s4 + $0x10] sm:$0xff]
      %v1057 = vld [vmem:[%s4 + $0x18] sm:$0xff]
      %1059 = vset.pattern.permute.xlu0 0
      %1060 = vperm.xlu0 %1059, %v1054
      %v1061 = vpop.permute.xlu0 %1060
      %1064 = vset.pattern.permute.xlu0 0
      %1065 = vperm.xlu0 %1064, %v1055
      %v1066 = vpop.permute.xlu0 %1065
      %1069 = vset.pattern.permute.xlu0 0
      %1070 = vperm.xlu0 %1069, %v1056
      %v1071 = vpop.permute.xlu0 %1070
      %1074 = vset.pattern.permute.xlu0 0
      %1075 = vperm.xlu0 %1074, %v1057
      %v1076 = vpop.permute.xlu0 %1075
      %v1078 = vadd.f32 %v1050, %v1061
      %v1079 = vadd.f32 %v1051, %v1066
      %v1080 = vadd.f32 %v1052, %v1071
      %v1081 = vadd.f32 %v1053, %v1076
      %v1082 = vmax.f32 %v1078, 0.0
      %v1083 = vmax.f32 %v1079, 0.0
      %v1084 = vmax.f32 %v1080, 0.0
      %v1085 = vmax.f32 %v1081, 0.0
      %v1086 = vlaneseq
      %vm1087 = vcmp.ge.s32.totalorder %v1086, 0
      %vm1088 = vcmp.lt.s32.totalorder %v1086, 50
      %vm1089 = vmand %vm1087, %vm1088
      %1090 = vst.msk [vmem:[#allocation2] sm:$0x1] %vm1089, %v1082
      %v1093 = vunpack.c.l.s4 1966171168
      %v1094 = vunpack.c.0.s8 %v1093
      %v1095 = vlaneseq
      %v1096 = vshrl.u32 %v1095, 7
      %v1097 = vsub.s32 %v1094, %v1096
      %v1098 = vrot.slane %v1082, %v1097
      %v1099 = vcombine.high %v1098, %v1098
      %v1101 = vunpack.c.l.s4 1966171168
      %v1102 = vunpack.c.0.s8 %v1101
      %v1103 = vlaneseq
      %v1104 = vshrl.u32 %v1103, 7
      %v1105 = vsub.s32 %v1102, %v1104
      %v1106 = vrot.slane %v1098, %v1105
      %v1108 = vunpack.c.l.s4 1966171168
      %v1109 = vunpack.c.0.s8 %v1108
      %v1110 = vlaneseq
      %v1111 = vshrl.u32 %v1110, 7
      %v1112 = vsub.s32 %v1109, %v1111
      %v1113 = vrot.slane %v1099, %v1112
      %1114 = vrot.lane.b32.xlu0 %v1113, 50
      %v1115 = vpop.permute.xlu0 %1114
      %vm1117 = vcmp.ge.s32.totalorder %v1086, 50
      %vm1118 = vcmp.lt.s32.totalorder %v1086, 100
      %vm1119 = vmand %vm1117, %vm1118
      %1120 = vst.msk [vmem:[#allocation2] sm:$0x1] %vm1119, %v1115
      %v1121 = vcombine.high %v1106, %v1106
      %1122 = vrot.lane.b32.xlu0 %v1121, 100
      %v1123 = vpop.permute.xlu0 %1122
      %v1124 = vrot.slane %v1123, 7
      %vm1125 = vcmask 818176
      %v1126 = vsel %vm1125, %v1124, %v1123
      %vm1128 = vcmp.ge.s32.totalorder %v1086, 100
      %vm1129 = vcmp.lt.s32.totalorder %v1086, 150
      %vm1130 = vmand %vm1128, %vm1129
      %1131 = vst.msk [vmem:[#allocation2] sm:$0x3] %vm1130, %v1126
      %v1132 = vcombine.high %v1113, %v1113
      %1133 = vrot.lane.b32.xlu0 %v1132, 22
      %v1134 = vpop.permute.xlu0 %1133
      %vm1136 = vcmp.ge.s32.totalorder %v1086, 22
      %vm1137 = vcmp.lt.s32.totalorder %v1086, 72
      %vm1138 = vmand %vm1136, %vm1137
      %1139 = vst.msk [vmem:[#allocation2 + $0x1] sm:$0x1] %vm1138, %v1134
      %v1140 = vcombine.high %v1082, %v1082
      %v1142 = vunpack.c.l.s4 1966171168
      %v1143 = vunpack.c.0.s8 %v1142
      %v1144 = vlaneseq
      %v1145 = vshrl.u32 %v1144, 7
      %v1146 = vsub.s32 %v1143, %v1145
      %v1147 = vrot.slane %v1140, %v1146
      %v1149 = vunpack.c.l.s4 1966171168
      %v1150 = vunpack.c.0.s8 %v1149
      %v1151 = vlaneseq
      %v1152 = vshrl.u32 %v1151, 7
      %v1153 = vsub.s32 %v1150, %v1152
      %v1154 = vrot.slane %v1147, %v1153
      %1155 = vrot.lane.b32.xlu0 %v1154, 72
      %v1156 = vpop.permute.xlu0 %1155
      %vm1158 = vcmp.ge.s32.totalorder %v1086, 72
      %vm1159 = vcmp.lt.s32.totalorder %v1086, 122
      %vm1160 = vmand %vm1158, %vm1159
      %1161 = vst.msk [vmem:[#allocation2 + $0x1] sm:$0x1] %vm1160, %v1156
      %v1162 = vcombine.high %v1147, %v1147
      %v1164 = vunpack.c.l.s4 1966171168
      %v1165 = vunpack.c.0.s8 %v1164
      %v1166 = vlaneseq
      %v1167 = vshrl.u32 %v1166, 7
      %v1168 = vsub.s32 %v1165, %v1167
      %v1169 = vrot.slane %v1162, %v1168
      %1170 = vrot.lane.b32.xlu0 %v1169, 122
      %v1171 = vpop.permute.xlu0 %1170
      %v1172 = vrot.slane %v1171, 7
      %vm1173 = vcmask 998400
      %v1174 = vsel %vm1173, %v1172, %v1171
      %vm1176 = vcmp.ge.s32.totalorder %v1086, 122
      %vm1177 = vcmp.lt.s32.totalorder %v1086, 172
      %vm1178 = vmand %vm1176, %vm1177
      %1179 = vst.msk [vmem:[#allocation2 + $0x1] sm:$0x3] %vm1178, %v1174
      %v1180 = vcombine.high %v1154, %v1154
      %1181 = vrot.lane.b32.xlu0 %v1180, 44
      %v1182 = vpop.permute.xlu0 %1181
      %vm1184 = vcmp.ge.s32.totalorder %v1086, 44
      %vm1185 = vcmp.lt.s32.totalorder %v1086, 94
      %vm1186 = vmand %vm1184, %vm1185
      %1187 = vst.msk [vmem:[#allocation2 + $0x2] sm:$0x1] %vm1186, %v1182
      %v1188 = vcombine.high %v1169, %v1169
      %1189 = vrot.lane.b32.xlu0 %v1188, 94
      %v1190 = vpop.permute.xlu0 %1189
      %v1191 = vrot.slane %v1190, 7
      %vm1192 = vcmask 769024
      %v1193 = vsel %vm1192, %v1191, %v1190
      %vm1195 = vcmp.ge.s32.totalorder %v1086, 94
      %vm1196 = vcmp.lt.s32.totalorder %v1086, 144
      %vm1197 = vmand %vm1195, %vm1196
      %1198 = vst.msk [vmem:[#allocation2 + $0x2] sm:$0x3] %vm1197, %v1193
      %v1201 = vunpack.c.l.s4 1966171168
      %v1202 = vunpack.c.0.s8 %v1201
      %v1203 = vlaneseq
      %v1204 = vshrl.u32 %v1203, 7
      %v1205 = vsub.s32 %v1202, %v1204
      %v1206 = vrot.slane %v1083, %v1205
      %v1208 = vunpack.c.l.s4 1966171168
      %v1209 = vunpack.c.0.s8 %v1208
      %v1210 = vlaneseq
      %v1211 = vshrl.u32 %v1210, 7
      %v1212 = vsub.s32 %v1209, %v1211
      %v1213 = vrot.slane %v1206, %v1212
      %1214 = vrot.lane.b32.xlu0 %v1213, 16
      %v1215 = vpop.permute.xlu0 %1214
      %vm1217 = vcmp.ge.s32.totalorder %v1086, 16
      %vm1218 = vcmp.lt.s32.totalorder %v1086, 66
      %vm1219 = vmand %vm1217, %vm1218
      %1220 = vst.msk [vmem:[#allocation2 + $0x3] sm:$0x1] %vm1219, %v1215
      %v1221 = vcombine.high %v1206, %v1206
      %v1223 = vunpack.c.l.s4 1966171168
      %v1224 = vunpack.c.0.s8 %v1223
      %v1225 = vlaneseq
      %v1226 = vshrl.u32 %v1225, 7
      %v1227 = vsub.s32 %v1224, %v1226
      %v1228 = vrot.slane %v1221, %v1227
      %1229 = vrot.lane.b32.xlu0 %v1228, 66
      %v1230 = vpop.permute.xlu0 %1229
      %vm1232 = vcmp.ge.s32.totalorder %v1086, 66
      %vm1233 = vcmp.lt.s32.totalorder %v1086, 116
      %vm1234 = vmand %vm1232, %vm1233
      %1235 = vst.msk [vmem:[#allocation2 + $0x3] sm:$0x1] %vm1234, %v1230
      %v1236 = vcombine.high %v1213, %v1213
      %1237 = vrot.lane.b32.xlu0 %v1236, 116
      %v1238 = vpop.permute.xlu0 %1237
      %v1239 = vrot.slane %v1238, 7
      %vm1240 = vcmask 949248
      %v1241 = vsel %vm1240, %v1239, %v1238
      %vm1243 = vcmp.ge.s32.totalorder %v1086, 116
      %vm1244 = vcmp.lt.s32.totalorder %v1086, 166
      %vm1245 = vmand %vm1243, %vm1244
      %1246 = vst.msk [vmem:[#allocation2 + $0x3] sm:$0x3] %vm1245, %v1241
      %v1247 = vcombine.high %v1228, %v1228
      %1248 = vrot.lane.b32.xlu0 %v1247, 38
      %v1249 = vpop.permute.xlu0 %1248
      %vm1251 = vcmp.ge.s32.totalorder %v1086, 38
      %vm1252 = vcmp.lt.s32.totalorder %v1086, 88
      %vm1253 = vmand %vm1251, %vm1252
      %1254 = vst.msk [vmem:[#allocation2 + $0x4] sm:$0x1] %vm1253, %v1249
      %v1255 = vcombine.high %v1083, %v1083
      %v1257 = vunpack.c.l.s4 1966171168
      %v1258 = vunpack.c.0.s8 %v1257
      %v1259 = vlaneseq
      %v1260 = vshrl.u32 %v1259, 7
      %v1261 = vsub.s32 %v1258, %v1260
      %v1262 = vrot.slane %v1255, %v1261
      %v1264 = vunpack.c.l.s4 1966171168
      %v1265 = vunpack.c.0.s8 %v1264
      %v1266 = vlaneseq
      %v1267 = vshrl.u32 %v1266, 7
      %v1268 = vsub.s32 %v1265, %v1267
      %v1269 = vrot.slane %v1262, %v1268
      %1270 = vrot.lane.b32.xlu0 %v1269, 88
      %v1271 = vpop.permute.xlu0 %1270
      %v1272 = vrot.slane %v1271, 7
      %vm1273 = vcmask 719872
      %v1274 = vsel %vm1273, %v1272, %v1271
      %vm1276 = vcmp.ge.s32.totalorder %v1086, 88
      %vm1277 = vcmp.lt.s32.totalorder %v1086, 138
      %vm1278 = vmand %vm1276, %vm1277
      %1279 = vst.msk [vmem:[#allocation2 + $0x4] sm:$0x3] %vm1278, %v1274
      %v1280 = vcombine.high %v1262, %v1262
      %v1282 = vunpack.c.l.s4 1966171168
      %v1283 = vunpack.c.0.s8 %v1282
      %v1284 = vlaneseq
      %v1285 = vshrl.u32 %v1284, 7
      %v1286 = vsub.s32 %v1283, %v1285
      %v1287 = vrot.slane %v1280, %v1286
      %1288 = vrot.lane.b32.xlu0 %v1287, 10
      %v1289 = vpop.permute.xlu0 %1288
      %vm1291 = vcmp.ge.s32.totalorder %v1086, 10
      %vm1292 = vcmp.lt.s32.totalorder %v1086, 60
      %vm1293 = vmand %vm1291, %vm1292
      %1294 = vst.msk [vmem:[#allocation2 + $0x5] sm:$0x1] %vm1293, %v1289
      %v1295 = vcombine.high %v1269, %v1269
      %1296 = vrot.lane.b32.xlu0 %v1295, 60
      %v1297 = vpop.permute.xlu0 %1296
      %vm1299 = vcmp.ge.s32.totalorder %v1086, 60
      %vm1300 = vcmp.lt.s32.totalorder %v1086, 110
      %vm1301 = vmand %vm1299, %vm1300
      %1302 = vst.msk [vmem:[#allocation2 + $0x5] sm:$0x1] %vm1301, %v1297
      %v1303 = vcombine.high %v1287, %v1287
      %1304 = vrot.lane.b32.xlu0 %v1303, 110
      %v1305 = vpop.permute.xlu0 %1304
      %v1306 = vrot.slane %v1305, 7
      %vm1307 = vcmask 900096
      %v1308 = vsel %vm1307, %v1306, %v1305
      %vm1310 = vcmp.ge.s32.totalorder %v1086, 110
      %vm1311 = vcmp.lt.s32.totalorder %v1086, 160
      %vm1312 = vmand %vm1310, %vm1311
      %1313 = vst.msk [vmem:[#allocation2 + $0x5] sm:$0x3] %vm1312, %v1308
      %v1316 = vunpack.c.l.s4 1966171168
      %v1317 = vunpack.c.0.s8 %v1316
      %v1318 = vlaneseq
      %v1319 = vshrl.u32 %v1318, 7
      %v1320 = vsub.s32 %v1317, %v1319
      %v1321 = vrot.slane %v1084, %v1320
      %v1323 = vunpack.c.l.s4 1966171168
      %v1324 = vunpack.c.0.s8 %v1323
      %v1325 = vlaneseq
      %v1326 = vshrl.u32 %v1325, 7
      %v1327 = vsub.s32 %v1324, %v1326
      %v1328 = vrot.slane %v1321, %v1327
      %1329 = vrot.lane.b32.xlu0 %v1328, 32
      %v1330 = vpop.permute.xlu0 %1329
      %vm1332 = vcmp.ge.s32.totalorder %v1086, 32
      %vm1333 = vcmp.lt.s32.totalorder %v1086, 82
      %vm1334 = vmand %vm1332, %vm1333
      %1335 = vst.msk [vmem:[#allocation2 + $0x6] sm:$0x1] %vm1334, %v1330
      %v1336 = vcombine.high %v1321, %v1321
      %v1338 = vunpack.c.l.s4 1966171168
      %v1339 = vunpack.c.0.s8 %v1338
      %v1340 = vlaneseq
      %v1341 = vshrl.u32 %v1340, 7
      %v1342 = vsub.s32 %v1339, %v1341
      %v1343 = vrot.slane %v1336, %v1342
      %1344 = vrot.lane.b32.xlu0 %v1343, 82
      %v1345 = vpop.permute.xlu0 %1344
      %v1346 = vrot.slane %v1345, 7
      %vm1347 = vcmask 670720
      %v1348 = vsel %vm1347, %v1346, %v1345
      %vm1350 = vcmp.ge.s32.totalorder %v1086, 82
      %vm1351 = vcmp.lt.s32.totalorder %v1086, 132
      %vm1352 = vmand %vm1350, %vm1351
      %1353 = vst.msk [vmem:[#allocation2 + $0x6] sm:$0x3] %vm1352, %v1348
      %v1354 = vcombine.high %v1328, %v1328
      %1355 = vrot.lane.b32.xlu0 %v1354, 4
      %v1356 = vpop.permute.xlu0 %1355
      %vm1358 = vcmp.ge.s32.totalorder %v1086, 4
      %vm1359 = vcmp.lt.s32.totalorder %v1086, 54
      %vm1360 = vmand %vm1358, %vm1359
      %1361 = vst.msk [vmem:[#allocation2 + $0x7] sm:$0x1] %vm1360, %v1356
      %v1362 = vcombine.high %v1343, %v1343
      %1363 = vrot.lane.b32.xlu0 %v1362, 54
      %v1364 = vpop.permute.xlu0 %1363
      %vm1366 = vcmp.ge.s32.totalorder %v1086, 54
      %vm1367 = vcmp.lt.s32.totalorder %v1086, 104
      %vm1368 = vmand %vm1366, %vm1367
      %1369 = vst.msk [vmem:[#allocation2 + $0x7] sm:$0x1] %vm1368, %v1364
      %v1370 = vcombine.high %v1084, %v1084
      %v1372 = vunpack.c.l.s4 1966171168
      %v1373 = vunpack.c.0.s8 %v1372
      %v1374 = vlaneseq
      %v1375 = vshrl.u32 %v1374, 7
      %v1376 = vsub.s32 %v1373, %v1375
      %v1377 = vrot.slane %v1370, %v1376
      %v1379 = vunpack.c.l.s4 1966171168
      %v1380 = vunpack.c.0.s8 %v1379
      %v1381 = vlaneseq
      %v1382 = vshrl.u32 %v1381, 7
      %v1383 = vsub.s32 %v1380, %v1382
      %v1384 = vrot.slane %v1377, %v1383
      %1385 = vrot.lane.b32.xlu0 %v1384, 104
      %v1386 = vpop.permute.xlu0 %1385
      %v1387 = vrot.slane %v1386, 7
      %vm1388 = vcmask 850944
      %v1389 = vsel %vm1388, %v1387, %v1386
      %vm1391 = vcmp.ge.s32.totalorder %v1086, 104
      %vm1392 = vcmp.lt.s32.totalorder %v1086, 154
      %vm1393 = vmand %vm1391, %vm1392
      %1394 = vst.msk [vmem:[#allocation2 + $0x7] sm:$0x3] %vm1393, %v1389
      %v1395 = vcombine.high %v1377, %v1377
      %v1397 = vunpack.c.l.s4 1966171168
      %v1398 = vunpack.c.0.s8 %v1397
      %v1399 = vlaneseq
      %v1400 = vshrl.u32 %v1399, 7
      %v1401 = vsub.s32 %v1398, %v1400
      %v1402 = vrot.slane %v1395, %v1401
      %1403 = vrot.lane.b32.xlu0 %v1402, 26
      %v1404 = vpop.permute.xlu0 %1403
      %vm1406 = vcmp.ge.s32.totalorder %v1086, 26
      %vm1407 = vcmp.lt.s32.totalorder %v1086, 76
      %vm1408 = vmand %vm1406, %vm1407
      %1409 = vst.msk [vmem:[#allocation2 + $0x8] sm:$0x1] %vm1408, %v1404
      %v1410 = vcombine.high %v1384, %v1384
      %1411 = vrot.lane.b32.xlu0 %v1410, 76
      %v1412 = vpop.permute.xlu0 %1411
      %vm1414 = vcmp.ge.s32.totalorder %v1086, 76
      %vm1415 = vcmp.lt.s32.totalorder %v1086, 126
      %vm1416 = vmand %vm1414, %vm1415
      %1417 = vst.msk [vmem:[#allocation2 + $0x8] sm:$0x1] %vm1416, %v1412
      %v1418 = vcombine.high %v1402, %v1402
      %1419 = vrot.lane.b32.xlu0 %v1418, 126
      %v1420 = vpop.permute.xlu0 %1419
      %v1421 = vrot.slane %v1420, 7
      %vm1422 = vcmask 1031168
      %v1423 = vsel %vm1422, %v1421, %v1420
      %vm1425 = vcmp.ge.s32.totalorder %v1086, 126
      %vm1426 = vcmp.lt.s32.totalorder %v1086, 176
      %vm1427 = vmand %vm1425, %vm1426
      %1428 = vst.msk [vmem:[#allocation2 + $0x8] sm:$0x3] %vm1427, %v1423
      %v1431 = vunpack.c.l.s4 1966171168
      %v1432 = vunpack.c.0.s8 %v1431
      %v1433 = vlaneseq
      %v1434 = vshrl.u32 %v1433, 7
      %v1435 = vsub.s32 %v1432, %v1434
      %v1436 = vrot.slane %v1085, %v1435
      %v1438 = vunpack.c.l.s4 1966171168
      %v1439 = vunpack.c.0.s8 %v1438
      %v1440 = vlaneseq
      %v1441 = vshrl.u32 %v1440, 7
      %v1442 = vsub.s32 %v1439, %v1441
      %v1443 = vrot.slane %v1436, %v1442
      %1444 = vrot.lane.b32.xlu0 %v1443, 48
      %v1445 = vpop.permute.xlu0 %1444
      %vm1447 = vcmp.ge.s32.totalorder %v1086, 48
      %vm1448 = vcmp.lt.s32.totalorder %v1086, 98
      %vm1449 = vmand %vm1447, %vm1448
      %1450 = vst.msk [vmem:[#allocation2 + $0x9] sm:$0x1] %vm1449, %v1445
      %v1451 = vcombine.high %v1436, %v1436
      %v1453 = vunpack.c.l.s4 1966171168
      %v1454 = vunpack.c.0.s8 %v1453
      %v1455 = vlaneseq
      %v1456 = vshrl.u32 %v1455, 7
      %v1457 = vsub.s32 %v1454, %v1456
      %v1458 = vrot.slane %v1451, %v1457
      %1459 = vrot.lane.b32.xlu0 %v1458, 98
      %v1460 = vpop.permute.xlu0 %1459
      %v1461 = vrot.slane %v1460, 7
      %vm1462 = vcmask 801792
      %v1463 = vsel %vm1462, %v1461, %v1460
      %vm1465 = vcmp.ge.s32.totalorder %v1086, 98
      %vm1466 = vcmp.lt.s32.totalorder %v1086, 148
      %vm1467 = vmand %vm1465, %vm1466
      %1468 = vst.msk [vmem:[#allocation2 + $0x9] sm:$0x3] %vm1467, %v1463
      %v1469 = vcombine.high %v1443, %v1443
      %1470 = vrot.lane.b32.xlu0 %v1469, 20
      %v1471 = vpop.permute.xlu0 %1470
      %vm1473 = vcmp.ge.s32.totalorder %v1086, 20
      %vm1474 = vcmp.lt.s32.totalorder %v1086, 70
      %vm1475 = vmand %vm1473, %vm1474
      %1476 = vst.msk [vmem:[#allocation2 + $0xa] sm:$0x1] %vm1475, %v1471
      %v1477 = vcombine.high %v1458, %v1458
      %1478 = vrot.lane.b32.xlu0 %v1477, 70
      %v1479 = vpop.permute.xlu0 %1478
      %vm1481 = vcmp.ge.s32.totalorder %v1086, 70
      %vm1482 = vcmp.lt.s32.totalorder %v1086, 120
      %vm1483 = vmand %vm1481, %vm1482
      %1484 = vst.msk [vmem:[#allocation2 + $0xa] sm:$0x1] %vm1483, %v1479
      %v1485 = vcombine.high %v1085, %v1085
      %v1487 = vunpack.c.l.s4 1966171168
      %v1488 = vunpack.c.0.s8 %v1487
      %v1489 = vlaneseq
      %v1490 = vshrl.u32 %v1489, 7
      %v1491 = vsub.s32 %v1488, %v1490
      %v1492 = vrot.slane %v1485, %v1491
      %v1494 = vunpack.c.l.s4 1966171168
      %v1495 = vunpack.c.0.s8 %v1494
      %v1496 = vlaneseq
      %v1497 = vshrl.u32 %v1496, 7
      %v1498 = vsub.s32 %v1495, %v1497
      %v1499 = vrot.slane %v1492, %v1498
      %1500 = vrot.lane.b32.xlu0 %v1499, 120
      %v1501 = vpop.permute.xlu0 %1500
      %v1502 = vrot.slane %v1501, 7
      %vm1503 = vcmask 982016
      %v1504 = vsel %vm1503, %v1502, %v1501
      %vm1506 = vcmp.ge.s32.totalorder %v1086, 120
      %vm1507 = vcmp.lt.s32.totalorder %v1086, 170
      %vm1508 = vmand %vm1506, %vm1507
      %1509 = vst.msk [vmem:[#allocation2 + $0xa] sm:$0x3] %vm1508, %v1504
      %v1510 = vcombine.high %v1492, %v1492
      %v1512 = vunpack.c.l.s4 1966171168
      %v1513 = vunpack.c.0.s8 %v1512
      %v1514 = vlaneseq
      %v1515 = vshrl.u32 %v1514, 7
      %v1516 = vsub.s32 %v1513, %v1515
      %v1517 = vrot.slane %v1510, %v1516
      %1518 = vrot.lane.b32.xlu0 %v1517, 42
      %v1519 = vpop.permute.xlu0 %1518
      %vm1521 = vcmp.ge.s32.totalorder %v1086, 42
      %vm1522 = vcmp.lt.s32.totalorder %v1086, 92
      %vm1523 = vmand %vm1521, %vm1522
      %1524 = vst.msk [vmem:[#allocation2 + $0xb] sm:$0x1] %vm1523, %v1519
      %v1525 = vcombine.high %v1499, %v1499
      %1526 = vrot.lane.b32.xlu0 %v1525, 92
      %v1527 = vpop.permute.xlu0 %1526
      %v1528 = vrot.slane %v1527, 7
      %vm1529 = vcmask 752640
      %v1530 = vsel %vm1529, %v1528, %v1527
      %vm1532 = vcmp.ge.s32.totalorder %v1086, 92
      %vm1533 = vcmp.lt.s32.totalorder %v1086, 142
      %vm1534 = vmand %vm1532, %vm1533
      %1535 = vst.msk [vmem:[#allocation2 + $0xb] sm:$0x3] %vm1534, %v1530
      %v1536 = vcombine.high %v1517, %v1517
      %1537 = vrot.lane.b32.xlu0 %v1536, 14
      %v1538 = vpop.permute.xlu0 %1537
      %vm1540 = vcmp.ge.s32.totalorder %v1086, 14
      %vm1541 = vcmp.lt.s32.totalorder %v1086, 64
      %vm1542 = vmand %vm1540, %vm1541
      %1543 = vst.msk [vmem:[#allocation2 + $0xc] sm:$0x1] %vm1542, %v1538
      %v1544 = vld [vmem:[#allocation2] sm:$0xff]
      %v1545 = vld [vmem:[#allocation2 + $0x8] sm:$0x1f]
      %v1548 = vlaneseq
      %v1549 = vshrl.u32 %v1548, 7
      %v1550 = vsub.s32 0, %v1549
      %v1551 = vrot.slane %v1544, %v1550
      %v1552 = vlaneseq
      %v1553 = vshrl.u32 %v1552, 7
      %v1554 = vsub.s32 1, %v1553
      %v1555 = vrot.slane %v1544, %v1554
      %v1556 = vlaneseq
      %v1557 = vshrl.u32 %v1556, 7
      %v1558 = vsub.s32 2, %v1557
      %v1559 = vrot.slane %v1544, %v1558
      %v1560 = vlaneseq
      %v1561 = vshrl.u32 %v1560, 7
      %v1562 = vsub.s32 3, %v1561
      %v1563 = vrot.slane %v1544, %v1562
      %v1564 = vlaneseq
      %v1565 = vshrl.u32 %v1564, 7
      %v1566 = vsub.s32 4, %v1565
      %v1567 = vrot.slane %v1544, %v1566
      %v1568 = vlaneseq
      %v1569 = vshrl.u32 %v1568, 7
      %v1570 = vsub.s32 5, %v1569
      %v1571 = vrot.slane %v1544, %v1570
      %v1572 = vlaneseq
      %v1573 = vshrl.u32 %v1572, 7
      %v1574 = vsub.s32 6, %v1573
      %v1575 = vrot.slane %v1544, %v1574
      %v1576 = vlaneseq
      %v1577 = vshrl.u32 %v1576, 7
      %v1578 = vsub.s32 7, %v1577
      %v1579 = vrot.slane %v1544, %v1578
      %v1580 = vlaneseq
      %v1581 = vshrl.u32 %v1580, 7
      %v1582 = vsub.s32 0, %v1581
      %v1583 = vrot.slane %v1545, %v1582
      %v1584 = vlaneseq
      %v1585 = vshrl.u32 %v1584, 7
      %v1586 = vsub.s32 1, %v1585
      %v1587 = vrot.slane %v1545, %v1586
      %v1588 = vlaneseq
      %v1589 = vshrl.u32 %v1588, 7
      %v1590 = vsub.s32 2, %v1589
      %v1591 = vrot.slane %v1545, %v1590
      %v1592 = vlaneseq
      %v1593 = vshrl.u32 %v1592, 7
      %v1594 = vsub.s32 3, %v1593
      %v1595 = vrot.slane %v1545, %v1594
      %v1596 = vlaneseq
      %v1597 = vshrl.u32 %v1596, 7
      %v1598 = vsub.s32 4, %v1597
      %v1599 = vrot.slane %v1545, %v1598
      %v1613 = vpack.c.bf16 %v1551, %v1551
      %v1614 = vpack.c.bf16 %v1555, %v1555
      %v1615 = vpack.c.bf16 %v1559, %v1559
      %v1616 = vpack.c.bf16 %v1563, %v1563
      %v1617 = vpack.c.bf16 %v1567, %v1567
      %v1618 = vpack.c.bf16 %v1571, %v1571
      %v1619 = vpack.c.bf16 %v1575, %v1575
      %v1620 = vpack.c.bf16 %v1579, %v1579
      %v1621 = vpack.c.bf16 %v1583, %v1583
      %v1622 = vpack.c.bf16 %v1587, %v1587
      %v1623 = vpack.c.bf16 %v1591, %v1591
      %v1624 = vpack.c.bf16 %v1595, %v1595
      %v1625 = vpack.c.bf16 %v1599, %v1599
      %v1626 = vld [vmem:[%s5] sm:$0xff]
      %v1627 = vld [vmem:[%s5 + $0x8] sm:$0xff]
      %v1628 = vld [vmem:[%s5 + $0x10] sm:$0xff]
      %v1629 = vld [vmem:[%s5 + $0x18] sm:$0xf]
      %v1630 = vld [vmem:[%s5 + $0x1c] sm:$0xff]
      %v1631 = vld [vmem:[%s5 + $0x24] sm:$0xff]
      %v1632 = vld [vmem:[%s5 + $0x2c] sm:$0xff]
      %v1633 = vld [vmem:[%s5 + $0x34] sm:$0xf]
      %v1634 = vld [vmem:[%s5 + $0x38] sm:$0xff]
      %v1635 = vld [vmem:[%s5 + $0x40] sm:$0xff]
      %v1636 = vld [vmem:[%s5 + $0x48] sm:$0xff]
      %v1637 = vld [vmem:[%s5 + $0x50] sm:$0xf]
      %v1638 = vld [vmem:[%s5 + $0x54] sm:$0xff]
      %v1639 = vld [vmem:[%s5 + $0x5c] sm:$0xff]
      %v1640 = vld [vmem:[%s5 + $0x64] sm:$0xff]
      %v1641 = vld [vmem:[%s5 + $0x6c] sm:$0xf]
      %v1642 = vld [vmem:[%s5 + $0x70] sm:$0xff]
      %v1643 = vld [vmem:[%s5 + $0x78] sm:$0xff]
      %v1644 = vld [vmem:[%s5 + $0x80] sm:$0xff]
      %v1645 = vld [vmem:[%s5 + $0x88] sm:$0xf]
      %v1646 = vld [vmem:[%s5 + $0x8c] sm:$0xff]
      %v1647 = vld [vmem:[%s5 + $0x94] sm:$0xff]
      %v1648 = vld [vmem:[%s5 + $0x9c] sm:$0xff]
      %v1649 = vld [vmem:[%s5 + $0xa4] sm:$0xf]
      %v1650 = vld [vmem:[%s5 + $0xa8] sm:$0xff]
      %v1651 = vld [vmem:[%s5 + $0xb0] sm:$0xff]
      %v1652 = vld [vmem:[%s5 + $0xb8] sm:$0xff]
      %v1653 = vld [vmem:[%s5 + $0xc0] sm:$0xf]
      %v1654 = vld [vmem:[%s5 + $0xc4] sm:$0xff]
      %v1655 = vld [vmem:[%s5 + $0xcc] sm:$0xff]
      %v1656 = vld [vmem:[%s5 + $0xd4] sm:$0xff]
      %v1657 = vld [vmem:[%s5 + $0xdc] sm:$0xf]
      %v1658 = vld [vmem:[%s5 + $0xe0] sm:$0xff]
      %v1659 = vld [vmem:[%s5 + $0xe8] sm:$0xff]
      %v1660 = vld [vmem:[%s5 + $0xf0] sm:$0xff]
      %v1661 = vld [vmem:[%s5 + $0xf8] sm:$0xf]
      %v1662 = vld [vmem:[%s5 + $0xfc] sm:$0xff]
      %v1663 = vld [vmem:[%s5 + $0x104] sm:$0xff]
      %v1664 = vld [vmem:[%s5 + $0x10c] sm:$0xff]
      %v1665 = vld [vmem:[%s5 + $0x114] sm:$0xf]
      %v1666 = vld [vmem:[%s5 + $0x118] sm:$0xff]
      %v1667 = vld [vmem:[%s5 + $0x120] sm:$0xff]
      %v1668 = vld [vmem:[%s5 + $0x128] sm:$0xff]
      %v1669 = vld [vmem:[%s5 + $0x130] sm:$0xf]
      %v1670 = vld [vmem:[%s5 + $0x134] sm:$0xff]
      %v1671 = vld [vmem:[%s5 + $0x13c] sm:$0xff]
      %v1672 = vld [vmem:[%s5 + $0x144] sm:$0xff]
      %v1673 = vld [vmem:[%s5 + $0x14c] sm:$0xf]
      %v1674 = vld [vmem:[%s5 + $0x150] sm:$0xff]
      %v1675 = vld [vmem:[%s5 + $0x158] sm:$0xff]
      %v1676 = vld [vmem:[%s5 + $0x160] sm:$0xff]
      %v1677 = vld [vmem:[%s5 + $0x168] sm:$0xf]
      %v1678 = vld [vmem:[%s5 + $0x16c] sm:$0xff]
      %v1679 = vld [vmem:[%s5 + $0x174] sm:$0xff]
      %v1680 = vld [vmem:[%s5 + $0x17c] sm:$0xff]
      %v1681 = vld [vmem:[%s5 + $0x184] sm:$0xf]
      %v1682 = vld [vmem:[%s5 + $0x188] sm:$0xff]
      %v1683 = vld [vmem:[%s5 + $0x190] sm:$0xff]
      %v1684 = vld [vmem:[%s5 + $0x198] sm:$0xff]
      %v1685 = vld [vmem:[%s5 + $0x1a0] sm:$0xf]
      %v1686 = vld [vmem:[%s5 + $0x1a4] sm:$0xff]
      %v1687 = vld [vmem:[%s5 + $0x1ac] sm:$0xff]
      %v1688 = vld [vmem:[%s5 + $0x1b4] sm:$0xff]
      %v1689 = vld [vmem:[%s5 + $0x1bc] sm:$0xf]
      %v1690 = vld [vmem:[%s5 + $0x1c0] sm:$0xff]
      %v1691 = vld [vmem:[%s5 + $0x1c8] sm:$0xff]
      %v1692 = vld [vmem:[%s5 + $0x1d0] sm:$0xff]
      %v1693 = vld [vmem:[%s5 + $0x1d8] sm:$0xf]
      %v1694 = vld [vmem:[%s5 + $0x1dc] sm:$0xff]
      %v1695 = vld [vmem:[%s5 + $0x1e4] sm:$0xff]
      %v1696 = vld [vmem:[%s5 + $0x1ec] sm:$0xff]
      %v1697 = vld [vmem:[%s5 + $0x1f4] sm:$0xf]
      %v1698 = vld [vmem:[%s5 + $0x1f8] sm:$0xff]
      %v1699 = vld [vmem:[%s5 + $0x200] sm:$0xff]
      %v1700 = vld [vmem:[%s5 + $0x208] sm:$0xff]
      %v1701 = vld [vmem:[%s5 + $0x210] sm:$0xf]
      %v1702 = vld [vmem:[%s5 + $0x214] sm:$0xff]
      %v1703 = vld [vmem:[%s5 + $0x21c] sm:$0xff]
      %v1704 = vld [vmem:[%s5 + $0x224] sm:$0xff]
      %v1705 = vld [vmem:[%s5 + $0x22c] sm:$0xf]
      %v1706 = vld [vmem:[%s5 + $0x230] sm:$0xff]
      %v1707 = vld [vmem:[%s5 + $0x238] sm:$0xff]
      %v1708 = vld [vmem:[%s5 + $0x240] sm:$0xff]
      %v1709 = vld [vmem:[%s5 + $0x248] sm:$0xf]
      %v1710 = vld [vmem:[%s5 + $0x24c] sm:$0xff]
      %v1711 = vld [vmem:[%s5 + $0x254] sm:$0xff]
      %v1712 = vld [vmem:[%s5 + $0x25c] sm:$0xff]
      %v1713 = vld [vmem:[%s5 + $0x264] sm:$0xf]
      %v1714 = vld [vmem:[%s5 + $0x268] sm:$0xff]
      %v1715 = vld [vmem:[%s5 + $0x270] sm:$0xff]
      %v1716 = vld [vmem:[%s5 + $0x278] sm:$0xff]
      %v1717 = vld [vmem:[%s5 + $0x280] sm:$0xf]
      %v1718 = vld [vmem:[%s5 + $0x284] sm:$0xff]
      %v1719 = vld [vmem:[%s5 + $0x28c] sm:$0xff]
      %v1720 = vld [vmem:[%s5 + $0x294] sm:$0xff]
      %v1721 = vld [vmem:[%s5 + $0x29c] sm:$0xf]
      %v1722 = vld [vmem:[%s5 + $0x2a0] sm:$0xff]
      %v1723 = vld [vmem:[%s5 + $0x2a8] sm:$0xff]
      %v1724 = vld [vmem:[%s5 + $0x2b0] sm:$0xff]
      %v1725 = vld [vmem:[%s5 + $0x2b8] sm:$0xf]
      %v1726 = vld [vmem:[%s5 + $0x2bc] sm:$0xff]
      %v1727 = vld [vmem:[%s5 + $0x2c4] sm:$0xff]
      %v1728 = vld [vmem:[%s5 + $0x2cc] sm:$0xff]
      %v1729 = vld [vmem:[%s5 + $0x2d4] sm:$0xf]
      %v1730 = vld [vmem:[%s5 + $0x2d8] sm:$0xff]
      %v1731 = vld [vmem:[%s5 + $0x2e0] sm:$0xff]
      %v1732 = vld [vmem:[%s5 + $0x2e8] sm:$0xff]
      %v1733 = vld [vmem:[%s5 + $0x2f0] sm:$0xf]
      %v1734 = vld [vmem:[%s5 + $0x2f4] sm:$0xff]
      %v1735 = vld [vmem:[%s5 + $0x2fc] sm:$0xff]
      %v1736 = vld [vmem:[%s5 + $0x304] sm:$0xff]
      %v1737 = vld [vmem:[%s5 + $0x30c] sm:$0xf]
      %v1738 = vld [vmem:[%s5 + $0x310] sm:$0xff]
      %v1739 = vld [vmem:[%s5 + $0x318] sm:$0xff]
      %v1740 = vld [vmem:[%s5 + $0x320] sm:$0xff]
      %v1741 = vld [vmem:[%s5 + $0x328] sm:$0xf]
      %v1742 = vld [vmem:[%s5 + $0x32c] sm:$0xff]
      %v1743 = vld [vmem:[%s5 + $0x334] sm:$0xff]
      %v1744 = vld [vmem:[%s5 + $0x33c] sm:$0xff]
      %v1745 = vld [vmem:[%s5 + $0x344] sm:$0xf]
      %v1746 = vld [vmem:[%s5 + $0x348] sm:$0xff]
      %v1747 = vld [vmem:[%s5 + $0x350] sm:$0xff]
      %v1748 = vld [vmem:[%s5 + $0x358] sm:$0xff]
      %v1749 = vld [vmem:[%s5 + $0x360] sm:$0xf]
      %v1750 = vld [vmem:[%s5 + $0x364] sm:$0xff]
      %v1751 = vld [vmem:[%s5 + $0x36c] sm:$0xff]
      %v1752 = vld [vmem:[%s5 + $0x374] sm:$0xff]
      %v1753 = vld [vmem:[%s5 + $0x37c] sm:$0xf]
      %v1754 = vld [vmem:[%s5 + $0x380] sm:$0xff]
      %v1755 = vld [vmem:[%s5 + $0x388] sm:$0xff]
      %v1756 = vld [vmem:[%s5 + $0x390] sm:$0xff]
      %v1757 = vld [vmem:[%s5 + $0x398] sm:$0xf]
      %v1758 = vld [vmem:[%s5 + $0x39c] sm:$0xff]
      %v1759 = vld [vmem:[%s5 + $0x3a4] sm:$0xff]
      %v1760 = vld [vmem:[%s5 + $0x3ac] sm:$0xff]
      %v1761 = vld [vmem:[%s5 + $0x3b4] sm:$0xf]
      %v1762 = vld [vmem:[%s5 + $0x3b8] sm:$0xff]
      %v1763 = vld [vmem:[%s5 + $0x3c0] sm:$0xff]
      %v1764 = vld [vmem:[%s5 + $0x3c8] sm:$0xff]
      %v1765 = vld [vmem:[%s5 + $0x3d0] sm:$0xf]
      %v1766 = vld [vmem:[%s5 + $0x3d4] sm:$0xff]
      %v1767 = vld [vmem:[%s5 + $0x3dc] sm:$0xff]
      %v1768 = vld [vmem:[%s5 + $0x3e4] sm:$0xff]
      %v1769 = vld [vmem:[%s5 + $0x3ec] sm:$0xf]
      %v1770 = vld [vmem:[%s5 + $0x3f0] sm:$0xff]
      %v1771 = vld [vmem:[%s5 + $0x3f8] sm:$0xff]
      %v1772 = vld [vmem:[%s5 + $0x400] sm:$0xff]
      %v1773 = vld [vmem:[%s5 + $0x408] sm:$0xf]
      %v1774 = vld [vmem:[%s5 + $0x40c] sm:$0xff]
      %v1775 = vld [vmem:[%s5 + $0x414] sm:$0xff]
      %v1776 = vld [vmem:[%s5 + $0x41c] sm:$0xff]
      %v1777 = vld [vmem:[%s5 + $0x424] sm:$0xf]
      %v1778 = vld [vmem:[%s5 + $0x428] sm:$0xff]
      %v1779 = vld [vmem:[%s5 + $0x430] sm:$0xff]
      %v1780 = vld [vmem:[%s5 + $0x438] sm:$0xff]
      %v1781 = vld [vmem:[%s5 + $0x440] sm:$0xf]
      %v1782 = vld [vmem:[%s5 + $0x444] sm:$0xff]
      %v1783 = vld [vmem:[%s5 + $0x44c] sm:$0xff]
      %v1784 = vld [vmem:[%s5 + $0x454] sm:$0xff]
      %v1785 = vld [vmem:[%s5 + $0x45c] sm:$0xf]
      %v1786 = vld [vmem:[%s5 + $0x460] sm:$0xff]
      %v1787 = vld [vmem:[%s5 + $0x468] sm:$0xff]
      %v1788 = vld [vmem:[%s5 + $0x470] sm:$0xff]
      %v1789 = vld [vmem:[%s5 + $0x478] sm:$0xf]
      %v1790 = vld [vmem:[%s5 + $0x47c] sm:$0xff]
      %v1791 = vld [vmem:[%s5 + $0x484] sm:$0xff]
      %v1792 = vld [vmem:[%s5 + $0x48c] sm:$0xff]
      %v1793 = vld [vmem:[%s5 + $0x494] sm:$0xf]
      %v1794 = vld [vmem:[%s5 + $0x498] sm:$0xff]
      %v1795 = vld [vmem:[%s5 + $0x4a0] sm:$0xff]
      %v1796 = vld [vmem:[%s5 + $0x4a8] sm:$0xff]
      %v1797 = vld [vmem:[%s5 + $0x4b0] sm:$0xf]
      %v1798 = vld [vmem:[%s5 + $0x4b4] sm:$0xff]
      %v1799 = vld [vmem:[%s5 + $0x4bc] sm:$0xff]
      %v1800 = vld [vmem:[%s5 + $0x4c4] sm:$0xff]
      %v1801 = vld [vmem:[%s5 + $0x4cc] sm:$0xf]
      %v1802 = vld [vmem:[%s5 + $0x4d0] sm:$0xff]
      %v1803 = vld [vmem:[%s5 + $0x4d8] sm:$0xff]
      %v1804 = vld [vmem:[%s5 + $0x4e0] sm:$0xff]
      %v1805 = vld [vmem:[%s5 + $0x4e8] sm:$0xf]
      %v1806 = vld [vmem:[%s5 + $0x4ec] sm:$0xff]
      %v1807 = vld [vmem:[%s5 + $0x4f4] sm:$0xff]
      %v1808 = vld [vmem:[%s5 + $0x4fc] sm:$0xff]
      %v1809 = vld [vmem:[%s5 + $0x504] sm:$0xf]
      %v1810 = vld [vmem:[%s5 + $0x508] sm:$0xff]
      %v1811 = vld [vmem:[%s5 + $0x510] sm:$0xff]
      %v1812 = vld [vmem:[%s5 + $0x518] sm:$0xff]
      %v1813 = vld [vmem:[%s5 + $0x520] sm:$0xf]
      %v1814 = vld [vmem:[%s5 + $0x524] sm:$0xff]
      %v1815 = vld [vmem:[%s5 + $0x52c] sm:$0xff]
      %v1816 = vld [vmem:[%s5 + $0x534] sm:$0xff]
      %v1817 = vld [vmem:[%s5 + $0x53c] sm:$0xf]
      %v1818 = vld [vmem:[%s5 + $0x540] sm:$0xff]
      %v1819 = vld [vmem:[%s5 + $0x548] sm:$0xff]
      %v1820 = vld [vmem:[%s5 + $0x550] sm:$0xff]
      %v1821 = vld [vmem:[%s5 + $0x558] sm:$0xf]
      %v1822 = vld [vmem:[%s5 + $0x55c] sm:$0xff]
      %v1823 = vld [vmem:[%s5 + $0x564] sm:$0xff]
      %v1824 = vld [vmem:[%s5 + $0x56c] sm:$0xff]
      %v1825 = vld [vmem:[%s5 + $0x574] sm:$0xf]
      %v1826 = vld [vmem:[%s5 + $0x578] sm:$0xff]
      %v1827 = vld [vmem:[%s5 + $0x580] sm:$0xff]
      %v1828 = vld [vmem:[%s5 + $0x588] sm:$0xff]
      %v1829 = vld [vmem:[%s5 + $0x590] sm:$0xf]
      %v1830 = vld [vmem:[%s5 + $0x594] sm:$0xff]
      %v1831 = vld [vmem:[%s5 + $0x59c] sm:$0xff]
      %v1832 = vld [vmem:[%s5 + $0x5a4] sm:$0xff]
      %v1833 = vld [vmem:[%s5 + $0x5ac] sm:$0xf]
      %v1834 = vld [vmem:[%s5 + $0x5b0] sm:$0xff]
      %v1835 = vld [vmem:[%s5 + $0x5b8] sm:$0xff]
      %v1836 = vld [vmem:[%s5 + $0x5c0] sm:$0xff]
      %v1837 = vld [vmem:[%s5 + $0x5c8] sm:$0xf]
      %v1838 = vld [vmem:[%s5 + $0x5cc] sm:$0xff]
      %v1839 = vld [vmem:[%s5 + $0x5d4] sm:$0xff]
      %v1840 = vld [vmem:[%s5 + $0x5dc] sm:$0xff]
      %v1841 = vld [vmem:[%s5 + $0x5e4] sm:$0xf]
      %v1842 = vld [vmem:[%s5 + $0x5e8] sm:$0xff]
      %v1843 = vld [vmem:[%s5 + $0x5f0] sm:$0xff]
      %v1844 = vld [vmem:[%s5 + $0x5f8] sm:$0xff]
      %v1845 = vld [vmem:[%s5 + $0x600] sm:$0xf]
      %v1846 = vld [vmem:[%s5 + $0x604] sm:$0xff]
      %v1847 = vld [vmem:[%s5 + $0x60c] sm:$0xff]
      %v1848 = vld [vmem:[%s5 + $0x614] sm:$0xff]
      %v1849 = vld [vmem:[%s5 + $0x61c] sm:$0xf]
      %v1850 = vld [vmem:[%s5 + $0x620] sm:$0xff]
      %v1851 = vld [vmem:[%s5 + $0x628] sm:$0xff]
      %v1852 = vld [vmem:[%s5 + $0x630] sm:$0xff]
      %v1853 = vld [vmem:[%s5 + $0x638] sm:$0xf]
      %v1854 = vld [vmem:[%s5 + $0x63c] sm:$0xff]
      %v1855 = vld [vmem:[%s5 + $0x644] sm:$0xff]
      %v1856 = vld [vmem:[%s5 + $0x64c] sm:$0xff]
      %v1857 = vld [vmem:[%s5 + $0x654] sm:$0xf]
      %v1858 = vld [vmem:[%s5 + $0x658] sm:$0xff]
      %v1859 = vld [vmem:[%s5 + $0x660] sm:$0xff]
      %v1860 = vld [vmem:[%s5 + $0x668] sm:$0xff]
      %v1861 = vld [vmem:[%s5 + $0x670] sm:$0xf]
      %v1862 = vld [vmem:[%s5 + $0x674] sm:$0xff]
      %v1863 = vld [vmem:[%s5 + $0x67c] sm:$0xff]
      %v1864 = vld [vmem:[%s5 + $0x684] sm:$0xff]
      %v1865 = vld [vmem:[%s5 + $0x68c] sm:$0xf]
      %v1866 = vld [vmem:[%s5 + $0x690] sm:$0xff]
      %v1867 = vld [vmem:[%s5 + $0x698] sm:$0xff]
      %v1868 = vld [vmem:[%s5 + $0x6a0] sm:$0xff]
      %v1869 = vld [vmem:[%s5 + $0x6a8] sm:$0xf]
      %v1870 = vld [vmem:[%s5 + $0x6ac] sm:$0xff]
      %v1871 = vld [vmem:[%s5 + $0x6b4] sm:$0xff]
      %v1872 = vld [vmem:[%s5 + $0x6bc] sm:$0xff]
      %v1873 = vld [vmem:[%s5 + $0x6c4] sm:$0xf]
      %v1874 = vld [vmem:[%s5 + $0x6c8] sm:$0xff]
      %v1875 = vld [vmem:[%s5 + $0x6d0] sm:$0xff]
      %v1876 = vld [vmem:[%s5 + $0x6d8] sm:$0xff]
      %v1877 = vld [vmem:[%s5 + $0x6e0] sm:$0xf]
      %v1878 = vld [vmem:[%s5 + $0x6e4] sm:$0xff]
      %v1879 = vld [vmem:[%s5 + $0x6ec] sm:$0xff]
      %v1880 = vld [vmem:[%s5 + $0x6f4] sm:$0xff]
      %v1881 = vld [vmem:[%s5 + $0x6fc] sm:$0xf]
      %v1882 = vld [vmem:[%s5 + $0x700] sm:$0xff]
      %v1883 = vld [vmem:[%s5 + $0x708] sm:$0xff]
      %v1884 = vld [vmem:[%s5 + $0x710] sm:$0xff]
      %v1885 = vld [vmem:[%s5 + $0x718] sm:$0xf]
      %v1886 = vld [vmem:[%s5 + $0x71c] sm:$0xff]
      %v1887 = vld [vmem:[%s5 + $0x724] sm:$0xff]
      %v1888 = vld [vmem:[%s5 + $0x72c] sm:$0xff]
      %v1889 = vld [vmem:[%s5 + $0x734] sm:$0xf]
      %v1890 = vld [vmem:[%s5 + $0x738] sm:$0xff]
      %v1891 = vld [vmem:[%s5 + $0x740] sm:$0xff]
      %v1892 = vld [vmem:[%s5 + $0x748] sm:$0xff]
      %v1893 = vld [vmem:[%s5 + $0x750] sm:$0xf]
      %v1894 = vld [vmem:[%s5 + $0x754] sm:$0xff]
      %v1895 = vld [vmem:[%s5 + $0x75c] sm:$0xff]
      %v1896 = vld [vmem:[%s5 + $0x764] sm:$0xff]
      %v1897 = vld [vmem:[%s5 + $0x76c] sm:$0xf]
      %v1898 = vld [vmem:[%s5 + $0x770] sm:$0xff]
      %v1899 = vld [vmem:[%s5 + $0x778] sm:$0xff]
      %v1900 = vld [vmem:[%s5 + $0x780] sm:$0xff]
      %v1901 = vld [vmem:[%s5 + $0x788] sm:$0xf]
      %v1902 = vld [vmem:[%s5 + $0x78c] sm:$0xff]
      %v1903 = vld [vmem:[%s5 + $0x794] sm:$0xff]
      %v1904 = vld [vmem:[%s5 + $0x79c] sm:$0xff]
      %v1905 = vld [vmem:[%s5 + $0x7a4] sm:$0xf]
      %v1906 = vld [vmem:[%s5 + $0x7a8] sm:$0xff]
      %v1907 = vld [vmem:[%s5 + $0x7b0] sm:$0xff]
      %v1908 = vld [vmem:[%s5 + $0x7b8] sm:$0xff]
      %v1909 = vld [vmem:[%s5 + $0x7c0] sm:$0xf]
      %v1910 = vld [vmem:[%s5 + $0x7c4] sm:$0xff]
      %v1911 = vld [vmem:[%s5 + $0x7cc] sm:$0xff]
      %v1912 = vld [vmem:[%s5 + $0x7d4] sm:$0xff]
      %v1913 = vld [vmem:[%s5 + $0x7dc] sm:$0xf]
      %v1914 = vld [vmem:[%s5 + $0x7e0] sm:$0xff]
      %v1915 = vld [vmem:[%s5 + $0x7e8] sm:$0xff]
      %v1916 = vld [vmem:[%s5 + $0x7f0] sm:$0xff]
      %v1917 = vld [vmem:[%s5 + $0x7f8] sm:$0xf]
      %v1918 = vld [vmem:[%s5 + $0x7fc] sm:$0xff]
      %v1919 = vld [vmem:[%s5 + $0x804] sm:$0xff]
      %v1920 = vld [vmem:[%s5 + $0x80c] sm:$0xff]
      %v1921 = vld [vmem:[%s5 + $0x814] sm:$0xf]
      %v1922 = vld [vmem:[%s5 + $0x818] sm:$0xff]
      %v1923 = vld [vmem:[%s5 + $0x820] sm:$0xff]
      %v1924 = vld [vmem:[%s5 + $0x828] sm:$0xff]
      %v1925 = vld [vmem:[%s5 + $0x830] sm:$0xf]
      %v1926 = vld [vmem:[%s5 + $0x834] sm:$0xff]
      %v1927 = vld [vmem:[%s5 + $0x83c] sm:$0xff]
      %v1928 = vld [vmem:[%s5 + $0x844] sm:$0xff]
      %v1929 = vld [vmem:[%s5 + $0x84c] sm:$0xf]
      %v1930 = vld [vmem:[%s5 + $0x850] sm:$0xff]
      %v1931 = vld [vmem:[%s5 + $0x858] sm:$0xff]
      %v1932 = vld [vmem:[%s5 + $0x860] sm:$0xff]
      %v1933 = vld [vmem:[%s5 + $0x868] sm:$0xf]
      %v1934 = vld [vmem:[%s5 + $0x86c] sm:$0xff]
      %v1935 = vld [vmem:[%s5 + $0x874] sm:$0xff]
      %v1936 = vld [vmem:[%s5 + $0x87c] sm:$0xff]
      %v1937 = vld [vmem:[%s5 + $0x884] sm:$0xf]
      %v1938 = vld [vmem:[%s5 + $0x888] sm:$0xff]
      %v1939 = vld [vmem:[%s5 + $0x890] sm:$0xff]
      %v1940 = vld [vmem:[%s5 + $0x898] sm:$0xff]
      %v1941 = vld [vmem:[%s5 + $0x8a0] sm:$0xf]
      %v1942 = vld [vmem:[%s5 + $0x8a4] sm:$0xff]
      %v1943 = vld [vmem:[%s5 + $0x8ac] sm:$0xff]
      %v1944 = vld [vmem:[%s5 + $0x8b4] sm:$0xff]
      %v1945 = vld [vmem:[%s5 + $0x8bc] sm:$0xf]
      %v1946 = vld [vmem:[%s5 + $0x8c0] sm:$0xff]
      %v1947 = vld [vmem:[%s5 + $0x8c8] sm:$0xff]
      %v1948 = vld [vmem:[%s5 + $0x8d0] sm:$0xff]
      %v1949 = vld [vmem:[%s5 + $0x8d8] sm:$0xf]
      %v1950 = vld [vmem:[%s5 + $0x8dc] sm:$0xff]
      %v1951 = vld [vmem:[%s5 + $0x8e4] sm:$0xff]
      %v1952 = vld [vmem:[%s5 + $0x8ec] sm:$0xff]
      %v1953 = vld [vmem:[%s5 + $0x8f4] sm:$0xf]
      %v1954 = vld [vmem:[%s5 + $0x8f8] sm:$0xff]
      %v1955 = vld [vmem:[%s5 + $0x900] sm:$0xff]
      %v1956 = vld [vmem:[%s5 + $0x908] sm:$0xff]
      %v1957 = vld [vmem:[%s5 + $0x910] sm:$0xf]
      %v1958 = vld [vmem:[%s5 + $0x914] sm:$0xff]
      %v1959 = vld [vmem:[%s5 + $0x91c] sm:$0xff]
      %v1960 = vld [vmem:[%s5 + $0x924] sm:$0xff]
      %v1961 = vld [vmem:[%s5 + $0x92c] sm:$0xf]
      %v1962 = vld [vmem:[%s5 + $0x930] sm:$0xff]
      %v1963 = vld [vmem:[%s5 + $0x938] sm:$0xff]
      %v1964 = vld [vmem:[%s5 + $0x940] sm:$0xff]
      %v1965 = vld [vmem:[%s5 + $0x948] sm:$0xf]
      %v1966 = vld [vmem:[%s5 + $0x94c] sm:$0xff]
      %v1967 = vld [vmem:[%s5 + $0x954] sm:$0xff]
      %v1968 = vld [vmem:[%s5 + $0x95c] sm:$0xff]
      %v1969 = vld [vmem:[%s5 + $0x964] sm:$0xf]
      %v1970 = vld [vmem:[%s5 + $0x968] sm:$0xff]
      %v1971 = vld [vmem:[%s5 + $0x970] sm:$0xff]
      %v1972 = vld [vmem:[%s5 + $0x978] sm:$0xff]
      %v1973 = vld [vmem:[%s5 + $0x980] sm:$0xf]
      %v1974 = vld [vmem:[%s5 + $0x984] sm:$0xff]
      %v1975 = vld [vmem:[%s5 + $0x98c] sm:$0xff]
      %v1976 = vld [vmem:[%s5 + $0x994] sm:$0xff]
      %v1977 = vld [vmem:[%s5 + $0x99c] sm:$0xf]
      %v1978 = vld [vmem:[%s5 + $0x9a0] sm:$0xff]
      %v1979 = vld [vmem:[%s5 + $0x9a8] sm:$0xff]
      %v1980 = vld [vmem:[%s5 + $0x9b0] sm:$0xff]
      %v1981 = vld [vmem:[%s5 + $0x9b8] sm:$0xf]
      %v1982 = vld [vmem:[%s5 + $0x9bc] sm:$0xff]
      %v1983 = vld [vmem:[%s5 + $0x9c4] sm:$0xff]
      %v1984 = vld [vmem:[%s5 + $0x9cc] sm:$0xff]
      %v1985 = vld [vmem:[%s5 + $0x9d4] sm:$0xf]
      %v1986 = vld [vmem:[%s5 + $0x9d8] sm:$0xff]
      %v1987 = vld [vmem:[%s5 + $0x9e0] sm:$0xff]
      %v1988 = vld [vmem:[%s5 + $0x9e8] sm:$0xff]
      %v1989 = vld [vmem:[%s5 + $0x9f0] sm:$0xf]
      %v1990 = vld [vmem:[%s5 + $0x9f4] sm:$0xff]
      %v1991 = vld [vmem:[%s5 + $0x9fc] sm:$0xff]
      %v1992 = vld [vmem:[%s5 + $0xa04] sm:$0xff]
      %v1993 = vld [vmem:[%s5 + $0xa0c] sm:$0xf]
      %v1994 = vld [vmem:[%s5 + $0xa10] sm:$0xff]
      %v1995 = vld [vmem:[%s5 + $0xa18] sm:$0xff]
      %v1996 = vld [vmem:[%s5 + $0xa20] sm:$0xff]
      %v1997 = vld [vmem:[%s5 + $0xa28] sm:$0xf]
      %v1998 = vld [vmem:[%s5 + $0xa2c] sm:$0xff]
      %v1999 = vld [vmem:[%s5 + $0xa34] sm:$0xff]
      %v2000 = vld [vmem:[%s5 + $0xa3c] sm:$0xff]
      %v2001 = vld [vmem:[%s5 + $0xa44] sm:$0xf]
      %v2002 = vld [vmem:[%s5 + $0xa48] sm:$0xff]
      %v2003 = vld [vmem:[%s5 + $0xa50] sm:$0xff]
      %v2004 = vld [vmem:[%s5 + $0xa58] sm:$0xff]
      %v2005 = vld [vmem:[%s5 + $0xa60] sm:$0xf]
      %v2006 = vld [vmem:[%s5 + $0xa64] sm:$0xff]
      %v2007 = vld [vmem:[%s5 + $0xa6c] sm:$0xff]
      %v2008 = vld [vmem:[%s5 + $0xa74] sm:$0xff]
      %v2009 = vld [vmem:[%s5 + $0xa7c] sm:$0xf]
      %v2010 = vld [vmem:[%s5 + $0xa80] sm:$0xff]
      %v2011 = vld [vmem:[%s5 + $0xa88] sm:$0xff]
      %v2012 = vld [vmem:[%s5 + $0xa90] sm:$0xff]
      %v2013 = vld [vmem:[%s5 + $0xa98] sm:$0xf]
      %v2014 = vld [vmem:[%s5 + $0xa9c] sm:$0xff]
      %v2015 = vld [vmem:[%s5 + $0xaa4] sm:$0xff]
      %v2016 = vld [vmem:[%s5 + $0xaac] sm:$0xff]
      %v2017 = vld [vmem:[%s5 + $0xab4] sm:$0xf]
      %v2018 = vld [vmem:[%s5 + $0xab8] sm:$0xff]
      %v2019 = vld [vmem:[%s5 + $0xac0] sm:$0xff]
      %v2020 = vld [vmem:[%s5 + $0xac8] sm:$0xff]
      %v2021 = vld [vmem:[%s5 + $0xad0] sm:$0xf]
      %v2022 = vld [vmem:[%s5 + $0xad4] sm:$0xff]
      %v2023 = vld [vmem:[%s5 + $0xadc] sm:$0xff]
      %v2024 = vld [vmem:[%s5 + $0xae4] sm:$0xff]
      %v2025 = vld [vmem:[%s5 + $0xaec] sm:$0xf]
      %v2026 = vld [vmem:[%s5 + $0xaf0] sm:$0xff]
      %v2027 = vld [vmem:[%s5 + $0xaf8] sm:$0xff]
      %v2028 = vld [vmem:[%s5 + $0xb00] sm:$0xff]
      %v2029 = vld [vmem:[%s5 + $0xb08] sm:$0xf]
      %v2030 = vld [vmem:[%s5 + $0xb0c] sm:$0xff]
      %v2031 = vld [vmem:[%s5 + $0xb14] sm:$0xff]
      %v2032 = vld [vmem:[%s5 + $0xb1c] sm:$0xff]
      %v2033 = vld [vmem:[%s5 + $0xb24] sm:$0xf]
      %v2034 = vld [vmem:[%s5 + $0xb28] sm:$0xff]
      %v2035 = vld [vmem:[%s5 + $0xb30] sm:$0xff]
      %v2036 = vld [vmem:[%s5 + $0xb38] sm:$0xff]
      %v2037 = vld [vmem:[%s5 + $0xb40] sm:$0xf]
      %v2038 = vld [vmem:[%s5 + $0xb44] sm:$0xff]
      %v2039 = vld [vmem:[%s5 + $0xb4c] sm:$0xff]
      %v2040 = vld [vmem:[%s5 + $0xb54] sm:$0xff]
      %v2041 = vld [vmem:[%s5 + $0xb5c] sm:$0xf]
      %v2042 = vld [vmem:[%s5 + $0xb60] sm:$0xff]
      %v2043 = vld [vmem:[%s5 + $0xb68] sm:$0xff]
      %v2044 = vld [vmem:[%s5 + $0xb70] sm:$0xff]
      %v2045 = vld [vmem:[%s5 + $0xb78] sm:$0xf]
      %v2046 = vld [vmem:[%s5 + $0xb7c] sm:$0xff]
      %v2047 = vld [vmem:[%s5 + $0xb84] sm:$0xff]
      %v2048 = vld [vmem:[%s5 + $0xb8c] sm:$0xff]
      %v2049 = vld [vmem:[%s5 + $0xb94] sm:$0xf]
      %v2050 = vld [vmem:[%s5 + $0xb98] sm:$0xff]
      %v2051 = vld [vmem:[%s5 + $0xba0] sm:$0xff]
      %v2052 = vld [vmem:[%s5 + $0xba8] sm:$0xff]
      %v2053 = vld [vmem:[%s5 + $0xbb0] sm:$0xf]
      %v2054 = vld [vmem:[%s5 + $0xbb4] sm:$0xff]
      %v2055 = vld [vmem:[%s5 + $0xbbc] sm:$0xff]
      %v2056 = vld [vmem:[%s5 + $0xbc4] sm:$0xff]
      %v2057 = vld [vmem:[%s5 + $0xbcc] sm:$0xf]
      %v2058 = vld [vmem:[%s5 + $0xbd0] sm:$0xff]
      %v2059 = vld [vmem:[%s5 + $0xbd8] sm:$0xff]
      %v2060 = vld [vmem:[%s5 + $0xbe0] sm:$0xff]
      %v2061 = vld [vmem:[%s5 + $0xbe8] sm:$0xf]
      %v2062 = vld [vmem:[%s5 + $0xbec] sm:$0xff]
      %v2063 = vld [vmem:[%s5 + $0xbf4] sm:$0xff]
      %v2064 = vld [vmem:[%s5 + $0xbfc] sm:$0xff]
      %v2065 = vld [vmem:[%s5 + $0xc04] sm:$0xf]
      %v2066 = vld [vmem:[%s5 + $0xc08] sm:$0xff]
      %v2067 = vld [vmem:[%s5 + $0xc10] sm:$0xff]
      %v2068 = vld [vmem:[%s5 + $0xc18] sm:$0xff]
      %v2069 = vld [vmem:[%s5 + $0xc20] sm:$0xf]
      %v2070 = vld [vmem:[%s5 + $0xc24] sm:$0xff]
      %v2071 = vld [vmem:[%s5 + $0xc2c] sm:$0xff]
      %v2072 = vld [vmem:[%s5 + $0xc34] sm:$0xff]
      %v2073 = vld [vmem:[%s5 + $0xc3c] sm:$0xf]
      %v2074 = vld [vmem:[%s5 + $0xc40] sm:$0xff]
      %v2075 = vld [vmem:[%s5 + $0xc48] sm:$0xff]
      %v2076 = vld [vmem:[%s5 + $0xc50] sm:$0xff]
      %v2077 = vld [vmem:[%s5 + $0xc58] sm:$0xf]
      %v2078 = vld [vmem:[%s5 + $0xc5c] sm:$0xff]
      %v2079 = vld [vmem:[%s5 + $0xc64] sm:$0xff]
      %v2080 = vld [vmem:[%s5 + $0xc6c] sm:$0xff]
      %v2081 = vld [vmem:[%s5 + $0xc74] sm:$0xf]
      %v2082 = vld [vmem:[%s5 + $0xc78] sm:$0xff]
      %v2083 = vld [vmem:[%s5 + $0xc80] sm:$0xff]
      %v2084 = vld [vmem:[%s5 + $0xc88] sm:$0xff]
      %v2085 = vld [vmem:[%s5 + $0xc90] sm:$0xf]
      %v2086 = vld [vmem:[%s5 + $0xc94] sm:$0xff]
      %v2087 = vld [vmem:[%s5 + $0xc9c] sm:$0xff]
      %v2088 = vld [vmem:[%s5 + $0xca4] sm:$0xff]
      %v2089 = vld [vmem:[%s5 + $0xcac] sm:$0xf]
      %v2090 = vld [vmem:[%s5 + $0xcb0] sm:$0xff]
      %v2091 = vld [vmem:[%s5 + $0xcb8] sm:$0xff]
      %v2092 = vld [vmem:[%s5 + $0xcc0] sm:$0xff]
      %v2093 = vld [vmem:[%s5 + $0xcc8] sm:$0xf]
      %v2094 = vld [vmem:[%s5 + $0xccc] sm:$0xff]
      %v2095 = vld [vmem:[%s5 + $0xcd4] sm:$0xff]
      %v2096 = vld [vmem:[%s5 + $0xcdc] sm:$0xff]
      %v2097 = vld [vmem:[%s5 + $0xce4] sm:$0xf]
      %v2098 = vld [vmem:[%s5 + $0xce8] sm:$0xff]
      %v2099 = vld [vmem:[%s5 + $0xcf0] sm:$0xff]
      %v2100 = vld [vmem:[%s5 + $0xcf8] sm:$0xff]
      %v2101 = vld [vmem:[%s5 + $0xd00] sm:$0xf]
      %v2102 = vld [vmem:[%s5 + $0xd04] sm:$0xff]
      %v2103 = vld [vmem:[%s5 + $0xd0c] sm:$0xff]
      %v2104 = vld [vmem:[%s5 + $0xd14] sm:$0xff]
      %v2105 = vld [vmem:[%s5 + $0xd1c] sm:$0xf]
      %v2106 = vld [vmem:[%s5 + $0xd20] sm:$0xff]
      %v2107 = vld [vmem:[%s5 + $0xd28] sm:$0xff]
      %v2108 = vld [vmem:[%s5 + $0xd30] sm:$0xff]
      %v2109 = vld [vmem:[%s5 + $0xd38] sm:$0xf]
      %v2110 = vld [vmem:[%s5 + $0xd3c] sm:$0xff]
      %v2111 = vld [vmem:[%s5 + $0xd44] sm:$0xff]
      %v2112 = vld [vmem:[%s5 + $0xd4c] sm:$0xff]
      %v2113 = vld [vmem:[%s5 + $0xd54] sm:$0xf]
      %v2114 = vld [vmem:[%s5 + $0xd58] sm:$0xff]
      %v2115 = vld [vmem:[%s5 + $0xd60] sm:$0xff]
      %v2116 = vld [vmem:[%s5 + $0xd68] sm:$0xff]
      %v2117 = vld [vmem:[%s5 + $0xd70] sm:$0xf]
      %v2118 = vld [vmem:[%s5 + $0xd74] sm:$0xff]
      %v2119 = vld [vmem:[%s5 + $0xd7c] sm:$0xff]
      %v2120 = vld [vmem:[%s5 + $0xd84] sm:$0xff]
      %v2121 = vld [vmem:[%s5 + $0xd8c] sm:$0xf]
      %v2122 = vld [vmem:[%s5 + $0xd90] sm:$0xff]
      %v2123 = vld [vmem:[%s5 + $0xd98] sm:$0xff]
      %v2124 = vld [vmem:[%s5 + $0xda0] sm:$0xff]
      %v2125 = vld [vmem:[%s5 + $0xda8] sm:$0xf]
      %v2126 = vld [vmem:[%s5 + $0xdac] sm:$0xff]
      %v2127 = vld [vmem:[%s5 + $0xdb4] sm:$0xff]
      %v2128 = vld [vmem:[%s5 + $0xdbc] sm:$0xff]
      %v2129 = vld [vmem:[%s5 + $0xdc4] sm:$0xf]
      %v2130 = vld [vmem:[%s5 + $0xdc8] sm:$0xff]
      %v2131 = vld [vmem:[%s5 + $0xdd0] sm:$0xff]
      %v2132 = vld [vmem:[%s5 + $0xdd8] sm:$0xff]
      %v2133 = vld [vmem:[%s5 + $0xde0] sm:$0xf]
      %v2134 = vld [vmem:[%s5 + $0xde4] sm:$0xff]
      %v2135 = vld [vmem:[%s5 + $0xdec] sm:$0xff]
      %v2136 = vld [vmem:[%s5 + $0xdf4] sm:$0xff]
      %v2137 = vld [vmem:[%s5 + $0xdfc] sm:$0xf]
      %v2138 = vld [vmem:[%s5 + $0xe00] sm:$0xff]
      %v2139 = vld [vmem:[%s5 + $0xe08] sm:$0xff]
      %v2140 = vld [vmem:[%s5 + $0xe10] sm:$0xff]
      %v2141 = vld [vmem:[%s5 + $0xe18] sm:$0xf]
      %v2142 = vld [vmem:[%s5 + $0xe1c] sm:$0xff]
      %v2143 = vld [vmem:[%s5 + $0xe24] sm:$0xff]
      %v2144 = vld [vmem:[%s5 + $0xe2c] sm:$0xff]
      %v2145 = vld [vmem:[%s5 + $0xe34] sm:$0xf]
      %v2146 = vld [vmem:[%s5 + $0xe38] sm:$0xff]
      %v2147 = vld [vmem:[%s5 + $0xe40] sm:$0xff]
      %v2148 = vld [vmem:[%s5 + $0xe48] sm:$0xff]
      %v2149 = vld [vmem:[%s5 + $0xe50] sm:$0xf]
      %v2150 = vld [vmem:[%s5 + $0xe54] sm:$0xff]
      %v2151 = vld [vmem:[%s5 + $0xe5c] sm:$0xff]
      %v2152 = vld [vmem:[%s5 + $0xe64] sm:$0xff]
      %v2153 = vld [vmem:[%s5 + $0xe6c] sm:$0xf]
      %v2154 = vld [vmem:[%s5 + $0xe70] sm:$0xff]
      %v2155 = vld [vmem:[%s5 + $0xe78] sm:$0xff]
      %v2156 = vld [vmem:[%s5 + $0xe80] sm:$0xff]
      %v2157 = vld [vmem:[%s5 + $0xe88] sm:$0xf]
      %v2158 = vld [vmem:[%s5 + $0xe8c] sm:$0xff]
      %v2159 = vld [vmem:[%s5 + $0xe94] sm:$0xff]
      %v2160 = vld [vmem:[%s5 + $0xe9c] sm:$0xff]
      %v2161 = vld [vmem:[%s5 + $0xea4] sm:$0xf]
      %v2162 = vld [vmem:[%s5 + $0xea8] sm:$0xff]
      %v2163 = vld [vmem:[%s5 + $0xeb0] sm:$0xff]
      %v2164 = vld [vmem:[%s5 + $0xeb8] sm:$0xff]
      %v2165 = vld [vmem:[%s5 + $0xec0] sm:$0xf]
      %v2166 = vld [vmem:[%s5 + $0xec4] sm:$0xff]
      %v2167 = vld [vmem:[%s5 + $0xecc] sm:$0xff]
      %v2168 = vld [vmem:[%s5 + $0xed4] sm:$0xff]
      %v2169 = vld [vmem:[%s5 + $0xedc] sm:$0xf]
      %v2170 = vld [vmem:[%s5 + $0xee0] sm:$0xff]
      %v2171 = vld [vmem:[%s5 + $0xee8] sm:$0xff]
      %v2172 = vld [vmem:[%s5 + $0xef0] sm:$0xff]
      %v2173 = vld [vmem:[%s5 + $0xef8] sm:$0xf]
      %v2174 = vld [vmem:[%s5 + $0xefc] sm:$0xff]
      %v2175 = vld [vmem:[%s5 + $0xf04] sm:$0xff]
      %v2176 = vld [vmem:[%s5 + $0xf0c] sm:$0xff]
      %v2177 = vld [vmem:[%s5 + $0xf14] sm:$0xf]
      %v2178 = vld [vmem:[%s5 + $0xf18] sm:$0xff]
      %v2179 = vld [vmem:[%s5 + $0xf20] sm:$0xff]
      %v2180 = vld [vmem:[%s5 + $0xf28] sm:$0xff]
      %v2181 = vld [vmem:[%s5 + $0xf30] sm:$0xf]
      %v2182 = vld [vmem:[%s5 + $0xf34] sm:$0xff]
      %v2183 = vld [vmem:[%s5 + $0xf3c] sm:$0xff]
      %v2184 = vld [vmem:[%s5 + $0xf44] sm:$0xff]
      %v2185 = vld [vmem:[%s5 + $0xf4c] sm:$0xf]
      %v2186 = vld [vmem:[%s5 + $0xf50] sm:$0xff]
      %v2187 = vld [vmem:[%s5 + $0xf58] sm:$0xff]
      %v2188 = vld [vmem:[%s5 + $0xf60] sm:$0xff]
      %v2189 = vld [vmem:[%s5 + $0xf68] sm:$0xf]
      %v2190 = vld [vmem:[%s5 + $0xf6c] sm:$0xff]
      %v2191 = vld [vmem:[%s5 + $0xf74] sm:$0xff]
      %v2192 = vld [vmem:[%s5 + $0xf7c] sm:$0xff]
      %v2193 = vld [vmem:[%s5 + $0xf84] sm:$0xf]
      %v2194 = vld [vmem:[%s5 + $0xf88] sm:$0xff]
      %v2195 = vld [vmem:[%s5 + $0xf90] sm:$0xff]
      %v2196 = vld [vmem:[%s5 + $0xf98] sm:$0xff]
      %v2197 = vld [vmem:[%s5 + $0xfa0] sm:$0xf]
      %v2198 = vld [vmem:[%s5 + $0xfa4] sm:$0xff]
      %v2199 = vld [vmem:[%s5 + $0xfac] sm:$0xff]
      %v2200 = vld [vmem:[%s5 + $0xfb4] sm:$0xff]
      %v2201 = vld [vmem:[%s5 + $0xfbc] sm:$0xf]
      %v2202 = vld [vmem:[%s5 + $0xfc0] sm:$0xff]
      %v2203 = vld [vmem:[%s5 + $0xfc8] sm:$0xff]
      %v2204 = vld [vmem:[%s5 + $0xfd0] sm:$0xff]
      %v2205 = vld [vmem:[%s5 + $0xfd8] sm:$0xf]
      %v2206 = vld [vmem:[%s5 + $0xfdc] sm:$0xff]
      %v2207 = vld [vmem:[%s5 + $0xfe4] sm:$0xff]
      %v2208 = vld [vmem:[%s5 + $0xfec] sm:$0xff]
      %v2209 = vld [vmem:[%s5 + $0xff4] sm:$0xf]
      %v2210 = vld [vmem:[%s5 + $0xff8] sm:$0xff]
      %v2211 = vld [vmem:[%s5 + $0x1000] sm:$0xff]
      %v2212 = vld [vmem:[%s5 + $0x1008] sm:$0xff]
      %v2213 = vld [vmem:[%s5 + $0x1010] sm:$0xf]
      %v2214 = vld [vmem:[%s5 + $0x1014] sm:$0xff]
      %v2215 = vld [vmem:[%s5 + $0x101c] sm:$0xff]
      %v2216 = vld [vmem:[%s5 + $0x1024] sm:$0xff]
      %v2217 = vld [vmem:[%s5 + $0x102c] sm:$0xf]
      %v2218 = vld [vmem:[%s5 + $0x1030] sm:$0xff]
      %v2219 = vld [vmem:[%s5 + $0x1038] sm:$0xff]
      %v2220 = vld [vmem:[%s5 + $0x1040] sm:$0xff]
      %v2221 = vld [vmem:[%s5 + $0x1048] sm:$0xf]
      %v2222 = vld [vmem:[%s5 + $0x104c] sm:$0xff]
      %v2223 = vld [vmem:[%s5 + $0x1054] sm:$0xff]
      %v2224 = vld [vmem:[%s5 + $0x105c] sm:$0xff]
      %v2225 = vld [vmem:[%s5 + $0x1064] sm:$0xf]
      %v2226 = vld [vmem:[%s5 + $0x1068] sm:$0xff]
      %v2227 = vld [vmem:[%s5 + $0x1070] sm:$0xff]
      %v2228 = vld [vmem:[%s5 + $0x1078] sm:$0xff]
      %v2229 = vld [vmem:[%s5 + $0x1080] sm:$0xf]
      %v2230 = vld [vmem:[%s5 + $0x1084] sm:$0xff]
      %v2231 = vld [vmem:[%s5 + $0x108c] sm:$0xff]
      %v2232 = vld [vmem:[%s5 + $0x1094] sm:$0xff]
      %v2233 = vld [vmem:[%s5 + $0x109c] sm:$0xf]
      %v2234 = vld [vmem:[%s5 + $0x10a0] sm:$0xff]
      %v2235 = vld [vmem:[%s5 + $0x10a8] sm:$0xff]
      %v2236 = vld [vmem:[%s5 + $0x10b0] sm:$0xff]
      %v2237 = vld [vmem:[%s5 + $0x10b8] sm:$0xf]
      %v2238 = vld [vmem:[%s5 + $0x10bc] sm:$0xff]
      %v2239 = vld [vmem:[%s5 + $0x10c4] sm:$0xff]
      %v2240 = vld [vmem:[%s5 + $0x10cc] sm:$0xff]
      %v2241 = vld [vmem:[%s5 + $0x10d4] sm:$0xf]
      %v2242 = vld [vmem:[%s5 + $0x10d8] sm:$0xff]
      %v2243 = vld [vmem:[%s5 + $0x10e0] sm:$0xff]
      %v2244 = vld [vmem:[%s5 + $0x10e8] sm:$0xff]
      %v2245 = vld [vmem:[%s5 + $0x10f0] sm:$0xf]
      %v2246 = vld [vmem:[%s5 + $0x10f4] sm:$0xff]
      %v2247 = vld [vmem:[%s5 + $0x10fc] sm:$0xff]
      %v2248 = vld [vmem:[%s5 + $0x1104] sm:$0xff]
      %v2249 = vld [vmem:[%s5 + $0x110c] sm:$0xf]
      %v2250 = vld [vmem:[%s5 + $0x1110] sm:$0xff]
      %v2251 = vld [vmem:[%s5 + $0x1118] sm:$0xff]
      %v2252 = vld [vmem:[%s5 + $0x1120] sm:$0xff]
      %v2253 = vld [vmem:[%s5 + $0x1128] sm:$0xf]
      %v2254 = vld [vmem:[%s5 + $0x112c] sm:$0xff]
      %v2255 = vld [vmem:[%s5 + $0x1134] sm:$0xff]
      %v2256 = vld [vmem:[%s5 + $0x113c] sm:$0xff]
      %v2257 = vld [vmem:[%s5 + $0x1144] sm:$0xf]
      %v2258 = vld [vmem:[%s5 + $0x1148] sm:$0xff]
      %v2259 = vld [vmem:[%s5 + $0x1150] sm:$0xff]
      %v2260 = vld [vmem:[%s5 + $0x1158] sm:$0xff]
      %v2261 = vld [vmem:[%s5 + $0x1160] sm:$0xf]
      %v2262 = vld [vmem:[%s5 + $0x1164] sm:$0xff]
      %v2263 = vld [vmem:[%s5 + $0x116c] sm:$0xff]
      %v2264 = vld [vmem:[%s5 + $0x1174] sm:$0xff]
      %v2265 = vld [vmem:[%s5 + $0x117c] sm:$0xf]
      %v2266 = vld [vmem:[%s5 + $0x1180] sm:$0xff]
      %v2267 = vld [vmem:[%s5 + $0x1188] sm:$0xff]
      %v2268 = vld [vmem:[%s5 + $0x1190] sm:$0xff]
      %v2269 = vld [vmem:[%s5 + $0x1198] sm:$0xf]
      %v2270 = vld [vmem:[%s5 + $0x119c] sm:$0xff]
      %v2271 = vld [vmem:[%s5 + $0x11a4] sm:$0xff]
      %v2272 = vld [vmem:[%s5 + $0x11ac] sm:$0xff]
      %v2273 = vld [vmem:[%s5 + $0x11b4] sm:$0xf]
      %v2274 = vld [vmem:[%s5 + $0x11b8] sm:$0xff]
      %v2275 = vld [vmem:[%s5 + $0x11c0] sm:$0xff]
      %v2276 = vld [vmem:[%s5 + $0x11c8] sm:$0xff]
      %v2277 = vld [vmem:[%s5 + $0x11d0] sm:$0xf]
      %v2278 = vld [vmem:[%s5 + $0x11d4] sm:$0xff]
      %v2279 = vld [vmem:[%s5 + $0x11dc] sm:$0xff]
      %v2280 = vld [vmem:[%s5 + $0x11e4] sm:$0xff]
      %v2281 = vld [vmem:[%s5 + $0x11ec] sm:$0xf]
      %v2282 = vld [vmem:[%s5 + $0x11f0] sm:$0xff]
      %v2283 = vld [vmem:[%s5 + $0x11f8] sm:$0xff]
      %v2284 = vld [vmem:[%s5 + $0x1200] sm:$0xff]
      %v2285 = vld [vmem:[%s5 + $0x1208] sm:$0xf]
      %v2286 = vld [vmem:[%s5 + $0x120c] sm:$0xff]
      %v2287 = vld [vmem:[%s5 + $0x1214] sm:$0xff]
      %v2288 = vld [vmem:[%s5 + $0x121c] sm:$0xff]
      %v2289 = vld [vmem:[%s5 + $0x1224] sm:$0xf]
      %v2290 = vld [vmem:[%s5 + $0x1228] sm:$0xff]
      %v2291 = vld [vmem:[%s5 + $0x1230] sm:$0xff]
      %v2292 = vld [vmem:[%s5 + $0x1238] sm:$0xff]
      %v2293 = vld [vmem:[%s5 + $0x1240] sm:$0xf]
      %v2294 = vld [vmem:[%s5 + $0x1244] sm:$0xff]
      %v2295 = vld [vmem:[%s5 + $0x124c] sm:$0xff]
      %v2296 = vld [vmem:[%s5 + $0x1254] sm:$0xff]
      %v2297 = vld [vmem:[%s5 + $0x125c] sm:$0xf]
      %v2298 = vld [vmem:[%s5 + $0x1260] sm:$0xff]
      %v2299 = vld [vmem:[%s5 + $0x1268] sm:$0xff]
      %v2300 = vld [vmem:[%s5 + $0x1270] sm:$0xff]
      %v2301 = vld [vmem:[%s5 + $0x1278] sm:$0xf]
      %v2302 = vld [vmem:[%s5 + $0x127c] sm:$0xff]
      %v2303 = vld [vmem:[%s5 + $0x1284] sm:$0xff]
      %v2304 = vld [vmem:[%s5 + $0x128c] sm:$0xff]
      %v2305 = vld [vmem:[%s5 + $0x1294] sm:$0xf]
      %v2306 = vld [vmem:[%s5 + $0x1298] sm:$0xff]
      %v2307 = vld [vmem:[%s5 + $0x12a0] sm:$0xff]
      %v2308 = vld [vmem:[%s5 + $0x12a8] sm:$0xff]
      %v2309 = vld [vmem:[%s5 + $0x12b0] sm:$0xf]
      %v2310 = vld [vmem:[%s5 + $0x12b4] sm:$0xff]
      %v2311 = vld [vmem:[%s5 + $0x12bc] sm:$0xff]
      %v2312 = vld [vmem:[%s5 + $0x12c4] sm:$0xff]
      %v2313 = vld [vmem:[%s5 + $0x12cc] sm:$0xf]
      %v2314 = vld [vmem:[%s5 + $0x12d0] sm:$0xff]
      %v2315 = vld [vmem:[%s5 + $0x12d8] sm:$0xff]
      %v2316 = vld [vmem:[%s5 + $0x12e0] sm:$0xff]
      %v2317 = vld [vmem:[%s5 + $0x12e8] sm:$0xf]
      %v2318 = vld [vmem:[%s5 + $0x12ec] sm:$0xff]
      %v2319 = vld [vmem:[%s5 + $0x12f4] sm:$0xff]
      %v2320 = vld [vmem:[%s5 + $0x12fc] sm:$0xff]
      %v2321 = vld [vmem:[%s5 + $0x1304] sm:$0xf]
      %v2322 = vld [vmem:[%s5 + $0x1308] sm:$0xff]
      %v2323 = vld [vmem:[%s5 + $0x1310] sm:$0xff]
      %v2324 = vld [vmem:[%s5 + $0x1318] sm:$0xff]
      %v2325 = vld [vmem:[%s5 + $0x1320] sm:$0xf]
      %v2326 = vld [vmem:[%s5 + $0x1324] sm:$0xff]
      %v2327 = vld [vmem:[%s5 + $0x132c] sm:$0xff]
      %v2328 = vld [vmem:[%s5 + $0x1334] sm:$0xff]
      %v2329 = vld [vmem:[%s5 + $0x133c] sm:$0xf]
      %v2330 = vld [vmem:[%s5 + $0x1340] sm:$0xff]
      %v2331 = vld [vmem:[%s5 + $0x1348] sm:$0xff]
      %v2332 = vld [vmem:[%s5 + $0x1350] sm:$0xff]
      %v2333 = vld [vmem:[%s5 + $0x1358] sm:$0xf]
      %v2334 = vld [vmem:[%s5 + $0x135c] sm:$0xff]
      %v2335 = vld [vmem:[%s5 + $0x1364] sm:$0xff]
      %v2336 = vld [vmem:[%s5 + $0x136c] sm:$0xff]
      %v2337 = vld [vmem:[%s5 + $0x1374] sm:$0xf]
      %v2338 = vld [vmem:[%s5 + $0x1378] sm:$0xff]
      %v2339 = vld [vmem:[%s5 + $0x1380] sm:$0xff]
      %v2340 = vld [vmem:[%s5 + $0x1388] sm:$0xff]
      %v2341 = vld [vmem:[%s5 + $0x1390] sm:$0xf]
      %v2342 = vld [vmem:[%s5 + $0x1394] sm:$0xff]
      %v2343 = vld [vmem:[%s5 + $0x139c] sm:$0xff]
      %v2344 = vld [vmem:[%s5 + $0x13a4] sm:$0xff]
      %v2345 = vld [vmem:[%s5 + $0x13ac] sm:$0xf]
      %v2346 = vld [vmem:[%s5 + $0x13b0] sm:$0xff]
      %v2347 = vld [vmem:[%s5 + $0x13b8] sm:$0xff]
      %v2348 = vld [vmem:[%s5 + $0x13c0] sm:$0xff]
      %v2349 = vld [vmem:[%s5 + $0x13c8] sm:$0xf]
      %v2350 = vld [vmem:[%s5 + $0x13cc] sm:$0xff]
      %v2351 = vld [vmem:[%s5 + $0x13d4] sm:$0xff]
      %v2352 = vld [vmem:[%s5 + $0x13dc] sm:$0xff]
      %v2353 = vld [vmem:[%s5 + $0x13e4] sm:$0xf]
      %v2354 = vld [vmem:[%s5 + $0x13e8] sm:$0xff]
      %v2355 = vld [vmem:[%s5 + $0x13f0] sm:$0xff]
      %v2356 = vld [vmem:[%s5 + $0x13f8] sm:$0xff]
      %v2357 = vld [vmem:[%s5 + $0x1400] sm:$0xf]
      %v2358 = vld [vmem:[%s5 + $0x1404] sm:$0xff]
      %v2359 = vld [vmem:[%s5 + $0x140c] sm:$0xff]
      %v2360 = vld [vmem:[%s5 + $0x1414] sm:$0xff]
      %v2361 = vld [vmem:[%s5 + $0x141c] sm:$0xf]
      %v2362 = vld [vmem:[%s5 + $0x1420] sm:$0xff]
      %v2363 = vld [vmem:[%s5 + $0x1428] sm:$0xff]
      %v2364 = vld [vmem:[%s5 + $0x1430] sm:$0xff]
      %v2365 = vld [vmem:[%s5 + $0x1438] sm:$0xf]
      %v2366 = vld [vmem:[%s5 + $0x143c] sm:$0xff]
      %v2367 = vld [vmem:[%s5 + $0x1444] sm:$0xff]
      %v2368 = vld [vmem:[%s5 + $0x144c] sm:$0xff]
      %v2369 = vld [vmem:[%s5 + $0x1454] sm:$0xf]
      %v2370 = vld [vmem:[%s5 + $0x1458] sm:$0xff]
      %v2371 = vld [vmem:[%s5 + $0x1460] sm:$0xff]
      %v2372 = vld [vmem:[%s5 + $0x1468] sm:$0xff]
      %v2373 = vld [vmem:[%s5 + $0x1470] sm:$0xf]
      %v2374 = vld [vmem:[%s5 + $0x1474] sm:$0xff]
      %v2375 = vld [vmem:[%s5 + $0x147c] sm:$0xff]
      %v2376 = vld [vmem:[%s5 + $0x1484] sm:$0xff]
      %v2377 = vld [vmem:[%s5 + $0x148c] sm:$0xf]
      %v2378 = vld [vmem:[%s5 + $0x1490] sm:$0xff]
      %v2379 = vld [vmem:[%s5 + $0x1498] sm:$0xff]
      %v2380 = vld [vmem:[%s5 + $0x14a0] sm:$0xff]
      %v2381 = vld [vmem:[%s5 + $0x14a8] sm:$0xf]
      %v2382 = vld [vmem:[%s5 + $0x14ac] sm:$0xff]
      %v2383 = vld [vmem:[%s5 + $0x14b4] sm:$0xff]
      %v2384 = vld [vmem:[%s5 + $0x14bc] sm:$0xff]
      %v2385 = vld [vmem:[%s5 + $0x14c4] sm:$0xf]
      %v2386 = vld [vmem:[%s5 + $0x14c8] sm:$0xff]
      %v2387 = vld [vmem:[%s5 + $0x14d0] sm:$0xff]
      %v2388 = vld [vmem:[%s5 + $0x14d8] sm:$0xff]
      %v2389 = vld [vmem:[%s5 + $0x14e0] sm:$0xf]
      %v2390 = vld [vmem:[%s5 + $0x14e4] sm:$0xff]
      %v2391 = vld [vmem:[%s5 + $0x14ec] sm:$0xff]
      %v2392 = vld [vmem:[%s5 + $0x14f4] sm:$0xff]
      %v2393 = vld [vmem:[%s5 + $0x14fc] sm:$0xf]
      %v2394 = vld [vmem:[%s5 + $0x1500] sm:$0xff]
      %v2395 = vld [vmem:[%s5 + $0x1508] sm:$0xff]
      %v2396 = vld [vmem:[%s5 + $0x1510] sm:$0xff]
      %v2397 = vld [vmem:[%s5 + $0x1518] sm:$0xf]
      %v2398 = vld [vmem:[%s5 + $0x151c] sm:$0xff]
      %v2399 = vld [vmem:[%s5 + $0x1524] sm:$0xff]
      %v2400 = vld [vmem:[%s5 + $0x152c] sm:$0xff]
      %v2401 = vld [vmem:[%s5 + $0x1534] sm:$0xf]
      %v2402 = vld [vmem:[%s5 + $0x1538] sm:$0xff]
      %v2403 = vld [vmem:[%s5 + $0x1540] sm:$0xff]
      %v2404 = vld [vmem:[%s5 + $0x1548] sm:$0xff]
      %v2405 = vld [vmem:[%s5 + $0x1550] sm:$0xf]
      %v2406 = vld [vmem:[%s5 + $0x1554] sm:$0xff]
      %v2407 = vld [vmem:[%s5 + $0x155c] sm:$0xff]
      %v2408 = vld [vmem:[%s5 + $0x1564] sm:$0xff]
      %v2409 = vld [vmem:[%s5 + $0x156c] sm:$0xf]
      %v2410 = vld [vmem:[%s5 + $0x1570] sm:$0xff]
      %v2411 = vld [vmem:[%s5 + $0x1578] sm:$0xff]
      %v2412 = vld [vmem:[%s5 + $0x1580] sm:$0xff]
      %v2413 = vld [vmem:[%s5 + $0x1588] sm:$0xf]
      %v2414 = vld [vmem:[%s5 + $0x158c] sm:$0xff]
      %v2415 = vld [vmem:[%s5 + $0x1594] sm:$0xff]
      %v2416 = vld [vmem:[%s5 + $0x159c] sm:$0xff]
      %v2417 = vld [vmem:[%s5 + $0x15a4] sm:$0xf]
      %v2418 = vld [vmem:[%s5 + $0x15a8] sm:$0xff]
      %v2419 = vld [vmem:[%s5 + $0x15b0] sm:$0xff]
      %v2420 = vld [vmem:[%s5 + $0x15b8] sm:$0xff]
      %v2421 = vld [vmem:[%s5 + $0x15c0] sm:$0xf]
      %v2422 = vld [vmem:[%s5 + $0x15c4] sm:$0xff]
      %v2423 = vld [vmem:[%s5 + $0x15cc] sm:$0xff]
      %v2424 = vld [vmem:[%s5 + $0x15d4] sm:$0xff]
      %v2425 = vld [vmem:[%s5 + $0x15dc] sm:$0xf]
      %v2426 = vld [vmem:[%s6] sm:$0x7f]
      %v3227 = vunpack.c.l.b16 %v1626
      %v3228 = vunpack.c.h.b16 %v1626
      %v3229 = vunpack.c.l.b16 %v1627
      %v3230 = vunpack.c.h.b16 %v1627
      %v3231 = vunpack.c.l.b16 %v1628
      %v3232 = vunpack.c.h.b16 %v1628
      %v3233 = vunpack.c.l.b16 %v1629
      %v3234 = vunpack.c.l.b16 %v1630
      %v3235 = vunpack.c.h.b16 %v1630
      %v3236 = vunpack.c.l.b16 %v1631
      %v3237 = vunpack.c.h.b16 %v1631
      %v3238 = vunpack.c.l.b16 %v1632
      %v3239 = vunpack.c.h.b16 %v1632
      %v3240 = vunpack.c.l.b16 %v1633
      %v3241 = vunpack.c.l.b16 %v1634
      %v3242 = vunpack.c.h.b16 %v1634
      %v3243 = vunpack.c.l.b16 %v1635
      %v3244 = vunpack.c.h.b16 %v1635
      %v3245 = vunpack.c.l.b16 %v1636
      %v3246 = vunpack.c.h.b16 %v1636
      %v3247 = vunpack.c.l.b16 %v1637
      %v3248 = vunpack.c.l.b16 %v1638
      %v3249 = vunpack.c.h.b16 %v1638
      %v3250 = vunpack.c.l.b16 %v1639
      %v3251 = vunpack.c.h.b16 %v1639
      %v3252 = vunpack.c.l.b16 %v1640
      %v3253 = vunpack.c.h.b16 %v1640
      %v3254 = vunpack.c.l.b16 %v1641
      %v3255 = vunpack.c.l.b16 %v1642
      %v3256 = vunpack.c.h.b16 %v1642
      %v3257 = vunpack.c.l.b16 %v1643
      %v3258 = vunpack.c.h.b16 %v1643
      %v3259 = vunpack.c.l.b16 %v1644
      %v3260 = vunpack.c.h.b16 %v1644
      %v3261 = vunpack.c.l.b16 %v1645
      %v3262 = vunpack.c.l.b16 %v1646
      %v3263 = vunpack.c.h.b16 %v1646
      %v3264 = vunpack.c.l.b16 %v1647
      %v3265 = vunpack.c.h.b16 %v1647
      %v3266 = vunpack.c.l.b16 %v1648
      %v3267 = vunpack.c.h.b16 %v1648
      %v3268 = vunpack.c.l.b16 %v1649
      %v3269 = vunpack.c.l.b16 %v1650
      %v3270 = vunpack.c.h.b16 %v1650
      %v3271 = vunpack.c.l.b16 %v1651
      %v3272 = vunpack.c.h.b16 %v1651
      %v3273 = vunpack.c.l.b16 %v1652
      %v3274 = vunpack.c.h.b16 %v1652
      %v3275 = vunpack.c.l.b16 %v1653
      %v3276 = vunpack.c.l.b16 %v1654
      %v3277 = vunpack.c.h.b16 %v1654
      %v3278 = vunpack.c.l.b16 %v1655
      %v3279 = vunpack.c.h.b16 %v1655
      %v3280 = vunpack.c.l.b16 %v1656
      %v3281 = vunpack.c.h.b16 %v1656
      %v3282 = vunpack.c.l.b16 %v1657
      %v3283 = vunpack.c.l.b16 %v1658
      %v3284 = vunpack.c.h.b16 %v1658
      %v3285 = vunpack.c.l.b16 %v1659
      %v3286 = vunpack.c.h.b16 %v1659
      %v3287 = vunpack.c.l.b16 %v1660
      %v3288 = vunpack.c.h.b16 %v1660
      %v3289 = vunpack.c.l.b16 %v1661
      %v3290 = vunpack.c.l.b16 %v1662
      %v3291 = vunpack.c.h.b16 %v1662
      %v3292 = vunpack.c.l.b16 %v1663
      %v3293 = vunpack.c.h.b16 %v1663
      %v3294 = vunpack.c.l.b16 %v1664
      %v3295 = vunpack.c.h.b16 %v1664
      %v3296 = vunpack.c.l.b16 %v1665
      %v3297 = vunpack.c.l.b16 %v1666
      %v3298 = vunpack.c.h.b16 %v1666
      %v3299 = vunpack.c.l.b16 %v1667
      %v3300 = vunpack.c.h.b16 %v1667
      %v3301 = vunpack.c.l.b16 %v1668
      %v3302 = vunpack.c.h.b16 %v1668
      %v3303 = vunpack.c.l.b16 %v1669
      %v3304 = vunpack.c.l.b16 %v1670
      %v3305 = vunpack.c.h.b16 %v1670
      %v3306 = vunpack.c.l.b16 %v1671
      %v3307 = vunpack.c.h.b16 %v1671
      %v3308 = vunpack.c.l.b16 %v1672
      %v3309 = vunpack.c.h.b16 %v1672
      %v3310 = vunpack.c.l.b16 %v1673
      %v3311 = vunpack.c.l.b16 %v1674
      %v3312 = vunpack.c.h.b16 %v1674
      %v3313 = vunpack.c.l.b16 %v1675
      %v3314 = vunpack.c.h.b16 %v1675
      %v3315 = vunpack.c.l.b16 %v1676
      %v3316 = vunpack.c.h.b16 %v1676
      %v3317 = vunpack.c.l.b16 %v1677
      %v3318 = vunpack.c.l.b16 %v1678
      %v3319 = vunpack.c.h.b16 %v1678
      %v3320 = vunpack.c.l.b16 %v1679
      %v3321 = vunpack.c.h.b16 %v1679
      %v3322 = vunpack.c.l.b16 %v1680
      %v3323 = vunpack.c.h.b16 %v1680
      %v3324 = vunpack.c.l.b16 %v1681
      %v3325 = vunpack.c.l.b16 %v1682
      %v3326 = vunpack.c.h.b16 %v1682
      %v3327 = vunpack.c.l.b16 %v1683
      %v3328 = vunpack.c.h.b16 %v1683
      %v3329 = vunpack.c.l.b16 %v1684
      %v3330 = vunpack.c.h.b16 %v1684
      %v3331 = vunpack.c.l.b16 %v1685
      %v3332 = vunpack.c.l.b16 %v1686
      %v3333 = vunpack.c.h.b16 %v1686
      %v3334 = vunpack.c.l.b16 %v1687
      %v3335 = vunpack.c.h.b16 %v1687
      %v3336 = vunpack.c.l.b16 %v1688
      %v3337 = vunpack.c.h.b16 %v1688
      %v3338 = vunpack.c.l.b16 %v1689
      %v3339 = vunpack.c.l.b16 %v1690
      %v3340 = vunpack.c.h.b16 %v1690
      %v3341 = vunpack.c.l.b16 %v1691
      %v3342 = vunpack.c.h.b16 %v1691
      %v3343 = vunpack.c.l.b16 %v1692
      %v3344 = vunpack.c.h.b16 %v1692
      %v3345 = vunpack.c.l.b16 %v1693
      %v3346 = vunpack.c.l.b16 %v1694
      %v3347 = vunpack.c.h.b16 %v1694
      %v3348 = vunpack.c.l.b16 %v1695
      %v3349 = vunpack.c.h.b16 %v1695
      %v3350 = vunpack.c.l.b16 %v1696
      %v3351 = vunpack.c.h.b16 %v1696
      %v3352 = vunpack.c.l.b16 %v1697
      %v3353 = vunpack.c.l.b16 %v1698
      %v3354 = vunpack.c.h.b16 %v1698
      %v3355 = vunpack.c.l.b16 %v1699
      %v3356 = vunpack.c.h.b16 %v1699
      %v3357 = vunpack.c.l.b16 %v1700
      %v3358 = vunpack.c.h.b16 %v1700
      %v3359 = vunpack.c.l.b16 %v1701
      %v3360 = vunpack.c.l.b16 %v1702
      %v3361 = vunpack.c.h.b16 %v1702
      %v3362 = vunpack.c.l.b16 %v1703
      %v3363 = vunpack.c.h.b16 %v1703
      %v3364 = vunpack.c.l.b16 %v1704
      %v3365 = vunpack.c.h.b16 %v1704
      %v3366 = vunpack.c.l.b16 %v1705
      %v3367 = vunpack.c.l.b16 %v1706
      %v3368 = vunpack.c.h.b16 %v1706
      %v3369 = vunpack.c.l.b16 %v1707
      %v3370 = vunpack.c.h.b16 %v1707
      %v3371 = vunpack.c.l.b16 %v1708
      %v3372 = vunpack.c.h.b16 %v1708
      %v3373 = vunpack.c.l.b16 %v1709
      %v3374 = vunpack.c.l.b16 %v1710
      %v3375 = vunpack.c.h.b16 %v1710
      %v3376 = vunpack.c.l.b16 %v1711
      %v3377 = vunpack.c.h.b16 %v1711
      %v3378 = vunpack.c.l.b16 %v1712
      %v3379 = vunpack.c.h.b16 %v1712
      %v3380 = vunpack.c.l.b16 %v1713
      %v3381 = vunpack.c.l.b16 %v1714
      %v3382 = vunpack.c.h.b16 %v1714
      %v3383 = vunpack.c.l.b16 %v1715
      %v3384 = vunpack.c.h.b16 %v1715
      %v3385 = vunpack.c.l.b16 %v1716
      %v3386 = vunpack.c.h.b16 %v1716
      %v3387 = vunpack.c.l.b16 %v1717
      %v3388 = vunpack.c.l.b16 %v1718
      %v3389 = vunpack.c.h.b16 %v1718
      %v3390 = vunpack.c.l.b16 %v1719
      %v3391 = vunpack.c.h.b16 %v1719
      %v3392 = vunpack.c.l.b16 %v1720
      %v3393 = vunpack.c.h.b16 %v1720
      %v3394 = vunpack.c.l.b16 %v1721
      %v3395 = vunpack.c.l.b16 %v1722
      %v3396 = vunpack.c.h.b16 %v1722
      %v3397 = vunpack.c.l.b16 %v1723
      %v3398 = vunpack.c.h.b16 %v1723
      %v3399 = vunpack.c.l.b16 %v1724
      %v3400 = vunpack.c.h.b16 %v1724
      %v3401 = vunpack.c.l.b16 %v1725
      %v3402 = vunpack.c.l.b16 %v1726
      %v3403 = vunpack.c.h.b16 %v1726
      %v3404 = vunpack.c.l.b16 %v1727
      %v3405 = vunpack.c.h.b16 %v1727
      %v3406 = vunpack.c.l.b16 %v1728
      %v3407 = vunpack.c.h.b16 %v1728
      %v3408 = vunpack.c.l.b16 %v1729
      %v3409 = vunpack.c.l.b16 %v1730
      %v3410 = vunpack.c.h.b16 %v1730
      %v3411 = vunpack.c.l.b16 %v1731
      %v3412 = vunpack.c.h.b16 %v1731
      %v3413 = vunpack.c.l.b16 %v1732
      %v3414 = vunpack.c.h.b16 %v1732
      %v3415 = vunpack.c.l.b16 %v1733
      %v3416 = vunpack.c.l.b16 %v1734
      %v3417 = vunpack.c.h.b16 %v1734
      %v3418 = vunpack.c.l.b16 %v1735
      %v3419 = vunpack.c.h.b16 %v1735
      %v3420 = vunpack.c.l.b16 %v1736
      %v3421 = vunpack.c.h.b16 %v1736
      %v3422 = vunpack.c.l.b16 %v1737
      %v3423 = vunpack.c.l.b16 %v1738
      %v3424 = vunpack.c.h.b16 %v1738
      %v3425 = vunpack.c.l.b16 %v1739
      %v3426 = vunpack.c.h.b16 %v1739
      %v3427 = vunpack.c.l.b16 %v1740
      %v3428 = vunpack.c.h.b16 %v1740
      %v3429 = vunpack.c.l.b16 %v1741
      %v3430 = vunpack.c.l.b16 %v1742
      %v3431 = vunpack.c.h.b16 %v1742
      %v3432 = vunpack.c.l.b16 %v1743
      %v3433 = vunpack.c.h.b16 %v1743
      %v3434 = vunpack.c.l.b16 %v1744
      %v3435 = vunpack.c.h.b16 %v1744
      %v3436 = vunpack.c.l.b16 %v1745
      %v3437 = vunpack.c.l.b16 %v1746
      %v3438 = vunpack.c.h.b16 %v1746
      %v3439 = vunpack.c.l.b16 %v1747
      %v3440 = vunpack.c.h.b16 %v1747
      %v3441 = vunpack.c.l.b16 %v1748
      %v3442 = vunpack.c.h.b16 %v1748
      %v3443 = vunpack.c.l.b16 %v1749
      %v3444 = vunpack.c.l.b16 %v1750
      %v3445 = vunpack.c.h.b16 %v1750
      %v3446 = vunpack.c.l.b16 %v1751
      %v3447 = vunpack.c.h.b16 %v1751
      %v3448 = vunpack.c.l.b16 %v1752
      %v3449 = vunpack.c.h.b16 %v1752
      %v3450 = vunpack.c.l.b16 %v1753
      %v3451 = vunpack.c.l.b16 %v1754
      %v3452 = vunpack.c.h.b16 %v1754
      %v3453 = vunpack.c.l.b16 %v1755
      %v3454 = vunpack.c.h.b16 %v1755
      %v3455 = vunpack.c.l.b16 %v1756
      %v3456 = vunpack.c.h.b16 %v1756
      %v3457 = vunpack.c.l.b16 %v1757
      %v3458 = vunpack.c.l.b16 %v1758
      %v3459 = vunpack.c.h.b16 %v1758
      %v3460 = vunpack.c.l.b16 %v1759
      %v3461 = vunpack.c.h.b16 %v1759
      %v3462 = vunpack.c.l.b16 %v1760
      %v3463 = vunpack.c.h.b16 %v1760
      %v3464 = vunpack.c.l.b16 %v1761
      %v3465 = vunpack.c.l.b16 %v1762
      %v3466 = vunpack.c.h.b16 %v1762
      %v3467 = vunpack.c.l.b16 %v1763
      %v3468 = vunpack.c.h.b16 %v1763
      %v3469 = vunpack.c.l.b16 %v1764
      %v3470 = vunpack.c.h.b16 %v1764
      %v3471 = vunpack.c.l.b16 %v1765
      %v3472 = vunpack.c.l.b16 %v1766
      %v3473 = vunpack.c.h.b16 %v1766
      %v3474 = vunpack.c.l.b16 %v1767
      %v3475 = vunpack.c.h.b16 %v1767
      %v3476 = vunpack.c.l.b16 %v1768
      %v3477 = vunpack.c.h.b16 %v1768
      %v3478 = vunpack.c.l.b16 %v1769
      %v3479 = vunpack.c.l.b16 %v1770
      %v3480 = vunpack.c.h.b16 %v1770
      %v3481 = vunpack.c.l.b16 %v1771
      %v3482 = vunpack.c.h.b16 %v1771
      %v3483 = vunpack.c.l.b16 %v1772
      %v3484 = vunpack.c.h.b16 %v1772
      %v3485 = vunpack.c.l.b16 %v1773
      %v3486 = vunpack.c.l.b16 %v1774
      %v3487 = vunpack.c.h.b16 %v1774
      %v3488 = vunpack.c.l.b16 %v1775
      %v3489 = vunpack.c.h.b16 %v1775
      %v3490 = vunpack.c.l.b16 %v1776
      %v3491 = vunpack.c.h.b16 %v1776
      %v3492 = vunpack.c.l.b16 %v1777
      %v3493 = vunpack.c.l.b16 %v1778
      %v3494 = vunpack.c.h.b16 %v1778
      %v3495 = vunpack.c.l.b16 %v1779
      %v3496 = vunpack.c.h.b16 %v1779
      %v3497 = vunpack.c.l.b16 %v1780
      %v3498 = vunpack.c.h.b16 %v1780
      %v3499 = vunpack.c.l.b16 %v1781
      %v3500 = vunpack.c.l.b16 %v1782
      %v3501 = vunpack.c.h.b16 %v1782
      %v3502 = vunpack.c.l.b16 %v1783
      %v3503 = vunpack.c.h.b16 %v1783
      %v3504 = vunpack.c.l.b16 %v1784
      %v3505 = vunpack.c.h.b16 %v1784
      %v3506 = vunpack.c.l.b16 %v1785
      %v3507 = vunpack.c.l.b16 %v1786
      %v3508 = vunpack.c.h.b16 %v1786
      %v3509 = vunpack.c.l.b16 %v1787
      %v3510 = vunpack.c.h.b16 %v1787
      %v3511 = vunpack.c.l.b16 %v1788
      %v3512 = vunpack.c.h.b16 %v1788
      %v3513 = vunpack.c.l.b16 %v1789
      %v3514 = vunpack.c.l.b16 %v1790
      %v3515 = vunpack.c.h.b16 %v1790
      %v3516 = vunpack.c.l.b16 %v1791
      %v3517 = vunpack.c.h.b16 %v1791
      %v3518 = vunpack.c.l.b16 %v1792
      %v3519 = vunpack.c.h.b16 %v1792
      %v3520 = vunpack.c.l.b16 %v1793
      %v3521 = vunpack.c.l.b16 %v1794
      %v3522 = vunpack.c.h.b16 %v1794
      %v3523 = vunpack.c.l.b16 %v1795
      %v3524 = vunpack.c.h.b16 %v1795
      %v3525 = vunpack.c.l.b16 %v1796
      %v3526 = vunpack.c.h.b16 %v1796
      %v3527 = vunpack.c.l.b16 %v1797
      %v3528 = vunpack.c.l.b16 %v1798
      %v3529 = vunpack.c.h.b16 %v1798
      %v3530 = vunpack.c.l.b16 %v1799
      %v3531 = vunpack.c.h.b16 %v1799
      %v3532 = vunpack.c.l.b16 %v1800
      %v3533 = vunpack.c.h.b16 %v1800
      %v3534 = vunpack.c.l.b16 %v1801
      %v3535 = vunpack.c.l.b16 %v1802
      %v3536 = vunpack.c.h.b16 %v1802
      %v3537 = vunpack.c.l.b16 %v1803
      %v3538 = vunpack.c.h.b16 %v1803
      %v3539 = vunpack.c.l.b16 %v1804
      %v3540 = vunpack.c.h.b16 %v1804
      %v3541 = vunpack.c.l.b16 %v1805
      %v3542 = vunpack.c.l.b16 %v1806
      %v3543 = vunpack.c.h.b16 %v1806
      %v3544 = vunpack.c.l.b16 %v1807
      %v3545 = vunpack.c.h.b16 %v1807
      %v3546 = vunpack.c.l.b16 %v1808
      %v3547 = vunpack.c.h.b16 %v1808
      %v3548 = vunpack.c.l.b16 %v1809
      %v3549 = vunpack.c.l.b16 %v1810
      %v3550 = vunpack.c.h.b16 %v1810
      %v3551 = vunpack.c.l.b16 %v1811
      %v3552 = vunpack.c.h.b16 %v1811
      %v3553 = vunpack.c.l.b16 %v1812
      %v3554 = vunpack.c.h.b16 %v1812
      %v3555 = vunpack.c.l.b16 %v1813
      %v3556 = vunpack.c.l.b16 %v1814
      %v3557 = vunpack.c.h.b16 %v1814
      %v3558 = vunpack.c.l.b16 %v1815
      %v3559 = vunpack.c.h.b16 %v1815
      %v3560 = vunpack.c.l.b16 %v1816
      %v3561 = vunpack.c.h.b16 %v1816
      %v3562 = vunpack.c.l.b16 %v1817
      %v3563 = vunpack.c.l.b16 %v1818
      %v3564 = vunpack.c.h.b16 %v1818
      %v3565 = vunpack.c.l.b16 %v1819
      %v3566 = vunpack.c.h.b16 %v1819
      %v3567 = vunpack.c.l.b16 %v1820
      %v3568 = vunpack.c.h.b16 %v1820
      %v3569 = vunpack.c.l.b16 %v1821
      %v3570 = vunpack.c.l.b16 %v1822
      %v3571 = vunpack.c.h.b16 %v1822
      %v3572 = vunpack.c.l.b16 %v1823
      %v3573 = vunpack.c.h.b16 %v1823
      %v3574 = vunpack.c.l.b16 %v1824
      %v3575 = vunpack.c.h.b16 %v1824
      %v3576 = vunpack.c.l.b16 %v1825
      %v3577 = vunpack.c.l.b16 %v1826
      %v3578 = vunpack.c.h.b16 %v1826
      %v3579 = vunpack.c.l.b16 %v1827
      %v3580 = vunpack.c.h.b16 %v1827
      %v3581 = vunpack.c.l.b16 %v1828
      %v3582 = vunpack.c.h.b16 %v1828
      %v3583 = vunpack.c.l.b16 %v1829
      %v3584 = vunpack.c.l.b16 %v1830
      %v3585 = vunpack.c.h.b16 %v1830
      %v3586 = vunpack.c.l.b16 %v1831
      %v3587 = vunpack.c.h.b16 %v1831
      %v3588 = vunpack.c.l.b16 %v1832
      %v3589 = vunpack.c.h.b16 %v1832
      %v3590 = vunpack.c.l.b16 %v1833
      %v3591 = vunpack.c.l.b16 %v1834
      %v3592 = vunpack.c.h.b16 %v1834
      %v3593 = vunpack.c.l.b16 %v1835
      %v3594 = vunpack.c.h.b16 %v1835
      %v3595 = vunpack.c.l.b16 %v1836
      %v3596 = vunpack.c.h.b16 %v1836
      %v3597 = vunpack.c.l.b16 %v1837
      %v3598 = vunpack.c.l.b16 %v1838
      %v3599 = vunpack.c.h.b16 %v1838
      %v3600 = vunpack.c.l.b16 %v1839
      %v3601 = vunpack.c.h.b16 %v1839
      %v3602 = vunpack.c.l.b16 %v1840
      %v3603 = vunpack.c.h.b16 %v1840
      %v3604 = vunpack.c.l.b16 %v1841
      %v3605 = vunpack.c.l.b16 %v1842
      %v3606 = vunpack.c.h.b16 %v1842
      %v3607 = vunpack.c.l.b16 %v1843
      %v3608 = vunpack.c.h.b16 %v1843
      %v3609 = vunpack.c.l.b16 %v1844
      %v3610 = vunpack.c.h.b16 %v1844
      %v3611 = vunpack.c.l.b16 %v1845
      %v3612 = vunpack.c.l.b16 %v1846
      %v3613 = vunpack.c.h.b16 %v1846
      %v3614 = vunpack.c.l.b16 %v1847
      %v3615 = vunpack.c.h.b16 %v1847
      %v3616 = vunpack.c.l.b16 %v1848
      %v3617 = vunpack.c.h.b16 %v1848
      %v3618 = vunpack.c.l.b16 %v1849
      %v3619 = vunpack.c.l.b16 %v1850
      %v3620 = vunpack.c.h.b16 %v1850
      %v3621 = vunpack.c.l.b16 %v1851
      %v3622 = vunpack.c.h.b16 %v1851
      %v3623 = vunpack.c.l.b16 %v1852
      %v3624 = vunpack.c.h.b16 %v1852
      %v3625 = vunpack.c.l.b16 %v1853
      %v3626 = vunpack.c.l.b16 %v1854
      %v3627 = vunpack.c.h.b16 %v1854
      %v3628 = vunpack.c.l.b16 %v1855
      %v3629 = vunpack.c.h.b16 %v1855
      %v3630 = vunpack.c.l.b16 %v1856
      %v3631 = vunpack.c.h.b16 %v1856
      %v3632 = vunpack.c.l.b16 %v1857
      %v3633 = vunpack.c.l.b16 %v1858
      %v3634 = vunpack.c.h.b16 %v1858
      %v3635 = vunpack.c.l.b16 %v1859
      %v3636 = vunpack.c.h.b16 %v1859
      %v3637 = vunpack.c.l.b16 %v1860
      %v3638 = vunpack.c.h.b16 %v1860
      %v3639 = vunpack.c.l.b16 %v1861
      %v3640 = vunpack.c.l.b16 %v1862
      %v3641 = vunpack.c.h.b16 %v1862
      %v3642 = vunpack.c.l.b16 %v1863
      %v3643 = vunpack.c.h.b16 %v1863
      %v3644 = vunpack.c.l.b16 %v1864
      %v3645 = vunpack.c.h.b16 %v1864
      %v3646 = vunpack.c.l.b16 %v1865
      %v3647 = vunpack.c.l.b16 %v1866
      %v3648 = vunpack.c.h.b16 %v1866
      %v3649 = vunpack.c.l.b16 %v1867
      %v3650 = vunpack.c.h.b16 %v1867
      %v3651 = vunpack.c.l.b16 %v1868
      %v3652 = vunpack.c.h.b16 %v1868
      %v3653 = vunpack.c.l.b16 %v1869
      %v3654 = vunpack.c.l.b16 %v1870
      %v3655 = vunpack.c.h.b16 %v1870
      %v3656 = vunpack.c.l.b16 %v1871
      %v3657 = vunpack.c.h.b16 %v1871
      %v3658 = vunpack.c.l.b16 %v1872
      %v3659 = vunpack.c.h.b16 %v1872
      %v3660 = vunpack.c.l.b16 %v1873
      %v3661 = vunpack.c.l.b16 %v1874
      %v3662 = vunpack.c.h.b16 %v1874
      %v3663 = vunpack.c.l.b16 %v1875
      %v3664 = vunpack.c.h.b16 %v1875
      %v3665 = vunpack.c.l.b16 %v1876
      %v3666 = vunpack.c.h.b16 %v1876
      %v3667 = vunpack.c.l.b16 %v1877
      %v3668 = vunpack.c.l.b16 %v1878
      %v3669 = vunpack.c.h.b16 %v1878
      %v3670 = vunpack.c.l.b16 %v1879
      %v3671 = vunpack.c.h.b16 %v1879
      %v3672 = vunpack.c.l.b16 %v1880
      %v3673 = vunpack.c.h.b16 %v1880
      %v3674 = vunpack.c.l.b16 %v1881
      %v3675 = vunpack.c.l.b16 %v1882
      %v3676 = vunpack.c.h.b16 %v1882
      %v3677 = vunpack.c.l.b16 %v1883
      %v3678 = vunpack.c.h.b16 %v1883
      %v3679 = vunpack.c.l.b16 %v1884
      %v3680 = vunpack.c.h.b16 %v1884
      %v3681 = vunpack.c.l.b16 %v1885
      %v3682 = vunpack.c.l.b16 %v1886
      %v3683 = vunpack.c.h.b16 %v1886
      %v3684 = vunpack.c.l.b16 %v1887
      %v3685 = vunpack.c.h.b16 %v1887
      %v3686 = vunpack.c.l.b16 %v1888
      %v3687 = vunpack.c.h.b16 %v1888
      %v3688 = vunpack.c.l.b16 %v1889
      %v3689 = vunpack.c.l.b16 %v1890
      %v3690 = vunpack.c.h.b16 %v1890
      %v3691 = vunpack.c.l.b16 %v1891
      %v3692 = vunpack.c.h.b16 %v1891
      %v3693 = vunpack.c.l.b16 %v1892
      %v3694 = vunpack.c.h.b16 %v1892
      %v3695 = vunpack.c.l.b16 %v1893
      %v3696 = vunpack.c.l.b16 %v1894
      %v3697 = vunpack.c.h.b16 %v1894
      %v3698 = vunpack.c.l.b16 %v1895
      %v3699 = vunpack.c.h.b16 %v1895
      %v3700 = vunpack.c.l.b16 %v1896
      %v3701 = vunpack.c.h.b16 %v1896
      %v3702 = vunpack.c.l.b16 %v1897
      %v3703 = vunpack.c.l.b16 %v1898
      %v3704 = vunpack.c.h.b16 %v1898
      %v3705 = vunpack.c.l.b16 %v1899
      %v3706 = vunpack.c.h.b16 %v1899
      %v3707 = vunpack.c.l.b16 %v1900
      %v3708 = vunpack.c.h.b16 %v1900
      %v3709 = vunpack.c.l.b16 %v1901
      %v3710 = vunpack.c.l.b16 %v1902
      %v3711 = vunpack.c.h.b16 %v1902
      %v3712 = vunpack.c.l.b16 %v1903
      %v3713 = vunpack.c.h.b16 %v1903
      %v3714 = vunpack.c.l.b16 %v1904
      %v3715 = vunpack.c.h.b16 %v1904
      %v3716 = vunpack.c.l.b16 %v1905
      %v3717 = vunpack.c.l.b16 %v1906
      %v3718 = vunpack.c.h.b16 %v1906
      %v3719 = vunpack.c.l.b16 %v1907
      %v3720 = vunpack.c.h.b16 %v1907
      %v3721 = vunpack.c.l.b16 %v1908
      %v3722 = vunpack.c.h.b16 %v1908
      %v3723 = vunpack.c.l.b16 %v1909
      %v3724 = vunpack.c.l.b16 %v1910
      %v3725 = vunpack.c.h.b16 %v1910
      %v3726 = vunpack.c.l.b16 %v1911
      %v3727 = vunpack.c.h.b16 %v1911
      %v3728 = vunpack.c.l.b16 %v1912
      %v3729 = vunpack.c.h.b16 %v1912
      %v3730 = vunpack.c.l.b16 %v1913
      %v3731 = vunpack.c.l.b16 %v1914
      %v3732 = vunpack.c.h.b16 %v1914
      %v3733 = vunpack.c.l.b16 %v1915
      %v3734 = vunpack.c.h.b16 %v1915
      %v3735 = vunpack.c.l.b16 %v1916
      %v3736 = vunpack.c.h.b16 %v1916
      %v3737 = vunpack.c.l.b16 %v1917
      %v3738 = vunpack.c.l.b16 %v1918
      %v3739 = vunpack.c.h.b16 %v1918
      %v3740 = vunpack.c.l.b16 %v1919
      %v3741 = vunpack.c.h.b16 %v1919
      %v3742 = vunpack.c.l.b16 %v1920
      %v3743 = vunpack.c.h.b16 %v1920
      %v3744 = vunpack.c.l.b16 %v1921
      %v3745 = vunpack.c.l.b16 %v1922
      %v3746 = vunpack.c.h.b16 %v1922
      %v3747 = vunpack.c.l.b16 %v1923
      %v3748 = vunpack.c.h.b16 %v1923
      %v3749 = vunpack.c.l.b16 %v1924
      %v3750 = vunpack.c.h.b16 %v1924
      %v3751 = vunpack.c.l.b16 %v1925
      %v3752 = vunpack.c.l.b16 %v1926
      %v3753 = vunpack.c.h.b16 %v1926
      %v3754 = vunpack.c.l.b16 %v1927
      %v3755 = vunpack.c.h.b16 %v1927
      %v3756 = vunpack.c.l.b16 %v1928
      %v3757 = vunpack.c.h.b16 %v1928
      %v3758 = vunpack.c.l.b16 %v1929
      %v3759 = vunpack.c.l.b16 %v1930
      %v3760 = vunpack.c.h.b16 %v1930
      %v3761 = vunpack.c.l.b16 %v1931
      %v3762 = vunpack.c.h.b16 %v1931
      %v3763 = vunpack.c.l.b16 %v1932
      %v3764 = vunpack.c.h.b16 %v1932
      %v3765 = vunpack.c.l.b16 %v1933
      %v3766 = vunpack.c.l.b16 %v1934
      %v3767 = vunpack.c.h.b16 %v1934
      %v3768 = vunpack.c.l.b16 %v1935
      %v3769 = vunpack.c.h.b16 %v1935
      %v3770 = vunpack.c.l.b16 %v1936
      %v3771 = vunpack.c.h.b16 %v1936
      %v3772 = vunpack.c.l.b16 %v1937
      %v3773 = vunpack.c.l.b16 %v1938
      %v3774 = vunpack.c.h.b16 %v1938
      %v3775 = vunpack.c.l.b16 %v1939
      %v3776 = vunpack.c.h.b16 %v1939
      %v3777 = vunpack.c.l.b16 %v1940
      %v3778 = vunpack.c.h.b16 %v1940
      %v3779 = vunpack.c.l.b16 %v1941
      %v3780 = vunpack.c.l.b16 %v1942
      %v3781 = vunpack.c.h.b16 %v1942
      %v3782 = vunpack.c.l.b16 %v1943
      %v3783 = vunpack.c.h.b16 %v1943
      %v3784 = vunpack.c.l.b16 %v1944
      %v3785 = vunpack.c.h.b16 %v1944
      %v3786 = vunpack.c.l.b16 %v1945
      %v3787 = vunpack.c.l.b16 %v1946
      %v3788 = vunpack.c.h.b16 %v1946
      %v3789 = vunpack.c.l.b16 %v1947
      %v3790 = vunpack.c.h.b16 %v1947
      %v3791 = vunpack.c.l.b16 %v1948
      %v3792 = vunpack.c.h.b16 %v1948
      %v3793 = vunpack.c.l.b16 %v1949
      %v3794 = vunpack.c.l.b16 %v1950
      %v3795 = vunpack.c.h.b16 %v1950
      %v3796 = vunpack.c.l.b16 %v1951
      %v3797 = vunpack.c.h.b16 %v1951
      %v3798 = vunpack.c.l.b16 %v1952
      %v3799 = vunpack.c.h.b16 %v1952
      %v3800 = vunpack.c.l.b16 %v1953
      %v3801 = vunpack.c.l.b16 %v1954
      %v3802 = vunpack.c.h.b16 %v1954
      %v3803 = vunpack.c.l.b16 %v1955
      %v3804 = vunpack.c.h.b16 %v1955
      %v3805 = vunpack.c.l.b16 %v1956
      %v3806 = vunpack.c.h.b16 %v1956
      %v3807 = vunpack.c.l.b16 %v1957
      %v3808 = vunpack.c.l.b16 %v1958
      %v3809 = vunpack.c.h.b16 %v1958
      %v3810 = vunpack.c.l.b16 %v1959
      %v3811 = vunpack.c.h.b16 %v1959
      %v3812 = vunpack.c.l.b16 %v1960
      %v3813 = vunpack.c.h.b16 %v1960
      %v3814 = vunpack.c.l.b16 %v1961
      %v3815 = vunpack.c.l.b16 %v1962
      %v3816 = vunpack.c.h.b16 %v1962
      %v3817 = vunpack.c.l.b16 %v1963
      %v3818 = vunpack.c.h.b16 %v1963
      %v3819 = vunpack.c.l.b16 %v1964
      %v3820 = vunpack.c.h.b16 %v1964
      %v3821 = vunpack.c.l.b16 %v1965
      %v3822 = vunpack.c.l.b16 %v1966
      %v3823 = vunpack.c.h.b16 %v1966
      %v3824 = vunpack.c.l.b16 %v1967
      %v3825 = vunpack.c.h.b16 %v1967
      %v3826 = vunpack.c.l.b16 %v1968
      %v3827 = vunpack.c.h.b16 %v1968
      %v3828 = vunpack.c.l.b16 %v1969
      %v3829 = vunpack.c.l.b16 %v1970
      %v3830 = vunpack.c.h.b16 %v1970
      %v3831 = vunpack.c.l.b16 %v1971
      %v3832 = vunpack.c.h.b16 %v1971
      %v3833 = vunpack.c.l.b16 %v1972
      %v3834 = vunpack.c.h.b16 %v1972
      %v3835 = vunpack.c.l.b16 %v1973
      %v3836 = vunpack.c.l.b16 %v1974
      %v3837 = vunpack.c.h.b16 %v1974
      %v3838 = vunpack.c.l.b16 %v1975
      %v3839 = vunpack.c.h.b16 %v1975
      %v3840 = vunpack.c.l.b16 %v1976
      %v3841 = vunpack.c.h.b16 %v1976
      %v3842 = vunpack.c.l.b16 %v1977
      %v3843 = vunpack.c.l.b16 %v1978
      %v3844 = vunpack.c.h.b16 %v1978
      %v3845 = vunpack.c.l.b16 %v1979
      %v3846 = vunpack.c.h.b16 %v1979
      %v3847 = vunpack.c.l.b16 %v1980
      %v3848 = vunpack.c.h.b16 %v1980
      %v3849 = vunpack.c.l.b16 %v1981
      %v3850 = vunpack.c.l.b16 %v1982
      %v3851 = vunpack.c.h.b16 %v1982
      %v3852 = vunpack.c.l.b16 %v1983
      %v3853 = vunpack.c.h.b16 %v1983
      %v3854 = vunpack.c.l.b16 %v1984
      %v3855 = vunpack.c.h.b16 %v1984
      %v3856 = vunpack.c.l.b16 %v1985
      %v3857 = vunpack.c.l.b16 %v1986
      %v3858 = vunpack.c.h.b16 %v1986
      %v3859 = vunpack.c.l.b16 %v1987
      %v3860 = vunpack.c.h.b16 %v1987
      %v3861 = vunpack.c.l.b16 %v1988
      %v3862 = vunpack.c.h.b16 %v1988
      %v3863 = vunpack.c.l.b16 %v1989
      %v3864 = vunpack.c.l.b16 %v1990
      %v3865 = vunpack.c.h.b16 %v1990
      %v3866 = vunpack.c.l.b16 %v1991
      %v3867 = vunpack.c.h.b16 %v1991
      %v3868 = vunpack.c.l.b16 %v1992
      %v3869 = vunpack.c.h.b16 %v1992
      %v3870 = vunpack.c.l.b16 %v1993
      %v3871 = vunpack.c.l.b16 %v1994
      %v3872 = vunpack.c.h.b16 %v1994
      %v3873 = vunpack.c.l.b16 %v1995
      %v3874 = vunpack.c.h.b16 %v1995
      %v3875 = vunpack.c.l.b16 %v1996
      %v3876 = vunpack.c.h.b16 %v1996
      %v3877 = vunpack.c.l.b16 %v1997
      %v3878 = vunpack.c.l.b16 %v1998
      %v3879 = vunpack.c.h.b16 %v1998
      %v3880 = vunpack.c.l.b16 %v1999
      %v3881 = vunpack.c.h.b16 %v1999
      %v3882 = vunpack.c.l.b16 %v2000
      %v3883 = vunpack.c.h.b16 %v2000
      %v3884 = vunpack.c.l.b16 %v2001
      %v3885 = vunpack.c.l.b16 %v2002
      %v3886 = vunpack.c.h.b16 %v2002
      %v3887 = vunpack.c.l.b16 %v2003
      %v3888 = vunpack.c.h.b16 %v2003
      %v3889 = vunpack.c.l.b16 %v2004
      %v3890 = vunpack.c.h.b16 %v2004
      %v3891 = vunpack.c.l.b16 %v2005
      %v3892 = vunpack.c.l.b16 %v2006
      %v3893 = vunpack.c.h.b16 %v2006
      %v3894 = vunpack.c.l.b16 %v2007
      %v3895 = vunpack.c.h.b16 %v2007
      %v3896 = vunpack.c.l.b16 %v2008
      %v3897 = vunpack.c.h.b16 %v2008
      %v3898 = vunpack.c.l.b16 %v2009
      %v3899 = vunpack.c.l.b16 %v2010
      %v3900 = vunpack.c.h.b16 %v2010
      %v3901 = vunpack.c.l.b16 %v2011
      %v3902 = vunpack.c.h.b16 %v2011
      %v3903 = vunpack.c.l.b16 %v2012
      %v3904 = vunpack.c.h.b16 %v2012
      %v3905 = vunpack.c.l.b16 %v2013
      %v3906 = vunpack.c.l.b16 %v2014
      %v3907 = vunpack.c.h.b16 %v2014
      %v3908 = vunpack.c.l.b16 %v2015
      %v3909 = vunpack.c.h.b16 %v2015
      %v3910 = vunpack.c.l.b16 %v2016
      %v3911 = vunpack.c.h.b16 %v2016
      %v3912 = vunpack.c.l.b16 %v2017
      %v3913 = vunpack.c.l.b16 %v2018
      %v3914 = vunpack.c.h.b16 %v2018
      %v3915 = vunpack.c.l.b16 %v2019
      %v3916 = vunpack.c.h.b16 %v2019
      %v3917 = vunpack.c.l.b16 %v2020
      %v3918 = vunpack.c.h.b16 %v2020
      %v3919 = vunpack.c.l.b16 %v2021
      %v3920 = vunpack.c.l.b16 %v2022
      %v3921 = vunpack.c.h.b16 %v2022
      %v3922 = vunpack.c.l.b16 %v2023
      %v3923 = vunpack.c.h.b16 %v2023
      %v3924 = vunpack.c.l.b16 %v2024
      %v3925 = vunpack.c.h.b16 %v2024
      %v3926 = vunpack.c.l.b16 %v2025
      %v3927 = vunpack.c.l.b16 %v2026
      %v3928 = vunpack.c.h.b16 %v2026
      %v3929 = vunpack.c.l.b16 %v2027
      %v3930 = vunpack.c.h.b16 %v2027
      %v3931 = vunpack.c.l.b16 %v2028
      %v3932 = vunpack.c.h.b16 %v2028
      %v3933 = vunpack.c.l.b16 %v2029
      %v3934 = vunpack.c.l.b16 %v2030
      %v3935 = vunpack.c.h.b16 %v2030
      %v3936 = vunpack.c.l.b16 %v2031
      %v3937 = vunpack.c.h.b16 %v2031
      %v3938 = vunpack.c.l.b16 %v2032
      %v3939 = vunpack.c.h.b16 %v2032
      %v3940 = vunpack.c.l.b16 %v2033
      %v3941 = vunpack.c.l.b16 %v2034
      %v3942 = vunpack.c.h.b16 %v2034
      %v3943 = vunpack.c.l.b16 %v2035
      %v3944 = vunpack.c.h.b16 %v2035
      %v3945 = vunpack.c.l.b16 %v2036
      %v3946 = vunpack.c.h.b16 %v2036
      %v3947 = vunpack.c.l.b16 %v2037
      %v3948 = vunpack.c.l.b16 %v2038
      %v3949 = vunpack.c.h.b16 %v2038
      %v3950 = vunpack.c.l.b16 %v2039
      %v3951 = vunpack.c.h.b16 %v2039
      %v3952 = vunpack.c.l.b16 %v2040
      %v3953 = vunpack.c.h.b16 %v2040
      %v3954 = vunpack.c.l.b16 %v2041
      %v3955 = vunpack.c.l.b16 %v2042
      %v3956 = vunpack.c.h.b16 %v2042
      %v3957 = vunpack.c.l.b16 %v2043
      %v3958 = vunpack.c.h.b16 %v2043
      %v3959 = vunpack.c.l.b16 %v2044
      %v3960 = vunpack.c.h.b16 %v2044
      %v3961 = vunpack.c.l.b16 %v2045
      %v3962 = vunpack.c.l.b16 %v2046
      %v3963 = vunpack.c.h.b16 %v2046
      %v3964 = vunpack.c.l.b16 %v2047
      %v3965 = vunpack.c.h.b16 %v2047
      %v3966 = vunpack.c.l.b16 %v2048
      %v3967 = vunpack.c.h.b16 %v2048
      %v3968 = vunpack.c.l.b16 %v2049
      %v3969 = vunpack.c.l.b16 %v2050
      %v3970 = vunpack.c.h.b16 %v2050
      %v3971 = vunpack.c.l.b16 %v2051
      %v3972 = vunpack.c.h.b16 %v2051
      %v3973 = vunpack.c.l.b16 %v2052
      %v3974 = vunpack.c.h.b16 %v2052
      %v3975 = vunpack.c.l.b16 %v2053
      %v3976 = vunpack.c.l.b16 %v2054
      %v3977 = vunpack.c.h.b16 %v2054
      %v3978 = vunpack.c.l.b16 %v2055
      %v3979 = vunpack.c.h.b16 %v2055
      %v3980 = vunpack.c.l.b16 %v2056
      %v3981 = vunpack.c.h.b16 %v2056
      %v3982 = vunpack.c.l.b16 %v2057
      %v3983 = vunpack.c.l.b16 %v2058
      %v3984 = vunpack.c.h.b16 %v2058
      %v3985 = vunpack.c.l.b16 %v2059
      %v3986 = vunpack.c.h.b16 %v2059
      %v3987 = vunpack.c.l.b16 %v2060
      %v3988 = vunpack.c.h.b16 %v2060
      %v3989 = vunpack.c.l.b16 %v2061
      %v3990 = vunpack.c.l.b16 %v2062
      %v3991 = vunpack.c.h.b16 %v2062
      %v3992 = vunpack.c.l.b16 %v2063
      %v3993 = vunpack.c.h.b16 %v2063
      %v3994 = vunpack.c.l.b16 %v2064
      %v3995 = vunpack.c.h.b16 %v2064
      %v3996 = vunpack.c.l.b16 %v2065
      %v3997 = vunpack.c.l.b16 %v2066
      %v3998 = vunpack.c.h.b16 %v2066
      %v3999 = vunpack.c.l.b16 %v2067
      %v4000 = vunpack.c.h.b16 %v2067
      %v4001 = vunpack.c.l.b16 %v2068
      %v4002 = vunpack.c.h.b16 %v2068
      %v4003 = vunpack.c.l.b16 %v2069
      %v4004 = vunpack.c.l.b16 %v2070
      %v4005 = vunpack.c.h.b16 %v2070
      %v4006 = vunpack.c.l.b16 %v2071
      %v4007 = vunpack.c.h.b16 %v2071
      %v4008 = vunpack.c.l.b16 %v2072
      %v4009 = vunpack.c.h.b16 %v2072
      %v4010 = vunpack.c.l.b16 %v2073
      %v4011 = vunpack.c.l.b16 %v2074
      %v4012 = vunpack.c.h.b16 %v2074
      %v4013 = vunpack.c.l.b16 %v2075
      %v4014 = vunpack.c.h.b16 %v2075
      %v4015 = vunpack.c.l.b16 %v2076
      %v4016 = vunpack.c.h.b16 %v2076
      %v4017 = vunpack.c.l.b16 %v2077
      %v4018 = vunpack.c.l.b16 %v2078
      %v4019 = vunpack.c.h.b16 %v2078
      %v4020 = vunpack.c.l.b16 %v2079
      %v4021 = vunpack.c.h.b16 %v2079
      %v4022 = vunpack.c.l.b16 %v2080
      %v4023 = vunpack.c.h.b16 %v2080
      %v4024 = vunpack.c.l.b16 %v2081
      %v4025 = vunpack.c.l.b16 %v2082
      %v4026 = vunpack.c.h.b16 %v2082
      %v4027 = vunpack.c.l.b16 %v2083
      %v4028 = vunpack.c.h.b16 %v2083
      %v4029 = vunpack.c.l.b16 %v2084
      %v4030 = vunpack.c.h.b16 %v2084
      %v4031 = vunpack.c.l.b16 %v2085
      %v4032 = vunpack.c.l.b16 %v2086
      %v4033 = vunpack.c.h.b16 %v2086
      %v4034 = vunpack.c.l.b16 %v2087
      %v4035 = vunpack.c.h.b16 %v2087
      %v4036 = vunpack.c.l.b16 %v2088
      %v4037 = vunpack.c.h.b16 %v2088
      %v4038 = vunpack.c.l.b16 %v2089
      %v4039 = vunpack.c.l.b16 %v2090
      %v4040 = vunpack.c.h.b16 %v2090
      %v4041 = vunpack.c.l.b16 %v2091
      %v4042 = vunpack.c.h.b16 %v2091
      %v4043 = vunpack.c.l.b16 %v2092
      %v4044 = vunpack.c.h.b16 %v2092
      %v4045 = vunpack.c.l.b16 %v2093
      %v4046 = vunpack.c.l.b16 %v2094
      %v4047 = vunpack.c.h.b16 %v2094
      %v4048 = vunpack.c.l.b16 %v2095
      %v4049 = vunpack.c.h.b16 %v2095
      %v4050 = vunpack.c.l.b16 %v2096
      %v4051 = vunpack.c.h.b16 %v2096
      %v4052 = vunpack.c.l.b16 %v2097
      %v4053 = vunpack.c.l.b16 %v2098
      %v4054 = vunpack.c.h.b16 %v2098
      %v4055 = vunpack.c.l.b16 %v2099
      %v4056 = vunpack.c.h.b16 %v2099
      %v4057 = vunpack.c.l.b16 %v2100
      %v4058 = vunpack.c.h.b16 %v2100
      %v4059 = vunpack.c.l.b16 %v2101
      %v4060 = vunpack.c.l.b16 %v2102
      %v4061 = vunpack.c.h.b16 %v2102
      %v4062 = vunpack.c.l.b16 %v2103
      %v4063 = vunpack.c.h.b16 %v2103
      %v4064 = vunpack.c.l.b16 %v2104
      %v4065 = vunpack.c.h.b16 %v2104
      %v4066 = vunpack.c.l.b16 %v2105
      %v4067 = vunpack.c.l.b16 %v2106
      %v4068 = vunpack.c.h.b16 %v2106
      %v4069 = vunpack.c.l.b16 %v2107
      %v4070 = vunpack.c.h.b16 %v2107
      %v4071 = vunpack.c.l.b16 %v2108
      %v4072 = vunpack.c.h.b16 %v2108
      %v4073 = vunpack.c.l.b16 %v2109
      %v4074 = vunpack.c.l.b16 %v2110
      %v4075 = vunpack.c.h.b16 %v2110
      %v4076 = vunpack.c.l.b16 %v2111
      %v4077 = vunpack.c.h.b16 %v2111
      %v4078 = vunpack.c.l.b16 %v2112
      %v4079 = vunpack.c.h.b16 %v2112
      %v4080 = vunpack.c.l.b16 %v2113
      %v4081 = vunpack.c.l.b16 %v2114
      %v4082 = vunpack.c.h.b16 %v2114
      %v4083 = vunpack.c.l.b16 %v2115
      %v4084 = vunpack.c.h.b16 %v2115
      %v4085 = vunpack.c.l.b16 %v2116
      %v4086 = vunpack.c.h.b16 %v2116
      %v4087 = vunpack.c.l.b16 %v2117
      %v4088 = vunpack.c.l.b16 %v2118
      %v4089 = vunpack.c.h.b16 %v2118
      %v4090 = vunpack.c.l.b16 %v2119
      %v4091 = vunpack.c.h.b16 %v2119
      %v4092 = vunpack.c.l.b16 %v2120
      %v4093 = vunpack.c.h.b16 %v2120
      %v4094 = vunpack.c.l.b16 %v2121
      %v4095 = vunpack.c.l.b16 %v2122
      %v4096 = vunpack.c.h.b16 %v2122
      %v4097 = vunpack.c.l.b16 %v2123
      %v4098 = vunpack.c.h.b16 %v2123
      %v4099 = vunpack.c.l.b16 %v2124
      %v4100 = vunpack.c.h.b16 %v2124
      %v4101 = vunpack.c.l.b16 %v2125
      %v4102 = vunpack.c.l.b16 %v2126
      %v4103 = vunpack.c.h.b16 %v2126
      %v4104 = vunpack.c.l.b16 %v2127
      %v4105 = vunpack.c.h.b16 %v2127
      %v4106 = vunpack.c.l.b16 %v2128
      %v4107 = vunpack.c.h.b16 %v2128
      %v4108 = vunpack.c.l.b16 %v2129
      %v4109 = vunpack.c.l.b16 %v2130
      %v4110 = vunpack.c.h.b16 %v2130
      %v4111 = vunpack.c.l.b16 %v2131
      %v4112 = vunpack.c.h.b16 %v2131
      %v4113 = vunpack.c.l.b16 %v2132
      %v4114 = vunpack.c.h.b16 %v2132
      %v4115 = vunpack.c.l.b16 %v2133
      %v4116 = vunpack.c.l.b16 %v2134
      %v4117 = vunpack.c.h.b16 %v2134
      %v4118 = vunpack.c.l.b16 %v2135
      %v4119 = vunpack.c.h.b16 %v2135
      %v4120 = vunpack.c.l.b16 %v2136
      %v4121 = vunpack.c.h.b16 %v2136
      %v4122 = vunpack.c.l.b16 %v2137
      %v4123 = vunpack.c.l.b16 %v2138
      %v4124 = vunpack.c.h.b16 %v2138
      %v4125 = vunpack.c.l.b16 %v2139
      %v4126 = vunpack.c.h.b16 %v2139
      %v4127 = vunpack.c.l.b16 %v2140
      %v4128 = vunpack.c.h.b16 %v2140
      %v4129 = vunpack.c.l.b16 %v2141
      %v4130 = vunpack.c.l.b16 %v2142
      %v4131 = vunpack.c.h.b16 %v2142
      %v4132 = vunpack.c.l.b16 %v2143
      %v4133 = vunpack.c.h.b16 %v2143
      %v4134 = vunpack.c.l.b16 %v2144
      %v4135 = vunpack.c.h.b16 %v2144
      %v4136 = vunpack.c.l.b16 %v2145
      %v4137 = vunpack.c.l.b16 %v2146
      %v4138 = vunpack.c.h.b16 %v2146
      %v4139 = vunpack.c.l.b16 %v2147
      %v4140 = vunpack.c.h.b16 %v2147
      %v4141 = vunpack.c.l.b16 %v2148
      %v4142 = vunpack.c.h.b16 %v2148
      %v4143 = vunpack.c.l.b16 %v2149
      %v4144 = vunpack.c.l.b16 %v2150
      %v4145 = vunpack.c.h.b16 %v2150
      %v4146 = vunpack.c.l.b16 %v2151
      %v4147 = vunpack.c.h.b16 %v2151
      %v4148 = vunpack.c.l.b16 %v2152
      %v4149 = vunpack.c.h.b16 %v2152
      %v4150 = vunpack.c.l.b16 %v2153
      %v4151 = vunpack.c.l.b16 %v2154
      %v4152 = vunpack.c.h.b16 %v2154
      %v4153 = vunpack.c.l.b16 %v2155
      %v4154 = vunpack.c.h.b16 %v2155
      %v4155 = vunpack.c.l.b16 %v2156
      %v4156 = vunpack.c.h.b16 %v2156
      %v4157 = vunpack.c.l.b16 %v2157
      %v4158 = vunpack.c.l.b16 %v2158
      %v4159 = vunpack.c.h.b16 %v2158
      %v4160 = vunpack.c.l.b16 %v2159
      %v4161 = vunpack.c.h.b16 %v2159
      %v4162 = vunpack.c.l.b16 %v2160
      %v4163 = vunpack.c.h.b16 %v2160
      %v4164 = vunpack.c.l.b16 %v2161
      %v4165 = vunpack.c.l.b16 %v2162
      %v4166 = vunpack.c.h.b16 %v2162
      %v4167 = vunpack.c.l.b16 %v2163
      %v4168 = vunpack.c.h.b16 %v2163
      %v4169 = vunpack.c.l.b16 %v2164
      %v4170 = vunpack.c.h.b16 %v2164
      %v4171 = vunpack.c.l.b16 %v2165
      %v4172 = vunpack.c.l.b16 %v2166
      %v4173 = vunpack.c.h.b16 %v2166
      %v4174 = vunpack.c.l.b16 %v2167
      %v4175 = vunpack.c.h.b16 %v2167
      %v4176 = vunpack.c.l.b16 %v2168
      %v4177 = vunpack.c.h.b16 %v2168
      %v4178 = vunpack.c.l.b16 %v2169
      %v4179 = vunpack.c.l.b16 %v2170
      %v4180 = vunpack.c.h.b16 %v2170
      %v4181 = vunpack.c.l.b16 %v2171
      %v4182 = vunpack.c.h.b16 %v2171
      %v4183 = vunpack.c.l.b16 %v2172
      %v4184 = vunpack.c.h.b16 %v2172
      %v4185 = vunpack.c.l.b16 %v2173
      %v4186 = vunpack.c.l.b16 %v2174
      %v4187 = vunpack.c.h.b16 %v2174
      %v4188 = vunpack.c.l.b16 %v2175
      %v4189 = vunpack.c.h.b16 %v2175
      %v4190 = vunpack.c.l.b16 %v2176
      %v4191 = vunpack.c.h.b16 %v2176
      %v4192 = vunpack.c.l.b16 %v2177
      %v4193 = vunpack.c.l.b16 %v2178
      %v4194 = vunpack.c.h.b16 %v2178
      %v4195 = vunpack.c.l.b16 %v2179
      %v4196 = vunpack.c.h.b16 %v2179
      %v4197 = vunpack.c.l.b16 %v2180
      %v4198 = vunpack.c.h.b16 %v2180
      %v4199 = vunpack.c.l.b16 %v2181
      %v4200 = vunpack.c.l.b16 %v2182
      %v4201 = vunpack.c.h.b16 %v2182
      %v4202 = vunpack.c.l.b16 %v2183
      %v4203 = vunpack.c.h.b16 %v2183
      %v4204 = vunpack.c.l.b16 %v2184
      %v4205 = vunpack.c.h.b16 %v2184
      %v4206 = vunpack.c.l.b16 %v2185
      %v4207 = vunpack.c.l.b16 %v2186
      %v4208 = vunpack.c.h.b16 %v2186
      %v4209 = vunpack.c.l.b16 %v2187
      %v4210 = vunpack.c.h.b16 %v2187
      %v4211 = vunpack.c.l.b16 %v2188
      %v4212 = vunpack.c.h.b16 %v2188
      %v4213 = vunpack.c.l.b16 %v2189
      %v4214 = vunpack.c.l.b16 %v2190
      %v4215 = vunpack.c.h.b16 %v2190
      %v4216 = vunpack.c.l.b16 %v2191
      %v4217 = vunpack.c.h.b16 %v2191
      %v4218 = vunpack.c.l.b16 %v2192
      %v4219 = vunpack.c.h.b16 %v2192
      %v4220 = vunpack.c.l.b16 %v2193
      %v4221 = vunpack.c.l.b16 %v2194
      %v4222 = vunpack.c.h.b16 %v2194
      %v4223 = vunpack.c.l.b16 %v2195
      %v4224 = vunpack.c.h.b16 %v2195
      %v4225 = vunpack.c.l.b16 %v2196
      %v4226 = vunpack.c.h.b16 %v2196
      %v4227 = vunpack.c.l.b16 %v2197
      %v4228 = vunpack.c.l.b16 %v2198
      %v4229 = vunpack.c.h.b16 %v2198
      %v4230 = vunpack.c.l.b16 %v2199
      %v4231 = vunpack.c.h.b16 %v2199
      %v4232 = vunpack.c.l.b16 %v2200
      %v4233 = vunpack.c.h.b16 %v2200
      %v4234 = vunpack.c.l.b16 %v2201
      %v4235 = vunpack.c.l.b16 %v2202
      %v4236 = vunpack.c.h.b16 %v2202
      %v4237 = vunpack.c.l.b16 %v2203
      %v4238 = vunpack.c.h.b16 %v2203
      %v4239 = vunpack.c.l.b16 %v2204
      %v4240 = vunpack.c.h.b16 %v2204
      %v4241 = vunpack.c.l.b16 %v2205
      %v4242 = vunpack.c.l.b16 %v2206
      %v4243 = vunpack.c.h.b16 %v2206
      %v4244 = vunpack.c.l.b16 %v2207
      %v4245 = vunpack.c.h.b16 %v2207
      %v4246 = vunpack.c.l.b16 %v2208
      %v4247 = vunpack.c.h.b16 %v2208
      %v4248 = vunpack.c.l.b16 %v2209
      %v4249 = vunpack.c.l.b16 %v2210
      %v4250 = vunpack.c.h.b16 %v2210
      %v4251 = vunpack.c.l.b16 %v2211
      %v4252 = vunpack.c.h.b16 %v2211
      %v4253 = vunpack.c.l.b16 %v2212
      %v4254 = vunpack.c.h.b16 %v2212
      %v4255 = vunpack.c.l.b16 %v2213
      %v4256 = vunpack.c.l.b16 %v2214
      %v4257 = vunpack.c.h.b16 %v2214
      %v4258 = vunpack.c.l.b16 %v2215
      %v4259 = vunpack.c.h.b16 %v2215
      %v4260 = vunpack.c.l.b16 %v2216
      %v4261 = vunpack.c.h.b16 %v2216
      %v4262 = vunpack.c.l.b16 %v2217
      %v4263 = vunpack.c.l.b16 %v2218
      %v4264 = vunpack.c.h.b16 %v2218
      %v4265 = vunpack.c.l.b16 %v2219
      %v4266 = vunpack.c.h.b16 %v2219
      %v4267 = vunpack.c.l.b16 %v2220
      %v4268 = vunpack.c.h.b16 %v2220
      %v4269 = vunpack.c.l.b16 %v2221
      %v4270 = vunpack.c.l.b16 %v2222
      %v4271 = vunpack.c.h.b16 %v2222
      %v4272 = vunpack.c.l.b16 %v2223
      %v4273 = vunpack.c.h.b16 %v2223
      %v4274 = vunpack.c.l.b16 %v2224
      %v4275 = vunpack.c.h.b16 %v2224
      %v4276 = vunpack.c.l.b16 %v2225
      %v4277 = vunpack.c.l.b16 %v2226
      %v4278 = vunpack.c.h.b16 %v2226
      %v4279 = vunpack.c.l.b16 %v2227
      %v4280 = vunpack.c.h.b16 %v2227
      %v4281 = vunpack.c.l.b16 %v2228
      %v4282 = vunpack.c.h.b16 %v2228
      %v4283 = vunpack.c.l.b16 %v2229
      %v4284 = vunpack.c.l.b16 %v2230
      %v4285 = vunpack.c.h.b16 %v2230
      %v4286 = vunpack.c.l.b16 %v2231
      %v4287 = vunpack.c.h.b16 %v2231
      %v4288 = vunpack.c.l.b16 %v2232
      %v4289 = vunpack.c.h.b16 %v2232
      %v4290 = vunpack.c.l.b16 %v2233
      %v4291 = vunpack.c.l.b16 %v2234
      %v4292 = vunpack.c.h.b16 %v2234
      %v4293 = vunpack.c.l.b16 %v2235
      %v4294 = vunpack.c.h.b16 %v2235
      %v4295 = vunpack.c.l.b16 %v2236
      %v4296 = vunpack.c.h.b16 %v2236
      %v4297 = vunpack.c.l.b16 %v2237
      %v4298 = vunpack.c.l.b16 %v2238
      %v4299 = vunpack.c.h.b16 %v2238
      %v4300 = vunpack.c.l.b16 %v2239
      %v4301 = vunpack.c.h.b16 %v2239
      %v4302 = vunpack.c.l.b16 %v2240
      %v4303 = vunpack.c.h.b16 %v2240
      %v4304 = vunpack.c.l.b16 %v2241
      %v4305 = vunpack.c.l.b16 %v2242
      %v4306 = vunpack.c.h.b16 %v2242
      %v4307 = vunpack.c.l.b16 %v2243
      %v4308 = vunpack.c.h.b16 %v2243
      %v4309 = vunpack.c.l.b16 %v2244
      %v4310 = vunpack.c.h.b16 %v2244
      %v4311 = vunpack.c.l.b16 %v2245
      %v4312 = vunpack.c.l.b16 %v2246
      %v4313 = vunpack.c.h.b16 %v2246
      %v4314 = vunpack.c.l.b16 %v2247
      %v4315 = vunpack.c.h.b16 %v2247
      %v4316 = vunpack.c.l.b16 %v2248
      %v4317 = vunpack.c.h.b16 %v2248
      %v4318 = vunpack.c.l.b16 %v2249
      %v4319 = vunpack.c.l.b16 %v2250
      %v4320 = vunpack.c.h.b16 %v2250
      %v4321 = vunpack.c.l.b16 %v2251
      %v4322 = vunpack.c.h.b16 %v2251
      %v4323 = vunpack.c.l.b16 %v2252
      %v4324 = vunpack.c.h.b16 %v2252
      %v4325 = vunpack.c.l.b16 %v2253
      %v4326 = vunpack.c.l.b16 %v2254
      %v4327 = vunpack.c.h.b16 %v2254
      %v4328 = vunpack.c.l.b16 %v2255
      %v4329 = vunpack.c.h.b16 %v2255
      %v4330 = vunpack.c.l.b16 %v2256
      %v4331 = vunpack.c.h.b16 %v2256
      %v4332 = vunpack.c.l.b16 %v2257
      %v4333 = vunpack.c.l.b16 %v2258
      %v4334 = vunpack.c.h.b16 %v2258
      %v4335 = vunpack.c.l.b16 %v2259
      %v4336 = vunpack.c.h.b16 %v2259
      %v4337 = vunpack.c.l.b16 %v2260
      %v4338 = vunpack.c.h.b16 %v2260
      %v4339 = vunpack.c.l.b16 %v2261
      %v4340 = vunpack.c.l.b16 %v2262
      %v4341 = vunpack.c.h.b16 %v2262
      %v4342 = vunpack.c.l.b16 %v2263
      %v4343 = vunpack.c.h.b16 %v2263
      %v4344 = vunpack.c.l.b16 %v2264
      %v4345 = vunpack.c.h.b16 %v2264
      %v4346 = vunpack.c.l.b16 %v2265
      %v4347 = vunpack.c.l.b16 %v2266
      %v4348 = vunpack.c.h.b16 %v2266
      %v4349 = vunpack.c.l.b16 %v2267
      %v4350 = vunpack.c.h.b16 %v2267
      %v4351 = vunpack.c.l.b16 %v2268
      %v4352 = vunpack.c.h.b16 %v2268
      %v4353 = vunpack.c.l.b16 %v2269
      %v4354 = vunpack.c.l.b16 %v2270
      %v4355 = vunpack.c.h.b16 %v2270
      %v4356 = vunpack.c.l.b16 %v2271
      %v4357 = vunpack.c.h.b16 %v2271
      %v4358 = vunpack.c.l.b16 %v2272
      %v4359 = vunpack.c.h.b16 %v2272
      %v4360 = vunpack.c.l.b16 %v2273
      %v4361 = vunpack.c.l.b16 %v2274
      %v4362 = vunpack.c.h.b16 %v2274
      %v4363 = vunpack.c.l.b16 %v2275
      %v4364 = vunpack.c.h.b16 %v2275
      %v4365 = vunpack.c.l.b16 %v2276
      %v4366 = vunpack.c.h.b16 %v2276
      %v4367 = vunpack.c.l.b16 %v2277
      %v4368 = vunpack.c.l.b16 %v2278
      %v4369 = vunpack.c.h.b16 %v2278
      %v4370 = vunpack.c.l.b16 %v2279
      %v4371 = vunpack.c.h.b16 %v2279
      %v4372 = vunpack.c.l.b16 %v2280
      %v4373 = vunpack.c.h.b16 %v2280
      %v4374 = vunpack.c.l.b16 %v2281
      %v4375 = vunpack.c.l.b16 %v2282
      %v4376 = vunpack.c.h.b16 %v2282
      %v4377 = vunpack.c.l.b16 %v2283
      %v4378 = vunpack.c.h.b16 %v2283
      %v4379 = vunpack.c.l.b16 %v2284
      %v4380 = vunpack.c.h.b16 %v2284
      %v4381 = vunpack.c.l.b16 %v2285
      %v4382 = vunpack.c.l.b16 %v2286
      %v4383 = vunpack.c.h.b16 %v2286
      %v4384 = vunpack.c.l.b16 %v2287
      %v4385 = vunpack.c.h.b16 %v2287
      %v4386 = vunpack.c.l.b16 %v2288
      %v4387 = vunpack.c.h.b16 %v2288
      %v4388 = vunpack.c.l.b16 %v2289
      %v4389 = vunpack.c.l.b16 %v2290
      %v4390 = vunpack.c.h.b16 %v2290
      %v4391 = vunpack.c.l.b16 %v2291
      %v4392 = vunpack.c.h.b16 %v2291
      %v4393 = vunpack.c.l.b16 %v2292
      %v4394 = vunpack.c.h.b16 %v2292
      %v4395 = vunpack.c.l.b16 %v2293
      %v4396 = vunpack.c.l.b16 %v2294
      %v4397 = vunpack.c.h.b16 %v2294
      %v4398 = vunpack.c.l.b16 %v2295
      %v4399 = vunpack.c.h.b16 %v2295
      %v4400 = vunpack.c.l.b16 %v2296
      %v4401 = vunpack.c.h.b16 %v2296
      %v4402 = vunpack.c.l.b16 %v2297
      %v4403 = vunpack.c.l.b16 %v2298
      %v4404 = vunpack.c.h.b16 %v2298
      %v4405 = vunpack.c.l.b16 %v2299
      %v4406 = vunpack.c.h.b16 %v2299
      %v4407 = vunpack.c.l.b16 %v2300
      %v4408 = vunpack.c.h.b16 %v2300
      %v4409 = vunpack.c.l.b16 %v2301
      %v4410 = vunpack.c.l.b16 %v2302
      %v4411 = vunpack.c.h.b16 %v2302
      %v4412 = vunpack.c.l.b16 %v2303
      %v4413 = vunpack.c.h.b16 %v2303
      %v4414 = vunpack.c.l.b16 %v2304
      %v4415 = vunpack.c.h.b16 %v2304
      %v4416 = vunpack.c.l.b16 %v2305
      %v4417 = vunpack.c.l.b16 %v2306
      %v4418 = vunpack.c.h.b16 %v2306
      %v4419 = vunpack.c.l.b16 %v2307
      %v4420 = vunpack.c.h.b16 %v2307
      %v4421 = vunpack.c.l.b16 %v2308
      %v4422 = vunpack.c.h.b16 %v2308
      %v4423 = vunpack.c.l.b16 %v2309
      %v4424 = vunpack.c.l.b16 %v2310
      %v4425 = vunpack.c.h.b16 %v2310
      %v4426 = vunpack.c.l.b16 %v2311
      %v4427 = vunpack.c.h.b16 %v2311
      %v4428 = vunpack.c.l.b16 %v2312
      %v4429 = vunpack.c.h.b16 %v2312
      %v4430 = vunpack.c.l.b16 %v2313
      %v4431 = vunpack.c.l.b16 %v2314
      %v4432 = vunpack.c.h.b16 %v2314
      %v4433 = vunpack.c.l.b16 %v2315
      %v4434 = vunpack.c.h.b16 %v2315
      %v4435 = vunpack.c.l.b16 %v2316
      %v4436 = vunpack.c.h.b16 %v2316
      %v4437 = vunpack.c.l.b16 %v2317
      %v4438 = vunpack.c.l.b16 %v2318
      %v4439 = vunpack.c.h.b16 %v2318
      %v4440 = vunpack.c.l.b16 %v2319
      %v4441 = vunpack.c.h.b16 %v2319
      %v4442 = vunpack.c.l.b16 %v2320
      %v4443 = vunpack.c.h.b16 %v2320
      %v4444 = vunpack.c.l.b16 %v2321
      %v4445 = vunpack.c.l.b16 %v2322
      %v4446 = vunpack.c.h.b16 %v2322
      %v4447 = vunpack.c.l.b16 %v2323
      %v4448 = vunpack.c.h.b16 %v2323
      %v4449 = vunpack.c.l.b16 %v2324
      %v4450 = vunpack.c.h.b16 %v2324
      %v4451 = vunpack.c.l.b16 %v2325
      %v4452 = vunpack.c.l.b16 %v2326
      %v4453 = vunpack.c.h.b16 %v2326
      %v4454 = vunpack.c.l.b16 %v2327
      %v4455 = vunpack.c.h.b16 %v2327
      %v4456 = vunpack.c.l.b16 %v2328
      %v4457 = vunpack.c.h.b16 %v2328
      %v4458 = vunpack.c.l.b16 %v2329
      %v4459 = vunpack.c.l.b16 %v2330
      %v4460 = vunpack.c.h.b16 %v2330
      %v4461 = vunpack.c.l.b16 %v2331
      %v4462 = vunpack.c.h.b16 %v2331
      %v4463 = vunpack.c.l.b16 %v2332
      %v4464 = vunpack.c.h.b16 %v2332
      %v4465 = vunpack.c.l.b16 %v2333
      %v4466 = vunpack.c.l.b16 %v2334
      %v4467 = vunpack.c.h.b16 %v2334
      %v4468 = vunpack.c.l.b16 %v2335
      %v4469 = vunpack.c.h.b16 %v2335
      %v4470 = vunpack.c.l.b16 %v2336
      %v4471 = vunpack.c.h.b16 %v2336
      %v4472 = vunpack.c.l.b16 %v2337
      %v4473 = vunpack.c.l.b16 %v2338
      %v4474 = vunpack.c.h.b16 %v2338
      %v4475 = vunpack.c.l.b16 %v2339
      %v4476 = vunpack.c.h.b16 %v2339
      %v4477 = vunpack.c.l.b16 %v2340
      %v4478 = vunpack.c.h.b16 %v2340
      %v4479 = vunpack.c.l.b16 %v2341
      %v4480 = vunpack.c.l.b16 %v2342
      %v4481 = vunpack.c.h.b16 %v2342
      %v4482 = vunpack.c.l.b16 %v2343
      %v4483 = vunpack.c.h.b16 %v2343
      %v4484 = vunpack.c.l.b16 %v2344
      %v4485 = vunpack.c.h.b16 %v2344
      %v4486 = vunpack.c.l.b16 %v2345
      %v4487 = vunpack.c.l.b16 %v2346
      %v4488 = vunpack.c.h.b16 %v2346
      %v4489 = vunpack.c.l.b16 %v2347
      %v4490 = vunpack.c.h.b16 %v2347
      %v4491 = vunpack.c.l.b16 %v2348
      %v4492 = vunpack.c.h.b16 %v2348
      %v4493 = vunpack.c.l.b16 %v2349
      %v4494 = vunpack.c.l.b16 %v2350
      %v4495 = vunpack.c.h.b16 %v2350
      %v4496 = vunpack.c.l.b16 %v2351
      %v4497 = vunpack.c.h.b16 %v2351
      %v4498 = vunpack.c.l.b16 %v2352
      %v4499 = vunpack.c.h.b16 %v2352
      %v4500 = vunpack.c.l.b16 %v2353
      %v4501 = vunpack.c.l.b16 %v2354
      %v4502 = vunpack.c.h.b16 %v2354
      %v4503 = vunpack.c.l.b16 %v2355
      %v4504 = vunpack.c.h.b16 %v2355
      %v4505 = vunpack.c.l.b16 %v2356
      %v4506 = vunpack.c.h.b16 %v2356
      %v4507 = vunpack.c.l.b16 %v2357
      %v4508 = vunpack.c.l.b16 %v2358
      %v4509 = vunpack.c.h.b16 %v2358
      %v4510 = vunpack.c.l.b16 %v2359
      %v4511 = vunpack.c.h.b16 %v2359
      %v4512 = vunpack.c.l.b16 %v2360
      %v4513 = vunpack.c.h.b16 %v2360
      %v4514 = vunpack.c.l.b16 %v2361
      %v4515 = vunpack.c.l.b16 %v2362
      %v4516 = vunpack.c.h.b16 %v2362
      %v4517 = vunpack.c.l.b16 %v2363
      %v4518 = vunpack.c.h.b16 %v2363
      %v4519 = vunpack.c.l.b16 %v2364
      %v4520 = vunpack.c.h.b16 %v2364
      %v4521 = vunpack.c.l.b16 %v2365
      %v4522 = vunpack.c.l.b16 %v2366
      %v4523 = vunpack.c.h.b16 %v2366
      %v4524 = vunpack.c.l.b16 %v2367
      %v4525 = vunpack.c.h.b16 %v2367
      %v4526 = vunpack.c.l.b16 %v2368
      %v4527 = vunpack.c.h.b16 %v2368
      %v4528 = vunpack.c.l.b16 %v2369
      %v4529 = vunpack.c.l.b16 %v2370
      %v4530 = vunpack.c.h.b16 %v2370
      %v4531 = vunpack.c.l.b16 %v2371
      %v4532 = vunpack.c.h.b16 %v2371
      %v4533 = vunpack.c.l.b16 %v2372
      %v4534 = vunpack.c.h.b16 %v2372
      %v4535 = vunpack.c.l.b16 %v2373
      %v4536 = vunpack.c.l.b16 %v2374
      %v4537 = vunpack.c.h.b16 %v2374
      %v4538 = vunpack.c.l.b16 %v2375
      %v4539 = vunpack.c.h.b16 %v2375
      %v4540 = vunpack.c.l.b16 %v2376
      %v4541 = vunpack.c.h.b16 %v2376
      %v4542 = vunpack.c.l.b16 %v2377
      %v4543 = vunpack.c.l.b16 %v2378
      %v4544 = vunpack.c.h.b16 %v2378
      %v4545 = vunpack.c.l.b16 %v2379
      %v4546 = vunpack.c.h.b16 %v2379
      %v4547 = vunpack.c.l.b16 %v2380
      %v4548 = vunpack.c.h.b16 %v2380
      %v4549 = vunpack.c.l.b16 %v2381
      %v4550 = vunpack.c.l.b16 %v2382
      %v4551 = vunpack.c.h.b16 %v2382
      %v4552 = vunpack.c.l.b16 %v2383
      %v4553 = vunpack.c.h.b16 %v2383
      %v4554 = vunpack.c.l.b16 %v2384
      %v4555 = vunpack.c.h.b16 %v2384
      %v4556 = vunpack.c.l.b16 %v2385
      %v4557 = vunpack.c.l.b16 %v2386
      %v4558 = vunpack.c.h.b16 %v2386
      %v4559 = vunpack.c.l.b16 %v2387
      %v4560 = vunpack.c.h.b16 %v2387
      %v4561 = vunpack.c.l.b16 %v2388
      %v4562 = vunpack.c.h.b16 %v2388
      %v4563 = vunpack.c.l.b16 %v2389
      %v4564 = vunpack.c.l.b16 %v2390
      %v4565 = vunpack.c.h.b16 %v2390
      %v4566 = vunpack.c.l.b16 %v2391
      %v4567 = vunpack.c.h.b16 %v2391
      %v4568 = vunpack.c.l.b16 %v2392
      %v4569 = vunpack.c.h.b16 %v2392
      %v4570 = vunpack.c.l.b16 %v2393
      %v4571 = vunpack.c.l.b16 %v2394
      %v4572 = vunpack.c.h.b16 %v2394
      %v4573 = vunpack.c.l.b16 %v2395
      %v4574 = vunpack.c.h.b16 %v2395
      %v4575 = vunpack.c.l.b16 %v2396
      %v4576 = vunpack.c.h.b16 %v2396
      %v4577 = vunpack.c.l.b16 %v2397
      %v4578 = vunpack.c.l.b16 %v2398
      %v4579 = vunpack.c.h.b16 %v2398
      %v4580 = vunpack.c.l.b16 %v2399
      %v4581 = vunpack.c.h.b16 %v2399
      %v4582 = vunpack.c.l.b16 %v2400
      %v4583 = vunpack.c.h.b16 %v2400
      %v4584 = vunpack.c.l.b16 %v2401
      %v4585 = vunpack.c.l.b16 %v2402
      %v4586 = vunpack.c.h.b16 %v2402
      %v4587 = vunpack.c.l.b16 %v2403
      %v4588 = vunpack.c.h.b16 %v2403
      %v4589 = vunpack.c.l.b16 %v2404
      %v4590 = vunpack.c.h.b16 %v2404
      %v4591 = vunpack.c.l.b16 %v2405
      %v4592 = vunpack.c.l.b16 %v2406
      %v4593 = vunpack.c.h.b16 %v2406
      %v4594 = vunpack.c.l.b16 %v2407
      %v4595 = vunpack.c.h.b16 %v2407
      %v4596 = vunpack.c.l.b16 %v2408
      %v4597 = vunpack.c.h.b16 %v2408
      %v4598 = vunpack.c.l.b16 %v2409
      %v4599 = vunpack.c.l.b16 %v2410
      %v4600 = vunpack.c.h.b16 %v2410
      %v4601 = vunpack.c.l.b16 %v2411
      %v4602 = vunpack.c.h.b16 %v2411
      %v4603 = vunpack.c.l.b16 %v2412
      %v4604 = vunpack.c.h.b16 %v2412
      %v4605 = vunpack.c.l.b16 %v2413
      %v4606 = vunpack.c.l.b16 %v2414
      %v4607 = vunpack.c.h.b16 %v2414
      %v4608 = vunpack.c.l.b16 %v2415
      %v4609 = vunpack.c.h.b16 %v2415
      %v4610 = vunpack.c.l.b16 %v2416
      %v4611 = vunpack.c.h.b16 %v2416
      %v4612 = vunpack.c.l.b16 %v2417
      %v4613 = vunpack.c.l.b16 %v2418
      %v4614 = vunpack.c.h.b16 %v2418
      %v4615 = vunpack.c.l.b16 %v2419
      %v4616 = vunpack.c.h.b16 %v2419
      %v4617 = vunpack.c.l.b16 %v2420
      %v4618 = vunpack.c.h.b16 %v2420
      %v4619 = vunpack.c.l.b16 %v2421
      %v4620 = vunpack.c.l.b16 %v2422
      %v4621 = vunpack.c.h.b16 %v2422
      %v4622 = vunpack.c.l.b16 %v2423
      %v4623 = vunpack.c.h.b16 %v2423
      %v4624 = vunpack.c.l.b16 %v2424
      %v4625 = vunpack.c.h.b16 %v2424
      %v4626 = vunpack.c.l.b16 %v2425
      %v4627 = vpack.c.b16 %v3234, %v3227
      %v4628 = vpack.c.b16 %v3235, %v3228
      %v4629 = vpack.c.b16 %v3236, %v3229
      %v4630 = vpack.c.b16 %v3237, %v3230
      %v4631 = vpack.c.b16 %v3238, %v3231
      %v4632 = vpack.c.b16 %v3239, %v3232
      %v4633 = vpack.c.b16 %v3240, %v3233
      %v4634 = vpack.c.b16 %v3248, %v3241
      %v4635 = vpack.c.b16 %v3249, %v3242
      %v4636 = vpack.c.b16 %v3250, %v3243
      %v4637 = vpack.c.b16 %v3251, %v3244
      %v4638 = vpack.c.b16 %v3252, %v3245
      %v4639 = vpack.c.b16 %v3253, %v3246
      %v4640 = vpack.c.b16 %v3254, %v3247
      %v4641 = vpack.c.b16 %v3262, %v3255
      %v4642 = vpack.c.b16 %v3263, %v3256
      %v4643 = vpack.c.b16 %v3264, %v3257
      %v4644 = vpack.c.b16 %v3265, %v3258
      %v4645 = vpack.c.b16 %v3266, %v3259
      %v4646 = vpack.c.b16 %v3267, %v3260
      %v4647 = vpack.c.b16 %v3268, %v3261
      %v4648 = vpack.c.b16 %v3276, %v3269
      %v4649 = vpack.c.b16 %v3277, %v3270
      %v4650 = vpack.c.b16 %v3278, %v3271
      %v4651 = vpack.c.b16 %v3279, %v3272
      %v4652 = vpack.c.b16 %v3280, %v3273
      %v4653 = vpack.c.b16 %v3281, %v3274
      %v4654 = vpack.c.b16 %v3282, %v3275
      %v4655 = vpack.c.b16 %v3290, %v3283
      %v4656 = vpack.c.b16 %v3291, %v3284
      %v4657 = vpack.c.b16 %v3292, %v3285
      %v4658 = vpack.c.b16 %v3293, %v3286
      %v4659 = vpack.c.b16 %v3294, %v3287
      %v4660 = vpack.c.b16 %v3295, %v3288
      %v4661 = vpack.c.b16 %v3296, %v3289
      %v4662 = vpack.c.b16 %v3304, %v3297
      %v4663 = vpack.c.b16 %v3305, %v3298
      %v4664 = vpack.c.b16 %v3306, %v3299
      %v4665 = vpack.c.b16 %v3307, %v3300
      %v4666 = vpack.c.b16 %v3308, %v3301
      %v4667 = vpack.c.b16 %v3309, %v3302
      %v4668 = vpack.c.b16 %v3310, %v3303
      %v4669 = vpack.c.b16 %v3318, %v3311
      %v4670 = vpack.c.b16 %v3319, %v3312
      %v4671 = vpack.c.b16 %v3320, %v3313
      %v4672 = vpack.c.b16 %v3321, %v3314
      %v4673 = vpack.c.b16 %v3322, %v3315
      %v4674 = vpack.c.b16 %v3323, %v3316
      %v4675 = vpack.c.b16 %v3324, %v3317
      %v4676 = vpack.c.b16 %v3332, %v3325
      %v4677 = vpack.c.b16 %v3333, %v3326
      %v4678 = vpack.c.b16 %v3334, %v3327
      %v4679 = vpack.c.b16 %v3335, %v3328
      %v4680 = vpack.c.b16 %v3336, %v3329
      %v4681 = vpack.c.b16 %v3337, %v3330
      %v4682 = vpack.c.b16 %v3338, %v3331
      %v4683 = vpack.c.b16 %v3346, %v3339
      %v4684 = vpack.c.b16 %v3347, %v3340
      %v4685 = vpack.c.b16 %v3348, %v3341
      %v4686 = vpack.c.b16 %v3349, %v3342
      %v4687 = vpack.c.b16 %v3350, %v3343
      %v4688 = vpack.c.b16 %v3351, %v3344
      %v4689 = vpack.c.b16 %v3352, %v3345
      %v4690 = vpack.c.b16 %v3360, %v3353
      %v4691 = vpack.c.b16 %v3361, %v3354
      %v4692 = vpack.c.b16 %v3362, %v3355
      %v4693 = vpack.c.b16 %v3363, %v3356
      %v4694 = vpack.c.b16 %v3364, %v3357
      %v4695 = vpack.c.b16 %v3365, %v3358
      %v4696 = vpack.c.b16 %v3366, %v3359
      %v4697 = vpack.c.b16 %v3374, %v3367
      %v4698 = vpack.c.b16 %v3375, %v3368
      %v4699 = vpack.c.b16 %v3376, %v3369
      %v4700 = vpack.c.b16 %v3377, %v3370
      %v4701 = vpack.c.b16 %v3378, %v3371
      %v4702 = vpack.c.b16 %v3379, %v3372
      %v4703 = vpack.c.b16 %v3380, %v3373
      %v4704 = vpack.c.b16 %v3388, %v3381
      %v4705 = vpack.c.b16 %v3389, %v3382
      %v4706 = vpack.c.b16 %v3390, %v3383
      %v4707 = vpack.c.b16 %v3391, %v3384
      %v4708 = vpack.c.b16 %v3392, %v3385
      %v4709 = vpack.c.b16 %v3393, %v3386
      %v4710 = vpack.c.b16 %v3394, %v3387
      %v4711 = vpack.c.b16 %v3402, %v3395
      %v4712 = vpack.c.b16 %v3403, %v3396
      %v4713 = vpack.c.b16 %v3404, %v3397
      %v4714 = vpack.c.b16 %v3405, %v3398
      %v4715 = vpack.c.b16 %v3406, %v3399
      %v4716 = vpack.c.b16 %v3407, %v3400
      %v4717 = vpack.c.b16 %v3408, %v3401
      %v4718 = vpack.c.b16 %v3416, %v3409
      %v4719 = vpack.c.b16 %v3417, %v3410
      %v4720 = vpack.c.b16 %v3418, %v3411
      %v4721 = vpack.c.b16 %v3419, %v3412
      %v4722 = vpack.c.b16 %v3420, %v3413
      %v4723 = vpack.c.b16 %v3421, %v3414
      %v4724 = vpack.c.b16 %v3422, %v3415
      %v4725 = vpack.c.b16 %v3430, %v3423
      %v4726 = vpack.c.b16 %v3431, %v3424
      %v4727 = vpack.c.b16 %v3432, %v3425
      %v4728 = vpack.c.b16 %v3433, %v3426
      %v4729 = vpack.c.b16 %v3434, %v3427
      %v4730 = vpack.c.b16 %v3435, %v3428
      %v4731 = vpack.c.b16 %v3436, %v3429
      %v4732 = vpack.c.b16 %v3444, %v3437
      %v4733 = vpack.c.b16 %v3445, %v3438
      %v4734 = vpack.c.b16 %v3446, %v3439
      %v4735 = vpack.c.b16 %v3447, %v3440
      %v4736 = vpack.c.b16 %v3448, %v3441
      %v4737 = vpack.c.b16 %v3449, %v3442
      %v4738 = vpack.c.b16 %v3450, %v3443
      %v4739 = vpack.c.b16 %v3458, %v3451
      %v4740 = vpack.c.b16 %v3459, %v3452
      %v4741 = vpack.c.b16 %v3460, %v3453
      %v4742 = vpack.c.b16 %v3461, %v3454
      %v4743 = vpack.c.b16 %v3462, %v3455
      %v4744 = vpack.c.b16 %v3463, %v3456
      %v4745 = vpack.c.b16 %v3464, %v3457
      %v4746 = vpack.c.b16 %v3472, %v3465
      %v4747 = vpack.c.b16 %v3473, %v3466
      %v4748 = vpack.c.b16 %v3474, %v3467
      %v4749 = vpack.c.b16 %v3475, %v3468
      %v4750 = vpack.c.b16 %v3476, %v3469
      %v4751 = vpack.c.b16 %v3477, %v3470
      %v4752 = vpack.c.b16 %v3478, %v3471
      %v4753 = vpack.c.b16 %v3486, %v3479
      %v4754 = vpack.c.b16 %v3487, %v3480
      %v4755 = vpack.c.b16 %v3488, %v3481
      %v4756 = vpack.c.b16 %v3489, %v3482
      %v4757 = vpack.c.b16 %v3490, %v3483
      %v4758 = vpack.c.b16 %v3491, %v3484
      %v4759 = vpack.c.b16 %v3492, %v3485
      %v4760 = vpack.c.b16 %v3500, %v3493
      %v4761 = vpack.c.b16 %v3501, %v3494
      %v4762 = vpack.c.b16 %v3502, %v3495
      %v4763 = vpack.c.b16 %v3503, %v3496
      %v4764 = vpack.c.b16 %v3504, %v3497
      %v4765 = vpack.c.b16 %v3505, %v3498
      %v4766 = vpack.c.b16 %v3506, %v3499
      %v4767 = vpack.c.b16 %v3514, %v3507
      %v4768 = vpack.c.b16 %v3515, %v3508
      %v4769 = vpack.c.b16 %v3516, %v3509
      %v4770 = vpack.c.b16 %v3517, %v3510
      %v4771 = vpack.c.b16 %v3518, %v3511
      %v4772 = vpack.c.b16 %v3519, %v3512
      %v4773 = vpack.c.b16 %v3520, %v3513
      %v4774 = vpack.c.b16 %v3528, %v3521
      %v4775 = vpack.c.b16 %v3529, %v3522
      %v4776 = vpack.c.b16 %v3530, %v3523
      %v4777 = vpack.c.b16 %v3531, %v3524
      %v4778 = vpack.c.b16 %v3532, %v3525
      %v4779 = vpack.c.b16 %v3533, %v3526
      %v4780 = vpack.c.b16 %v3534, %v3527
      %v4781 = vpack.c.b16 %v3542, %v3535
      %v4782 = vpack.c.b16 %v3543, %v3536
      %v4783 = vpack.c.b16 %v3544, %v3537
      %v4784 = vpack.c.b16 %v3545, %v3538
      %v4785 = vpack.c.b16 %v3546, %v3539
      %v4786 = vpack.c.b16 %v3547, %v3540
      %v4787 = vpack.c.b16 %v3548, %v3541
      %v4788 = vpack.c.b16 %v3556, %v3549
      %v4789 = vpack.c.b16 %v3557, %v3550
      %v4790 = vpack.c.b16 %v3558, %v3551
      %v4791 = vpack.c.b16 %v3559, %v3552
      %v4792 = vpack.c.b16 %v3560, %v3553
      %v4793 = vpack.c.b16 %v3561, %v3554
      %v4794 = vpack.c.b16 %v3562, %v3555
      %v4795 = vpack.c.b16 %v3570, %v3563
      %v4796 = vpack.c.b16 %v3571, %v3564
      %v4797 = vpack.c.b16 %v3572, %v3565
      %v4798 = vpack.c.b16 %v3573, %v3566
      %v4799 = vpack.c.b16 %v3574, %v3567
      %v4800 = vpack.c.b16 %v3575, %v3568
      %v4801 = vpack.c.b16 %v3576, %v3569
      %v4802 = vpack.c.b16 %v3584, %v3577
      %v4803 = vpack.c.b16 %v3585, %v3578
      %v4804 = vpack.c.b16 %v3586, %v3579
      %v4805 = vpack.c.b16 %v3587, %v3580
      %v4806 = vpack.c.b16 %v3588, %v3581
      %v4807 = vpack.c.b16 %v3589, %v3582
      %v4808 = vpack.c.b16 %v3590, %v3583
      %v4809 = vpack.c.b16 %v3598, %v3591
      %v4810 = vpack.c.b16 %v3599, %v3592
      %v4811 = vpack.c.b16 %v3600, %v3593
      %v4812 = vpack.c.b16 %v3601, %v3594
      %v4813 = vpack.c.b16 %v3602, %v3595
      %v4814 = vpack.c.b16 %v3603, %v3596
      %v4815 = vpack.c.b16 %v3604, %v3597
      %v4816 = vpack.c.b16 %v3612, %v3605
      %v4817 = vpack.c.b16 %v3613, %v3606
      %v4818 = vpack.c.b16 %v3614, %v3607
      %v4819 = vpack.c.b16 %v3615, %v3608
      %v4820 = vpack.c.b16 %v3616, %v3609
      %v4821 = vpack.c.b16 %v3617, %v3610
      %v4822 = vpack.c.b16 %v3618, %v3611
      %v4823 = vpack.c.b16 %v3626, %v3619
      %v4824 = vpack.c.b16 %v3627, %v3620
      %v4825 = vpack.c.b16 %v3628, %v3621
      %v4826 = vpack.c.b16 %v3629, %v3622
      %v4827 = vpack.c.b16 %v3630, %v3623
      %v4828 = vpack.c.b16 %v3631, %v3624
      %v4829 = vpack.c.b16 %v3632, %v3625
      %v4830 = vpack.c.b16 %v3640, %v3633
      %v4831 = vpack.c.b16 %v3641, %v3634
      %v4832 = vpack.c.b16 %v3642, %v3635
      %v4833 = vpack.c.b16 %v3643, %v3636
      %v4834 = vpack.c.b16 %v3644, %v3637
      %v4835 = vpack.c.b16 %v3645, %v3638
      %v4836 = vpack.c.b16 %v3646, %v3639
      %v4837 = vpack.c.b16 %v3654, %v3647
      %v4838 = vpack.c.b16 %v3655, %v3648
      %v4839 = vpack.c.b16 %v3656, %v3649
      %v4840 = vpack.c.b16 %v3657, %v3650
      %v4841 = vpack.c.b16 %v3658, %v3651
      %v4842 = vpack.c.b16 %v3659, %v3652
      %v4843 = vpack.c.b16 %v3660, %v3653
      %v4844 = vpack.c.b16 %v3668, %v3661
      %v4845 = vpack.c.b16 %v3669, %v3662
      %v4846 = vpack.c.b16 %v3670, %v3663
      %v4847 = vpack.c.b16 %v3671, %v3664
      %v4848 = vpack.c.b16 %v3672, %v3665
      %v4849 = vpack.c.b16 %v3673, %v3666
      %v4850 = vpack.c.b16 %v3674, %v3667
      %v4851 = vpack.c.b16 %v3682, %v3675
      %v4852 = vpack.c.b16 %v3683, %v3676
      %v4853 = vpack.c.b16 %v3684, %v3677
      %v4854 = vpack.c.b16 %v3685, %v3678
      %v4855 = vpack.c.b16 %v3686, %v3679
      %v4856 = vpack.c.b16 %v3687, %v3680
      %v4857 = vpack.c.b16 %v3688, %v3681
      %v4858 = vpack.c.b16 %v3696, %v3689
      %v4859 = vpack.c.b16 %v3697, %v3690
      %v4860 = vpack.c.b16 %v3698, %v3691
      %v4861 = vpack.c.b16 %v3699, %v3692
      %v4862 = vpack.c.b16 %v3700, %v3693
      %v4863 = vpack.c.b16 %v3701, %v3694
      %v4864 = vpack.c.b16 %v3702, %v3695
      %v4865 = vpack.c.b16 %v3710, %v3703
      %v4866 = vpack.c.b16 %v3711, %v3704
      %v4867 = vpack.c.b16 %v3712, %v3705
      %v4868 = vpack.c.b16 %v3713, %v3706
      %v4869 = vpack.c.b16 %v3714, %v3707
      %v4870 = vpack.c.b16 %v3715, %v3708
      %v4871 = vpack.c.b16 %v3716, %v3709
      %v4872 = vpack.c.b16 %v3724, %v3717
      %v4873 = vpack.c.b16 %v3725, %v3718
      %v4874 = vpack.c.b16 %v3726, %v3719
      %v4875 = vpack.c.b16 %v3727, %v3720
      %v4876 = vpack.c.b16 %v3728, %v3721
      %v4877 = vpack.c.b16 %v3729, %v3722
      %v4878 = vpack.c.b16 %v3730, %v3723
      %v4879 = vpack.c.b16 %v3738, %v3731
      %v4880 = vpack.c.b16 %v3739, %v3732
      %v4881 = vpack.c.b16 %v3740, %v3733
      %v4882 = vpack.c.b16 %v3741, %v3734
      %v4883 = vpack.c.b16 %v3742, %v3735
      %v4884 = vpack.c.b16 %v3743, %v3736
      %v4885 = vpack.c.b16 %v3744, %v3737
      %v4886 = vpack.c.b16 %v3752, %v3745
      %v4887 = vpack.c.b16 %v3753, %v3746
      %v4888 = vpack.c.b16 %v3754, %v3747
      %v4889 = vpack.c.b16 %v3755, %v3748
      %v4890 = vpack.c.b16 %v3756, %v3749
      %v4891 = vpack.c.b16 %v3757, %v3750
      %v4892 = vpack.c.b16 %v3758, %v3751
      %v4893 = vpack.c.b16 %v3766, %v3759
      %v4894 = vpack.c.b16 %v3767, %v3760
      %v4895 = vpack.c.b16 %v3768, %v3761
      %v4896 = vpack.c.b16 %v3769, %v3762
      %v4897 = vpack.c.b16 %v3770, %v3763
      %v4898 = vpack.c.b16 %v3771, %v3764
      %v4899 = vpack.c.b16 %v3772, %v3765
      %v4900 = vpack.c.b16 %v3780, %v3773
      %v4901 = vpack.c.b16 %v3781, %v3774
      %v4902 = vpack.c.b16 %v3782, %v3775
      %v4903 = vpack.c.b16 %v3783, %v3776
      %v4904 = vpack.c.b16 %v3784, %v3777
      %v4905 = vpack.c.b16 %v3785, %v3778
      %v4906 = vpack.c.b16 %v3786, %v3779
      %v4907 = vpack.c.b16 %v3794, %v3787
      %v4908 = vpack.c.b16 %v3795, %v3788
      %v4909 = vpack.c.b16 %v3796, %v3789
      %v4910 = vpack.c.b16 %v3797, %v3790
      %v4911 = vpack.c.b16 %v3798, %v3791
      %v4912 = vpack.c.b16 %v3799, %v3792
      %v4913 = vpack.c.b16 %v3800, %v3793
      %v4914 = vpack.c.b16 %v3808, %v3801
      %v4915 = vpack.c.b16 %v3809, %v3802
      %v4916 = vpack.c.b16 %v3810, %v3803
      %v4917 = vpack.c.b16 %v3811, %v3804
      %v4918 = vpack.c.b16 %v3812, %v3805
      %v4919 = vpack.c.b16 %v3813, %v3806
      %v4920 = vpack.c.b16 %v3814, %v3807
      %v4921 = vpack.c.b16 %v3822, %v3815
      %v4922 = vpack.c.b16 %v3823, %v3816
      %v4923 = vpack.c.b16 %v3824, %v3817
      %v4924 = vpack.c.b16 %v3825, %v3818
      %v4925 = vpack.c.b16 %v3826, %v3819
      %v4926 = vpack.c.b16 %v3827, %v3820
      %v4927 = vpack.c.b16 %v3828, %v3821
      %v4928 = vpack.c.b16 %v3836, %v3829
      %v4929 = vpack.c.b16 %v3837, %v3830
      %v4930 = vpack.c.b16 %v3838, %v3831
      %v4931 = vpack.c.b16 %v3839, %v3832
      %v4932 = vpack.c.b16 %v3840, %v3833
      %v4933 = vpack.c.b16 %v3841, %v3834
      %v4934 = vpack.c.b16 %v3842, %v3835
      %v4935 = vpack.c.b16 %v3850, %v3843
      %v4936 = vpack.c.b16 %v3851, %v3844
      %v4937 = vpack.c.b16 %v3852, %v3845
      %v4938 = vpack.c.b16 %v3853, %v3846
      %v4939 = vpack.c.b16 %v3854, %v3847
      %v4940 = vpack.c.b16 %v3855, %v3848
      %v4941 = vpack.c.b16 %v3856, %v3849
      %v4942 = vpack.c.b16 %v3864, %v3857
      %v4943 = vpack.c.b16 %v3865, %v3858
      %v4944 = vpack.c.b16 %v3866, %v3859
      %v4945 = vpack.c.b16 %v3867, %v3860
      %v4946 = vpack.c.b16 %v3868, %v3861
      %v4947 = vpack.c.b16 %v3869, %v3862
      %v4948 = vpack.c.b16 %v3870, %v3863
      %v4949 = vpack.c.b16 %v3878, %v3871
      %v4950 = vpack.c.b16 %v3879, %v3872
      %v4951 = vpack.c.b16 %v3880, %v3873
      %v4952 = vpack.c.b16 %v3881, %v3874
      %v4953 = vpack.c.b16 %v3882, %v3875
      %v4954 = vpack.c.b16 %v3883, %v3876
      %v4955 = vpack.c.b16 %v3884, %v3877
      %v4956 = vpack.c.b16 %v3892, %v3885
      %v4957 = vpack.c.b16 %v3893, %v3886
      %v4958 = vpack.c.b16 %v3894, %v3887
      %v4959 = vpack.c.b16 %v3895, %v3888
      %v4960 = vpack.c.b16 %v3896, %v3889
      %v4961 = vpack.c.b16 %v3897, %v3890
      %v4962 = vpack.c.b16 %v3898, %v3891
      %v4963 = vpack.c.b16 %v3906, %v3899
      %v4964 = vpack.c.b16 %v3907, %v3900
      %v4965 = vpack.c.b16 %v3908, %v3901
      %v4966 = vpack.c.b16 %v3909, %v3902
      %v4967 = vpack.c.b16 %v3910, %v3903
      %v4968 = vpack.c.b16 %v3911, %v3904
      %v4969 = vpack.c.b16 %v3912, %v3905
      %v4970 = vpack.c.b16 %v3920, %v3913
      %v4971 = vpack.c.b16 %v3921, %v3914
      %v4972 = vpack.c.b16 %v3922, %v3915
      %v4973 = vpack.c.b16 %v3923, %v3916
      %v4974 = vpack.c.b16 %v3924, %v3917
      %v4975 = vpack.c.b16 %v3925, %v3918
      %v4976 = vpack.c.b16 %v3926, %v3919
      %v4977 = vpack.c.b16 %v3934, %v3927
      %v4978 = vpack.c.b16 %v3935, %v3928
      %v4979 = vpack.c.b16 %v3936, %v3929
      %v4980 = vpack.c.b16 %v3937, %v3930
      %v4981 = vpack.c.b16 %v3938, %v3931
      %v4982 = vpack.c.b16 %v3939, %v3932
      %v4983 = vpack.c.b16 %v3940, %v3933
      %v4984 = vpack.c.b16 %v3948, %v3941
      %v4985 = vpack.c.b16 %v3949, %v3942
      %v4986 = vpack.c.b16 %v3950, %v3943
      %v4987 = vpack.c.b16 %v3951, %v3944
      %v4988 = vpack.c.b16 %v3952, %v3945
      %v4989 = vpack.c.b16 %v3953, %v3946
      %v4990 = vpack.c.b16 %v3954, %v3947
      %v4991 = vpack.c.b16 %v3962, %v3955
      %v4992 = vpack.c.b16 %v3963, %v3956
      %v4993 = vpack.c.b16 %v3964, %v3957
      %v4994 = vpack.c.b16 %v3965, %v3958
      %v4995 = vpack.c.b16 %v3966, %v3959
      %v4996 = vpack.c.b16 %v3967, %v3960
      %v4997 = vpack.c.b16 %v3968, %v3961
      %v4998 = vpack.c.b16 %v3976, %v3969
      %v4999 = vpack.c.b16 %v3977, %v3970
      %v5000 = vpack.c.b16 %v3978, %v3971
      %v5001 = vpack.c.b16 %v3979, %v3972
      %v5002 = vpack.c.b16 %v3980, %v3973
      %v5003 = vpack.c.b16 %v3981, %v3974
      %v5004 = vpack.c.b16 %v3982, %v3975
      %v5005 = vpack.c.b16 %v3990, %v3983
      %v5006 = vpack.c.b16 %v3991, %v3984
      %v5007 = vpack.c.b16 %v3992, %v3985
      %v5008 = vpack.c.b16 %v3993, %v3986
      %v5009 = vpack.c.b16 %v3994, %v3987
      %v5010 = vpack.c.b16 %v3995, %v3988
      %v5011 = vpack.c.b16 %v3996, %v3989
      %v5012 = vpack.c.b16 %v4004, %v3997
      %v5013 = vpack.c.b16 %v4005, %v3998
      %v5014 = vpack.c.b16 %v4006, %v3999
      %v5015 = vpack.c.b16 %v4007, %v4000
      %v5016 = vpack.c.b16 %v4008, %v4001
      %v5017 = vpack.c.b16 %v4009, %v4002
      %v5018 = vpack.c.b16 %v4010, %v4003
      %v5019 = vpack.c.b16 %v4018, %v4011
      %v5020 = vpack.c.b16 %v4019, %v4012
      %v5021 = vpack.c.b16 %v4020, %v4013
      %v5022 = vpack.c.b16 %v4021, %v4014
      %v5023 = vpack.c.b16 %v4022, %v4015
      %v5024 = vpack.c.b16 %v4023, %v4016
      %v5025 = vpack.c.b16 %v4024, %v4017
      %v5026 = vpack.c.b16 %v4032, %v4025
      %v5027 = vpack.c.b16 %v4033, %v4026
      %v5028 = vpack.c.b16 %v4034, %v4027
      %v5029 = vpack.c.b16 %v4035, %v4028
      %v5030 = vpack.c.b16 %v4036, %v4029
      %v5031 = vpack.c.b16 %v4037, %v4030
      %v5032 = vpack.c.b16 %v4038, %v4031
      %v5033 = vpack.c.b16 %v4046, %v4039
      %v5034 = vpack.c.b16 %v4047, %v4040
      %v5035 = vpack.c.b16 %v4048, %v4041
      %v5036 = vpack.c.b16 %v4049, %v4042
      %v5037 = vpack.c.b16 %v4050, %v4043
      %v5038 = vpack.c.b16 %v4051, %v4044
      %v5039 = vpack.c.b16 %v4052, %v4045
      %v5040 = vpack.c.b16 %v4060, %v4053
      %v5041 = vpack.c.b16 %v4061, %v4054
      %v5042 = vpack.c.b16 %v4062, %v4055
      %v5043 = vpack.c.b16 %v4063, %v4056
      %v5044 = vpack.c.b16 %v4064, %v4057
      %v5045 = vpack.c.b16 %v4065, %v4058
      %v5046 = vpack.c.b16 %v4066, %v4059
      %v5047 = vpack.c.b16 %v4074, %v4067
      %v5048 = vpack.c.b16 %v4075, %v4068
      %v5049 = vpack.c.b16 %v4076, %v4069
      %v5050 = vpack.c.b16 %v4077, %v4070
      %v5051 = vpack.c.b16 %v4078, %v4071
      %v5052 = vpack.c.b16 %v4079, %v4072
      %v5053 = vpack.c.b16 %v4080, %v4073
      %v5054 = vpack.c.b16 %v4088, %v4081
      %v5055 = vpack.c.b16 %v4089, %v4082
      %v5056 = vpack.c.b16 %v4090, %v4083
      %v5057 = vpack.c.b16 %v4091, %v4084
      %v5058 = vpack.c.b16 %v4092, %v4085
      %v5059 = vpack.c.b16 %v4093, %v4086
      %v5060 = vpack.c.b16 %v4094, %v4087
      %v5061 = vpack.c.b16 %v4102, %v4095
      %v5062 = vpack.c.b16 %v4103, %v4096
      %v5063 = vpack.c.b16 %v4104, %v4097
      %v5064 = vpack.c.b16 %v4105, %v4098
      %v5065 = vpack.c.b16 %v4106, %v4099
      %v5066 = vpack.c.b16 %v4107, %v4100
      %v5067 = vpack.c.b16 %v4108, %v4101
      %v5068 = vpack.c.b16 %v4116, %v4109
      %v5069 = vpack.c.b16 %v4117, %v4110
      %v5070 = vpack.c.b16 %v4118, %v4111
      %v5071 = vpack.c.b16 %v4119, %v4112
      %v5072 = vpack.c.b16 %v4120, %v4113
      %v5073 = vpack.c.b16 %v4121, %v4114
      %v5074 = vpack.c.b16 %v4122, %v4115
      %v5075 = vpack.c.b16 %v4130, %v4123
      %v5076 = vpack.c.b16 %v4131, %v4124
      %v5077 = vpack.c.b16 %v4132, %v4125
      %v5078 = vpack.c.b16 %v4133, %v4126
      %v5079 = vpack.c.b16 %v4134, %v4127
      %v5080 = vpack.c.b16 %v4135, %v4128
      %v5081 = vpack.c.b16 %v4136, %v4129
      %v5082 = vpack.c.b16 %v4144, %v4137
      %v5083 = vpack.c.b16 %v4145, %v4138
      %v5084 = vpack.c.b16 %v4146, %v4139
      %v5085 = vpack.c.b16 %v4147, %v4140
      %v5086 = vpack.c.b16 %v4148, %v4141
      %v5087 = vpack.c.b16 %v4149, %v4142
      %v5088 = vpack.c.b16 %v4150, %v4143
      %v5089 = vpack.c.b16 %v4158, %v4151
      %v5090 = vpack.c.b16 %v4159, %v4152
      %v5091 = vpack.c.b16 %v4160, %v4153
      %v5092 = vpack.c.b16 %v4161, %v4154
      %v5093 = vpack.c.b16 %v4162, %v4155
      %v5094 = vpack.c.b16 %v4163, %v4156
      %v5095 = vpack.c.b16 %v4164, %v4157
      %v5096 = vpack.c.b16 %v4172, %v4165
      %v5097 = vpack.c.b16 %v4173, %v4166
      %v5098 = vpack.c.b16 %v4174, %v4167
      %v5099 = vpack.c.b16 %v4175, %v4168
      %v5100 = vpack.c.b16 %v4176, %v4169
      %v5101 = vpack.c.b16 %v4177, %v4170
      %v5102 = vpack.c.b16 %v4178, %v4171
      %v5103 = vpack.c.b16 %v4186, %v4179
      %v5104 = vpack.c.b16 %v4187, %v4180
      %v5105 = vpack.c.b16 %v4188, %v4181
      %v5106 = vpack.c.b16 %v4189, %v4182
      %v5107 = vpack.c.b16 %v4190, %v4183
      %v5108 = vpack.c.b16 %v4191, %v4184
      %v5109 = vpack.c.b16 %v4192, %v4185
      %v5110 = vpack.c.b16 %v4200, %v4193
      %v5111 = vpack.c.b16 %v4201, %v4194
      %v5112 = vpack.c.b16 %v4202, %v4195
      %v5113 = vpack.c.b16 %v4203, %v4196
      %v5114 = vpack.c.b16 %v4204, %v4197
      %v5115 = vpack.c.b16 %v4205, %v4198
      %v5116 = vpack.c.b16 %v4206, %v4199
      %v5117 = vpack.c.b16 %v4214, %v4207
      %v5118 = vpack.c.b16 %v4215, %v4208
      %v5119 = vpack.c.b16 %v4216, %v4209
      %v5120 = vpack.c.b16 %v4217, %v4210
      %v5121 = vpack.c.b16 %v4218, %v4211
      %v5122 = vpack.c.b16 %v4219, %v4212
      %v5123 = vpack.c.b16 %v4220, %v4213
      %v5124 = vpack.c.b16 %v4228, %v4221
      %v5125 = vpack.c.b16 %v4229, %v4222
      %v5126 = vpack.c.b16 %v4230, %v4223
      %v5127 = vpack.c.b16 %v4231, %v4224
      %v5128 = vpack.c.b16 %v4232, %v4225
      %v5129 = vpack.c.b16 %v4233, %v4226
      %v5130 = vpack.c.b16 %v4234, %v4227
      %v5131 = vpack.c.b16 %v4242, %v4235
      %v5132 = vpack.c.b16 %v4243, %v4236
      %v5133 = vpack.c.b16 %v4244, %v4237
      %v5134 = vpack.c.b16 %v4245, %v4238
      %v5135 = vpack.c.b16 %v4246, %v4239
      %v5136 = vpack.c.b16 %v4247, %v4240
      %v5137 = vpack.c.b16 %v4248, %v4241
      %v5138 = vpack.c.b16 %v4256, %v4249
      %v5139 = vpack.c.b16 %v4257, %v4250
      %v5140 = vpack.c.b16 %v4258, %v4251
      %v5141 = vpack.c.b16 %v4259, %v4252
      %v5142 = vpack.c.b16 %v4260, %v4253
      %v5143 = vpack.c.b16 %v4261, %v4254
      %v5144 = vpack.c.b16 %v4262, %v4255
      %v5145 = vpack.c.b16 %v4270, %v4263
      %v5146 = vpack.c.b16 %v4271, %v4264
      %v5147 = vpack.c.b16 %v4272, %v4265
      %v5148 = vpack.c.b16 %v4273, %v4266
      %v5149 = vpack.c.b16 %v4274, %v4267
      %v5150 = vpack.c.b16 %v4275, %v4268
      %v5151 = vpack.c.b16 %v4276, %v4269
      %v5152 = vpack.c.b16 %v4284, %v4277
      %v5153 = vpack.c.b16 %v4285, %v4278
      %v5154 = vpack.c.b16 %v4286, %v4279
      %v5155 = vpack.c.b16 %v4287, %v4280
      %v5156 = vpack.c.b16 %v4288, %v4281
      %v5157 = vpack.c.b16 %v4289, %v4282
      %v5158 = vpack.c.b16 %v4290, %v4283
      %v5159 = vpack.c.b16 %v4298, %v4291
      %v5160 = vpack.c.b16 %v4299, %v4292
      %v5161 = vpack.c.b16 %v4300, %v4293
      %v5162 = vpack.c.b16 %v4301, %v4294
      %v5163 = vpack.c.b16 %v4302, %v4295
      %v5164 = vpack.c.b16 %v4303, %v4296
      %v5165 = vpack.c.b16 %v4304, %v4297
      %v5166 = vpack.c.b16 %v4312, %v4305
      %v5167 = vpack.c.b16 %v4313, %v4306
      %v5168 = vpack.c.b16 %v4314, %v4307
      %v5169 = vpack.c.b16 %v4315, %v4308
      %v5170 = vpack.c.b16 %v4316, %v4309
      %v5171 = vpack.c.b16 %v4317, %v4310
      %v5172 = vpack.c.b16 %v4318, %v4311
      %v5173 = vpack.c.b16 %v4326, %v4319
      %v5174 = vpack.c.b16 %v4327, %v4320
      %v5175 = vpack.c.b16 %v4328, %v4321
      %v5176 = vpack.c.b16 %v4329, %v4322
      %v5177 = vpack.c.b16 %v4330, %v4323
      %v5178 = vpack.c.b16 %v4331, %v4324
      %v5179 = vpack.c.b16 %v4332, %v4325
      %v5180 = vpack.c.b16 %v4340, %v4333
      %v5181 = vpack.c.b16 %v4341, %v4334
      %v5182 = vpack.c.b16 %v4342, %v4335
      %v5183 = vpack.c.b16 %v4343, %v4336
      %v5184 = vpack.c.b16 %v4344, %v4337
      %v5185 = vpack.c.b16 %v4345, %v4338
      %v5186 = vpack.c.b16 %v4346, %v4339
      %v5187 = vpack.c.b16 %v4354, %v4347
      %v5188 = vpack.c.b16 %v4355, %v4348
      %v5189 = vpack.c.b16 %v4356, %v4349
      %v5190 = vpack.c.b16 %v4357, %v4350
      %v5191 = vpack.c.b16 %v4358, %v4351
      %v5192 = vpack.c.b16 %v4359, %v4352
      %v5193 = vpack.c.b16 %v4360, %v4353
      %v5194 = vpack.c.b16 %v4368, %v4361
      %v5195 = vpack.c.b16 %v4369, %v4362
      %v5196 = vpack.c.b16 %v4370, %v4363
      %v5197 = vpack.c.b16 %v4371, %v4364
      %v5198 = vpack.c.b16 %v4372, %v4365
      %v5199 = vpack.c.b16 %v4373, %v4366
      %v5200 = vpack.c.b16 %v4374, %v4367
      %v5201 = vpack.c.b16 %v4382, %v4375
      %v5202 = vpack.c.b16 %v4383, %v4376
      %v5203 = vpack.c.b16 %v4384, %v4377
      %v5204 = vpack.c.b16 %v4385, %v4378
      %v5205 = vpack.c.b16 %v4386, %v4379
      %v5206 = vpack.c.b16 %v4387, %v4380
      %v5207 = vpack.c.b16 %v4388, %v4381
      %v5208 = vpack.c.b16 %v4396, %v4389
      %v5209 = vpack.c.b16 %v4397, %v4390
      %v5210 = vpack.c.b16 %v4398, %v4391
      %v5211 = vpack.c.b16 %v4399, %v4392
      %v5212 = vpack.c.b16 %v4400, %v4393
      %v5213 = vpack.c.b16 %v4401, %v4394
      %v5214 = vpack.c.b16 %v4402, %v4395
      %v5215 = vpack.c.b16 %v4410, %v4403
      %v5216 = vpack.c.b16 %v4411, %v4404
      %v5217 = vpack.c.b16 %v4412, %v4405
      %v5218 = vpack.c.b16 %v4413, %v4406
      %v5219 = vpack.c.b16 %v4414, %v4407
      %v5220 = vpack.c.b16 %v4415, %v4408
      %v5221 = vpack.c.b16 %v4416, %v4409
      %v5222 = vpack.c.b16 %v4424, %v4417
      %v5223 = vpack.c.b16 %v4425, %v4418
      %v5224 = vpack.c.b16 %v4426, %v4419
      %v5225 = vpack.c.b16 %v4427, %v4420
      %v5226 = vpack.c.b16 %v4428, %v4421
      %v5227 = vpack.c.b16 %v4429, %v4422
      %v5228 = vpack.c.b16 %v4430, %v4423
      %v5229 = vpack.c.b16 %v4438, %v4431
      %v5230 = vpack.c.b16 %v4439, %v4432
      %v5231 = vpack.c.b16 %v4440, %v4433
      %v5232 = vpack.c.b16 %v4441, %v4434
      %v5233 = vpack.c.b16 %v4442, %v4435
      %v5234 = vpack.c.b16 %v4443, %v4436
      %v5235 = vpack.c.b16 %v4444, %v4437
      %v5236 = vpack.c.b16 %v4452, %v4445
      %v5237 = vpack.c.b16 %v4453, %v4446
      %v5238 = vpack.c.b16 %v4454, %v4447
      %v5239 = vpack.c.b16 %v4455, %v4448
      %v5240 = vpack.c.b16 %v4456, %v4449
      %v5241 = vpack.c.b16 %v4457, %v4450
      %v5242 = vpack.c.b16 %v4458, %v4451
      %v5243 = vpack.c.b16 %v4466, %v4459
      %v5244 = vpack.c.b16 %v4467, %v4460
      %v5245 = vpack.c.b16 %v4468, %v4461
      %v5246 = vpack.c.b16 %v4469, %v4462
      %v5247 = vpack.c.b16 %v4470, %v4463
      %v5248 = vpack.c.b16 %v4471, %v4464
      %v5249 = vpack.c.b16 %v4472, %v4465
      %v5250 = vpack.c.b16 %v4480, %v4473
      %v5251 = vpack.c.b16 %v4481, %v4474
      %v5252 = vpack.c.b16 %v4482, %v4475
      %v5253 = vpack.c.b16 %v4483, %v4476
      %v5254 = vpack.c.b16 %v4484, %v4477
      %v5255 = vpack.c.b16 %v4485, %v4478
      %v5256 = vpack.c.b16 %v4486, %v4479
      %v5257 = vpack.c.b16 %v4494, %v4487
      %v5258 = vpack.c.b16 %v4495, %v4488
      %v5259 = vpack.c.b16 %v4496, %v4489
      %v5260 = vpack.c.b16 %v4497, %v4490
      %v5261 = vpack.c.b16 %v4498, %v4491
      %v5262 = vpack.c.b16 %v4499, %v4492
      %v5263 = vpack.c.b16 %v4500, %v4493
      %v5264 = vpack.c.b16 %v4508, %v4501
      %v5265 = vpack.c.b16 %v4509, %v4502
      %v5266 = vpack.c.b16 %v4510, %v4503
      %v5267 = vpack.c.b16 %v4511, %v4504
      %v5268 = vpack.c.b16 %v4512, %v4505
      %v5269 = vpack.c.b16 %v4513, %v4506
      %v5270 = vpack.c.b16 %v4514, %v4507
      %v5271 = vpack.c.b16 %v4522, %v4515
      %v5272 = vpack.c.b16 %v4523, %v4516
      %v5273 = vpack.c.b16 %v4524, %v4517
      %v5274 = vpack.c.b16 %v4525, %v4518
      %v5275 = vpack.c.b16 %v4526, %v4519
      %v5276 = vpack.c.b16 %v4527, %v4520
      %v5277 = vpack.c.b16 %v4528, %v4521
      %v5278 = vpack.c.b16 %v4536, %v4529
      %v5279 = vpack.c.b16 %v4537, %v4530
      %v5280 = vpack.c.b16 %v4538, %v4531
      %v5281 = vpack.c.b16 %v4539, %v4532
      %v5282 = vpack.c.b16 %v4540, %v4533
      %v5283 = vpack.c.b16 %v4541, %v4534
      %v5284 = vpack.c.b16 %v4542, %v4535
      %v5285 = vpack.c.b16 %v4550, %v4543
      %v5286 = vpack.c.b16 %v4551, %v4544
      %v5287 = vpack.c.b16 %v4552, %v4545
      %v5288 = vpack.c.b16 %v4553, %v4546
      %v5289 = vpack.c.b16 %v4554, %v4547
      %v5290 = vpack.c.b16 %v4555, %v4548
      %v5291 = vpack.c.b16 %v4556, %v4549
      %v5292 = vpack.c.b16 %v4564, %v4557
      %v5293 = vpack.c.b16 %v4565, %v4558
      %v5294 = vpack.c.b16 %v4566, %v4559
      %v5295 = vpack.c.b16 %v4567, %v4560
      %v5296 = vpack.c.b16 %v4568, %v4561
      %v5297 = vpack.c.b16 %v4569, %v4562
      %v5298 = vpack.c.b16 %v4570, %v4563
      %v5299 = vpack.c.b16 %v4578, %v4571
      %v5300 = vpack.c.b16 %v4579, %v4572
      %v5301 = vpack.c.b16 %v4580, %v4573
      %v5302 = vpack.c.b16 %v4581, %v4574
      %v5303 = vpack.c.b16 %v4582, %v4575
      %v5304 = vpack.c.b16 %v4583, %v4576
      %v5305 = vpack.c.b16 %v4584, %v4577
      %v5306 = vpack.c.b16 %v4592, %v4585
      %v5307 = vpack.c.b16 %v4593, %v4586
      %v5308 = vpack.c.b16 %v4594, %v4587
      %v5309 = vpack.c.b16 %v4595, %v4588
      %v5310 = vpack.c.b16 %v4596, %v4589
      %v5311 = vpack.c.b16 %v4597, %v4590
      %v5312 = vpack.c.b16 %v4598, %v4591
      %v5313 = vpack.c.b16 %v4606, %v4599
      %v5314 = vpack.c.b16 %v4607, %v4600
      %v5315 = vpack.c.b16 %v4608, %v4601
      %v5316 = vpack.c.b16 %v4609, %v4602
      %v5317 = vpack.c.b16 %v4610, %v4603
      %v5318 = vpack.c.b16 %v4611, %v4604
      %v5319 = vpack.c.b16 %v4612, %v4605
      %v5320 = vpack.c.b16 %v4620, %v4613
      %v5321 = vpack.c.b16 %v4621, %v4614
      %v5322 = vpack.c.b16 %v4622, %v4615
      %v5323 = vpack.c.b16 %v4623, %v4616
      %v5324 = vpack.c.b16 %v4624, %v4617
      %v5325 = vpack.c.b16 %v4625, %v4618
      %v5326 = vpack.c.b16 %v4626, %v4619
      %v6028 = vlaneseq
      %v6029 = vshrl.u32 %v6028, 7
      %v6030 = vsub.s32 0, %v6029
      %v6031 = vrot.slane %v2426, %v6030
      %v6032 = vlaneseq
      %v6033 = vshrl.u32 %v6032, 7
      %v6034 = vsub.s32 1, %v6033
      %v6035 = vrot.slane %v2426, %v6034
      %v6036 = vlaneseq
      %v6037 = vshrl.u32 %v6036, 7
      %v6038 = vsub.s32 2, %v6037
      %v6039 = vrot.slane %v2426, %v6038
      %v6040 = vlaneseq
      %v6041 = vshrl.u32 %v6040, 7
      %v6042 = vsub.s32 3, %v6041
      %v6043 = vrot.slane %v2426, %v6042
      %v6044 = vlaneseq
      %v6045 = vshrl.u32 %v6044, 7
      %v6046 = vsub.s32 4, %v6045
      %v6047 = vrot.slane %v2426, %v6046
      %v6048 = vlaneseq
      %v6049 = vshrl.u32 %v6048, 7
      %v6050 = vsub.s32 5, %v6049
      %v6051 = vrot.slane %v2426, %v6050
      %v6052 = vlaneseq
      %v6053 = vshrl.u32 %v6052, 7
      %v6054 = vsub.s32 6, %v6053
      %v6055 = vrot.slane %v2426, %v6054
      %v6064 = vsel %vm675, %v1625, 0
      %6066 = vmatprep.subr.bf16.mxu0 %v4628
      %6067 = vmatpush1.bf16.msra.mxu0 %v4627
      %6068 = vmatprep.subr.bf16.mxu0 %v4635
      %6069 = vmatpush1.bf16.msra.mxu0 %v4634
      %6070 = vmatprep.subr.bf16.mxu0 %v4642
      %6071 = vmatpush1.bf16.msra.mxu0 %v4641
      %6072 = vmatprep.subr.bf16.mxu0 %v4649
      %6073 = vmatpush1.bf16.msra.mxu0 %v4648
      %6074 = vmatprep.subr.bf16.mxu0 %v4656
      %6075 = vmatpush1.bf16.msra.mxu0 %v4655
      %6076 = vmatprep.subr.bf16.mxu0 %v4663
      %6077 = vmatpush1.bf16.msra.mxu0 %v4662
      %6078 = vmatprep.subr.bf16.mxu0 %v4670
      %6079 = vmatpush1.bf16.msra.mxu0 %v4669
      %6080 = vmatprep.subr.bf16.mxu0 %v4677
      %6081 = vmatpush1.bf16.msra.mxu0 %v4676
      %6082 = vmatprep.subr.bf16.mxu0 %v4684
      %6083 = vmatpush1.bf16.msra.mxu0 %v4683
      %6084 = vmatprep.subr.bf16.mxu0 %v4691
      %6085 = vmatpush1.bf16.msra.mxu0 %v4690
      %6086 = vmatprep.subr.bf16.mxu0 %v4698
      %6087 = vmatpush1.bf16.msra.mxu0 %v4697
      %6088 = vmatprep.subr.bf16.mxu0 %v4705
      %6089 = vmatpush1.bf16.msra.mxu0 %v4704
      %6090 = vmatprep.subr.bf16.mxu0 %v4712
      %6091 = vmatpush1.bf16.msra.mxu0 %v4711
      %6092 = vmatprep.subr.bf16.mxu0 %v4719
      %6093 = vmatpush1.bf16.msra.mxu0 %v4718
      %6094 = vmatprep.subr.bf16.mxu0 %v4726
      %6095 = vmatpush1.bf16.msra.mxu0 %v4725
      %6096 = vmatprep.subr.bf16.mxu0 %v4733
      %6097 = vmatpush1.bf16.msra.mxu0 %v4732
      %6098 = vmatprep.mubr.bf16.mxu0 %v1614
      %6099 = vmatmul.mubr.bf16.gmra.mrb[0].mxu0 %v1613
      %v6100 = vpop.f32.mrb[0].mxu0
      %v6101 = vadd.f32 %v6031, %v6100
      %v6102 = vpop.f32.mrb[0].mxu0
      %v6103 = vadd.f32 %v6035, %v6102
      %v6104 = vpop.f32.mrb[0].mxu0
      %v6105 = vpop.f32.mrb[0].mxu0
      %6106 = vdwg.mxu0
      %6107 = vmatprep.subr.bf16.mxu0 %v4740
      %6108 = vmatpush1.bf16.msra.mxu0 %v4739
      %6109 = vmatprep.subr.bf16.mxu0 %v4747
      %6110 = vmatpush1.bf16.msra.mxu0 %v4746
      %6111 = vmatprep.subr.bf16.mxu0 %v4754
      %6112 = vmatpush1.bf16.msra.mxu0 %v4753
      %6113 = vmatprep.subr.bf16.mxu0 %v4761
      %6114 = vmatpush1.bf16.msra.mxu0 %v4760
      %6115 = vmatprep.subr.bf16.mxu0 %v4768
      %6116 = vmatpush1.bf16.msra.mxu0 %v4767
      %6117 = vmatprep.subr.bf16.mxu0 %v4775
      %6118 = vmatpush1.bf16.msra.mxu0 %v4774
      %6119 = vmatprep.subr.bf16.mxu0 %v4782
      %6120 = vmatpush1.bf16.msra.mxu0 %v4781
      %6121 = vmatprep.subr.bf16.mxu0 %v4789
      %6122 = vmatpush1.bf16.msra.mxu0 %v4788
      %6123 = vmatprep.subr.bf16.mxu0 %v4796
      %6124 = vmatpush1.bf16.msra.mxu0 %v4795
      %6125 = vmatprep.subr.bf16.mxu0 %v4803
      %6126 = vmatpush1.bf16.msra.mxu0 %v4802
      %6127 = vmatprep.subr.bf16.mxu0 %v4810
      %6128 = vmatpush1.bf16.msra.mxu0 %v4809
      %6129 = vmatprep.subr.bf16.mxu0 %v4817
      %6130 = vmatpush1.bf16.msra.mxu0 %v4816
      %6131 = vmatprep.subr.bf16.mxu0 %v4824
      %6132 = vmatpush1.bf16.msra.mxu0 %v4823
      %6133 = vmatprep.subr.bf16.mxu0 %v4831
      %6134 = vmatpush1.bf16.msra.mxu0 %v4830
      %6135 = vmatprep.subr.bf16.mxu0 %v4838
      %6136 = vmatpush1.bf16.msra.mxu0 %v4837
      %6137 = vmatprep.subr.bf16.mxu0 %v4845
      %6138 = vmatpush1.bf16.msra.mxu0 %v4844
      %6139 = vmatprep.mubr.bf16.mxu0 %v1616
      %6140 = vmatmul.mubr.bf16.gmra.mrb[0].mxu0 %v1615
      %v6141 = vpop.f32.mrb[0].mxu0
      %v6142 = vadd.f32 %v6101, %v6141
      %v6143 = vpop.f32.mrb[0].mxu0
      %v6144 = vadd.f32 %v6103, %v6143
      %v6145 = vpop.f32.mrb[0].mxu0
      %v6146 = vpop.f32.mrb[0].mxu0
      %6147 = vdwg.mxu0
      %6148 = vmatprep.subr.bf16.mxu0 %v4852
      %6149 = vmatpush1.bf16.msra.mxu0 %v4851
      %6150 = vmatprep.subr.bf16.mxu0 %v4859
      %6151 = vmatpush1.bf16.msra.mxu0 %v4858
      %6152 = vmatprep.subr.bf16.mxu0 %v4866
      %6153 = vmatpush1.bf16.msra.mxu0 %v4865
      %6154 = vmatprep.subr.bf16.mxu0 %v4873
      %6155 = vmatpush1.bf16.msra.mxu0 %v4872
      %6156 = vmatprep.subr.bf16.mxu0 %v4880
      %6157 = vmatpush1.bf16.msra.mxu0 %v4879
      %6158 = vmatprep.subr.bf16.mxu0 %v4887
      %6159 = vmatpush1.bf16.msra.mxu0 %v4886
      %6160 = vmatprep.subr.bf16.mxu0 %v4894
      %6161 = vmatpush1.bf16.msra.mxu0 %v4893
      %6162 = vmatprep.subr.bf16.mxu0 %v4901
      %6163 = vmatpush1.bf16.msra.mxu0 %v4900
      %6164 = vmatprep.subr.bf16.mxu0 %v4908
      %6165 = vmatpush1.bf16.msra.mxu0 %v4907
      %6166 = vmatprep.subr.bf16.mxu0 %v4915
      %6167 = vmatpush1.bf16.msra.mxu0 %v4914
      %6168 = vmatprep.subr.bf16.mxu0 %v4922
      %6169 = vmatpush1.bf16.msra.mxu0 %v4921
      %6170 = vmatprep.subr.bf16.mxu0 %v4929
      %6171 = vmatpush1.bf16.msra.mxu0 %v4928
      %6172 = vmatprep.subr.bf16.mxu0 %v4936
      %6173 = vmatpush1.bf16.msra.mxu0 %v4935
      %6174 = vmatprep.subr.bf16.mxu0 %v4943
      %6175 = vmatpush1.bf16.msra.mxu0 %v4942
      %6176 = vmatprep.subr.bf16.mxu0 %v4950
      %6177 = vmatpush1.bf16.msra.mxu0 %v4949
      %6178 = vmatprep.subr.bf16.mxu0 %v4957
      %6179 = vmatpush1.bf16.msra.mxu0 %v4956
      %6180 = vmatprep.mubr.bf16.mxu0 %v1618
      %6181 = vmatmul.mubr.bf16.gmra.mrb[0].mxu0 %v1617
      %v6182 = vpop.f32.mrb[0].mxu0
      %v6183 = vadd.f32 %v6142, %v6182
      %v6184 = vpop.f32.mrb[0].mxu0
      %v6185 = vadd.f32 %v6144, %v6184
      %v6186 = vpop.f32.mrb[0].mxu0
      %v6187 = vpop.f32.mrb[0].mxu0
      %6188 = vdwg.mxu0
      %6189 = vmatprep.subr.bf16.mxu0 %v4964
      %6190 = vmatpush1.bf16.msra.mxu0 %v4963
      %6191 = vmatprep.subr.bf16.mxu0 %v4971
      %6192 = vmatpush1.bf16.msra.mxu0 %v4970
      %6193 = vmatprep.subr.bf16.mxu0 %v4978
      %6194 = vmatpush1.bf16.msra.mxu0 %v4977
      %6195 = vmatprep.subr.bf16.mxu0 %v4985
      %6196 = vmatpush1.bf16.msra.mxu0 %v4984
      %6197 = vmatprep.subr.bf16.mxu0 %v4992
      %6198 = vmatpush1.bf16.msra.mxu0 %v4991
      %6199 = vmatprep.subr.bf16.mxu0 %v4999
      %6200 = vmatpush1.bf16.msra.mxu0 %v4998
      %6201 = vmatprep.subr.bf16.mxu0 %v5006
      %6202 = vmatpush1.bf16.msra.mxu0 %v5005
      %6203 = vmatprep.subr.bf16.mxu0 %v5013
      %6204 = vmatpush1.bf16.msra.mxu0 %v5012
      %6205 = vmatprep.subr.bf16.mxu0 %v5020
      %6206 = vmatpush1.bf16.msra.mxu0 %v5019
      %6207 = vmatprep.subr.bf16.mxu0 %v5027
      %6208 = vmatpush1.bf16.msra.mxu0 %v5026
      %6209 = vmatprep.subr.bf16.mxu0 %v5034
      %6210 = vmatpush1.bf16.msra.mxu0 %v5033
      %6211 = vmatprep.subr.bf16.mxu0 %v5041
      %6212 = vmatpush1.bf16.msra.mxu0 %v5040
      %6213 = vmatprep.subr.bf16.mxu0 %v5048
      %6214 = vmatpush1.bf16.msra.mxu0 %v5047
      %6215 = vmatprep.subr.bf16.mxu0 %v5055
      %6216 = vmatpush1.bf16.msra.mxu0 %v5054
      %6217 = vmatprep.subr.bf16.mxu0 %v5062
      %6218 = vmatpush1.bf16.msra.mxu0 %v5061
      %6219 = vmatprep.subr.bf16.mxu0 %v5069
      %6220 = vmatpush1.bf16.msra.mxu0 %v5068
      %6221 = vmatprep.mubr.bf16.mxu0 %v1620
      %6222 = vmatmul.mubr.bf16.gmra.mrb[0].mxu0 %v1619
      %v6223 = vpop.f32.mrb[0].mxu0
      %v6224 = vadd.f32 %v6183, %v6223
      %v6225 = vpop.f32.mrb[0].mxu0
      %v6226 = vadd.f32 %v6185, %v6225
      %v6227 = vpop.f32.mrb[0].mxu0
      %v6228 = vpop.f32.mrb[0].mxu0
      %6229 = vdwg.mxu0
      %6230 = vmatprep.subr.bf16.mxu0 %v5076
      %6231 = vmatpush1.bf16.msra.mxu0 %v5075
      %6232 = vmatprep.subr.bf16.mxu0 %v5083
      %6233 = vmatpush1.bf16.msra.mxu0 %v5082
      %6234 = vmatprep.subr.bf16.mxu0 %v5090
      %6235 = vmatpush1.bf16.msra.mxu0 %v5089
      %6236 = vmatprep.subr.bf16.mxu0 %v5097
      %6237 = vmatpush1.bf16.msra.mxu0 %v5096
      %6238 = vmatprep.subr.bf16.mxu0 %v5104
      %6239 = vmatpush1.bf16.msra.mxu0 %v5103
      %6240 = vmatprep.subr.bf16.mxu0 %v5111
      %6241 = vmatpush1.bf16.msra.mxu0 %v5110
      %6242 = vmatprep.subr.bf16.mxu0 %v5118
      %6243 = vmatpush1.bf16.msra.mxu0 %v5117
      %6244 = vmatprep.subr.bf16.mxu0 %v5125
      %6245 = vmatpush1.bf16.msra.mxu0 %v5124
      %6246 = vmatprep.subr.bf16.mxu0 %v5132
      %6247 = vmatpush1.bf16.msra.mxu0 %v5131
      %6248 = vmatprep.subr.bf16.mxu0 %v5139
      %6249 = vmatpush1.bf16.msra.mxu0 %v5138
      %6250 = vmatprep.subr.bf16.mxu0 %v5146
      %6251 = vmatpush1.bf16.msra.mxu0 %v5145
      %6252 = vmatprep.subr.bf16.mxu0 %v5153
      %6253 = vmatpush1.bf16.msra.mxu0 %v5152
      %6254 = vmatprep.subr.bf16.mxu0 %v5160
      %6255 = vmatpush1.bf16.msra.mxu0 %v5159
      %6256 = vmatprep.subr.bf16.mxu0 %v5167
      %6257 = vmatpush1.bf16.msra.mxu0 %v5166
      %6258 = vmatprep.subr.bf16.mxu0 %v5174
      %6259 = vmatpush1.bf16.msra.mxu0 %v5173
      %6260 = vmatprep.subr.bf16.mxu0 %v5181
      %6261 = vmatpush1.bf16.msra.mxu0 %v5180
      %6262 = vmatprep.mubr.bf16.mxu0 %v1622
      %6263 = vmatmul.mubr.bf16.gmra.mrb[0].mxu0 %v1621
      %v6264 = vpop.f32.mrb[0].mxu0
      %v6265 = vadd.f32 %v6224, %v6264
      %v6266 = vpop.f32.mrb[0].mxu0
      %v6267 = vadd.f32 %v6226, %v6266
      %v6268 = vpop.f32.mrb[0].mxu0
      %v6269 = vpop.f32.mrb[0].mxu0
      %6270 = vdwg.mxu0
      %6271 = vmatprep.subr.bf16.mxu0 %v5188
      %6272 = vmatpush1.bf16.msra.mxu0 %v5187
      %6273 = vmatprep.subr.bf16.mxu0 %v5195
      %6274 = vmatpush1.bf16.msra.mxu0 %v5194
      %6275 = vmatprep.subr.bf16.mxu0 %v5202
      %6276 = vmatpush1.bf16.msra.mxu0 %v5201
      %6277 = vmatprep.subr.bf16.mxu0 %v5209
      %6278 = vmatpush1.bf16.msra.mxu0 %v5208
      %6279 = vmatprep.subr.bf16.mxu0 %v5216
      %6280 = vmatpush1.bf16.msra.mxu0 %v5215
      %6281 = vmatprep.subr.bf16.mxu0 %v5223
      %6282 = vmatpush1.bf16.msra.mxu0 %v5222
      %6283 = vmatprep.subr.bf16.mxu0 %v5230
      %6284 = vmatpush1.bf16.msra.mxu0 %v5229
      %6285 = vmatprep.subr.bf16.mxu0 %v5237
      %6286 = vmatpush1.bf16.msra.mxu0 %v5236
      %6287 = vmatprep.subr.bf16.mxu0 %v5244
      %6288 = vmatpush1.bf16.msra.mxu0 %v5243
      %6289 = vmatprep.subr.bf16.mxu0 %v5251
      %6290 = vmatpush1.bf16.msra.mxu0 %v5250
      %6291 = vmatprep.subr.bf16.mxu0 %v5258
      %6292 = vmatpush1.bf16.msra.mxu0 %v5257
      %6293 = vmatprep.subr.bf16.mxu0 %v5265
      %6294 = vmatpush1.bf16.msra.mxu0 %v5264
      %6295 = vmatprep.subr.bf16.mxu0 %v5272
      %6296 = vmatpush1.bf16.msra.mxu0 %v5271
      %6297 = vmatprep.subr.bf16.mxu0 %v5279
      %6298 = vmatpush1.bf16.msra.mxu0 %v5278
      %6299 = vmatprep.subr.bf16.mxu0 %v5286
      %6300 = vmatpush1.bf16.msra.mxu0 %v5285
      %6301 = vmatprep.subr.bf16.mxu0 %v5293
      %6302 = vmatpush1.bf16.msra.mxu0 %v5292
      %6303 = vmatprep.mubr.bf16.mxu0 %v1624
      %6304 = vmatmul.mubr.bf16.gmra.mrb[0].mxu0 %v1623
      %v6305 = vpop.f32.mrb[0].mxu0
      %v6306 = vadd.f32 %v6265, %v6305
      %v6307 = vpop.f32.mrb[0].mxu0
      %v6308 = vadd.f32 %v6267, %v6307
      %v6309 = vpop.f32.mrb[0].mxu0
      %v6310 = vpop.f32.mrb[0].mxu0
      %6311 = vdwg.mxu0
      %6312 = vmatprep.subr.bf16.mxu0 %v5300
      %6313 = vmatpush1.bf16.msra.mxu0 %v5299
      %6314 = vmatprep.subr.bf16.mxu0 %v5307
      %6315 = vmatpush1.bf16.msra.mxu0 %v5306
      %6316 = vmatprep.subr.bf16.mxu0 %v5314
      %6317 = vmatpush1.bf16.msra.mxu0 %v5313
      %6318 = vmatprep.subr.bf16.mxu0 %v5321
      %6319 = vmatpush1.bf16.msra.mxu0 %v5320
      %6320 = vmatprep.subr.bf16.mxu0 0
      %6321 = vmatpush1.bf16.msra.mxu0 0
      %6322 = vmatprep.subr.bf16.mxu0 0
      %6323 = vmatpush1.bf16.msra.mxu0 0
      %6324 = vmatprep.subr.bf16.mxu0 0
      %6325 = vmatpush1.bf16.msra.mxu0 0
      %6326 = vmatprep.subr.bf16.mxu0 0
      %6327 = vmatpush1.bf16.msra.mxu0 0
      %6328 = vmatprep.subr.bf16.mxu0 0
      %6329 = vmatpush1.bf16.msra.mxu0 0
      %6330 = vmatprep.subr.bf16.mxu0 0
      %6331 = vmatpush1.bf16.msra.mxu0 0
      %6332 = vmatprep.subr.bf16.mxu0 0
      %6333 = vmatpush1.bf16.msra.mxu0 0
      %6334 = vmatprep.subr.bf16.mxu0 0
      %6335 = vmatpush1.bf16.msra.mxu0 0
      %6336 = vmatprep.subr.bf16.mxu0 0
      %6337 = vmatpush1.bf16.msra.mxu0 0
      %6338 = vmatprep.subr.bf16.mxu0 0
      %6339 = vmatpush1.bf16.msra.mxu0 0
      %6340 = vmatprep.subr.bf16.mxu0 0
      %6341 = vmatpush1.bf16.msra.mxu0 0
      %6342 = vmatprep.subr.bf16.mxu0 0
      %6343 = vmatpush1.bf16.msra.mxu0 0
      %6344 = vmatprep.mubr.bf16.mxu0 0
      %6345 = vmatmul.mubr.bf16.gmra.mrb[0].mxu0 %v6064
      %v6346 = vpop.f32.mrb[0].mxu0
      %v6347 = vadd.f32 %v6306, %v6346
      %v6348 = vpop.f32.mrb[0].mxu0
      %v6349 = vadd.f32 %v6308, %v6348
      %v6350 = vpop.f32.mrb[0].mxu0
      %v6351 = vpop.f32.mrb[0].mxu0
      %6352 = vdwg.mxu0
      %6353 = vmatprep.subr.bf16.mxu0 %v4630
      %6354 = vmatpush1.bf16.msra.mxu0 %v4629
      %6355 = vmatprep.subr.bf16.mxu0 %v4637
      %6356 = vmatpush1.bf16.msra.mxu0 %v4636
      %6357 = vmatprep.subr.bf16.mxu0 %v4644
      %6358 = vmatpush1.bf16.msra.mxu0 %v4643
      %6359 = vmatprep.subr.bf16.mxu0 %v4651
      %6360 = vmatpush1.bf16.msra.mxu0 %v4650
      %6361 = vmatprep.subr.bf16.mxu0 %v4658
      %6362 = vmatpush1.bf16.msra.mxu0 %v4657
      %6363 = vmatprep.subr.bf16.mxu0 %v4665
      %6364 = vmatpush1.bf16.msra.mxu0 %v4664
      %6365 = vmatprep.subr.bf16.mxu0 %v4672
      %6366 = vmatpush1.bf16.msra.mxu0 %v4671
      %6367 = vmatprep.subr.bf16.mxu0 %v4679
      %6368 = vmatpush1.bf16.msra.mxu0 %v4678
      %6369 = vmatprep.subr.bf16.mxu0 %v4686
      %6370 = vmatpush1.bf16.msra.mxu0 %v4685
      %6371 = vmatprep.subr.bf16.mxu0 %v4693
      %6372 = vmatpush1.bf16.msra.mxu0 %v4692
      %6373 = vmatprep.subr.bf16.mxu0 %v4700
      %6374 = vmatpush1.bf16.msra.mxu0 %v4699
      %6375 = vmatprep.subr.bf16.mxu0 %v4707
      %6376 = vmatpush1.bf16.msra.mxu0 %v4706
      %6377 = vmatprep.subr.bf16.mxu0 %v4714
      %6378 = vmatpush1.bf16.msra.mxu0 %v4713
      %6379 = vmatprep.subr.bf16.mxu0 %v4721
      %6380 = vmatpush1.bf16.msra.mxu0 %v4720
      %6381 = vmatprep.subr.bf16.mxu0 %v4728
      %6382 = vmatpush1.bf16.msra.mxu0 %v4727
      %6383 = vmatprep.subr.bf16.mxu0 %v4735
      %6384 = vmatpush1.bf16.msra.mxu0 %v4734
      %6385 = vmatprep.mubr.bf16.mxu0 %v1614
      %6386 = vmatmul.mubr.bf16.gmra.mrb[0].mxu0 %v1613
      %v6387 = vpop.f32.mrb[0].mxu0
      %v6388 = vadd.f32 %v6039, %v6387
      %v6389 = vpop.f32.mrb[0].mxu0
      %v6390 = vadd.f32 %v6043, %v6389
      %v6391 = vpop.f32.mrb[0].mxu0
      %v6392 = vpop.f32.mrb[0].mxu0
      %6393 = vdwg.mxu0
      %6394 = vmatprep.subr.bf16.mxu0 %v4742
      %6395 = vmatpush1.bf16.msra.mxu0 %v4741
      %6396 = vmatprep.subr.bf16.mxu0 %v4749
      %6397 = vmatpush1.bf16.msra.mxu0 %v4748
      %6398 = vmatprep.subr.bf16.mxu0 %v4756
      %6399 = vmatpush1.bf16.msra.mxu0 %v4755
      %6400 = vmatprep.subr.bf16.mxu0 %v4763
      %6401 = vmatpush1.bf16.msra.mxu0 %v4762
      %6402 = vmatprep.subr.bf16.mxu0 %v4770
      %6403 = vmatpush1.bf16.msra.mxu0 %v4769
      %6404 = vmatprep.subr.bf16.mxu0 %v4777
      %6405 = vmatpush1.bf16.msra.mxu0 %v4776
      %6406 = vmatprep.subr.bf16.mxu0 %v4784
      %6407 = vmatpush1.bf16.msra.mxu0 %v4783
      %6408 = vmatprep.subr.bf16.mxu0 %v4791
      %6409 = vmatpush1.bf16.msra.mxu0 %v4790
      %6410 = vmatprep.subr.bf16.mxu0 %v4798
      %6411 = vmatpush1.bf16.msra.mxu0 %v4797
      %6412 = vmatprep.subr.bf16.mxu0 %v4805
      %6413 = vmatpush1.bf16.msra.mxu0 %v4804
      %6414 = vmatprep.subr.bf16.mxu0 %v4812
      %6415 = vmatpush1.bf16.msra.mxu0 %v4811
      %6416 = vmatprep.subr.bf16.mxu0 %v4819
      %6417 = vmatpush1.bf16.msra.mxu0 %v4818
      %6418 = vmatprep.subr.bf16.mxu0 %v4826
      %6419 = vmatpush1.bf16.msra.mxu0 %v4825
      %6420 = vmatprep.subr.bf16.mxu0 %v4833
      %6421 = vmatpush1.bf16.msra.mxu0 %v4832
      %6422 = vmatprep.subr.bf16.mxu0 %v4840
      %6423 = vmatpush1.bf16.msra.mxu0 %v4839
      %6424 = vmatprep.subr.bf16.mxu0 %v4847
      %6425 = vmatpush1.bf16.msra.mxu0 %v4846
      %6426 = vmatprep.mubr.bf16.mxu0 %v1616
      %6427 = vmatmul.mubr.bf16.gmra.mrb[0].mxu0 %v1615
      %v6428 = vpop.f32.mrb[0].mxu0
      %v6429 = vadd.f32 %v6388, %v6428
      %v6430 = vpop.f32.mrb[0].mxu0
      %v6431 = vadd.f32 %v6390, %v6430
      %v6432 = vpop.f32.mrb[0].mxu0
      %v6433 = vpop.f32.mrb[0].mxu0
      %6434 = vdwg.mxu0
      %6435 = vmatprep.subr.bf16.mxu0 %v4854
      %6436 = vmatpush1.bf16.msra.mxu0 %v4853
      %6437 = vmatprep.subr.bf16.mxu0 %v4861
      %6438 = vmatpush1.bf16.msra.mxu0 %v4860
      %6439 = vmatprep.subr.bf16.mxu0 %v4868
      %6440 = vmatpush1.bf16.msra.mxu0 %v4867
      %6441 = vmatprep.subr.bf16.mxu0 %v4875
      %6442 = vmatpush1.bf16.msra.mxu0 %v4874
      %6443 = vmatprep.subr.bf16.mxu0 %v4882
      %6444 = vmatpush1.bf16.msra.mxu0 %v4881
      %6445 = vmatprep.subr.bf16.mxu0 %v4889
      %6446 = vmatpush1.bf16.msra.mxu0 %v4888
      %6447 = vmatprep.subr.bf16.mxu0 %v4896
      %6448 = vmatpush1.bf16.msra.mxu0 %v4895
      %6449 = vmatprep.subr.bf16.mxu0 %v4903
      %6450 = vmatpush1.bf16.msra.mxu0 %v4902
      %6451 = vmatprep.subr.bf16.mxu0 %v4910
      %6452 = vmatpush1.bf16.msra.mxu0 %v4909
      %6453 = vmatprep.subr.bf16.mxu0 %v4917
      %6454 = vmatpush1.bf16.msra.mxu0 %v4916
      %6455 = vmatprep.subr.bf16.mxu0 %v4924
      %6456 = vmatpush1.bf16.msra.mxu0 %v4923
      %6457 = vmatprep.subr.bf16.mxu0 %v4931
      %6458 = vmatpush1.bf16.msra.mxu0 %v4930
      %6459 = vmatprep.subr.bf16.mxu0 %v4938
      %6460 = vmatpush1.bf16.msra.mxu0 %v4937
      %6461 = vmatprep.subr.bf16.mxu0 %v4945
      %6462 = vmatpush1.bf16.msra.mxu0 %v4944
      %6463 = vmatprep.subr.bf16.mxu0 %v4952
      %6464 = vmatpush1.bf16.msra.mxu0 %v4951
      %6465 = vmatprep.subr.bf16.mxu0 %v4959
      %6466 = vmatpush1.bf16.msra.mxu0 %v4958
      %6467 = vmatprep.mubr.bf16.mxu0 %v1618
      %6468 = vmatmul.mubr.bf16.gmra.mrb[0].mxu0 %v1617
      %v6469 = vpop.f32.mrb[0].mxu0
      %v6470 = vadd.f32 %v6429, %v6469
      %v6471 = vpop.f32.mrb[0].mxu0
      %v6472 = vadd.f32 %v6431, %v6471
      %v6473 = vpop.f32.mrb[0].mxu0
      %v6474 = vpop.f32.mrb[0].mxu0
      %6475 = vdwg.mxu0
      %6476 = vmatprep.subr.bf16.mxu0 %v4966
      %6477 = vmatpush1.bf16.msra.mxu0 %v4965
      %6478 = vmatprep.subr.bf16.mxu0 %v4973
      %6479 = vmatpush1.bf16.msra.mxu0 %v4972
      %6480 = vmatprep.subr.bf16.mxu0 %v4980
      %6481 = vmatpush1.bf16.msra.mxu0 %v4979
      %6482 = vmatprep.subr.bf16.mxu0 %v4987
      %6483 = vmatpush1.bf16.msra.mxu0 %v4986
      %6484 = vmatprep.subr.bf16.mxu0 %v4994
      %6485 = vmatpush1.bf16.msra.mxu0 %v4993
      %6486 = vmatprep.subr.bf16.mxu0 %v5001
      %6487 = vmatpush1.bf16.msra.mxu0 %v5000
      %6488 = vmatprep.subr.bf16.mxu0 %v5008
      %6489 = vmatpush1.bf16.msra.mxu0 %v5007
      %6490 = vmatprep.subr.bf16.mxu0 %v5015
      %6491 = vmatpush1.bf16.msra.mxu0 %v5014
      %6492 = vmatprep.subr.bf16.mxu0 %v5022
      %6493 = vmatpush1.bf16.msra.mxu0 %v5021
      %6494 = vmatprep.subr.bf16.mxu0 %v5029
      %6495 = vmatpush1.bf16.msra.mxu0 %v5028
      %6496 = vmatprep.subr.bf16.mxu0 %v5036
      %6497 = vmatpush1.bf16.msra.mxu0 %v5035
      %6498 = vmatprep.subr.bf16.mxu0 %v5043
      %6499 = vmatpush1.bf16.msra.mxu0 %v5042
      %6500 = vmatprep.subr.bf16.mxu0 %v5050
      %6501 = vmatpush1.bf16.msra.mxu0 %v5049
      %6502 = vmatprep.subr.bf16.mxu0 %v5057
      %6503 = vmatpush1.bf16.msra.mxu0 %v5056
      %6504 = vmatprep.subr.bf16.mxu0 %v5064
      %6505 = vmatpush1.bf16.msra.mxu0 %v5063
      %6506 = vmatprep.subr.bf16.mxu0 %v5071
      %6507 = vmatpush1.bf16.msra.mxu0 %v5070
      %6508 = vmatprep.mubr.bf16.mxu0 %v1620
      %6509 = vmatmul.mubr.bf16.gmra.mrb[0].mxu0 %v1619
      %v6510 = vpop.f32.mrb[0].mxu0
      %v6511 = vadd.f32 %v6470, %v6510
      %v6512 = vpop.f32.mrb[0].mxu0
      %v6513 = vadd.f32 %v6472, %v6512
      %v6514 = vpop.f32.mrb[0].mxu0
      %v6515 = vpop.f32.mrb[0].mxu0
      %6516 = vdwg.mxu0
      %6517 = vmatprep.subr.bf16.mxu0 %v5078
      %6518 = vmatpush1.bf16.msra.mxu0 %v5077
      %6519 = vmatprep.subr.bf16.mxu0 %v5085
      %6520 = vmatpush1.bf16.msra.mxu0 %v5084
      %6521 = vmatprep.subr.bf16.mxu0 %v5092
      %6522 = vmatpush1.bf16.msra.mxu0 %v5091
      %6523 = vmatprep.subr.bf16.mxu0 %v5099
      %6524 = vmatpush1.bf16.msra.mxu0 %v5098
      %6525 = vmatprep.subr.bf16.mxu0 %v5106
      %6526 = vmatpush1.bf16.msra.mxu0 %v5105
      %6527 = vmatprep.subr.bf16.mxu0 %v5113
      %6528 = vmatpush1.bf16.msra.mxu0 %v5112
      %6529 = vmatprep.subr.bf16.mxu0 %v5120
      %6530 = vmatpush1.bf16.msra.mxu0 %v5119
      %6531 = vmatprep.subr.bf16.mxu0 %v5127
      %6532 = vmatpush1.bf16.msra.mxu0 %v5126
      %6533 = vmatprep.subr.bf16.mxu0 %v5134
      %6534 = vmatpush1.bf16.msra.mxu0 %v5133
      %6535 = vmatprep.subr.bf16.mxu0 %v5141
      %6536 = vmatpush1.bf16.msra.mxu0 %v5140
      %6537 = vmatprep.subr.bf16.mxu0 %v5148
      %6538 = vmatpush1.bf16.msra.mxu0 %v5147
      %6539 = vmatprep.subr.bf16.mxu0 %v5155
      %6540 = vmatpush1.bf16.msra.mxu0 %v5154
      %6541 = vmatprep.subr.bf16.mxu0 %v5162
      %6542 = vmatpush1.bf16.msra.mxu0 %v5161
      %6543 = vmatprep.subr.bf16.mxu0 %v5169
      %6544 = vmatpush1.bf16.msra.mxu0 %v5168
      %6545 = vmatprep.subr.bf16.mxu0 %v5176
      %6546 = vmatpush1.bf16.msra.mxu0 %v5175
      %6547 = vmatprep.subr.bf16.mxu0 %v5183
      %6548 = vmatpush1.bf16.msra.mxu0 %v5182
      %6549 = vmatprep.mubr.bf16.mxu0 %v1622
      %6550 = vmatmul.mubr.bf16.gmra.mrb[0].mxu0 %v1621
      %v6551 = vpop.f32.mrb[0].mxu0
      %v6552 = vadd.f32 %v6511, %v6551
      %v6553 = vpop.f32.mrb[0].mxu0
      %v6554 = vadd.f32 %v6513, %v6553
      %v6555 = vpop.f32.mrb[0].mxu0
      %v6556 = vpop.f32.mrb[0].mxu0
      %6557 = vdwg.mxu0
      %6558 = vmatprep.subr.bf16.mxu0 %v5190
      %6559 = vmatpush1.bf16.msra.mxu0 %v5189
      %6560 = vmatprep.subr.bf16.mxu0 %v5197
      %6561 = vmatpush1.bf16.msra.mxu0 %v5196
      %6562 = vmatprep.subr.bf16.mxu0 %v5204
      %6563 = vmatpush1.bf16.msra.mxu0 %v5203
      %6564 = vmatprep.subr.bf16.mxu0 %v5211
      %6565 = vmatpush1.bf16.msra.mxu0 %v5210
      %6566 = vmatprep.subr.bf16.mxu0 %v5218
      %6567 = vmatpush1.bf16.msra.mxu0 %v5217
      %6568 = vmatprep.subr.bf16.mxu0 %v5225
      %6569 = vmatpush1.bf16.msra.mxu0 %v5224
      %6570 = vmatprep.subr.bf16.mxu0 %v5232
      %6571 = vmatpush1.bf16.msra.mxu0 %v5231
      %6572 = vmatprep.subr.bf16.mxu0 %v5239
      %6573 = vmatpush1.bf16.msra.mxu0 %v5238
      %6574 = vmatprep.subr.bf16.mxu0 %v5246
      %6575 = vmatpush1.bf16.msra.mxu0 %v5245
      %6576 = vmatprep.subr.bf16.mxu0 %v5253
      %6577 = vmatpush1.bf16.msra.mxu0 %v5252
      %6578 = vmatprep.subr.bf16.mxu0 %v5260
      %6579 = vmatpush1.bf16.msra.mxu0 %v5259
      %6580 = vmatprep.subr.bf16.mxu0 %v5267
      %6581 = vmatpush1.bf16.msra.mxu0 %v5266
      %6582 = vmatprep.subr.bf16.mxu0 %v5274
      %6583 = vmatpush1.bf16.msra.mxu0 %v5273
      %6584 = vmatprep.subr.bf16.mxu0 %v5281
      %6585 = vmatpush1.bf16.msra.mxu0 %v5280
      %6586 = vmatprep.subr.bf16.mxu0 %v5288
      %6587 = vmatpush1.bf16.msra.mxu0 %v5287
      %6588 = vmatprep.subr.bf16.mxu0 %v5295
      %6589 = vmatpush1.bf16.msra.mxu0 %v5294
      %6590 = vmatprep.mubr.bf16.mxu0 %v1624
      %6591 = vmatmul.mubr.bf16.gmra.mrb[0].mxu0 %v1623
      %v6592 = vpop.f32.mrb[0].mxu0
      %v6593 = vadd.f32 %v6552, %v6592
      %v6594 = vpop.f32.mrb[0].mxu0
      %v6595 = vadd.f32 %v6554, %v6594
      %v6596 = vpop.f32.mrb[0].mxu0
      %v6597 = vpop.f32.mrb[0].mxu0
      %6598 = vdwg.mxu0
      %6599 = vmatprep.subr.bf16.mxu0 %v5302
      %6600 = vmatpush1.bf16.msra.mxu0 %v5301
      %6601 = vmatprep.subr.bf16.mxu0 %v5309
      %6602 = vmatpush1.bf16.msra.mxu0 %v5308
      %6603 = vmatprep.subr.bf16.mxu0 %v5316
      %6604 = vmatpush1.bf16.msra.mxu0 %v5315
      %6605 = vmatprep.subr.bf16.mxu0 %v5323
      %6606 = vmatpush1.bf16.msra.mxu0 %v5322
      %6607 = vmatprep.subr.bf16.mxu0 0
      %6608 = vmatpush1.bf16.msra.mxu0 0
      %6609 = vmatprep.subr.bf16.mxu0 0
      %6610 = vmatpush1.bf16.msra.mxu0 0
      %6611 = vmatprep.subr.bf16.mxu0 0
      %6612 = vmatpush1.bf16.msra.mxu0 0
      %6613 = vmatprep.subr.bf16.mxu0 0
      %6614 = vmatpush1.bf16.msra.mxu0 0
      %6615 = vmatprep.subr.bf16.mxu0 0
      %6616 = vmatpush1.bf16.msra.mxu0 0
      %6617 = vmatprep.subr.bf16.mxu0 0
      %6618 = vmatpush1.bf16.msra.mxu0 0
      %6619 = vmatprep.subr.bf16.mxu0 0
      %6620 = vmatpush1.bf16.msra.mxu0 0
      %6621 = vmatprep.subr.bf16.mxu0 0
      %6622 = vmatpush1.bf16.msra.mxu0 0
      %6623 = vmatprep.subr.bf16.mxu0 0
      %6624 = vmatpush1.bf16.msra.mxu0 0
      %6625 = vmatprep.subr.bf16.mxu0 0
      %6626 = vmatpush1.bf16.msra.mxu0 0
      %6627 = vmatprep.subr.bf16.mxu0 0
      %6628 = vmatpush1.bf16.msra.mxu0 0
      %6629 = vmatprep.subr.bf16.mxu0 0
      %6630 = vmatpush1.bf16.msra.mxu0 0
      %6631 = vmatprep.mubr.bf16.mxu0 0
      %6632 = vmatmul.mubr.bf16.gmra.mrb[0].mxu0 %v6064
      %v6633 = vpop.f32.mrb[0].mxu0
      %v6634 = vadd.f32 %v6593, %v6633
      %v6635 = vpop.f32.mrb[0].mxu0
      %v6636 = vadd.f32 %v6595, %v6635
      %v6637 = vpop.f32.mrb[0].mxu0
      %v6638 = vpop.f32.mrb[0].mxu0
      %6639 = vdwg.mxu0
      %6640 = vmatprep.subr.bf16.mxu0 %v4632
      %6641 = vmatpush1.bf16.msra.mxu0 %v4631
      %6642 = vmatprep.subr.bf16.mxu0 %v4639
      %6643 = vmatpush1.bf16.msra.mxu0 %v4638
      %6644 = vmatprep.subr.bf16.mxu0 %v4646
      %6645 = vmatpush1.bf16.msra.mxu0 %v4645
      %6646 = vmatprep.subr.bf16.mxu0 %v4653
      %6647 = vmatpush1.bf16.msra.mxu0 %v4652
      %6648 = vmatprep.subr.bf16.mxu0 %v4660
      %6649 = vmatpush1.bf16.msra.mxu0 %v4659
      %6650 = vmatprep.subr.bf16.mxu0 %v4667
      %6651 = vmatpush1.bf16.msra.mxu0 %v4666
      %6652 = vmatprep.subr.bf16.mxu0 %v4674
      %6653 = vmatpush1.bf16.msra.mxu0 %v4673
      %6654 = vmatprep.subr.bf16.mxu0 %v4681
      %6655 = vmatpush1.bf16.msra.mxu0 %v4680
      %6656 = vmatprep.subr.bf16.mxu0 %v4688
      %6657 = vmatpush1.bf16.msra.mxu0 %v4687
      %6658 = vmatprep.subr.bf16.mxu0 %v4695
      %6659 = vmatpush1.bf16.msra.mxu0 %v4694
      %6660 = vmatprep.subr.bf16.mxu0 %v4702
      %6661 = vmatpush1.bf16.msra.mxu0 %v4701
      %6662 = vmatprep.subr.bf16.mxu0 %v4709
      %6663 = vmatpush1.bf16.msra.mxu0 %v4708
      %6664 = vmatprep.subr.bf16.mxu0 %v4716
      %6665 = vmatpush1.bf16.msra.mxu0 %v4715
      %6666 = vmatprep.subr.bf16.mxu0 %v4723
      %6667 = vmatpush1.bf16.msra.mxu0 %v4722
      %6668 = vmatprep.subr.bf16.mxu0 %v4730
      %6669 = vmatpush1.bf16.msra.mxu0 %v4729
      %6670 = vmatprep.subr.bf16.mxu0 %v4737
      %6671 = vmatpush1.bf16.msra.mxu0 %v4736
      %6672 = vmatprep.mubr.bf16.mxu0 %v1614
      %6673 = vmatmul.mubr.bf16.gmra.mrb[0].mxu0 %v1613
      %v6674 = vpop.f32.mrb[0].mxu0
      %v6675 = vadd.f32 %v6047, %v6674
      %v6676 = vpop.f32.mrb[0].mxu0
      %v6677 = vadd.f32 %v6051, %v6676
      %v6678 = vpop.f32.mrb[0].mxu0
      %v6679 = vpop.f32.mrb[0].mxu0
      %6680 = vdwg.mxu0
      %6681 = vmatprep.subr.bf16.mxu0 %v4744
      %6682 = vmatpush1.bf16.msra.mxu0 %v4743
      %6683 = vmatprep.subr.bf16.mxu0 %v4751
      %6684 = vmatpush1.bf16.msra.mxu0 %v4750
      %6685 = vmatprep.subr.bf16.mxu0 %v4758
      %6686 = vmatpush1.bf16.msra.mxu0 %v4757
      %6687 = vmatprep.subr.bf16.mxu0 %v4765
      %6688 = vmatpush1.bf16.msra.mxu0 %v4764
      %6689 = vmatprep.subr.bf16.mxu0 %v4772
      %6690 = vmatpush1.bf16.msra.mxu0 %v4771
      %6691 = vmatprep.subr.bf16.mxu0 %v4779
      %6692 = vmatpush1.bf16.msra.mxu0 %v4778
      %6693 = vmatprep.subr.bf16.mxu0 %v4786
      %6694 = vmatpush1.bf16.msra.mxu0 %v4785
      %6695 = vmatprep.subr.bf16.mxu0 %v4793
      %6696 = vmatpush1.bf16.msra.mxu0 %v4792
      %6697 = vmatprep.subr.bf16.mxu0 %v4800
      %6698 = vmatpush1.bf16.msra.mxu0 %v4799
      %6699 = vmatprep.subr.bf16.mxu0 %v4807
      %6700 = vmatpush1.bf16.msra.mxu0 %v4806
      %6701 = vmatprep.subr.bf16.mxu0 %v4814
      %6702 = vmatpush1.bf16.msra.mxu0 %v4813
      %6703 = vmatprep.subr.bf16.mxu0 %v4821
      %6704 = vmatpush1.bf16.msra.mxu0 %v4820
      %6705 = vmatprep.subr.bf16.mxu0 %v4828
      %6706 = vmatpush1.bf16.msra.mxu0 %v4827
      %6707 = vmatprep.subr.bf16.mxu0 %v4835
      %6708 = vmatpush1.bf16.msra.mxu0 %v4834
      %6709 = vmatprep.subr.bf16.mxu0 %v4842
      %6710 = vmatpush1.bf16.msra.mxu0 %v4841
      %6711 = vmatprep.subr.bf16.mxu0 %v4849
      %6712 = vmatpush1.bf16.msra.mxu0 %v4848
      %6713 = vmatprep.mubr.bf16.mxu0 %v1616
      %6714 = vmatmul.mubr.bf16.gmra.mrb[0].mxu0 %v1615
      %v6715 = vpop.f32.mrb[0].mxu0
      %v6716 = vadd.f32 %v6675, %v6715
      %v6717 = vpop.f32.mrb[0].mxu0
      %v6718 = vadd.f32 %v6677, %v6717
      %v6719 = vpop.f32.mrb[0].mxu0
      %v6720 = vpop.f32.mrb[0].mxu0
      %6721 = vdwg.mxu0
      %6722 = vmatprep.subr.bf16.mxu0 %v4856
      %6723 = vmatpush1.bf16.msra.mxu0 %v4855
      %6724 = vmatprep.subr.bf16.mxu0 %v4863
      %6725 = vmatpush1.bf16.msra.mxu0 %v4862
      %6726 = vmatprep.subr.bf16.mxu0 %v4870
      %6727 = vmatpush1.bf16.msra.mxu0 %v4869
      %6728 = vmatprep.subr.bf16.mxu0 %v4877
      %6729 = vmatpush1.bf16.msra.mxu0 %v4876
      %6730 = vmatprep.subr.bf16.mxu0 %v4884
      %6731 = vmatpush1.bf16.msra.mxu0 %v4883
      %6732 = vmatprep.subr.bf16.mxu0 %v4891
      %6733 = vmatpush1.bf16.msra.mxu0 %v4890
      %6734 = vmatprep.subr.bf16.mxu0 %v4898
      %6735 = vmatpush1.bf16.msra.mxu0 %v4897
      %6736 = vmatprep.subr.bf16.mxu0 %v4905
      %6737 = vmatpush1.bf16.msra.mxu0 %v4904
      %6738 = vmatprep.subr.bf16.mxu0 %v4912
      %6739 = vmatpush1.bf16.msra.mxu0 %v4911
      %6740 = vmatprep.subr.bf16.mxu0 %v4919
      %6741 = vmatpush1.bf16.msra.mxu0 %v4918
      %6742 = vmatprep.subr.bf16.mxu0 %v4926
      %6743 = vmatpush1.bf16.msra.mxu0 %v4925
      %6744 = vmatprep.subr.bf16.mxu0 %v4933
      %6745 = vmatpush1.bf16.msra.mxu0 %v4932
      %6746 = vmatprep.subr.bf16.mxu0 %v4940
      %6747 = vmatpush1.bf16.msra.mxu0 %v4939
      %6748 = vmatprep.subr.bf16.mxu0 %v4947
      %6749 = vmatpush1.bf16.msra.mxu0 %v4946
      %6750 = vmatprep.subr.bf16.mxu0 %v4954
      %6751 = vmatpush1.bf16.msra.mxu0 %v4953
      %6752 = vmatprep.subr.bf16.mxu0 %v4961
      %6753 = vmatpush1.bf16.msra.mxu0 %v4960
      %6754 = vmatprep.mubr.bf16.mxu0 %v1618
      %6755 = vmatmul.mubr.bf16.gmra.mrb[0].mxu0 %v1617
      %v6756 = vpop.f32.mrb[0].mxu0
      %v6757 = vadd.f32 %v6716, %v6756
      %v6758 = vpop.f32.mrb[0].mxu0
      %v6759 = vadd.f32 %v6718, %v6758
      %v6760 = vpop.f32.mrb[0].mxu0
      %v6761 = vpop.f32.mrb[0].mxu0
      %6762 = vdwg.mxu0
      %6763 = vmatprep.subr.bf16.mxu0 %v4968
      %6764 = vmatpush1.bf16.msra.mxu0 %v4967
      %6765 = vmatprep.subr.bf16.mxu0 %v4975
      %6766 = vmatpush1.bf16.msra.mxu0 %v4974
      %6767 = vmatprep.subr.bf16.mxu0 %v4982
      %6768 = vmatpush1.bf16.msra.mxu0 %v4981
      %6769 = vmatprep.subr.bf16.mxu0 %v4989
      %6770 = vmatpush1.bf16.msra.mxu0 %v4988
      %6771 = vmatprep.subr.bf16.mxu0 %v4996
      %6772 = vmatpush1.bf16.msra.mxu0 %v4995
      %6773 = vmatprep.subr.bf16.mxu0 %v5003
      %6774 = vmatpush1.bf16.msra.mxu0 %v5002
      %6775 = vmatprep.subr.bf16.mxu0 %v5010
      %6776 = vmatpush1.bf16.msra.mxu0 %v5009
      %6777 = vmatprep.subr.bf16.mxu0 %v5017
      %6778 = vmatpush1.bf16.msra.mxu0 %v5016
      %6779 = vmatprep.subr.bf16.mxu0 %v5024
      %6780 = vmatpush1.bf16.msra.mxu0 %v5023
      %6781 = vmatprep.subr.bf16.mxu0 %v5031
      %6782 = vmatpush1.bf16.msra.mxu0 %v5030
      %6783 = vmatprep.subr.bf16.mxu0 %v5038
      %6784 = vmatpush1.bf16.msra.mxu0 %v5037
      %6785 = vmatprep.subr.bf16.mxu0 %v5045
      %6786 = vmatpush1.bf16.msra.mxu0 %v5044
      %6787 = vmatprep.subr.bf16.mxu0 %v5052
      %6788 = vmatpush1.bf16.msra.mxu0 %v5051
      %6789 = vmatprep.subr.bf16.mxu0 %v5059
      %6790 = vmatpush1.bf16.msra.mxu0 %v5058
      %6791 = vmatprep.subr.bf16.mxu0 %v5066
      %6792 = vmatpush1.bf16.msra.mxu0 %v5065
      %6793 = vmatprep.subr.bf16.mxu0 %v5073
      %6794 = vmatpush1.bf16.msra.mxu0 %v5072
      %6795 = vmatprep.mubr.bf16.mxu0 %v1620
      %6796 = vmatmul.mubr.bf16.gmra.mrb[0].mxu0 %v1619
      %v6797 = vpop.f32.mrb[0].mxu0
      %v6798 = vadd.f32 %v6757, %v6797
      %v6799 = vpop.f32.mrb[0].mxu0
      %v6800 = vadd.f32 %v6759, %v6799
      %v6801 = vpop.f32.mrb[0].mxu0
      %v6802 = vpop.f32.mrb[0].mxu0
      %6803 = vdwg.mxu0
      %6804 = vmatprep.subr.bf16.mxu0 %v5080
      %6805 = vmatpush1.bf16.msra.mxu0 %v5079
      %6806 = vmatprep.subr.bf16.mxu0 %v5087
      %6807 = vmatpush1.bf16.msra.mxu0 %v5086
      %6808 = vmatprep.subr.bf16.mxu0 %v5094
      %6809 = vmatpush1.bf16.msra.mxu0 %v5093
      %6810 = vmatprep.subr.bf16.mxu0 %v5101
      %6811 = vmatpush1.bf16.msra.mxu0 %v5100
      %6812 = vmatprep.subr.bf16.mxu0 %v5108
      %6813 = vmatpush1.bf16.msra.mxu0 %v5107
      %6814 = vmatprep.subr.bf16.mxu0 %v5115
      %6815 = vmatpush1.bf16.msra.mxu0 %v5114
      %6816 = vmatprep.subr.bf16.mxu0 %v5122
      %6817 = vmatpush1.bf16.msra.mxu0 %v5121
      %6818 = vmatprep.subr.bf16.mxu0 %v5129
      %6819 = vmatpush1.bf16.msra.mxu0 %v5128
      %6820 = vmatprep.subr.bf16.mxu0 %v5136
      %6821 = vmatpush1.bf16.msra.mxu0 %v5135
      %6822 = vmatprep.subr.bf16.mxu0 %v5143
      %6823 = vmatpush1.bf16.msra.mxu0 %v5142
      %6824 = vmatprep.subr.bf16.mxu0 %v5150
      %6825 = vmatpush1.bf16.msra.mxu0 %v5149
      %6826 = vmatprep.subr.bf16.mxu0 %v5157
      %6827 = vmatpush1.bf16.msra.mxu0 %v5156
      %6828 = vmatprep.subr.bf16.mxu0 %v5164
      %6829 = vmatpush1.bf16.msra.mxu0 %v5163
      %6830 = vmatprep.subr.bf16.mxu0 %v5171
      %6831 = vmatpush1.bf16.msra.mxu0 %v5170
      %6832 = vmatprep.subr.bf16.mxu0 %v5178
      %6833 = vmatpush1.bf16.msra.mxu0 %v5177
      %6834 = vmatprep.subr.bf16.mxu0 %v5185
      %6835 = vmatpush1.bf16.msra.mxu0 %v5184
      %6836 = vmatprep.mubr.bf16.mxu0 %v1622
      %6837 = vmatmul.mubr.bf16.gmra.mrb[0].mxu0 %v1621
      %v6838 = vpop.f32.mrb[0].mxu0
      %v6839 = vadd.f32 %v6798, %v6838
      %v6840 = vpop.f32.mrb[0].mxu0
      %v6841 = vadd.f32 %v6800, %v6840
      %v6842 = vpop.f32.mrb[0].mxu0
      %v6843 = vpop.f32.mrb[0].mxu0
      %6844 = vdwg.mxu0
      %6845 = vmatprep.subr.bf16.mxu0 %v5192
      %6846 = vmatpush1.bf16.msra.mxu0 %v5191
      %6847 = vmatprep.subr.bf16.mxu0 %v5199
      %6848 = vmatpush1.bf16.msra.mxu0 %v5198
      %6849 = vmatprep.subr.bf16.mxu0 %v5206
      %6850 = vmatpush1.bf16.msra.mxu0 %v5205
      %6851 = vmatprep.subr.bf16.mxu0 %v5213
      %6852 = vmatpush1.bf16.msra.mxu0 %v5212
      %6853 = vmatprep.subr.bf16.mxu0 %v5220
      %6854 = vmatpush1.bf16.msra.mxu0 %v5219
      %6855 = vmatprep.subr.bf16.mxu0 %v5227
      %6856 = vmatpush1.bf16.msra.mxu0 %v5226
      %6857 = vmatprep.subr.bf16.mxu0 %v5234
      %6858 = vmatpush1.bf16.msra.mxu0 %v5233
      %6859 = vmatprep.subr.bf16.mxu0 %v5241
      %6860 = vmatpush1.bf16.msra.mxu0 %v5240
      %6861 = vmatprep.subr.bf16.mxu0 %v5248
      %6862 = vmatpush1.bf16.msra.mxu0 %v5247
      %6863 = vmatprep.subr.bf16.mxu0 %v5255
      %6864 = vmatpush1.bf16.msra.mxu0 %v5254
      %6865 = vmatprep.subr.bf16.mxu0 %v5262
      %6866 = vmatpush1.bf16.msra.mxu0 %v5261
      %6867 = vmatprep.subr.bf16.mxu0 %v5269
      %6868 = vmatpush1.bf16.msra.mxu0 %v5268
      %6869 = vmatprep.subr.bf16.mxu0 %v5276
      %6870 = vmatpush1.bf16.msra.mxu0 %v5275
      %6871 = vmatprep.subr.bf16.mxu0 %v5283
      %6872 = vmatpush1.bf16.msra.mxu0 %v5282
      %6873 = vmatprep.subr.bf16.mxu0 %v5290
      %6874 = vmatpush1.bf16.msra.mxu0 %v5289
      %6875 = vmatprep.subr.bf16.mxu0 %v5297
      %6876 = vmatpush1.bf16.msra.mxu0 %v5296
      %6877 = vmatprep.mubr.bf16.mxu0 %v1624
      %6878 = vmatmul.mubr.bf16.gmra.mrb[0].mxu0 %v1623
      %v6879 = vpop.f32.mrb[0].mxu0
      %v6880 = vadd.f32 %v6839, %v6879
      %v6881 = vpop.f32.mrb[0].mxu0
      %v6882 = vadd.f32 %v6841, %v6881
      %v6883 = vpop.f32.mrb[0].mxu0
      %v6884 = vpop.f32.mrb[0].mxu0
      %6885 = vdwg.mxu0
      %6886 = vmatprep.subr.bf16.mxu0 %v5304
      %6887 = vmatpush1.bf16.msra.mxu0 %v5303
      %6888 = vmatprep.subr.bf16.mxu0 %v5311
      %6889 = vmatpush1.bf16.msra.mxu0 %v5310
      %6890 = vmatprep.subr.bf16.mxu0 %v5318
      %6891 = vmatpush1.bf16.msra.mxu0 %v5317
      %6892 = vmatprep.subr.bf16.mxu0 %v5325
      %6893 = vmatpush1.bf16.msra.mxu0 %v5324
      %6894 = vmatprep.subr.bf16.mxu0 0
      %6895 = vmatpush1.bf16.msra.mxu0 0
      %6896 = vmatprep.subr.bf16.mxu0 0
      %6897 = vmatpush1.bf16.msra.mxu0 0
      %6898 = vmatprep.subr.bf16.mxu0 0
      %6899 = vmatpush1.bf16.msra.mxu0 0
      %6900 = vmatprep.subr.bf16.mxu0 0
      %6901 = vmatpush1.bf16.msra.mxu0 0
      %6902 = vmatprep.subr.bf16.mxu0 0
      %6903 = vmatpush1.bf16.msra.mxu0 0
      %6904 = vmatprep.subr.bf16.mxu0 0
      %6905 = vmatpush1.bf16.msra.mxu0 0
      %6906 = vmatprep.subr.bf16.mxu0 0
      %6907 = vmatpush1.bf16.msra.mxu0 0
      %6908 = vmatprep.subr.bf16.mxu0 0
      %6909 = vmatpush1.bf16.msra.mxu0 0
      %6910 = vmatprep.subr.bf16.mxu0 0
      %6911 = vmatpush1.bf16.msra.mxu0 0
      %6912 = vmatprep.subr.bf16.mxu0 0
      %6913 = vmatpush1.bf16.msra.mxu0 0
      %6914 = vmatprep.subr.bf16.mxu0 0
      %6915 = vmatpush1.bf16.msra.mxu0 0
      %6916 = vmatprep.subr.bf16.mxu0 0
      %6917 = vmatpush1.bf16.msra.mxu0 0
      %6918 = vmatprep.mubr.bf16.mxu0 0
      %6919 = vmatmul.mubr.bf16.gmra.mrb[0].mxu0 %v6064
      %v6920 = vpop.f32.mrb[0].mxu0
      %v6921 = vadd.f32 %v6880, %v6920
      %v6922 = vpop.f32.mrb[0].mxu0
      %v6923 = vadd.f32 %v6882, %v6922
      %v6924 = vpop.f32.mrb[0].mxu0
      %v6925 = vpop.f32.mrb[0].mxu0
      %6926 = vdwg.mxu0
      %6927 = vmatprep.subr.bf16.mxu0 0
      %6928 = vmatpush1.bf16.msra.mxu0 %v4633
      %6929 = vmatprep.subr.bf16.mxu0 0
      %6930 = vmatpush1.bf16.msra.mxu0 %v4640
      %6931 = vmatprep.subr.bf16.mxu0 0
      %6932 = vmatpush1.bf16.msra.mxu0 %v4647
      %6933 = vmatprep.subr.bf16.mxu0 0
      %6934 = vmatpush1.bf16.msra.mxu0 %v4654
      %6935 = vmatprep.subr.bf16.mxu0 0
      %6936 = vmatpush1.bf16.msra.mxu0 %v4661
      %6937 = vmatprep.subr.bf16.mxu0 0
      %6938 = vmatpush1.bf16.msra.mxu0 %v4668
      %6939 = vmatprep.subr.bf16.mxu0 0
      %6940 = vmatpush1.bf16.msra.mxu0 %v4675
      %6941 = vmatprep.subr.bf16.mxu0 0
      %6942 = vmatpush1.bf16.msra.mxu0 %v4682
      %6943 = vmatprep.subr.bf16.mxu0 0
      %6944 = vmatpush1.bf16.msra.mxu0 %v4689
      %6945 = vmatprep.subr.bf16.mxu0 0
      %6946 = vmatpush1.bf16.msra.mxu0 %v4696
      %6947 = vmatprep.subr.bf16.mxu0 0
      %6948 = vmatpush1.bf16.msra.mxu0 %v4703
      %6949 = vmatprep.subr.bf16.mxu0 0
      %6950 = vmatpush1.bf16.msra.mxu0 %v4710
      %6951 = vmatprep.subr.bf16.mxu0 0
      %6952 = vmatpush1.bf16.msra.mxu0 %v4717
      %6953 = vmatprep.subr.bf16.mxu0 0
      %6954 = vmatpush1.bf16.msra.mxu0 %v4724
      %6955 = vmatprep.subr.bf16.mxu0 0
      %6956 = vmatpush1.bf16.msra.mxu0 %v4731
      %6957 = vmatprep.subr.bf16.mxu0 0
      %6958 = vmatpush1.bf16.msra.mxu0 %v4738
      %6959 = vmatprep.mubr.bf16.mxu0 %v1614
      %6960 = vmatmul.mubr.bf16.gmra.mrb[0].mxu0 %v1613
      %v6961 = vpop.f32.mrb[0].mxu0
      %v6962 = vadd.f32 %v6055, %v6961
      %v6963 = vpop.f32.mrb[0].mxu0
      %v6964 = vpop.f32.mrb[0].mxu0
      %v6965 = vpop.f32.mrb[0].mxu0
      %6966 = vdwg.mxu0
      %6967 = vmatprep.subr.bf16.mxu0 0
      %6968 = vmatpush1.bf16.msra.mxu0 %v4745
      %6969 = vmatprep.subr.bf16.mxu0 0
      %6970 = vmatpush1.bf16.msra.mxu0 %v4752
      %6971 = vmatprep.subr.bf16.mxu0 0
      %6972 = vmatpush1.bf16.msra.mxu0 %v4759
      %6973 = vmatprep.subr.bf16.mxu0 0
      %6974 = vmatpush1.bf16.msra.mxu0 %v4766
      %6975 = vmatprep.subr.bf16.mxu0 0
      %6976 = vmatpush1.bf16.msra.mxu0 %v4773
      %6977 = vmatprep.subr.bf16.mxu0 0
      %6978 = vmatpush1.bf16.msra.mxu0 %v4780
      %6979 = vmatprep.subr.bf16.mxu0 0
      %6980 = vmatpush1.bf16.msra.mxu0 %v4787
      %6981 = vmatprep.subr.bf16.mxu0 0
      %6982 = vmatpush1.bf16.msra.mxu0 %v4794
      %6983 = vmatprep.subr.bf16.mxu0 0
      %6984 = vmatpush1.bf16.msra.mxu0 %v4801
      %6985 = vmatprep.subr.bf16.mxu0 0
      %6986 = vmatpush1.bf16.msra.mxu0 %v4808
      %6987 = vmatprep.subr.bf16.mxu0 0
      %6988 = vmatpush1.bf16.msra.mxu0 %v4815
      %6989 = vmatprep.subr.bf16.mxu0 0
      %6990 = vmatpush1.bf16.msra.mxu0 %v4822
      %6991 = vmatprep.subr.bf16.mxu0 0
      %6992 = vmatpush1.bf16.msra.mxu0 %v4829
      %6993 = vmatprep.subr.bf16.mxu0 0
      %6994 = vmatpush1.bf16.msra.mxu0 %v4836
      %6995 = vmatprep.subr.bf16.mxu0 0
      %6996 = vmatpush1.bf16.msra.mxu0 %v4843
      %6997 = vmatprep.subr.bf16.mxu0 0
      %6998 = vmatpush1.bf16.msra.mxu0 %v4850
      %6999 = vmatprep.mubr.bf16.mxu0 %v1616
      %7000 = vmatmul.mubr.bf16.gmra.mrb[0].mxu0 %v1615
      %v7001 = vpop.f32.mrb[0].mxu0
      %v7002 = vadd.f32 %v6962, %v7001
      %v7003 = vpop.f32.mrb[0].mxu0
      %v7004 = vpop.f32.mrb[0].mxu0
      %v7005 = vpop.f32.mrb[0].mxu0
      %7006 = vdwg.mxu0
      %7007 = vmatprep.subr.bf16.mxu0 0
      %7008 = vmatpush1.bf16.msra.mxu0 %v4857
      %7009 = vmatprep.subr.bf16.mxu0 0
      %7010 = vmatpush1.bf16.msra.mxu0 %v4864
      %7011 = vmatprep.subr.bf16.mxu0 0
      %7012 = vmatpush1.bf16.msra.mxu0 %v4871
      %7013 = vmatprep.subr.bf16.mxu0 0
      %7014 = vmatpush1.bf16.msra.mxu0 %v4878
      %7015 = vmatprep.subr.bf16.mxu0 0
      %7016 = vmatpush1.bf16.msra.mxu0 %v4885
      %7017 = vmatprep.subr.bf16.mxu0 0
      %7018 = vmatpush1.bf16.msra.mxu0 %v4892
      %7019 = vmatprep.subr.bf16.mxu0 0
      %7020 = vmatpush1.bf16.msra.mxu0 %v4899
      %7021 = vmatprep.subr.bf16.mxu0 0
      %7022 = vmatpush1.bf16.msra.mxu0 %v4906
      %7023 = vmatprep.subr.bf16.mxu0 0
      %7024 = vmatpush1.bf16.msra.mxu0 %v4913
      %7025 = vmatprep.subr.bf16.mxu0 0
      %7026 = vmatpush1.bf16.msra.mxu0 %v4920
      %7027 = vmatprep.subr.bf16.mxu0 0
      %7028 = vmatpush1.bf16.msra.mxu0 %v4927
      %7029 = vmatprep.subr.bf16.mxu0 0
      %7030 = vmatpush1.bf16.msra.mxu0 %v4934
      %7031 = vmatprep.subr.bf16.mxu0 0
      %7032 = vmatpush1.bf16.msra.mxu0 %v4941
      %7033 = vmatprep.subr.bf16.mxu0 0
      %7034 = vmatpush1.bf16.msra.mxu0 %v4948
      %7035 = vmatprep.subr.bf16.mxu0 0
      %7036 = vmatpush1.bf16.msra.mxu0 %v4955
      %7037 = vmatprep.subr.bf16.mxu0 0
      %7038 = vmatpush1.bf16.msra.mxu0 %v4962
      %7039 = vmatprep.mubr.bf16.mxu0 %v1618
      %7040 = vmatmul.mubr.bf16.gmra.mrb[0].mxu0 %v1617
      %v7041 = vpop.f32.mrb[0].mxu0
      %v7042 = vadd.f32 %v7002, %v7041
      %v7043 = vpop.f32.mrb[0].mxu0
      %v7044 = vpop.f32.mrb[0].mxu0
      %v7045 = vpop.f32.mrb[0].mxu0
      %7046 = vdwg.mxu0
      %7047 = vmatprep.subr.bf16.mxu0 0
      %7048 = vmatpush1.bf16.msra.mxu0 %v4969
      %7049 = vmatprep.subr.bf16.mxu0 0
      %7050 = vmatpush1.bf16.msra.mxu0 %v4976
      %7051 = vmatprep.subr.bf16.mxu0 0
      %7052 = vmatpush1.bf16.msra.mxu0 %v4983
      %7053 = vmatprep.subr.bf16.mxu0 0
      %7054 = vmatpush1.bf16.msra.mxu0 %v4990
      %7055 = vmatprep.subr.bf16.mxu0 0
      %7056 = vmatpush1.bf16.msra.mxu0 %v4997
      %7057 = vmatprep.subr.bf16.mxu0 0
      %7058 = vmatpush1.bf16.msra.mxu0 %v5004
      %7059 = vmatprep.subr.bf16.mxu0 0
      %7060 = vmatpush1.bf16.msra.mxu0 %v5011
      %7061 = vmatprep.subr.bf16.mxu0 0
      %7062 = vmatpush1.bf16.msra.mxu0 %v5018
      %7063 = vmatprep.subr.bf16.mxu0 0
      %7064 = vmatpush1.bf16.msra.mxu0 %v5025
      %7065 = vmatprep.subr.bf16.mxu0 0
      %7066 = vmatpush1.bf16.msra.mxu0 %v5032
      %7067 = vmatprep.subr.bf16.mxu0 0
      %7068 = vmatpush1.bf16.msra.mxu0 %v5039
      %7069 = vmatprep.subr.bf16.mxu0 0
      %7070 = vmatpush1.bf16.msra.mxu0 %v5046
      %7071 = vmatprep.subr.bf16.mxu0 0
      %7072 = vmatpush1.bf16.msra.mxu0 %v5053
      %7073 = vmatprep.subr.bf16.mxu0 0
      %7074 = vmatpush1.bf16.msra.mxu0 %v5060
      %7075 = vmatprep.subr.bf16.mxu0 0
      %7076 = vmatpush1.bf16.msra.mxu0 %v5067
      %7077 = vmatprep.subr.bf16.mxu0 0
      %7078 = vmatpush1.bf16.msra.mxu0 %v5074
      %7079 = vmatprep.mubr.bf16.mxu0 %v1620
      %7080 = vmatmul.mubr.bf16.gmra.mrb[0].mxu0 %v1619
      %v7081 = vpop.f32.mrb[0].mxu0
      %v7082 = vadd.f32 %v7042, %v7081
      %v7083 = vpop.f32.mrb[0].mxu0
      %v7084 = vpop.f32.mrb[0].mxu0
      %v7085 = vpop.f32.mrb[0].mxu0
      %7086 = vdwg.mxu0
      %7087 = vmatprep.subr.bf16.mxu0 0
      %7088 = vmatpush1.bf16.msra.mxu0 %v5081
      %7089 = vmatprep.subr.bf16.mxu0 0
      %7090 = vmatpush1.bf16.msra.mxu0 %v5088
      %7091 = vmatprep.subr.bf16.mxu0 0
      %7092 = vmatpush1.bf16.msra.mxu0 %v5095
      %7093 = vmatprep.subr.bf16.mxu0 0
      %7094 = vmatpush1.bf16.msra.mxu0 %v5102
      %7095 = vmatprep.subr.bf16.mxu0 0
      %7096 = vmatpush1.bf16.msra.mxu0 %v5109
      %7097 = vmatprep.subr.bf16.mxu0 0
      %7098 = vmatpush1.bf16.msra.mxu0 %v5116
      %7099 = vmatprep.subr.bf16.mxu0 0
      %7100 = vmatpush1.bf16.msra.mxu0 %v5123
      %7101 = vmatprep.subr.bf16.mxu0 0
      %7102 = vmatpush1.bf16.msra.mxu0 %v5130
      %7103 = vmatprep.subr.bf16.mxu0 0
      %7104 = vmatpush1.bf16.msra.mxu0 %v5137
      %7105 = vmatprep.subr.bf16.mxu0 0
      %7106 = vmatpush1.bf16.msra.mxu0 %v5144
      %7107 = vmatprep.subr.bf16.mxu0 0
      %7108 = vmatpush1.bf16.msra.mxu0 %v5151
      %7109 = vmatprep.subr.bf16.mxu0 0
      %7110 = vmatpush1.bf16.msra.mxu0 %v5158
      %7111 = vmatprep.subr.bf16.mxu0 0
      %7112 = vmatpush1.bf16.msra.mxu0 %v5165
      %7113 = vmatprep.subr.bf16.mxu0 0
      %7114 = vmatpush1.bf16.msra.mxu0 %v5172
      %7115 = vmatprep.subr.bf16.mxu0 0
      %7116 = vmatpush1.bf16.msra.mxu0 %v5179
      %7117 = vmatprep.subr.bf16.mxu0 0
      %7118 = vmatpush1.bf16.msra.mxu0 %v5186
      %7119 = vmatprep.mubr.bf16.mxu0 %v1622
      %7120 = vmatmul.mubr.bf16.gmra.mrb[0].mxu0 %v1621
      %v7121 = vpop.f32.mrb[0].mxu0
      %v7122 = vadd.f32 %v7082, %v7121
      %v7123 = vpop.f32.mrb[0].mxu0
      %v7124 = vpop.f32.mrb[0].mxu0
      %v7125 = vpop.f32.mrb[0].mxu0
      %7126 = vdwg.mxu0
      %7127 = vmatprep.subr.bf16.mxu0 0
      %7128 = vmatpush1.bf16.msra.mxu0 %v5193
      %7129 = vmatprep.subr.bf16.mxu0 0
      %7130 = vmatpush1.bf16.msra.mxu0 %v5200
      %7131 = vmatprep.subr.bf16.mxu0 0
      %7132 = vmatpush1.bf16.msra.mxu0 %v5207
      %7133 = vmatprep.subr.bf16.mxu0 0
      %7134 = vmatpush1.bf16.msra.mxu0 %v5214
      %7135 = vmatprep.subr.bf16.mxu0 0
      %7136 = vmatpush1.bf16.msra.mxu0 %v5221
      %7137 = vmatprep.subr.bf16.mxu0 0
      %7138 = vmatpush1.bf16.msra.mxu0 %v5228
      %7139 = vmatprep.subr.bf16.mxu0 0
      %7140 = vmatpush1.bf16.msra.mxu0 %v5235
      %7141 = vmatprep.subr.bf16.mxu0 0
      %7142 = vmatpush1.bf16.msra.mxu0 %v5242
      %7143 = vmatprep.subr.bf16.mxu0 0
      %7144 = vmatpush1.bf16.msra.mxu0 %v5249
      %7145 = vmatprep.subr.bf16.mxu0 0
      %7146 = vmatpush1.bf16.msra.mxu0 %v5256
      %7147 = vmatprep.subr.bf16.mxu0 0
      %7148 = vmatpush1.bf16.msra.mxu0 %v5263
      %7149 = vmatprep.subr.bf16.mxu0 0
      %7150 = vmatpush1.bf16.msra.mxu0 %v5270
      %7151 = vmatprep.subr.bf16.mxu0 0
      %7152 = vmatpush1.bf16.msra.mxu0 %v5277
      %7153 = vmatprep.subr.bf16.mxu0 0
      %7154 = vmatpush1.bf16.msra.mxu0 %v5284
      %7155 = vmatprep.subr.bf16.mxu0 0
      %7156 = vmatpush1.bf16.msra.mxu0 %v5291
      %7157 = vmatprep.subr.bf16.mxu0 0
      %7158 = vmatpush1.bf16.msra.mxu0 %v5298
      %7159 = vmatprep.mubr.bf16.mxu0 %v1624
      %7160 = vmatmul.mubr.bf16.gmra.mrb[0].mxu0 %v1623
      %v7161 = vpop.f32.mrb[0].mxu0
      %v7162 = vadd.f32 %v7122, %v7161
      %v7163 = vpop.f32.mrb[0].mxu0
      %v7164 = vpop.f32.mrb[0].mxu0
      %v7165 = vpop.f32.mrb[0].mxu0
      %7166 = vdwg.mxu0
      %7167 = vmatprep.subr.bf16.mxu0 0
      %7168 = vmatpush1.bf16.msra.mxu0 %v5305
      %7169 = vmatprep.subr.bf16.mxu0 0
      %7170 = vmatpush1.bf16.msra.mxu0 %v5312
      %7171 = vmatprep.subr.bf16.mxu0 0
      %7172 = vmatpush1.bf16.msra.mxu0 %v5319
      %7173 = vmatprep.subr.bf16.mxu0 0
      %7174 = vmatpush1.bf16.msra.mxu0 %v5326
      %7175 = vmatprep.subr.bf16.mxu0 0
      %7176 = vmatpush1.bf16.msra.mxu0 0
      %7177 = vmatprep.subr.bf16.mxu0 0
      %7178 = vmatpush1.bf16.msra.mxu0 0
      %7179 = vmatprep.subr.bf16.mxu0 0
      %7180 = vmatpush1.bf16.msra.mxu0 0
      %7181 = vmatprep.subr.bf16.mxu0 0
      %7182 = vmatpush1.bf16.msra.mxu0 0
      %7183 = vmatprep.subr.bf16.mxu0 0
      %7184 = vmatpush1.bf16.msra.mxu0 0
      %7185 = vmatprep.subr.bf16.mxu0 0
      %7186 = vmatpush1.bf16.msra.mxu0 0
      %7187 = vmatprep.subr.bf16.mxu0 0
      %7188 = vmatpush1.bf16.msra.mxu0 0
      %7189 = vmatprep.subr.bf16.mxu0 0
      %7190 = vmatpush1.bf16.msra.mxu0 0
      %7191 = vmatprep.subr.bf16.mxu0 0
      %7192 = vmatpush1.bf16.msra.mxu0 0
      %7193 = vmatprep.subr.bf16.mxu0 0
      %7194 = vmatpush1.bf16.msra.mxu0 0
      %7195 = vmatprep.subr.bf16.mxu0 0
      %7196 = vmatpush1.bf16.msra.mxu0 0
      %7197 = vmatprep.subr.bf16.mxu0 0
      %7198 = vmatpush1.bf16.msra.mxu0 0
      %7199 = vmatprep.mubr.bf16.mxu0 0
      %7200 = vmatmul.mubr.bf16.gmra.mrb[0].mxu0 %v6064
      %v7201 = vpop.f32.mrb[0].mxu0
      %v7202 = vadd.f32 %v7162, %v7201
      %v7203 = vpop.f32.mrb[0].mxu0
      %v7204 = vpop.f32.mrb[0].mxu0
      %v7205 = vpop.f32.mrb[0].mxu0
      %7206 = vdwg.mxu0
      %v7207 = vmax.f32 %v6347, 0.0
      %v7208 = vmax.f32 %v6349, 0.0
      %v7209 = vmax.f32 %v6634, 0.0
      %v7210 = vmax.f32 %v6636, 0.0
      %v7211 = vmax.f32 %v6921, 0.0
      %v7212 = vmax.f32 %v6923, 0.0
      %v7213 = vmax.f32 %v7202, 0.0
      %v7214 = vpack.c.bf16 %v7207, %v7207
      %v7215 = vpack.c.bf16 %v7208, %v7208
      %v7216 = vpack.c.bf16 %v7209, %v7209
      %v7217 = vpack.c.bf16 %v7210, %v7210
      %v7218 = vpack.c.bf16 %v7211, %v7211
      %v7219 = vpack.c.bf16 %v7212, %v7212
      %v7220 = vpack.c.bf16 %v7213, %v7213
      %v7221 = vld [vmem:[%s7] sm:$0xf]
      %v7222 = vld [vmem:[%s7 + $0x4] sm:$0xf]
      %v7223 = vld [vmem:[%s7 + $0x8] sm:$0xf]
      %v7224 = vld [vmem:[%s7 + $0xc] sm:$0xf]
      %v7225 = vld [vmem:[%s7 + $0x10] sm:$0xf]
      %v7226 = vld [vmem:[%s7 + $0x14] sm:$0xf]
      %v7227 = vld [vmem:[%s7 + $0x18] sm:$0xf]
      %v7228 = vld [vmem:[%s7 + $0x1c] sm:$0xf]
      %v7229 = vld [vmem:[%s7 + $0x20] sm:$0xf]
      %v7230 = vld [vmem:[%s7 + $0x24] sm:$0xf]
      %v7231 = vld [vmem:[%s7 + $0x28] sm:$0xf]
      %v7232 = vld [vmem:[%s7 + $0x2c] sm:$0xf]
      %v7233 = vld [vmem:[%s7 + $0x30] sm:$0xf]
      %v7234 = vld [vmem:[%s7 + $0x34] sm:$0xf]
      %v7235 = vld [vmem:[%s7 + $0x38] sm:$0xf]
      %v7236 = vld [vmem:[%s7 + $0x3c] sm:$0xf]
      %v7237 = vld [vmem:[%s7 + $0x40] sm:$0xf]
      %v7238 = vld [vmem:[%s7 + $0x44] sm:$0xf]
      %v7239 = vld [vmem:[%s7 + $0x48] sm:$0xf]
      %v7240 = vld [vmem:[%s7 + $0x4c] sm:$0xf]
      %v7241 = vld [vmem:[%s7 + $0x50] sm:$0xf]
      %v7242 = vld [vmem:[%s7 + $0x54] sm:$0xf]
      %v7243 = vld [vmem:[%s7 + $0x58] sm:$0xf]
      %v7244 = vld [vmem:[%s7 + $0x5c] sm:$0xf]
      %v7245 = vld [vmem:[%s7 + $0x60] sm:$0xf]
      %v7246 = vld [vmem:[%s7 + $0x64] sm:$0xf]
      %v7247 = vld [vmem:[%s7 + $0x68] sm:$0xf]
      %v7248 = vld [vmem:[%s7 + $0x6c] sm:$0xf]
      %v7249 = vld [vmem:[%s7 + $0x70] sm:$0xf]
      %v7250 = vld [vmem:[%s7 + $0x74] sm:$0xf]
      %v7251 = vld [vmem:[%s7 + $0x78] sm:$0xf]
      %v7252 = vld [vmem:[%s7 + $0x7c] sm:$0xf]
      %v7253 = vld [vmem:[%s7 + $0x80] sm:$0xf]
      %v7254 = vld [vmem:[%s7 + $0x84] sm:$0xf]
      %v7255 = vld [vmem:[%s7 + $0x88] sm:$0xf]
      %v7256 = vld [vmem:[%s7 + $0x8c] sm:$0xf]
      %v7257 = vld [vmem:[%s7 + $0x90] sm:$0xf]
      %v7258 = vld [vmem:[%s7 + $0x94] sm:$0xf]
      %v7259 = vld [vmem:[%s7 + $0x98] sm:$0xf]
      %v7260 = vld [vmem:[%s7 + $0x9c] sm:$0xf]
      %v7261 = vld [vmem:[%s7 + $0xa0] sm:$0xf]
      %v7262 = vld [vmem:[%s7 + $0xa4] sm:$0xf]
      %v7263 = vld [vmem:[%s7 + $0xa8] sm:$0xf]
      %v7264 = vld [vmem:[%s7 + $0xac] sm:$0xf]
      %v7265 = vld [vmem:[%s7 + $0xb0] sm:$0xf]
      %v7266 = vld [vmem:[%s7 + $0xb4] sm:$0xf]
      %v7267 = vld [vmem:[%s7 + $0xb8] sm:$0xf]
      %v7268 = vld [vmem:[%s7 + $0xbc] sm:$0xf]
      %v7269 = vld [vmem:[%s7 + $0xc0] sm:$0xf]
      %v7270 = vld [vmem:[%s7 + $0xc4] sm:$0xf]
      %v7271 = vld [vmem:[%s7 + $0xc8] sm:$0xf]
      %v7272 = vld [vmem:[%s7 + $0xcc] sm:$0xf]
      %v7273 = vld [vmem:[%s7 + $0xd0] sm:$0xf]
      %v7274 = vld [vmem:[%s7 + $0xd4] sm:$0xf]
      %v7275 = vld [vmem:[%s7 + $0xd8] sm:$0xf]
      %v7276 = vld [vmem:[%s7 + $0xdc] sm:$0xf]
      %v7277 = vld [vmem:[%s7 + $0xe0] sm:$0xf]
      %v7278 = vld [vmem:[%s7 + $0xe4] sm:$0xf]
      %v7279 = vld [vmem:[%s7 + $0xe8] sm:$0xf]
      %v7280 = vld [vmem:[%s7 + $0xec] sm:$0xf]
      %v7281 = vld [vmem:[%s7 + $0xf0] sm:$0xf]
      %v7282 = vld [vmem:[%s7 + $0xf4] sm:$0xf]
      %v7283 = vld [vmem:[%s7 + $0xf8] sm:$0xf]
      %v7284 = vld [vmem:[%s7 + $0xfc] sm:$0xf]
      %v7285 = vld [vmem:[%s7 + $0x100] sm:$0xf]
      %v7286 = vld [vmem:[%s7 + $0x104] sm:$0xf]
      %v7287 = vld [vmem:[%s7 + $0x108] sm:$0xf]
      %v7288 = vld [vmem:[%s7 + $0x10c] sm:$0xf]
      %v7289 = vld [vmem:[%s7 + $0x110] sm:$0xf]
      %v7290 = vld [vmem:[%s7 + $0x114] sm:$0xf]
      %v7291 = vld [vmem:[%s7 + $0x118] sm:$0xf]
      %v7292 = vld [vmem:[%s7 + $0x11c] sm:$0xf]
      %v7293 = vld [vmem:[%s7 + $0x120] sm:$0xf]
      %v7294 = vld [vmem:[%s7 + $0x124] sm:$0xf]
      %v7295 = vld [vmem:[%s7 + $0x128] sm:$0xf]
      %v7296 = vld [vmem:[%s7 + $0x12c] sm:$0xf]
      %v7297 = vld [vmem:[%s7 + $0x130] sm:$0xf]
      %v7298 = vld [vmem:[%s7 + $0x134] sm:$0xf]
      %v7299 = vld [vmem:[%s7 + $0x138] sm:$0xf]
      %v7300 = vld [vmem:[%s7 + $0x13c] sm:$0xf]
      %v7301 = vld [vmem:[%s7 + $0x140] sm:$0xf]
      %v7302 = vld [vmem:[%s7 + $0x144] sm:$0xf]
      %v7303 = vld [vmem:[%s7 + $0x148] sm:$0xf]
      %v7304 = vld [vmem:[%s7 + $0x14c] sm:$0xf]
      %v7305 = vld [vmem:[%s7 + $0x150] sm:$0xf]
      %v7306 = vld [vmem:[%s7 + $0x154] sm:$0xf]
      %v7307 = vld [vmem:[%s7 + $0x158] sm:$0xf]
      %v7308 = vld [vmem:[%s7 + $0x15c] sm:$0xf]
      %v7309 = vld [vmem:[%s7 + $0x160] sm:$0xf]
      %v7310 = vld [vmem:[%s7 + $0x164] sm:$0xf]
      %v7311 = vld [vmem:[%s7 + $0x168] sm:$0xf]
      %v7312 = vld [vmem:[%s7 + $0x16c] sm:$0xf]
      %v7313 = vld [vmem:[%s7 + $0x170] sm:$0xf]
      %v7314 = vld [vmem:[%s7 + $0x174] sm:$0xf]
      %v7315 = vld [vmem:[%s7 + $0x178] sm:$0xf]
      %v7316 = vld [vmem:[%s7 + $0x17c] sm:$0xf]
      %v7317 = vld [vmem:[%s7 + $0x180] sm:$0xf]
      %v7318 = vld [vmem:[%s7 + $0x184] sm:$0xf]
      %v7319 = vld [vmem:[%s7 + $0x188] sm:$0xf]
      %v7320 = vld [vmem:[%s7 + $0x18c] sm:$0xf]
      %v7321 = vld [vmem:[#allocation3] sm:$0x1]
      %v7422 = vunpack.c.l.b16 %v7221
      %v7423 = vunpack.c.l.b16 %v7222
      %v7424 = vunpack.c.l.b16 %v7223
      %v7425 = vunpack.c.l.b16 %v7224
      %v7426 = vunpack.c.l.b16 %v7225
      %v7427 = vunpack.c.l.b16 %v7226
      %v7428 = vunpack.c.l.b16 %v7227
      %v7429 = vunpack.c.l.b16 %v7228
      %v7430 = vunpack.c.l.b16 %v7229
      %v7431 = vunpack.c.l.b16 %v7230
      %v7432 = vunpack.c.l.b16 %v7231
      %v7433 = vunpack.c.l.b16 %v7232
      %v7434 = vunpack.c.l.b16 %v7233
      %v7435 = vunpack.c.l.b16 %v7234
      %v7436 = vunpack.c.l.b16 %v7235
      %v7437 = vunpack.c.l.b16 %v7236
      %v7438 = vunpack.c.l.b16 %v7237
      %v7439 = vunpack.c.l.b16 %v7238
      %v7440 = vunpack.c.l.b16 %v7239
      %v7441 = vunpack.c.l.b16 %v7240
      %v7442 = vunpack.c.l.b16 %v7241
      %v7443 = vunpack.c.l.b16 %v7242
      %v7444 = vunpack.c.l.b16 %v7243
      %v7445 = vunpack.c.l.b16 %v7244
      %v7446 = vunpack.c.l.b16 %v7245
      %v7447 = vunpack.c.l.b16 %v7246
      %v7448 = vunpack.c.l.b16 %v7247
      %v7449 = vunpack.c.l.b16 %v7248
      %v7450 = vunpack.c.l.b16 %v7249
      %v7451 = vunpack.c.l.b16 %v7250
      %v7452 = vunpack.c.l.b16 %v7251
      %v7453 = vunpack.c.l.b16 %v7252
      %v7454 = vunpack.c.l.b16 %v7253
      %v7455 = vunpack.c.l.b16 %v7254
      %v7456 = vunpack.c.l.b16 %v7255
      %v7457 = vunpack.c.l.b16 %v7256
      %v7458 = vunpack.c.l.b16 %v7257
      %v7459 = vunpack.c.l.b16 %v7258
      %v7460 = vunpack.c.l.b16 %v7259
      %v7461 = vunpack.c.l.b16 %v7260
      %v7462 = vunpack.c.l.b16 %v7261
      %v7463 = vunpack.c.l.b16 %v7262
      %v7464 = vunpack.c.l.b16 %v7263
      %v7465 = vunpack.c.l.b16 %v7264
      %v7466 = vunpack.c.l.b16 %v7265
      %v7467 = vunpack.c.l.b16 %v7266
      %v7468 = vunpack.c.l.b16 %v7267
      %v7469 = vunpack.c.l.b16 %v7268
      %v7470 = vunpack.c.l.b16 %v7269
      %v7471 = vunpack.c.l.b16 %v7270
      %v7472 = vunpack.c.l.b16 %v7271
      %v7473 = vunpack.c.l.b16 %v7272
      %v7474 = vunpack.c.l.b16 %v7273
      %v7475 = vunpack.c.l.b16 %v7274
      %v7476 = vunpack.c.l.b16 %v7275
      %v7477 = vunpack.c.l.b16 %v7276
      %v7478 = vunpack.c.l.b16 %v7277
      %v7479 = vunpack.c.l.b16 %v7278
      %v7480 = vunpack.c.l.b16 %v7279
      %v7481 = vunpack.c.l.b16 %v7280
      %v7482 = vunpack.c.l.b16 %v7281
      %v7483 = vunpack.c.l.b16 %v7282
      %v7484 = vunpack.c.l.b16 %v7283
      %v7485 = vunpack.c.l.b16 %v7284
      %v7486 = vunpack.c.l.b16 %v7285
      %v7487 = vunpack.c.l.b16 %v7286
      %v7488 = vunpack.c.l.b16 %v7287
      %v7489 = vunpack.c.l.b16 %v7288
      %v7490 = vunpack.c.l.b16 %v7289
      %v7491 = vunpack.c.l.b16 %v7290
      %v7492 = vunpack.c.l.b16 %v7291
      %v7493 = vunpack.c.l.b16 %v7292
      %v7494 = vunpack.c.l.b16 %v7293
      %v7495 = vunpack.c.l.b16 %v7294
      %v7496 = vunpack.c.l.b16 %v7295
      %v7497 = vunpack.c.l.b16 %v7296
      %v7498 = vunpack.c.l.b16 %v7297
      %v7499 = vunpack.c.l.b16 %v7298
      %v7500 = vunpack.c.l.b16 %v7299
      %v7501 = vunpack.c.l.b16 %v7300
      %v7502 = vunpack.c.l.b16 %v7301
      %v7503 = vunpack.c.l.b16 %v7302
      %v7504 = vunpack.c.l.b16 %v7303
      %v7505 = vunpack.c.l.b16 %v7304
      %v7506 = vunpack.c.l.b16 %v7305
      %v7507 = vunpack.c.l.b16 %v7306
      %v7508 = vunpack.c.l.b16 %v7307
      %v7509 = vunpack.c.l.b16 %v7308
      %v7510 = vunpack.c.l.b16 %v7309
      %v7511 = vunpack.c.l.b16 %v7310
      %v7512 = vunpack.c.l.b16 %v7311
      %v7513 = vunpack.c.l.b16 %v7312
      %v7514 = vunpack.c.l.b16 %v7313
      %v7515 = vunpack.c.l.b16 %v7314
      %v7516 = vunpack.c.l.b16 %v7315
      %v7517 = vunpack.c.l.b16 %v7316
      %v7518 = vunpack.c.l.b16 %v7317
      %v7519 = vunpack.c.l.b16 %v7318
      %v7520 = vunpack.c.l.b16 %v7319
      %v7521 = vunpack.c.l.b16 %v7320
      %v7522 = vpack.c.b16 %v7423, %v7422
      %v7523 = vpack.c.b16 %v7425, %v7424
      %v7524 = vpack.c.b16 %v7427, %v7426
      %v7525 = vpack.c.b16 %v7429, %v7428
      %v7526 = vpack.c.b16 %v7431, %v7430
      %v7527 = vpack.c.b16 %v7433, %v7432
      %v7528 = vpack.c.b16 %v7435, %v7434
      %v7529 = vpack.c.b16 %v7437, %v7436
      %v7530 = vpack.c.b16 %v7439, %v7438
      %v7531 = vpack.c.b16 %v7441, %v7440
      %v7532 = vpack.c.b16 %v7443, %v7442
      %v7533 = vpack.c.b16 %v7445, %v7444
      %v7534 = vpack.c.b16 %v7447, %v7446
      %v7535 = vpack.c.b16 %v7449, %v7448
      %v7536 = vpack.c.b16 %v7451, %v7450
      %v7537 = vpack.c.b16 %v7453, %v7452
      %v7538 = vpack.c.b16 %v7455, %v7454
      %v7539 = vpack.c.b16 %v7457, %v7456
      %v7540 = vpack.c.b16 %v7459, %v7458
      %v7541 = vpack.c.b16 %v7461, %v7460
      %v7542 = vpack.c.b16 %v7463, %v7462
      %v7543 = vpack.c.b16 %v7465, %v7464
      %v7544 = vpack.c.b16 %v7467, %v7466
      %v7545 = vpack.c.b16 %v7469, %v7468
      %v7546 = vpack.c.b16 %v7471, %v7470
      %v7547 = vpack.c.b16 %v7473, %v7472
      %v7548 = vpack.c.b16 %v7475, %v7474
      %v7549 = vpack.c.b16 %v7477, %v7476
      %v7550 = vpack.c.b16 %v7479, %v7478
      %v7551 = vpack.c.b16 %v7481, %v7480
      %v7552 = vpack.c.b16 %v7483, %v7482
      %v7553 = vpack.c.b16 %v7485, %v7484
      %v7554 = vpack.c.b16 %v7487, %v7486
      %v7555 = vpack.c.b16 %v7489, %v7488
      %v7556 = vpack.c.b16 %v7491, %v7490
      %v7557 = vpack.c.b16 %v7493, %v7492
      %v7558 = vpack.c.b16 %v7495, %v7494
      %v7559 = vpack.c.b16 %v7497, %v7496
      %v7560 = vpack.c.b16 %v7499, %v7498
      %v7561 = vpack.c.b16 %v7501, %v7500
      %v7562 = vpack.c.b16 %v7503, %v7502
      %v7563 = vpack.c.b16 %v7505, %v7504
      %v7564 = vpack.c.b16 %v7507, %v7506
      %v7565 = vpack.c.b16 %v7509, %v7508
      %v7566 = vpack.c.b16 %v7511, %v7510
      %v7567 = vpack.c.b16 %v7513, %v7512
      %v7568 = vpack.c.b16 %v7515, %v7514
      %v7569 = vpack.c.b16 %v7517, %v7516
      %v7570 = vpack.c.b16 %v7519, %v7518
      %v7571 = vpack.c.b16 %v7521, %v7520
      %vm7622 = vcmask 261120
      %v7624 = vsel %vm7622, %v7220, 0
      %7626 = vmatprep.subr.bf16.mxu0 0
      %7627 = vmatpush1.bf16.msra.mxu0 %v7522
      %7628 = vmatprep.subr.bf16.mxu0 0
      %7629 = vmatpush1.bf16.msra.mxu0 %v7523
      %7630 = vmatprep.subr.bf16.mxu0 0
      %7631 = vmatpush1.bf16.msra.mxu0 %v7524
      %7632 = vmatprep.subr.bf16.mxu0 0
      %7633 = vmatpush1.bf16.msra.mxu0 %v7525
      %7634 = vmatprep.subr.bf16.mxu0 0
      %7635 = vmatpush1.bf16.msra.mxu0 %v7526
      %7636 = vmatprep.subr.bf16.mxu0 0
      %7637 = vmatpush1.bf16.msra.mxu0 %v7527
      %7638 = vmatprep.subr.bf16.mxu0 0
      %7639 = vmatpush1.bf16.msra.mxu0 %v7528
      %7640 = vmatprep.subr.bf16.mxu0 0
      %7641 = vmatpush1.bf16.msra.mxu0 %v7529
      %7642 = vmatprep.subr.bf16.mxu0 0
      %7643 = vmatpush1.bf16.msra.mxu0 %v7530
      %7644 = vmatprep.subr.bf16.mxu0 0
      %7645 = vmatpush1.bf16.msra.mxu0 %v7531
      %7646 = vmatprep.subr.bf16.mxu0 0
      %7647 = vmatpush1.bf16.msra.mxu0 %v7532
      %7648 = vmatprep.subr.bf16.mxu0 0
      %7649 = vmatpush1.bf16.msra.mxu0 %v7533
      %7650 = vmatprep.subr.bf16.mxu0 0
      %7651 = vmatpush1.bf16.msra.mxu0 %v7534
      %7652 = vmatprep.subr.bf16.mxu0 0
      %7653 = vmatpush1.bf16.msra.mxu0 %v7535
      %7654 = vmatprep.subr.bf16.mxu0 0
      %7655 = vmatpush1.bf16.msra.mxu0 %v7536
      %7656 = vmatprep.subr.bf16.mxu0 0
      %7657 = vmatpush1.bf16.msra.mxu0 %v7537
      %7658 = vmatprep.mubr.bf16.mxu0 %v7215
      %7659 = vmatmul.mubr.bf16.gmra.mrb[0].mxu0 %v7214
      %v7660 = vpop.f32.mrb[0].mxu0
      %v7661 = vadd.f32 %v7321, %v7660
      %v7662 = vpop.f32.mrb[0].mxu0
      %v7663 = vpop.f32.mrb[0].mxu0
      %v7664 = vpop.f32.mrb[0].mxu0
      %7665 = vdwg.mxu0
      %7666 = vmatprep.subr.bf16.mxu0 0
      %7667 = vmatpush1.bf16.msra.mxu0 %v7538
      %7668 = vmatprep.subr.bf16.mxu0 0
      %7669 = vmatpush1.bf16.msra.mxu0 %v7539
      %7670 = vmatprep.subr.bf16.mxu0 0
      %7671 = vmatpush1.bf16.msra.mxu0 %v7540
      %7672 = vmatprep.subr.bf16.mxu0 0
      %7673 = vmatpush1.bf16.msra.mxu0 %v7541
      %7674 = vmatprep.subr.bf16.mxu0 0
      %7675 = vmatpush1.bf16.msra.mxu0 %v7542
      %7676 = vmatprep.subr.bf16.mxu0 0
      %7677 = vmatpush1.bf16.msra.mxu0 %v7543
      %7678 = vmatprep.subr.bf16.mxu0 0
      %7679 = vmatpush1.bf16.msra.mxu0 %v7544
      %7680 = vmatprep.subr.bf16.mxu0 0
      %7681 = vmatpush1.bf16.msra.mxu0 %v7545
      %7682 = vmatprep.subr.bf16.mxu0 0
      %7683 = vmatpush1.bf16.msra.mxu0 %v7546
      %7684 = vmatprep.subr.bf16.mxu0 0
      %7685 = vmatpush1.bf16.msra.mxu0 %v7547
      %7686 = vmatprep.subr.bf16.mxu0 0
      %7687 = vmatpush1.bf16.msra.mxu0 %v7548
      %7688 = vmatprep.subr.bf16.mxu0 0
      %7689 = vmatpush1.bf16.msra.mxu0 %v7549
      %7690 = vmatprep.subr.bf16.mxu0 0
      %7691 = vmatpush1.bf16.msra.mxu0 %v7550
      %7692 = vmatprep.subr.bf16.mxu0 0
      %7693 = vmatpush1.bf16.msra.mxu0 %v7551
      %7694 = vmatprep.subr.bf16.mxu0 0
      %7695 = vmatpush1.bf16.msra.mxu0 %v7552
      %7696 = vmatprep.subr.bf16.mxu0 0
      %7697 = vmatpush1.bf16.msra.mxu0 %v7553
      %7698 = vmatprep.mubr.bf16.mxu0 %v7217
      %7699 = vmatmul.mubr.bf16.gmra.mrb[0].mxu0 %v7216
      %v7700 = vpop.f32.mrb[0].mxu0
      %v7701 = vadd.f32 %v7661, %v7700
      %v7702 = vpop.f32.mrb[0].mxu0
      %v7703 = vpop.f32.mrb[0].mxu0
      %v7704 = vpop.f32.mrb[0].mxu0
      %7705 = vdwg.mxu0
      %7706 = vmatprep.subr.bf16.mxu0 0
      %7707 = vmatpush1.bf16.msra.mxu0 %v7554
      %7708 = vmatprep.subr.bf16.mxu0 0
      %7709 = vmatpush1.bf16.msra.mxu0 %v7555
      %7710 = vmatprep.subr.bf16.mxu0 0
      %7711 = vmatpush1.bf16.msra.mxu0 %v7556
      %7712 = vmatprep.subr.bf16.mxu0 0
      %7713 = vmatpush1.bf16.msra.mxu0 %v7557
      %7714 = vmatprep.subr.bf16.mxu0 0
      %7715 = vmatpush1.bf16.msra.mxu0 %v7558
      %7716 = vmatprep.subr.bf16.mxu0 0
      %7717 = vmatpush1.bf16.msra.mxu0 %v7559
      %7718 = vmatprep.subr.bf16.mxu0 0
      %7719 = vmatpush1.bf16.msra.mxu0 %v7560
      %7720 = vmatprep.subr.bf16.mxu0 0
      %7721 = vmatpush1.bf16.msra.mxu0 %v7561
      %7722 = vmatprep.subr.bf16.mxu0 0
      %7723 = vmatpush1.bf16.msra.mxu0 %v7562
      %7724 = vmatprep.subr.bf16.mxu0 0
      %7725 = vmatpush1.bf16.msra.mxu0 %v7563
      %7726 = vmatprep.subr.bf16.mxu0 0
      %7727 = vmatpush1.bf16.msra.mxu0 %v7564
      %7728 = vmatprep.subr.bf16.mxu0 0
      %7729 = vmatpush1.bf16.msra.mxu0 %v7565
      %7730 = vmatprep.subr.bf16.mxu0 0
      %7731 = vmatpush1.bf16.msra.mxu0 %v7566
      %7732 = vmatprep.subr.bf16.mxu0 0
      %7733 = vmatpush1.bf16.msra.mxu0 %v7567
      %7734 = vmatprep.subr.bf16.mxu0 0
      %7735 = vmatpush1.bf16.msra.mxu0 %v7568
      %7736 = vmatprep.subr.bf16.mxu0 0
      %7737 = vmatpush1.bf16.msra.mxu0 %v7569
      %7738 = vmatprep.mubr.bf16.mxu0 %v7219
      %7739 = vmatmul.mubr.bf16.gmra.mrb[0].mxu0 %v7218
      %v7740 = vpop.f32.mrb[0].mxu0
      %v7741 = vadd.f32 %v7701, %v7740
      %v7742 = vpop.f32.mrb[0].mxu0
      %v7743 = vpop.f32.mrb[0].mxu0
      %v7744 = vpop.f32.mrb[0].mxu0
      %7745 = vdwg.mxu0
      %7746 = vmatprep.subr.bf16.mxu0 0
      %7747 = vmatpush1.bf16.msra.mxu0 %v7570
      %7748 = vmatprep.subr.bf16.mxu0 0
      %7749 = vmatpush1.bf16.msra.mxu0 %v7571
      %7750 = vmatprep.subr.bf16.mxu0 0
      %7751 = vmatpush1.bf16.msra.mxu0 0
      %7752 = vmatprep.subr.bf16.mxu0 0
      %7753 = vmatpush1.bf16.msra.mxu0 0
      %7754 = vmatprep.subr.bf16.mxu0 0
      %7755 = vmatpush1.bf16.msra.mxu0 0
      %7756 = vmatprep.subr.bf16.mxu0 0
      %7757 = vmatpush1.bf16.msra.mxu0 0
      %7758 = vmatprep.subr.bf16.mxu0 0
      %7759 = vmatpush1.bf16.msra.mxu0 0
      %7760 = vmatprep.subr.bf16.mxu0 0
      %7761 = vmatpush1.bf16.msra.mxu0 0
      %7762 = vmatprep.subr.bf16.mxu0 0
      %7763 = vmatpush1.bf16.msra.mxu0 0
      %7764 = vmatprep.subr.bf16.mxu0 0
      %7765 = vmatpush1.bf16.msra.mxu0 0
      %7766 = vmatprep.subr.bf16.mxu0 0
      %7767 = vmatpush1.bf16.msra.mxu0 0
      %7768 = vmatprep.subr.bf16.mxu0 0
      %7769 = vmatpush1.bf16.msra.mxu0 0
      %7770 = vmatprep.subr.bf16.mxu0 0
      %7771 = vmatpush1.bf16.msra.mxu0 0
      %7772 = vmatprep.subr.bf16.mxu0 0
      %7773 = vmatpush1.bf16.msra.mxu0 0
      %7774 = vmatprep.subr.bf16.mxu0 0
      %7775 = vmatpush1.bf16.msra.mxu0 0
      %7776 = vmatprep.subr.bf16.mxu0 0
      %7777 = vmatpush1.bf16.msra.mxu0 0
      %7778 = vmatprep.mubr.bf16.mxu0 0
      %7779 = vmatmul.mubr.bf16.gmra.mrb[0].mxu0 %v7624
      %v7780 = vpop.f32.mrb[0].mxu0
      %v7781 = vadd.f32 %v7741, %v7780
      %v7782 = vpop.f32.mrb[0].mxu0
      %v7783 = vpop.f32.mrb[0].mxu0
      %v7784 = vpop.f32.mrb[0].mxu0
      %7785 = vdwg.mxu0
      %v7786 = vsub.f32 0.0, %v7781
      %v7787 = vmul.f32 %v7786, 1.442695
      %v7788 = vpow.pop %v7787
      %v7789 = vadd.f32 %v7788, 1.0
      %v7790 = vrcp.pop %v7789
      %v7791 = vmul.f32 1.0, %v7790
      %vm7792 = vcmask 0
      %7793 = vst.msk [vmem:[%s330] sm:$0x1] %vm7792, %v7791
      %p7794 = scmp.lt.s32.totalorder %s22, 1
      %s7795 = scalar_select %p7794, %s22, 1
      %s7796 = scalar_lea.vmem %s9, %s7795
      // Predicated region
      $region57: #{cnn_forward.1} parent=55 // pred_check
        %p7797 = pneg %p234
      $region58: #{cnn_forward.1} parent=55 // pred_check_branch
        %7799 = sbr.rel (%p7797) target = $region60
      $region59: #{cnn_forward.1} parent=55 // pred_region
        _
      $region60: #{cnn_forward.1} parent=55 // pred_fallthru
        _
    $region56: #{cnn_forward.1} parent=5 // pred_fallthru
      _
    %p7800 = scmp.le.s32.totalorder 2, %s17
    // Predicated region
    $region61: #{cnn_forward.1} parent=5 // pred_check
      %p7801 = pneg %p7800
    $region62: #{cnn_forward.1} parent=5 // pred_check_branch
      %7803 = sbr.rel (%p7801) target = $region64
    $region63: #{cnn_forward.1} parent=5 // pred_region
      %s7804 = ssub.s32 %s17, 2
      // Predicated region
      $region65: #{cnn_forward.1} parent=63 // pred_check
        %p7805 = pneg %p240
      $region66: #{cnn_forward.1} parent=63 // pred_check_branch
        %7807 = sbr.rel (%p7805) target = $region68
      $region67: #{cnn_forward.1} parent=63 // pred_region
        %p7808 = scmp.lt.s32.totalorder %s23, 1
        %s7809 = scalar_select %p7808, %s23, 1
        %s7810 = scalar_lea.vmem %s9, %s7809
      $region68: #{cnn_forward.1} parent=63 // pred_fallthru
        _
    $region64: #{cnn_forward.1} parent=5 // pred_fallthru
      _
  $region6: #{cnn_forward.1} parent=0 // loop_footer
    %s21 = sadd.s32 1, %s17
  $region7: #{cnn_forward.1} parent=0 // loop_footer_branch
    %16 = sbr.rel target = $region3
  $region8: #{cnn_forward.1} parent=0 // loop_exit
    _

</llo_original>
